<compile_context>
chip_gen: v5e
topology: v5e:2x2
jax: 0.10.0
libtpu: 0.0.40
codegen_flags: <defaults>
</compile_context>

<pallas_src>
import functools

import jax
import jax.numpy as jnp
from jax.experimental import pallas as pl
from jax.experimental.pallas import tpu as pltpu

_EPS = 1e-5
_LANE = 128


def _round_up(x, m):
    return (x + m - 1) // m * m


@functools.lru_cache(maxsize=None)
def _vmem_limit_bytes():
    # Derive the scoped-VMEM budget from the actual chip (64 MiB on v7x,
    # 128 MiB on v5e/v6e); keep half as headroom for double buffering.
    try:
        return min(int(pltpu.get_tpu_info().vmem_capacity_bytes) // 2,
                   100 * 1024 * 1024)
    except Exception:                      # conservative fallback
        return 32 * 1024 * 1024


def _cparams(*semantics):
    return pltpu.CompilerParams(dimension_semantics=semantics,
                                vmem_limit_bytes=_vmem_limit_bytes())


# ---------------------------------------------------------------------------
# wrapper-side layout helpers (cheap JAX glue: pad / reshape only)
# ---------------------------------------------------------------------------
def _pad_flatten(img, c_pad):
    """(N, H, W, C) -> (N, (H+4)*Wp, c_pad) zero-padded 'padded-coordinate' slab.

    H gets 2 rows of padding per side (1 for the conv ring + 1 so the computed
    output slab starts at an 8-aligned flat row); W is padded left by 1 (ring)
    and right up to Wp = round_up(W+2, 8); channels are zero-padded to c_pad
    (a multiple of 128) so the lane dim is dense.
    """
    n, h, w, c = img.shape
    wp = _round_up(w + 2, 8)
    xp = jnp.pad(img, ((0, 0), (2, 2), (1, wp - w - 1), (0, c_pad - c)))
    return xp.reshape(n, (h + 4) * wp, c_pad), wp


def _grid_mask(h, w, ho, wo, stride, wp):
    """(R, 1) f32 mask over the (h+4)*wp padded-coordinate rows: 1.0 at rows
    corresponding to a (strided) conv output position, else 0."""
    hh = jnp.arange(h + 4)
    ww = jnp.arange(wp)
    hv = (hh >= 2) & (hh <= 2 + (ho - 1) * stride) & ((hh - 2) % stride == 0)
    wv = (ww >= 1) & (ww <= 1 + (wo - 1) * stride) & ((ww - 1) % stride == 0)
    m = (hv[:, None] & wv[None, :]).astype(jnp.float32)
    return m.reshape((h + 4) * wp, 1)


def _conv_w3x3(w, cin_p, cout_p):
    """(Cout, Cin, 3, 3) OIHW -> (9*cin_p, cout_p) bf16; tap t = kh*3+kw owns
    rows [t*cin_p, (t+1)*cin_p)."""
    cout, cin = w.shape[0], w.shape[1]
    wt = jnp.transpose(w, (2, 3, 1, 0))                      # (3, 3, Cin, Cout)
    wt = jnp.pad(wt, ((0, 0), (0, 0), (0, cin_p - cin), (0, cout_p - cout)))
    return wt.reshape(9 * cin_p, cout_p).astype(jnp.bfloat16)


def _pad_vec(v, n, val=0.0):
    return jnp.pad(v, (0, n - v.shape[0]), constant_values=val)


# ---------------------------------------------------------------------------
# Pallas kernels
# ---------------------------------------------------------------------------
def _conv3x3_bnstats_kernel(*refs, fuse_bn, wp, m_rows):
    """3x3 stride-1 conv over one sample's padded-coordinate slab, optionally
    fused with the previous layer's BN+ReLU prologue, and with this layer's BN
    batch-statistic partial sums in the epilogue.

    refs (fuse_bn=True):  xp, w, scale_in, shift_in, mask, y, sum, sq
    refs (fuse_bn=False): xp, w, mask, y, sum, sq

    xp   : (1, R, Cin_p)     bf16, R = (H+4)*Wp
    w    : (9*Cin_p, Cout_p) bf16
    mask : (R, 1)            f32, 1.0 at valid (strided) output rows
    y    : (1, R, Cout_p)    bf16, same padded coords (top/bottom borders zeroed)
    sum/sq: (1, 1, Cout_p)   f32 per-sample partial stats
    """
    if fuse_bn:
        xp_ref, w_ref, scale_ref, shift_ref, mask_ref, y_ref, sum_ref, sq_ref = refs
    else:
        xp_ref, w_ref, mask_ref, y_ref, sum_ref, sq_ref = refs

    cout = w_ref.shape[1]
    r_tot = xp_ref.shape[1]
    mask = mask_ref[...]                                      # (R, 1) f32

    if fuse_bn:
        # Previous layer's BN + ReLU; the mask multiply also re-creates the exact
        # zero padding this conv needs (kills the standalone bn1/ReLU pass and an
        # HBM round trip of the activation).
        v = jnp.maximum(xp_ref[0].astype(jnp.float32) * scale_ref[...]
                        + shift_ref[...], 0.0)
        base = (v * mask).astype(jnp.bfloat16)
    else:
        base = xp_ref[0]                                      # genuine zero borders

    # im2col slab: 9 static in-VMEM slices concatenated along lanes -> a single
    # big-K MXU matmul.  Output slab rows are flat [2*wp, 2*wp + m_rows).
    # TODO(synk): the kw=0/kw=2 tap slices start +/-1 off an 8-row boundary;
    # pre-shifting them once with pltpu.roll would make all 9 slices aligned.
    r0 = 2 * wp
    taps = []
    for kh in range(3):
        for kw in range(3):
            s = r0 + (kh - 1) * wp + (kw - 1)
            taps.append(base[s:s + m_rows, :])
    lhs = jnp.concatenate(taps, axis=1)                       # (m_rows, 9*Cin_p)
    acc = jnp.dot(lhs, w_ref[...], preferred_element_type=jnp.float32)

    # fused BatchNorm batch statistics (masked, per-sample partials; reduced over
    # the batch in the wrapper so this grid axis stays megacore-parallel).
    msk = mask[r0:r0 + m_rows, :]
    masked = acc * msk
    sum_ref[0] = jnp.sum(masked, axis=0, keepdims=True)
    sq_ref[0] = jnp.sum(masked * acc, axis=0, keepdims=True)  # = sum(mask*acc^2)

    # lane-dense bf16 stores in padded coords; aligned border / slab offsets.
    border = jnp.zeros((r0, cout), y_ref.dtype)
    y_ref[0, pl.ds(0, r0), :] = border
    y_ref[0, pl.ds(r0, m_rows), :] = acc.astype(y_ref.dtype)
    y_ref[0, pl.ds(r0 + m_rows, r_tot - r0 - m_rows), :] = border


def _bn2_conv1x1_add_relu_kernel(y_ref, xs_ref, w3_ref, b3_ref,
                                 scale_ref, shift_ref, o_ref):
    """relu(bn2(y2) + (x_shortcut @ w3 + b3)) fused in one pass."""
    sc = jnp.dot(xs_ref[0], w3_ref[...],
                 preferred_element_type=jnp.float32) + b3_ref[...]
    bn = y_ref[0].astype(jnp.float32) * scale_ref[...] + shift_ref[...]
    o_ref[0] = jnp.maximum(bn + sc, 0.0)


def _bn2_add_relu_kernel(y_ref, xs_ref, scale_ref, shift_ref, o_ref):
    """relu(bn2(y2) + x) for the identity-shortcut case."""
    o_ref[0] = jnp.maximum(
        y_ref[0].astype(jnp.float32) * scale_ref[...] + shift_ref[...]
        + xs_ref[0].astype(jnp.float32), 0.0)


# ---------------------------------------------------------------------------
# Pallas wrappers
# ---------------------------------------------------------------------------
def conv3x3_bnstats(xp_flat, w9, mask, *, h, wp, bn_scale=None, bn_shift=None):
    n, r, cin_p = xp_flat.shape
    cout_p = w9.shape[1]
    m_rows = h * wp
    fuse_bn = bn_scale is not None
    kernel = functools.partial(_conv3x3_bnstats_kernel,
                               fuse_bn=fuse_bn, wp=wp, m_rows=m_rows)

    in_specs = [pl.BlockSpec((1, r, cin_p), lambda i: (i, 0, 0)),
                pl.BlockSpec((9 * cin_p, cout_p), lambda i: (0, 0))]
    args = [xp_flat, w9]
    if fuse_bn:
        in_specs += [pl.BlockSpec((1, cin_p), lambda i: (0, 0)),
                     pl.BlockSpec((1, cin_p), lambda i: (0, 0))]
        args += [bn_scale, bn_shift]
    in_specs += [pl.BlockSpec((r, 1), lambda i: (0, 0))]
    args += [mask]

    # TODO(synk): for realistic ResNet shapes add a spatial (row-slab) grid axis
    # with a 2-row halo so one block comfortably fits v7x's 64 MiB VMEM.
    return pl.pallas_call(
        kernel,
        out_shape=(jax.ShapeDtypeStruct((n, r, cout_p), jnp.bfloat16),
                   jax.ShapeDtypeStruct((n, 1, cout_p), jnp.float32),
                   jax.ShapeDtypeStruct((n, 1, cout_p), jnp.float32)),
        grid_spec=pltpu.PrefetchScalarGridSpec(
            num_scalar_prefetch=0, grid=(n,),
            in_specs=in_specs,
            out_specs=[pl.BlockSpec((1, r, cout_p), lambda i: (i, 0, 0)),
                       pl.BlockSpec((1, 1, cout_p), lambda i: (i, 0, 0)),
                       pl.BlockSpec((1, 1, cout_p), lambda i: (i, 0, 0))]),
        compiler_params=_cparams("parallel"),     # partial stats -> no carry
    )(*args)


def bn2_shortcut_relu(y2, xsc, w3, b3, scale, shift):
    n, r, cout_p = y2.shape
    cin_p = xsc.shape[2]
    return pl.pallas_call(
        _bn2_conv1x1_add_relu_kernel,
        out_shape=jax.ShapeDtypeStruct((n, r, cout_p), jnp.float32),
        grid_spec=pltpu.PrefetchScalarGridSpec(
            num_scalar_prefetch=0, grid=(n,),
            in_specs=[pl.BlockSpec((1, r, cout_p), lambda i: (i, 0, 0)),
                      pl.BlockSpec((1, r, cin_p), lambda i: (i, 0, 0)),
                      pl.BlockSpec((cin_p, cout_p), lambda i: (0, 0)),
                      pl.BlockSpec((1, cout_p), lambda i: (0, 0)),
                      pl.BlockSpec((1, cout_p), lambda i: (0, 0)),
                      pl.BlockSpec((1, cout_p), lambda i: (0, 0))],
            out_specs=pl.BlockSpec((1, r, cout_p), lambda i: (i, 0, 0))),
        compiler_params=_cparams("parallel"),
    )(y2, xsc, w3, b3, scale, shift)


def bn2_add_relu(y2, xsc, scale, shift):
    n, r, cout_p = y2.shape
    return pl.pallas_call(
        _bn2_add_relu_kernel,
        out_shape=jax.ShapeDtypeStruct((n, r, cout_p), jnp.float32),
        grid_spec=pltpu.PrefetchScalarGridSpec(
            num_scalar_prefetch=0, grid=(n,),
            in_specs=[pl.BlockSpec((1, r, cout_p), lambda i: (i, 0, 0)),
                      pl.BlockSpec((1, r, cout_p), lambda i: (i, 0, 0)),
                      pl.BlockSpec((1, cout_p), lambda i: (0, 0)),
                      pl.BlockSpec((1, cout_p), lambda i: (0, 0))],
            out_specs=pl.BlockSpec((1, r, cout_p), lambda i: (i, 0, 0))),
        compiler_params=_cparams("parallel"),
    )(y2, xsc, scale, shift)


# ---------------------------------------------------------------------------
# Residual block forward
# ---------------------------------------------------------------------------
def _bn_affine(sum_, sqsum_, count, gamma, beta):
    """Training-mode BatchNorm: biased batch stats -> per-channel scale/shift."""
    mean = sum_ / count                                       # (1, C)
    # E[x^2] - mean^2 can go slightly negative from cancellation; clamp before eps.
    var = jnp.maximum(sqsum_ / count - mean * mean, 0.0)
    scale = gamma[None, :] / jnp.sqrt(var + _EPS)
    shift = beta[None, :] - mean * scale
    return scale, shift


@functools.partial(jax.jit, static_argnames=("stride", "use_1x1conv"))
def residual_forward(x_nchw, params, stride=1, use_1x1conv=True):
    # TODO(synk): accept/return NHWC and store the un-padded output directly from
    # the final kernel to avoid this transpose + the wrapper-side slice below.
    x = jnp.transpose(x_nchw, (0, 2, 3, 1)).astype(jnp.float32)   # NCHW -> NHWC
    n, h, w, cin = x.shape
    cout = params["w1"].shape[0]
    cin_p = _round_up(cin, _LANE)
    cout_p = _round_up(cout, _LANE)
    ho = (h - 1) // stride + 1
    wo = (w - 1) // stride + 1

    # --- conv1 (3x3, pad=1) fused with bn1 partial batch stats ----------------
    # conv biases b1/b2 are intentionally dropped (training-mode BN subtracts the
    # batch mean so they cancel exactly; not valid for eval/running stats).
    xp1, wp1 = _pad_flatten(x.astype(jnp.bfloat16), cin_p)
    mask1 = _grid_mask(h, w, ho, wo, stride, wp1)
    y1_raw, s1, ss1 = conv3x3_bnstats(
        xp1, _conv_w3x3(params["w1"], cin_p, cout_p), mask1, h=h, wp=wp1)
    scale1, shift1 = _bn_affine(jnp.sum(s1, axis=0), jnp.sum(ss1, axis=0),
                                n * ho * wo,
                                _pad_vec(params["g1"], cout_p, 1.0),
                                _pad_vec(params["bt1"], cout_p, 0.0))

    if stride != 1:
        # TODO(synk): stride>1 conv1 is computed densely then subsampled here
        # (correct but ~stride^2 extra conv1 FLOPs); a native strided fast path
        # would need a different in-kernel slab layout.
        y1_img = y1_raw.reshape(n, h + 4, wp1, cout_p)
        y1_img = y1_img[:, 2:3 + (ho - 1) * stride:stride,
                        1:2 + (wo - 1) * stride:stride, :]
        y1_for2, wp2 = _pad_flatten(y1_img, cout_p)
        mask_o = _grid_mask(ho, wo, ho, wo, 1, wp2)
    else:
        y1_for2, wp2, mask_o = y1_raw, wp1, mask1

    # --- conv2 (3x3, pad=1, stride=1): bn1+ReLU fused into the prologue, bn2
    #     partial batch stats fused into the epilogue ---------------------------
    y2_raw, s2, ss2 = conv3x3_bnstats(
        y1_for2, _conv_w3x3(params["w2"], cout_p, cout_p), mask_o, h=ho, wp=wp2,
        bn_scale=scale1, bn_shift=shift1)
    scale2, shift2 = _bn_affine(jnp.sum(s2, axis=0), jnp.sum(ss2, axis=0),
                                n * ho * wo,
                                _pad_vec(params["g2"], cout_p, 1.0),
                                _pad_vec(params["bt2"], cout_p, 0.0))

    # --- bn2 + shortcut + residual add + ReLU (single fused kernel) ------------
    if use_1x1conv:
        x_sc = x[:, ::stride, ::stride, :]                        # (n, ho, wo, cin)
        xsc, _ = _pad_flatten(x_sc.astype(jnp.bfloat16), cin_p)
        w3 = params["w3"][:, :, 0, 0].T                           # (cin, cout)
        w3 = jnp.pad(w3, ((0, cin_p - cin),
                          (0, cout_p - cout))).astype(jnp.bfloat16)
        b3 = _pad_vec(params["b3"], cout_p)[None, :].astype(jnp.float32)
        out_flat = bn2_shortcut_relu(y2_raw, xsc, w3, b3, scale2, shift2)
    else:
        assert stride == 1 and cin == cout, \
            "use_1x1conv=False requires stride==1 and input_channel==num_channels"
        xsc, _ = _pad_flatten(x.astype(jnp.bfloat16), cout_p)
        out_flat = bn2_add_relu(y2_raw, xsc, scale2, shift2)

    out_img = out_flat.reshape(n, ho + 4, wp2, cout_p)[:, 2:ho + 2, 1:wo + 1, :cout]
    return jnp.transpose(out_img, (0, 3, 1, 2))                   # back to NCHW


# ---------------------------------------------------------------------------
# Pure-JAX reference (mirrors the PyTorch forward exactly, training-mode BN)
# ---------------------------------------------------------------------------
def reference_forward(x, params, stride=1, use_1x1conv=True):
    def conv(x, w, b, s, pad):
        y = jax.lax.conv_general_dilated(
            x, w, (s, s), [(pad, pad), (pad, pad)],
            dimension_numbers=("NCHW", "OIHW", "NCHW"))
        return y + b[None, :, None, None]

    def bn(x, gamma, beta):
        mean = x.mean(axis=(0, 2, 3), keepdims=True)
        var = x.var(axis=(0, 2, 3), keepdims=True)   # biased, like torch training BN
        xn = (x - mean) / jnp.sqrt(var + _EPS)
        return xn * gamma[None, :, None, None] + beta[None, :, None, None]

    y = jax.nn.relu(bn(conv(x, params["w1"], params["b1"], stride, 1),
                       params["g1"], params["bt1"]))
    y = bn(conv(y, params["w2"], params["b2"], 1, 1), params["g2"], params["bt2"])
    if use_1x1conv:
        x = conv(x, params["w3"], params["b3"], stride, 0)
    return jax.nn.relu(y + x)


# ---------------------------------------------------------------------------
# main
# ---------------------------------------------------------------------------
if __name__ == "__main__":
    key = jax.random.PRNGKey(0)
    k_x, k_w1, k_b1, k_w2, k_b2, k_w3, k_b3 = jax.random.split(key, 7)

    N, C_IN, C_OUT, H, W = 2, 4, 8, 16, 16
    STRIDE, USE_1X1 = 1, True

    x = jax.random.normal(k_x, (N, C_IN, H, W), dtype=jnp.float32)

    params = {
        "w1": 0.1 * jax.random.normal(k_w1, (C_OUT, C_IN, 3, 3), jnp.float32),
        "b1": 0.1 * jax.random.normal(k_b1, (C_OUT,), jnp.float32),
        "w2": 0.1 * jax.random.normal(k_w2, (C_OUT, C_OUT, 3, 3), jnp.float32),
        "b2": 0.1 * jax.random.normal(k_b2, (C_OUT,), jnp.float32),
        "w3": 0.1 * jax.random.normal(k_w3, (C_OUT, C_IN, 1, 1), jnp.float32),
        "b3": 0.1 * jax.random.normal(k_b3, (C_OUT,), jnp.float32),
        "g1": jnp.ones((C_OUT,), jnp.float32),   # BatchNorm default init
        "bt1": jnp.zeros((C_OUT,), jnp.float32),
        "g2": jnp.ones((C_OUT,), jnp.float32),
        "bt2": jnp.zeros((C_OUT,), jnp.float32),
    }

    out = residual_forward(x, params, stride=STRIDE, use_1x1conv=USE_1X1)
    out = jax.block_until_ready(out)

    ref = reference_forward(x, params, stride=STRIDE, use_1x1conv=USE_1X1)
    ref = jax.block_until_ready(ref)

    assert out.shape == ref.shape == (N, C_OUT, H // STRIDE, W // STRIDE)
    # bf16 MXU operands + bf16-stored intermediates through two chained convs and
    # two BNs vs an f32 reference -> tolerance sized for bf16 rounding.
    assert jnp.allclose(out, ref, atol=5e-2, rtol=5e-2), \
        f"max abs err {jnp.max(jnp.abs(out - ref))}"

    print("KERNEL_OK")
</pallas_src>

<mosaic_0001>
module attributes {stable_mosaic.version = 11 : i64} {
  func.func @_conv3x3_bnstats_kernel(%arg0: i32, %arg1: memref<1x480x128xbf16, #tpu.memory_space<vmem>>, %arg2: memref<1152x128xbf16, #tpu.memory_space<vmem>>, %arg3: memref<480x1xf32, #tpu.memory_space<vmem>>, %arg4: memref<1x480x128xbf16, #tpu.memory_space<vmem>>, %arg5: memref<1x1x128xf32, #tpu.memory_space<vmem>>, %arg6: memref<1x1x128xf32, #tpu.memory_space<vmem>>) attributes {dimension_semantics = [#tpu.dimension_semantics<parallel>], iteration_bounds = array<i64: 2>, scalar_prefetch = 0 : i64, scratch_operands = 0 : i64, tpu.core_type = #tpu.core_type<tc>, window_params = [{transform_indices = @transform_0, window_bounds = array<i64: 1, 480, 128>}, {pipeline_mode = #tpu.pipeline_mode<synchronous>, transform_indices = @transform_1, window_bounds = array<i64: 1152, 128>}, {pipeline_mode = #tpu.pipeline_mode<synchronous>, transform_indices = @transform_2, window_bounds = array<i64: 480, 1>}, {transform_indices = @transform_3, window_bounds = array<i64: 1, 480, 128>}, {transform_indices = @transform_4, window_bounds = array<i64: 1, 1, 128>}, {transform_indices = @transform_5, window_bounds = array<i64: 1, 1, 128>}]} {
    %c0 = arith.constant 0 : index
    %c0_0 = arith.constant 0 : index
    %0 = vector.load %arg3[%c0, %c0_0] : memref<480x1xf32, #tpu.memory_space<vmem>>, vector<480x1xf32>
    %c0_1 = arith.constant 0 : index
    %c0_2 = arith.constant 0 : index
    %c0_3 = arith.constant 0 : index
    %1 = vector.load %arg1[%c0_1, %c0_2, %c0_3] : memref<1x480x128xbf16, #tpu.memory_space<vmem>>, vector<1x480x128xbf16>
    %2 = vector.shape_cast %1 : vector<1x480x128xbf16> to vector<480x128xbf16>
    %3 = vector.extract_strided_slice %2 {offsets = [23, 0], sizes = [384, 128], strides = [1, 1]} : vector<480x128xbf16> to vector<384x128xbf16>
    %4 = vector.extract_strided_slice %2 {offsets = [24, 0], sizes = [384, 128], strides = [1, 1]} : vector<480x128xbf16> to vector<384x128xbf16>
    %5 = vector.extract_strided_slice %2 {offsets = [25, 0], sizes = [384, 128], strides = [1, 1]} : vector<480x128xbf16> to vector<384x128xbf16>
    %6 = vector.extract_strided_slice %2 {offsets = [47, 0], sizes = [384, 128], strides = [1, 1]} : vector<480x128xbf16> to vector<384x128xbf16>
    %7 = vector.extract_strided_slice %2 {offsets = [48, 0], sizes = [384, 128], strides = [1, 1]} : vector<480x128xbf16> to vector<384x128xbf16>
    %8 = vector.extract_strided_slice %2 {offsets = [49, 0], sizes = [384, 128], strides = [1, 1]} : vector<480x128xbf16> to vector<384x128xbf16>
    %9 = vector.extract_strided_slice %2 {offsets = [71, 0], sizes = [384, 128], strides = [1, 1]} : vector<480x128xbf16> to vector<384x128xbf16>
    %10 = vector.extract_strided_slice %2 {offsets = [72, 0], sizes = [384, 128], strides = [1, 1]} : vector<480x128xbf16> to vector<384x128xbf16>
    %11 = vector.extract_strided_slice %2 {offsets = [73, 0], sizes = [384, 128], strides = [1, 1]} : vector<480x128xbf16> to vector<384x128xbf16>
    %12 = tpu.concatenate %3, %4, %5, %6, %7, %8, %9, %10, %11 in 1 : vector<384x128xbf16>, vector<384x128xbf16>, vector<384x128xbf16>, vector<384x128xbf16>, vector<384x128xbf16>, vector<384x128xbf16>, vector<384x128xbf16>, vector<384x128xbf16>, vector<384x128xbf16> -> vector<384x1152xbf16>
    %c0_4 = arith.constant 0 : index
    %c0_5 = arith.constant 0 : index
    %13 = vector.load %arg2[%c0_4, %c0_5] : memref<1152x128xbf16, #tpu.memory_space<vmem>>, vector<1152x128xbf16>
    %cst = arith.constant dense<0.000000e+00> : vector<384x128xf32>
    %14 = tpu.matmul %12, %13, %cst {dimension_numbers = #tpu.dot_dimension_numbers<[1], [0], [0], [1], [0, 0, 1, 1], [], []>} : vector<384x1152xbf16>, vector<1152x128xbf16>, vector<384x128xf32> -> vector<384x128xf32>
    %15 = vector.extract_strided_slice %0 {offsets = [48, 0], sizes = [384, 1], strides = [1, 1]} : vector<480x1xf32> to vector<384x1xf32>
    %16 = vector.broadcast %15 : vector<384x1xf32> to vector<384x128xf32>
    %17 = arith.mulf %14, %16 : vector<384x128xf32>
    %cst_6 = arith.constant dense<0.000000e+00> : vector<128xf32>
    %18 = vector.multi_reduction <add>, %17, %cst_6 [0] : vector<384x128xf32> to vector<128xf32>
    %19 = vector.shape_cast %18 : vector<128xf32> to vector<1x128xf32>
    %c0_7 = arith.constant 0 : index
    %c0_8 = arith.constant 0 : index
    %c0_9 = arith.constant 0 : index
    %20 = vector.load %arg5[%c0_7, %c0_8, %c0_9] : memref<1x1x128xf32, #tpu.memory_space<vmem>>, vector<1x1x128xf32>
    %21 = vector.shape_cast %20 : vector<1x1x128xf32> to vector<1x128xf32>
    %22 = vector.shape_cast %19 : vector<1x128xf32> to vector<1x1x128xf32>
    tpu.vector_store %arg5[%c0_7, %c0_8, %c0_9], %22 {strides = array<i32>} : memref<1x1x128xf32, #tpu.memory_space<vmem>>, vector<1x1x128xf32>,
    %23 = arith.mulf %17, %14 : vector<384x128xf32>
    %cst_10 = arith.constant dense<0.000000e+00> : vector<128xf32>
    %24 = vector.multi_reduction <add>, %23, %cst_10 [0] : vector<384x128xf32> to vector<128xf32>
    %25 = vector.shape_cast %24 : vector<128xf32> to vector<1x128xf32>
    %c0_11 = arith.constant 0 : index
    %c0_12 = arith.constant 0 : index
    %c0_13 = arith.constant 0 : index
    %26 = vector.load %arg6[%c0_11, %c0_12, %c0_13] : memref<1x1x128xf32, #tpu.memory_space<vmem>>, vector<1x1x128xf32>
    %27 = vector.shape_cast %26 : vector<1x1x128xf32> to vector<1x128xf32>
    %28 = vector.shape_cast %25 : vector<1x128xf32> to vector<1x1x128xf32>
    tpu.vector_store %arg6[%c0_11, %c0_12, %c0_13], %28 {strides = array<i32>} : memref<1x1x128xf32, #tpu.memory_space<vmem>>, vector<1x1x128xf32>,
    %cst_14 = arith.constant 0.000000e+00 : bf16
    %29 = vector.broadcast %cst_14 : bf16 to vector<48x128xbf16>
    %c0_15 = arith.constant 0 : index
    %c0_16 = arith.constant 0 : index
    %c0_17 = arith.constant 0 : index
    %30 = vector.load %arg4[%c0_15, %c0_16, %c0_17] : memref<1x480x128xbf16, #tpu.memory_space<vmem>>, vector<1x48x128xbf16>
    %31 = vector.shape_cast %30 : vector<1x48x128xbf16> to vector<48x128xbf16>
    %32 = vector.shape_cast %29 : vector<48x128xbf16> to vector<1x48x128xbf16>
    tpu.vector_store %arg4[%c0_15, %c0_16, %c0_17], %32 {strides = array<i32>} : memref<1x480x128xbf16, #tpu.memory_space<vmem>>, vector<1x48x128xbf16>,
    %33 = arith.truncf %14 : vector<384x128xf32> to vector<384x128xbf16>
    %c0_18 = arith.constant 0 : index
    %c48 = arith.constant 48 : index
    %c0_19 = arith.constant 0 : index
    %34 = vector.load %arg4[%c0_18, %c48, %c0_19] : memref<1x480x128xbf16, #tpu.memory_space<vmem>>, vector<1x384x128xbf16>
    %35 = vector.shape_cast %34 : vector<1x384x128xbf16> to vector<384x128xbf16>
    %36 = vector.shape_cast %33 : vector<384x128xbf16> to vector<1x384x128xbf16>
    tpu.vector_store %arg4[%c0_18, %c48, %c0_19], %36 {strides = array<i32>} : memref<1x480x128xbf16, #tpu.memory_space<vmem>>, vector<1x384x128xbf16>,
    %c0_20 = arith.constant 0 : index
    %c432 = arith.constant 432 : index
    %c0_21 = arith.constant 0 : index
    %37 = vector.load %arg4[%c0_20, %c432, %c0_21] : memref<1x480x128xbf16, #tpu.memory_space<vmem>>, vector<1x48x128xbf16>
    %38 = vector.shape_cast %37 : vector<1x48x128xbf16> to vector<48x128xbf16>
    %39 = vector.shape_cast %29 : vector<48x128xbf16> to vector<1x48x128xbf16>
    tpu.vector_store %arg4[%c0_20, %c432, %c0_21], %39 {strides = array<i32>} : memref<1x480x128xbf16, #tpu.memory_space<vmem>>, vector<1x48x128xbf16>,
    return
  }
  func.func @transform_0(%arg0: i32) -> (i32, i32, i32) {
    %c0_i32 = arith.constant 0 : i32
    %c0_i32_0 = arith.constant 0 : i32
    %c0_i32_1 = arith.constant 0 : i32
    return %arg0, %c0_i32, %c0_i32_0 : i32, i32, i32
  }
  func.func @transform_1(%arg0: i32) -> (i32, i32) {
    %c0_i32 = arith.constant 0 : i32
    %c0_i32_0 = arith.constant 0 : i32
    %c0_i32_1 = arith.constant 0 : i32
    return %c0_i32, %c0_i32_0 : i32, i32
  }
  func.func @transform_2(%arg0: i32) -> (i32, i32) {
    %c0_i32 = arith.constant 0 : i32
    %c0_i32_0 = arith.constant 0 : i32
    %c0_i32_1 = arith.constant 0 : i32
    return %c0_i32, %c0_i32_0 : i32, i32
  }
  func.func @transform_3(%arg0: i32) -> (i32, i32, i32) {
    %c0_i32 = arith.constant 0 : i32
    %c0_i32_0 = arith.constant 0 : i32
    %c0_i32_1 = arith.constant 0 : i32
    return %arg0, %c0_i32, %c0_i32_0 : i32, i32, i32
  }
  func.func @transform_4(%arg0: i32) -> (i32, i32, i32) {
    %c0_i32 = arith.constant 0 : i32
    %c0_i32_0 = arith.constant 0 : i32
    %c0_i32_1 = arith.constant 0 : i32
    return %arg0, %c0_i32, %c0_i32_0 : i32, i32, i32
  }
  func.func @transform_5(%arg0: i32) -> (i32, i32, i32) {
    %c0_i32 = arith.constant 0 : i32
    %c0_i32_0 = arith.constant 0 : i32
    %c0_i32_1 = arith.constant 0 : i32
    return %arg0, %c0_i32, %c0_i32_0 : i32, i32, i32
  }
}

module attributes {stable_mosaic.version = 11 : i64} {
  func.func @_conv3x3_bnstats_kernel(%arg0: i32, %arg1: memref<1x480x128xbf16, #tpu.memory_space<vmem>>, %arg2: memref<1152x128xbf16, #tpu.memory_space<vmem>>, %arg3: memref<1x128xf32, #tpu.memory_space<vmem>>, %arg4: memref<1x128xf32, #tpu.memory_space<vmem>>, %arg5: memref<480x1xf32, #tpu.memory_space<vmem>>, %arg6: memref<1x480x128xbf16, #tpu.memory_space<vmem>>, %arg7: memref<1x1x128xf32, #tpu.memory_space<vmem>>, %arg8: memref<1x1x128xf32, #tpu.memory_space<vmem>>) attributes {dimension_semantics = [#tpu.dimension_semantics<parallel>], iteration_bounds = array<i64: 2>, scalar_prefetch = 0 : i64, scratch_operands = 0 : i64, tpu.core_type = #tpu.core_type<tc>, window_params = [{transform_indices = @transform_0, window_bounds = array<i64: 1, 480, 128>}, {pipeline_mode = #tpu.pipeline_mode<synchronous>, transform_indices = @transform_1, window_bounds = array<i64: 1152, 128>}, {pipeline_mode = #tpu.pipeline_mode<synchronous>, transform_indices = @transform_2, window_bounds = array<i64: 1, 128>}, {pipeline_mode = #tpu.pipeline_mode<synchronous>, transform_indices = @transform_3, window_bounds = array<i64: 1, 128>}, {pipeline_mode = #tpu.pipeline_mode<synchronous>, transform_indices = @transform_4, window_bounds = array<i64: 480, 1>}, {transform_indices = @transform_5, window_bounds = array<i64: 1, 480, 128>}, {transform_indices = @transform_6, window_bounds = array<i64: 1, 1, 128>}, {transform_indices = @transform_7, window_bounds = array<i64: 1, 1, 128>}]} {
    %c0 = arith.constant 0 : index
    %c0_0 = arith.constant 0 : index
    %0 = vector.load %arg5[%c0, %c0_0] : memref<480x1xf32, #tpu.memory_space<vmem>>, vector<480x1xf32>
    %c0_1 = arith.constant 0 : index
    %c0_2 = arith.constant 0 : index
    %c0_3 = arith.constant 0 : index
    %1 = vector.load %arg1[%c0_1, %c0_2, %c0_3] : memref<1x480x128xbf16, #tpu.memory_space<vmem>>, vector<1x480x128xbf16>
    %2 = vector.shape_cast %1 : vector<1x480x128xbf16> to vector<480x128xbf16>
    %3 = arith.extf %2 : vector<480x128xbf16> to vector<480x128xf32>
    %c0_4 = arith.constant 0 : index
    %c0_5 = arith.constant 0 : index
    %4 = vector.load %arg3[%c0_4, %c0_5] : memref<1x128xf32, #tpu.memory_space<vmem>>, vector<1x128xf32>
    %5 = vector.broadcast %4 : vector<1x128xf32> to vector<480x128xf32>
    %6 = arith.mulf %3, %5 : vector<480x128xf32>
    %c0_6 = arith.constant 0 : index
    %c0_7 = arith.constant 0 : index
    %7 = vector.load %arg4[%c0_6, %c0_7] : memref<1x128xf32, #tpu.memory_space<vmem>>, vector<1x128xf32>
    %8 = vector.broadcast %7 : vector<1x128xf32> to vector<480x128xf32>
    %9 = arith.addf %6, %8 : vector<480x128xf32>
    %cst = arith.constant 0.000000e+00 : f32
    %10 = vector.broadcast %cst : f32 to vector<480x128xf32>
    %11 = arith.maximumf %9, %10 : vector<480x128xf32>
    %12 = vector.broadcast %0 : vector<480x1xf32> to vector<480x128xf32>
    %13 = arith.mulf %11, %12 : vector<480x128xf32>
    %14 = arith.truncf %13 : vector<480x128xf32> to vector<480x128xbf16>
    %15 = vector.extract_strided_slice %14 {offsets = [23, 0], sizes = [384, 128], strides = [1, 1]} : vector<480x128xbf16> to vector<384x128xbf16>
    %16 = vector.extract_strided_slice %14 {offsets = [24, 0], sizes = [384, 128], strides = [1, 1]} : vector<480x128xbf16> to vector<384x128xbf16>
    %17 = vector.extract_strided_slice %14 {offsets = [25, 0], sizes = [384, 128], strides = [1, 1]} : vector<480x128xbf16> to vector<384x128xbf16>
    %18 = vector.extract_strided_slice %14 {offsets = [47, 0], sizes = [384, 128], strides = [1, 1]} : vector<480x128xbf16> to vector<384x128xbf16>
    %19 = vector.extract_strided_slice %14 {offsets = [48, 0], sizes = [384, 128], strides = [1, 1]} : vector<480x128xbf16> to vector<384x128xbf16>
    %20 = vector.extract_strided_slice %14 {offsets = [49, 0], sizes = [384, 128], strides = [1, 1]} : vector<480x128xbf16> to vector<384x128xbf16>
    %21 = vector.extract_strided_slice %14 {offsets = [71, 0], sizes = [384, 128], strides = [1, 1]} : vector<480x128xbf16> to vector<384x128xbf16>
    %22 = vector.extract_strided_slice %14 {offsets = [72, 0], sizes = [384, 128], strides = [1, 1]} : vector<480x128xbf16> to vector<384x128xbf16>
    %23 = vector.extract_strided_slice %14 {offsets = [73, 0], sizes = [384, 128], strides = [1, 1]} : vector<480x128xbf16> to vector<384x128xbf16>
    %24 = tpu.concatenate %15, %16, %17, %18, %19, %20, %21, %22, %23 in 1 : vector<384x128xbf16>, vector<384x128xbf16>, vector<384x128xbf16>, vector<384x128xbf16>, vector<384x128xbf16>, vector<384x128xbf16>, vector<384x128xbf16>, vector<384x128xbf16>, vector<384x128xbf16> -> vector<384x1152xbf16>
    %c0_8 = arith.constant 0 : index
    %c0_9 = arith.constant 0 : index
    %25 = vector.load %arg2[%c0_8, %c0_9] : memref<1152x128xbf16, #tpu.memory_space<vmem>>, vector<1152x128xbf16>
    %cst_10 = arith.constant dense<0.000000e+00> : vector<384x128xf32>
    %26 = tpu.matmul %24, %25, %cst_10 {dimension_numbers = #tpu.dot_dimension_numbers<[1], [0], [0], [1], [0, 0, 1, 1], [], []>} : vector<384x1152xbf16>, vector<1152x128xbf16>, vector<384x128xf32> -> vector<384x128xf32>
    %27 = vector.extract_strided_slice %0 {offsets = [48, 0], sizes = [384, 1], strides = [1, 1]} : vector<480x1xf32> to vector<384x1xf32>
    %28 = vector.broadcast %27 : vector<384x1xf32> to vector<384x128xf32>
    %29 = arith.mulf %26, %28 : vector<384x128xf32>
    %cst_11 = arith.constant dense<0.000000e+00> : vector<128xf32>
    %30 = vector.multi_reduction <add>, %29, %cst_11 [0] : vector<384x128xf32> to vector<128xf32>
    %31 = vector.shape_cast %30 : vector<128xf32> to vector<1x128xf32>
    %c0_12 = arith.constant 0 : index
    %c0_13 = arith.constant 0 : index
    %c0_14 = arith.constant 0 : index
    %32 = vector.load %arg7[%c0_12, %c0_13, %c0_14] : memref<1x1x128xf32, #tpu.memory_space<vmem>>, vector<1x1x128xf32>
    %33 = vector.shape_cast %32 : vector<1x1x128xf32> to vector<1x128xf32>
    %34 = vector.shape_cast %31 : vector<1x128xf32> to vector<1x1x128xf32>
    tpu.vector_store %arg7[%c0_12, %c0_13, %c0_14], %34 {strides = array<i32>} : memref<1x1x128xf32, #tpu.memory_space<vmem>>, vector<1x1x128xf32>,
    %35 = arith.mulf %29, %26 : vector<384x128xf32>
    %cst_15 = arith.constant dense<0.000000e+00> : vector<128xf32>
    %36 = vector.multi_reduction <add>, %35, %cst_15 [0] : vector<384x128xf32> to vector<128xf32>
    %37 = vector.shape_cast %36 : vector<128xf32> to vector<1x128xf32>
    %c0_16 = arith.constant 0 : index
    %c0_17 = arith.constant 0 : index
    %c0_18 = arith.constant 0 : index
    %38 = vector.load %arg8[%c0_16, %c0_17, %c0_18] : memref<1x1x128xf32, #tpu.memory_space<vmem>>, vector<1x1x128xf32>
    %39 = vector.shape_cast %38 : vector<1x1x128xf32> to vector<1x128xf32>
    %40 = vector.shape_cast %37 : vector<1x128xf32> to vector<1x1x128xf32>
    tpu.vector_store %arg8[%c0_16, %c0_17, %c0_18], %40 {strides = array<i32>} : memref<1x1x128xf32, #tpu.memory_space<vmem>>, vector<1x1x128xf32>,
    %cst_19 = arith.constant 0.000000e+00 : bf16
    %41 = vector.broadcast %cst_19 : bf16 to vector<48x128xbf16>
    %c0_20 = arith.constant 0 : index
    %c0_21 = arith.constant 0 : index
    %c0_22 = arith.constant 0 : index
    %42 = vector.load %arg6[%c0_20, %c0_21, %c0_22] : memref<1x480x128xbf16, #tpu.memory_space<vmem>>, vector<1x48x128xbf16>
    %43 = vector.shape_cast %42 : vector<1x48x128xbf16> to vector<48x128xbf16>
    %44 = vector.shape_cast %41 : vector<48x128xbf16> to vector<1x48x128xbf16>
    tpu.vector_store %arg6[%c0_20, %c0_21, %c0_22], %44 {strides = array<i32>} : memref<1x480x128xbf16, #tpu.memory_space<vmem>>, vector<1x48x128xbf16>,
    %45 = arith.truncf %26 : vector<384x128xf32> to vector<384x128xbf16>
    %c0_23 = arith.constant 0 : index
    %c48 = arith.constant 48 : index
    %c0_24 = arith.constant 0 : index
    %46 = vector.load %arg6[%c0_23, %c48, %c0_24] : memref<1x480x128xbf16, #tpu.memory_space<vmem>>, vector<1x384x128xbf16>
    %47 = vector.shape_cast %46 : vector<1x384x128xbf16> to vector<384x128xbf16>
    %48 = vector.shape_cast %45 : vector<384x128xbf16> to vector<1x384x128xbf16>
    tpu.vector_store %arg6[%c0_23, %c48, %c0_24], %48 {strides = array<i32>} : memref<1x480x128xbf16, #tpu.memory_space<vmem>>, vector<1x384x128xbf16>,
    %c0_25 = arith.constant 0 : index
    %c432 = arith.constant 432 : index
    %c0_26 = arith.constant 0 : index
    %49 = vector.load %arg6[%c0_25, %c432, %c0_26] : memref<1x480x128xbf16, #tpu.memory_space<vmem>>, vector<1x48x128xbf16>
    %50 = vector.shape_cast %49 : vector<1x48x128xbf16> to vector<48x128xbf16>
    %51 = vector.shape_cast %41 : vector<48x128xbf16> to vector<1x48x128xbf16>
    tpu.vector_store %arg6[%c0_25, %c432, %c0_26], %51 {strides = array<i32>} : memref<1x480x128xbf16, #tpu.memory_space<vmem>>, vector<1x48x128xbf16>,
    return
  }
  func.func @transform_0(%arg0: i32) -> (i32, i32, i32) {
    %c0_i32 = arith.constant 0 : i32
    %c0_i32_0 = arith.constant 0 : i32
    %c0_i32_1 = arith.constant 0 : i32
    return %arg0, %c0_i32, %c0_i32_0 : i32, i32, i32
  }
  func.func @transform_1(%arg0: i32) -> (i32, i32) {
    %c0_i32 = arith.constant 0 : i32
    %c0_i32_0 = arith.constant 0 : i32
    %c0_i32_1 = arith.constant 0 : i32
    return %c0_i32, %c0_i32_0 : i32, i32
  }
  func.func @transform_2(%arg0: i32) -> (i32, i32) {
    %c0_i32 = arith.constant 0 : i32
    %c0_i32_0 = arith.constant 0 : i32
    %c0_i32_1 = arith.constant 0 : i32
    return %c0_i32, %c0_i32_0 : i32, i32
  }
  func.func @transform_3(%arg0: i32) -> (i32, i32) {
    %c0_i32 = arith.constant 0 : i32
    %c0_i32_0 = arith.constant 0 : i32
    %c0_i32_1 = arith.constant 0 : i32
    return %c0_i32, %c0_i32_0 : i32, i32
  }
  func.func @transform_4(%arg0: i32) -> (i32, i32) {
    %c0_i32 = arith.constant 0 : i32
    %c0_i32_0 = arith.constant 0 : i32
    %c0_i32_1 = arith.constant 0 : i32
    return %c0_i32, %c0_i32_0 : i32, i32
  }
  func.func @transform_5(%arg0: i32) -> (i32, i32, i32) {
    %c0_i32 = arith.constant 0 : i32
    %c0_i32_0 = arith.constant 0 : i32
    %c0_i32_1 = arith.constant 0 : i32
    return %arg0, %c0_i32, %c0_i32_0 : i32, i32, i32
  }
  func.func @transform_6(%arg0: i32) -> (i32, i32, i32) {
    %c0_i32 = arith.constant 0 : i32
    %c0_i32_0 = arith.constant 0 : i32
    %c0_i32_1 = arith.constant 0 : i32
    return %arg0, %c0_i32, %c0_i32_0 : i32, i32, i32
  }
  func.func @transform_7(%arg0: i32) -> (i32, i32, i32) {
    %c0_i32 = arith.constant 0 : i32
    %c0_i32_0 = arith.constant 0 : i32
    %c0_i32_1 = arith.constant 0 : i32
    return %arg0, %c0_i32, %c0_i32_0 : i32, i32, i32
  }
}

module attributes {stable_mosaic.version = 11 : i64} {
  func.func @_bn2_conv1x1_add_relu_kernel(%arg0: i32, %arg1: memref<1x480x128xbf16, #tpu.memory_space<vmem>>, %arg2: memref<1x480x128xbf16, #tpu.memory_space<vmem>>, %arg3: memref<128x128xbf16, #tpu.memory_space<vmem>>, %arg4: memref<1x128xf32, #tpu.memory_space<vmem>>, %arg5: memref<1x128xf32, #tpu.memory_space<vmem>>, %arg6: memref<1x128xf32, #tpu.memory_space<vmem>>, %arg7: memref<1x480x128xf32, #tpu.memory_space<vmem>>) attributes {dimension_semantics = [#tpu.dimension_semantics<parallel>], iteration_bounds = array<i64: 2>, scalar_prefetch = 0 : i64, scratch_operands = 0 : i64, tpu.core_type = #tpu.core_type<tc>, window_params = [{transform_indices = @transform_0, window_bounds = array<i64: 1, 480, 128>}, {transform_indices = @transform_1, window_bounds = array<i64: 1, 480, 128>}, {pipeline_mode = #tpu.pipeline_mode<synchronous>, transform_indices = @transform_2, window_bounds = array<i64: 128, 128>}, {pipeline_mode = #tpu.pipeline_mode<synchronous>, transform_indices = @transform_3, window_bounds = array<i64: 1, 128>}, {pipeline_mode = #tpu.pipeline_mode<synchronous>, transform_indices = @transform_4, window_bounds = array<i64: 1, 128>}, {pipeline_mode = #tpu.pipeline_mode<synchronous>, transform_indices = @transform_5, window_bounds = array<i64: 1, 128>}, {transform_indices = @transform_6, window_bounds = array<i64: 1, 480, 128>}]} {
    %c0 = arith.constant 0 : index
    %c0_0 = arith.constant 0 : index
    %c0_1 = arith.constant 0 : index
    %0 = vector.load %arg2[%c0, %c0_0, %c0_1] : memref<1x480x128xbf16, #tpu.memory_space<vmem>>, vector<1x480x128xbf16>
    %1 = vector.shape_cast %0 : vector<1x480x128xbf16> to vector<480x128xbf16>
    %c0_2 = arith.constant 0 : index
    %c0_3 = arith.constant 0 : index
    %2 = vector.load %arg3[%c0_2, %c0_3] : memref<128x128xbf16, #tpu.memory_space<vmem>>, vector<128x128xbf16>
    %cst = arith.constant dense<0.000000e+00> : vector<480x128xf32>
    %3 = tpu.matmul %1, %2, %cst {dimension_numbers = #tpu.dot_dimension_numbers<[1], [0], [0], [1], [0, 0, 1, 1], [], []>} : vector<480x128xbf16>, vector<128x128xbf16>, vector<480x128xf32> -> vector<480x128xf32>
    %c0_4 = arith.constant 0 : index
    %c0_5 = arith.constant 0 : index
    %4 = vector.load %arg4[%c0_4, %c0_5] : memref<1x128xf32, #tpu.memory_space<vmem>>, vector<1x128xf32>
    %5 = vector.broadcast %4 : vector<1x128xf32> to vector<480x128xf32>
    %6 = arith.addf %3, %5 : vector<480x128xf32>
    %c0_6 = arith.constant 0 : index
    %c0_7 = arith.constant 0 : index
    %c0_8 = arith.constant 0 : index
    %7 = vector.load %arg1[%c0_6, %c0_7, %c0_8] : memref<1x480x128xbf16, #tpu.memory_space<vmem>>, vector<1x480x128xbf16>
    %8 = vector.shape_cast %7 : vector<1x480x128xbf16> to vector<480x128xbf16>
    %9 = arith.extf %8 : vector<480x128xbf16> to vector<480x128xf32>
    %c0_9 = arith.constant 0 : index
    %c0_10 = arith.constant 0 : index
    %10 = vector.load %arg5[%c0_9, %c0_10] : memref<1x128xf32, #tpu.memory_space<vmem>>, vector<1x128xf32>
    %11 = vector.broadcast %10 : vector<1x128xf32> to vector<480x128xf32>
    %12 = arith.mulf %9, %11 : vector<480x128xf32>
    %c0_11 = arith.constant 0 : index
    %c0_12 = arith.constant 0 : index
    %13 = vector.load %arg6[%c0_11, %c0_12] : memref<1x128xf32, #tpu.memory_space<vmem>>, vector<1x128xf32>
    %14 = vector.broadcast %13 : vector<1x128xf32> to vector<480x128xf32>
    %15 = arith.addf %12, %14 : vector<480x128xf32>
    %16 = arith.addf %15, %6 : vector<480x128xf32>
    %cst_13 = arith.constant 0.000000e+00 : f32
    %17 = vector.broadcast %cst_13 : f32 to vector<480x128xf32>
    %18 = arith.maximumf %16, %17 : vector<480x128xf32>
    %c0_14 = arith.constant 0 : index
    %c0_15 = arith.constant 0 : index
    %c0_16 = arith.constant 0 : index
    %19 = vector.load %arg7[%c0_14, %c0_15, %c0_16] : memref<1x480x128xf32, #tpu.memory_space<vmem>>, vector<1x480x128xf32>
    %20 = vector.shape_cast %19 : vector<1x480x128xf32> to vector<480x128xf32>
    %21 = vector.shape_cast %18 : vector<480x128xf32> to vector<1x480x128xf32>
    tpu.vector_store %arg7[%c0_14, %c0_15, %c0_16], %21 {strides = array<i32>} : memref<1x480x128xf32, #tpu.memory_space<vmem>>, vector<1x480x128xf32>,
    return
  }
  func.func @transform_0(%arg0: i32) -> (i32, i32, i32) {
    %c0_i32 = arith.constant 0 : i32
    %c0_i32_0 = arith.constant 0 : i32
    %c0_i32_1 = arith.constant 0 : i32
    return %arg0, %c0_i32, %c0_i32_0 : i32, i32, i32
  }
  func.func @transform_1(%arg0: i32) -> (i32, i32, i32) {
    %c0_i32 = arith.constant 0 : i32
    %c0_i32_0 = arith.constant 0 : i32
    %c0_i32_1 = arith.constant 0 : i32
    return %arg0, %c0_i32, %c0_i32_0 : i32, i32, i32
  }
  func.func @transform_2(%arg0: i32) -> (i32, i32) {
    %c0_i32 = arith.constant 0 : i32
    %c0_i32_0 = arith.constant 0 : i32
    %c0_i32_1 = arith.constant 0 : i32
    return %c0_i32, %c0_i32_0 : i32, i32
  }
  func.func @transform_3(%arg0: i32) -> (i32, i32) {
    %c0_i32 = arith.constant 0 : i32
    %c0_i32_0 = arith.constant 0 : i32
    %c0_i32_1 = arith.constant 0 : i32
    return %c0_i32, %c0_i32_0 : i32, i32
  }
  func.func @transform_4(%arg0: i32) -> (i32, i32) {
    %c0_i32 = arith.constant 0 : i32
    %c0_i32_0 = arith.constant 0 : i32
    %c0_i32_1 = arith.constant 0 : i32
    return %c0_i32, %c0_i32_0 : i32, i32
  }
  func.func @transform_5(%arg0: i32) -> (i32, i32) {
    %c0_i32 = arith.constant 0 : i32
    %c0_i32_0 = arith.constant 0 : i32
    %c0_i32_1 = arith.constant 0 : i32
    return %c0_i32, %c0_i32_0 : i32, i32
  }
  func.func @transform_6(%arg0: i32) -> (i32, i32, i32) {
    %c0_i32 = arith.constant 0 : i32
    %c0_i32_0 = arith.constant 0 : i32
    %c0_i32_1 = arith.constant 0 : i32
    return %arg0, %c0_i32, %c0_i32_0 : i32, i32, i32
  }
}

</mosaic_0001>

<llo_original>
// kernel: residual_forward.5
$region0: #{residual_forward.5}
  #allocation0 [shape = 'u32[]', space=smem, size = 0x4, offset = 0x4, fixed_abs, tag = 'smem constant byte address 0x4 - core index']
  #allocation1 [shape = 'u32[72,128]{1,0:T(1,128)}', space=vmem, size = 0x9000, scoped, tag = 'internal scratch']
  %s0 = inlined_call_operand.vmem [shape: bf16[2,480,128], index: 0, kind: input, shape index: {}]
  %s1 = inlined_call_operand.vmem [shape: bf16[2,480,128], index: 1, kind: input, shape index: {}]
  %s2 = inlined_call_operand.vmem [shape: bf16[128,128], index: 2, kind: input, shape index: {}]
  %s3 = inlined_call_operand.vmem [shape: f32[1,128], index: 3, kind: input, shape index: {}]
  %s4 = inlined_call_operand.vmem [shape: f32[1,128], index: 4, kind: input, shape index: {}]
  %s5 = inlined_call_operand.vmem [shape: f32[1,128], index: 5, kind: input, shape index: {}]
  %s6 = inlined_call_operand.vmem [shape: f32[2,480,128], index: 6, kind: output, shape index: {}]
  %s7 = sld [smem:[#allocation0]]
  $region57: #{residual_forward.5} parent=0
    _
  %s9 = ssub.s32 1, %s7
  %s10 = scalar_select 0, %s9, %s7
  loop: start=0, step=1, limit=4
  $region2: #{residual_forward.5} parent=0 // loop_pre_header
    _
  $region3: #{residual_forward.5} parent=0 // loop_header
    %s12 = sphi 0, %s16
    %p13 = scmp.ge.s32.totalorder %s12, 4
    %s22 = sphi 0, %s24
    %s25 = sphi 0, %s22
    %s26 = sphi 0, %s25
    %s42 = sphi 0, %s26
    %s48 = sphi 0, %s50
    %s51 = sphi 0, %s48
    %s52 = sphi 0, %s51
    %s68 = sphi 0, %s52
    %s72 = sphi 0, %s72
    %s74 = sphi 0, %s72
    %s75 = sphi 0, %s74
    %s89 = sphi 0, %s75
    %s93 = sphi 0, %s93
    %s95 = sphi 0, %s93
    %s96 = sphi 0, %s95
    %s110 = sphi 0, %s96
    %s114 = sphi 0, %s114
    %s116 = sphi 0, %s114
    %s117 = sphi 0, %s116
    %s131 = sphi 0, %s117
    %s135 = sphi 0, %s135
    %s137 = sphi 0, %s135
    %s138 = sphi 0, %s137
    %s152 = sphi 0, %s138
    %s158 = sphi 0, %s160
    %s161 = sphi 0, %s158
    %s162 = sphi 0, %s161
    %s178 = sphi 0, %s162
  $region4: #{residual_forward.5} parent=0 // loop_header_branch
    %15 = sbr.rel (%p13) target = $region8
  $region5: #{residual_forward.5} parent=0 // loop_body
    %s17 = ssub.s32 %s12, 1
    %s18 = ssub.s32 %s12, 2
    %s19 = sadd.s32 %s12, 1
    %s20 = ssub.s32 %s12, %s19
    %p21 = scmp.eq.s32.totalorder %s20, 0
    %s23 = sadd.s32 %s22, 1
    %s24 = scalar_select %p21, %s22, %s23
    %p27 = pneg %p21
    %p28 = scmp.eq.s32.totalorder %s12, 1
    %p29 = por %p27, %p28
    %p30 = scmp.ne.s32.totalorder %s22, %s25
    %p31 = scmp.eq.s32.totalorder %s12, 0
    %p32 = por %p30, %p31
    %p33 = scmp.ne.s32.totalorder %s22, %s25
    %p34 = scmp.eq.s32.totalorder %s17, 1
    %p35 = por %p33, %p34
    %p36 = scmp.ne.s32.totalorder %s25, %s26
    %p37 = scmp.eq.s32.totalorder %s17, 0
    %p38 = por %p36, %p37
    %p39 = scmp.ne.s32.totalorder %s25, %s26
    %p40 = scmp.eq.s32.totalorder %s18, 1
    %p41 = por %p39, %p40
    %p43 = scmp.ne.s32.totalorder %s26, %s42
    %p44 = scmp.eq.s32.totalorder %s18, 0
    %p45 = por %p43, %p44
    %s46 = ssub.s32 %s12, %s19
    %p47 = scmp.eq.s32.totalorder %s46, 0
    %s49 = sadd.s32 %s48, 1
    %s50 = scalar_select %p47, %s48, %s49
    %p53 = pneg %p47
    %p54 = scmp.eq.s32.totalorder %s12, 1
    %p55 = por %p53, %p54
    %p56 = scmp.ne.s32.totalorder %s48, %s51
    %p57 = scmp.eq.s32.totalorder %s12, 0
    %p58 = por %p56, %p57
    %p59 = scmp.ne.s32.totalorder %s48, %s51
    %p60 = scmp.eq.s32.totalorder %s17, 1
    %p61 = por %p59, %p60
    %p62 = scmp.ne.s32.totalorder %s51, %s52
    %p63 = scmp.eq.s32.totalorder %s17, 0
    %p64 = por %p62, %p63
    %p65 = scmp.ne.s32.totalorder %s51, %s52
    %p66 = scmp.eq.s32.totalorder %s18, 1
    %p67 = por %p65, %p66
    %p69 = scmp.ne.s32.totalorder %s52, %s68
    %p70 = scmp.eq.s32.totalorder %s18, 0
    %p71 = por %p69, %p70
    %s73 = sadd.s32 %s72, 1
    %p76 = scmp.eq.s32.totalorder %s12, 1
    %p77 = scmp.ne.s32.totalorder %s72, %s74
    %p78 = scmp.eq.s32.totalorder %s12, 0
    %p79 = por %p77, %p78
    %p80 = scmp.ne.s32.totalorder %s72, %s74
    %p81 = scmp.eq.s32.totalorder %s17, 1
    %p82 = por %p80, %p81
    %p83 = scmp.ne.s32.totalorder %s74, %s75
    %p84 = scmp.eq.s32.totalorder %s17, 0
    %p85 = por %p83, %p84
    %p86 = scmp.ne.s32.totalorder %s74, %s75
    %p87 = scmp.eq.s32.totalorder %s18, 1
    %p88 = por %p86, %p87
    %p90 = scmp.ne.s32.totalorder %s75, %s89
    %p91 = scmp.eq.s32.totalorder %s18, 0
    %p92 = por %p90, %p91
    %s94 = sadd.s32 %s93, 1
    %p97 = scmp.eq.s32.totalorder %s12, 1
    %p98 = scmp.ne.s32.totalorder %s93, %s95
    %p99 = scmp.eq.s32.totalorder %s12, 0
    %p100 = por %p98, %p99
    %p101 = scmp.ne.s32.totalorder %s93, %s95
    %p102 = scmp.eq.s32.totalorder %s17, 1
    %p103 = por %p101, %p102
    %p104 = scmp.ne.s32.totalorder %s95, %s96
    %p105 = scmp.eq.s32.totalorder %s17, 0
    %p106 = por %p104, %p105
    %p107 = scmp.ne.s32.totalorder %s95, %s96
    %p108 = scmp.eq.s32.totalorder %s18, 1
    %p109 = por %p107, %p108
    %p111 = scmp.ne.s32.totalorder %s96, %s110
    %p112 = scmp.eq.s32.totalorder %s18, 0
    %p113 = por %p111, %p112
    %s115 = sadd.s32 %s114, 1
    %p118 = scmp.eq.s32.totalorder %s12, 1
    %p119 = scmp.ne.s32.totalorder %s114, %s116
    %p120 = scmp.eq.s32.totalorder %s12, 0
    %p121 = por %p119, %p120
    %p122 = scmp.ne.s32.totalorder %s114, %s116
    %p123 = scmp.eq.s32.totalorder %s17, 1
    %p124 = por %p122, %p123
    %p125 = scmp.ne.s32.totalorder %s116, %s117
    %p126 = scmp.eq.s32.totalorder %s17, 0
    %p127 = por %p125, %p126
    %p128 = scmp.ne.s32.totalorder %s116, %s117
    %p129 = scmp.eq.s32.totalorder %s18, 1
    %p130 = por %p128, %p129
    %p132 = scmp.ne.s32.totalorder %s117, %s131
    %p133 = scmp.eq.s32.totalorder %s18, 0
    %p134 = por %p132, %p133
    %s136 = sadd.s32 %s135, 1
    %p139 = scmp.eq.s32.totalorder %s12, 1
    %p140 = scmp.ne.s32.totalorder %s135, %s137
    %p141 = scmp.eq.s32.totalorder %s12, 0
    %p142 = por %p140, %p141
    %p143 = scmp.ne.s32.totalorder %s135, %s137
    %p144 = scmp.eq.s32.totalorder %s17, 1
    %p145 = por %p143, %p144
    %p146 = scmp.ne.s32.totalorder %s137, %s138
    %p147 = scmp.eq.s32.totalorder %s17, 0
    %p148 = por %p146, %p147
    %p149 = scmp.ne.s32.totalorder %s137, %s138
    %p150 = scmp.eq.s32.totalorder %s18, 1
    %p151 = por %p149, %p150
    %p153 = scmp.ne.s32.totalorder %s138, %s152
    %p154 = scmp.eq.s32.totalorder %s18, 0
    %p155 = por %p153, %p154
    %s156 = ssub.s32 %s12, %s19
    %p157 = scmp.eq.s32.totalorder %s156, 0
    %s159 = sadd.s32 %s158, 1
    %s160 = scalar_select %p157, %s158, %s159
    %p163 = pneg %p157
    %p164 = scmp.eq.s32.totalorder %s12, 1
    %p165 = por %p163, %p164
    %p166 = scmp.ne.s32.totalorder %s158, %s161
    %p167 = scmp.eq.s32.totalorder %s12, 0
    %p168 = por %p166, %p167
    %p169 = scmp.ne.s32.totalorder %s158, %s161
    %p170 = scmp.eq.s32.totalorder %s17, 1
    %p171 = por %p169, %p170
    %p172 = scmp.ne.s32.totalorder %s161, %s162
    %p173 = scmp.eq.s32.totalorder %s17, 0
    %p174 = por %p172, %p173
    %p175 = scmp.ne.s32.totalorder %s161, %s162
    %p176 = scmp.eq.s32.totalorder %s18, 1
    %p177 = por %p175, %p176
    %p179 = scmp.ne.s32.totalorder %s162, %s178
    %p180 = scmp.eq.s32.totalorder %s18, 0
    %p181 = por %p179, %p180
    %p182 = scmp.le.s32.totalorder 1, %s12
    %p183 = scmp.lt.s32.totalorder %s12, 3
    %p184 = pnand %p182, %p183
    %p185 = pneg %p184
    // Predicated region
    $region9: #{residual_forward.5} parent=5 // pred_check
      _
    $region10: #{residual_forward.5} parent=5 // pred_check_branch
      %187 = sbr.rel (%p184) target = $region12
    $region11: #{residual_forward.5} parent=5 // pred_region
      %s188 = ssub.s32 %s12, 1
      // Predicated region
      $region13: #{residual_forward.5} parent=11 // pred_check
        %p189 = pneg %p85
      $region14: #{residual_forward.5} parent=11 // pred_check_branch
        %191 = sbr.rel (%p189) target = $region16
      $region15: #{residual_forward.5} parent=11 // pred_region
        _
      $region16: #{residual_forward.5} parent=11 // pred_fallthru
        _
      // Predicated region
      $region17: #{residual_forward.5} parent=11 // pred_check
        %p192 = pneg %p106
      $region18: #{residual_forward.5} parent=11 // pred_check_branch
        %194 = sbr.rel (%p192) target = $region20
      $region19: #{residual_forward.5} parent=11 // pred_region
        _
      $region20: #{residual_forward.5} parent=11 // pred_fallthru
        _
      // Predicated region
      $region21: #{residual_forward.5} parent=11 // pred_check
        %p195 = pneg %p127
      $region22: #{residual_forward.5} parent=11 // pred_check_branch
        %197 = sbr.rel (%p195) target = $region24
      $region23: #{residual_forward.5} parent=11 // pred_region
        _
      $region24: #{residual_forward.5} parent=11 // pred_fallthru
        _
      // Predicated region
      $region25: #{residual_forward.5} parent=11 // pred_check
        %p198 = pneg %p148
      $region26: #{residual_forward.5} parent=11 // pred_check_branch
        %200 = sbr.rel (%p198) target = $region28
      $region27: #{residual_forward.5} parent=11 // pred_region
        _
      $region28: #{residual_forward.5} parent=11 // pred_fallthru
        _
    $region12: #{residual_forward.5} parent=5 // pred_fallthru
      _
    %p201 = scmp.lt.s32.totalorder %s12, 2
    // Predicated region
    $region29: #{residual_forward.5} parent=5 // pred_check
      %p202 = pneg %p201
    $region30: #{residual_forward.5} parent=5 // pred_check_branch
      %204 = sbr.rel (%p202) target = $region32
    $region31: #{residual_forward.5} parent=5 // pred_region
      // Predicated region
      $region33: #{residual_forward.5} parent=31 // pred_check
        %p205 = pneg %p32
      $region34: #{residual_forward.5} parent=31 // pred_check_branch
        %207 = sbr.rel (%p205) target = $region36
      $region35: #{residual_forward.5} parent=31 // pred_region
        %p208 = scmp.lt.s32.totalorder %s12, 1
        %s209 = scalar_select %p208, %s12, 1
        %s210 = smul.addr %s209, 60
        %s211 = smul.addr %s210, 4
        %s212 = scalar_lea.vmem %s0, %s211
      $region36: #{residual_forward.5} parent=31 // pred_fallthru
        _
      // Predicated region
      $region37: #{residual_forward.5} parent=31 // pred_check
        %p213 = pneg %p58
      $region38: #{residual_forward.5} parent=31 // pred_check_branch
        %215 = sbr.rel (%p213) target = $region40
      $region39: #{residual_forward.5} parent=31 // pred_region
        %p216 = scmp.lt.s32.totalorder %s12, 1
        %s217 = scalar_select %p216, %s12, 1
        %s218 = smul.addr %s217, 60
        %s219 = smul.addr %s218, 4
        %s220 = scalar_lea.vmem %s1, %s219
      $region40: #{residual_forward.5} parent=31 // pred_fallthru
        _
    $region32: #{residual_forward.5} parent=5 // pred_fallthru
      _
    %p221 = scmp.le.s32.totalorder 1, %s12
    %p222 = scmp.lt.s32.totalorder %s12, 3
    %p223 = pnand %p221, %p222
    %p224 = pneg %p223
    // Predicated region
    $region41: #{residual_forward.5} parent=5 // pred_check
      _
    $region42: #{residual_forward.5} parent=5 // pred_check_branch
      %226 = sbr.rel (%p223) target = $region44
    $region43: #{residual_forward.5} parent=5 // pred_region
      %s227 = ssub.s32 %s12, 1
      %p228 = scmp.lt.s32.totalorder %s17, 1
      %s229 = scalar_select %p228, %s17, 1
      %s230 = smul.addr %s229, 60
      %s231 = smul.addr %s230, 4
      %s232 = scalar_lea.vmem %s0, %s231
      %p233 = pneg %p38
      %p234 = pneg %p35
      %p235 = scmp.lt.s32.totalorder %s17, 1
      %s236 = scalar_select %p235, %s17, 1
      %s237 = smul.addr %s236, 60
      %s238 = smul.addr %s237, 4
      %s239 = scalar_lea.vmem %s1, %s238
      %p240 = pneg %p64
      %p241 = pneg %p61
      %p242 = pneg %p85
      %p243 = pneg %p82
      %p244 = pneg %p106
      %p245 = pneg %p103
      %p246 = pneg %p127
      %p247 = pneg %p124
      %p248 = pneg %p148
      %p249 = pneg %p145
      %p250 = pneg %p174
      %p251 = pneg %p171
      %p252 = scmp.lt.s32.totalorder %s17, 1
      %s253 = scalar_select %p252, %s17, 1
      %s254 = smul.addr %s253, 60
      %s255 = smul.addr %s254, 8
      %s256 = scalar_lea.vmem %s6, %s255
      %p257 = scmp.lt.s32.totalorder %s17, 1
      %s258 = scalar_select %p257, %s17, 1
      %s259 = smul.addr %s258, 60
      %s260 = smul.addr %s259, 4
      %s261 = scalar_lea.vmem %s0, %s260
      %p262 = scmp.lt.s32.totalorder %s17, 1
      %s263 = scalar_select %p262, %s17, 1
      %s264 = smul.addr %s263, 60
      %s265 = smul.addr %s264, 4
      %s266 = scalar_lea.vmem %s1, %s265
      %p267 = scmp.lt.s32.totalorder %s17, 1
      %s268 = scalar_select %p267, %s17, 1
      %s269 = smul.addr %s268, 60
      %s270 = smul.addr %s269, 8
      %s271 = scalar_lea.vmem %s6, %s270
      %v272 = vld [vmem:[%s266] sm:$0xf]
      %v273 = vld [vmem:[%s266 + $0x4] sm:$0xf]
      %v274 = vld [vmem:[%s266 + $0x8] sm:$0xf]
      %v275 = vld [vmem:[%s266 + $0xc] sm:$0xf]
      %v276 = vld [vmem:[%s266 + $0x10] sm:$0xf]
      %v277 = vld [vmem:[%s266 + $0x14] sm:$0xf]
      %v278 = vld [vmem:[%s266 + $0x18] sm:$0xf]
      %v279 = vld [vmem:[%s266 + $0x1c] sm:$0xf]
      %v280 = vld [vmem:[%s266 + $0x20] sm:$0xf]
      %v281 = vld [vmem:[%s266 + $0x24] sm:$0xf]
      %v282 = vld [vmem:[%s266 + $0x28] sm:$0xf]
      %v283 = vld [vmem:[%s266 + $0x2c] sm:$0xf]
      %v284 = vld [vmem:[%s266 + $0x30] sm:$0xf]
      %v285 = vld [vmem:[%s266 + $0x34] sm:$0xf]
      %v286 = vld [vmem:[%s266 + $0x38] sm:$0xf]
      %v287 = vld [vmem:[%s266 + $0x3c] sm:$0xf]
      %v288 = vld [vmem:[%s266 + $0x40] sm:$0xf]
      %v289 = vld [vmem:[%s266 + $0x44] sm:$0xf]
      %v290 = vld [vmem:[%s266 + $0x48] sm:$0xf]
      %v291 = vld [vmem:[%s266 + $0x4c] sm:$0xf]
      %v292 = vld [vmem:[%s266 + $0x50] sm:$0xf]
      %v293 = vld [vmem:[%s266 + $0x54] sm:$0xf]
      %v294 = vld [vmem:[%s266 + $0x58] sm:$0xf]
      %v295 = vld [vmem:[%s266 + $0x5c] sm:$0xf]
      %v296 = vld [vmem:[%s266 + $0x60] sm:$0xf]
      %v297 = vld [vmem:[%s266 + $0x64] sm:$0xf]
      %v298 = vld [vmem:[%s266 + $0x68] sm:$0xf]
      %v299 = vld [vmem:[%s266 + $0x6c] sm:$0xf]
      %v300 = vld [vmem:[%s266 + $0x70] sm:$0xf]
      %v301 = vld [vmem:[%s266 + $0x74] sm:$0xf]
      %v302 = vld [vmem:[%s266 + $0x78] sm:$0xf]
      %v303 = vld [vmem:[%s266 + $0x7c] sm:$0xf]
      %v304 = vld [vmem:[%s266 + $0x80] sm:$0xf]
      %v305 = vld [vmem:[%s266 + $0x84] sm:$0xf]
      %v306 = vld [vmem:[%s266 + $0x88] sm:$0xf]
      %v307 = vld [vmem:[%s266 + $0x8c] sm:$0xf]
      %v308 = vld [vmem:[%s266 + $0x90] sm:$0xf]
      %v309 = vld [vmem:[%s266 + $0x94] sm:$0xf]
      %v310 = vld [vmem:[%s266 + $0x98] sm:$0xf]
      %v311 = vld [vmem:[%s266 + $0x9c] sm:$0xf]
      %v312 = vld [vmem:[%s266 + $0xa0] sm:$0xf]
      %v313 = vld [vmem:[%s266 + $0xa4] sm:$0xf]
      %v314 = vld [vmem:[%s266 + $0xa8] sm:$0xf]
      %v315 = vld [vmem:[%s266 + $0xac] sm:$0xf]
      %v316 = vld [vmem:[%s266 + $0xb0] sm:$0xf]
      %v317 = vld [vmem:[%s266 + $0xb4] sm:$0xf]
      %v318 = vld [vmem:[%s266 + $0xb8] sm:$0xf]
      %v319 = vld [vmem:[%s266 + $0xbc] sm:$0xf]
      %v320 = vld [vmem:[%s266 + $0xc0] sm:$0xf]
      %v321 = vld [vmem:[%s266 + $0xc4] sm:$0xf]
      %v322 = vld [vmem:[%s266 + $0xc8] sm:$0xf]
      %v323 = vld [vmem:[%s266 + $0xcc] sm:$0xf]
      %v324 = vld [vmem:[%s266 + $0xd0] sm:$0xf]
      %v325 = vld [vmem:[%s266 + $0xd4] sm:$0xf]
      %v326 = vld [vmem:[%s266 + $0xd8] sm:$0xf]
      %v327 = vld [vmem:[%s266 + $0xdc] sm:$0xf]
      %v328 = vld [vmem:[%s266 + $0xe0] sm:$0xf]
      %v329 = vld [vmem:[%s266 + $0xe4] sm:$0xf]
      %v330 = vld [vmem:[%s266 + $0xe8] sm:$0xf]
      %v331 = vld [vmem:[%s266 + $0xec] sm:$0xf]
      %v332 = vld [vmem:[%s2] sm:$0xf]
      %v333 = vld [vmem:[%s2 + $0x4] sm:$0xf]
      %v334 = vld [vmem:[%s2 + $0x8] sm:$0xf]
      %v335 = vld [vmem:[%s2 + $0xc] sm:$0xf]
      %v336 = vld [vmem:[%s2 + $0x10] sm:$0xf]
      %v337 = vld [vmem:[%s2 + $0x14] sm:$0xf]
      %v338 = vld [vmem:[%s2 + $0x18] sm:$0xf]
      %v339 = vld [vmem:[%s2 + $0x1c] sm:$0xf]
      %v340 = vld [vmem:[%s2 + $0x20] sm:$0xf]
      %v341 = vld [vmem:[%s2 + $0x24] sm:$0xf]
      %v342 = vld [vmem:[%s2 + $0x28] sm:$0xf]
      %v343 = vld [vmem:[%s2 + $0x2c] sm:$0xf]
      %v344 = vld [vmem:[%s2 + $0x30] sm:$0xf]
      %v345 = vld [vmem:[%s2 + $0x34] sm:$0xf]
      %v346 = vld [vmem:[%s2 + $0x38] sm:$0xf]
      %v347 = vld [vmem:[%s2 + $0x3c] sm:$0xf]
      %v348 = vld [vmem:[%s3] sm:$0x1]
      %v350 = vperm.slane %v348, 0
      %v412 = vunpack.c.l.b16 %v272
      %v413 = vunpack.c.l.b16 %v273
      %v414 = vunpack.c.l.b16 %v274
      %v415 = vunpack.c.l.b16 %v275
      %v416 = vunpack.c.l.b16 %v276
      %v417 = vunpack.c.l.b16 %v277
      %v418 = vunpack.c.l.b16 %v278
      %v419 = vunpack.c.l.b16 %v279
      %v420 = vunpack.c.l.b16 %v280
      %v421 = vunpack.c.l.b16 %v281
      %v422 = vunpack.c.l.b16 %v282
      %v423 = vunpack.c.l.b16 %v283
      %v424 = vunpack.c.l.b16 %v284
      %v425 = vunpack.c.l.b16 %v285
      %v426 = vunpack.c.l.b16 %v286
      %v427 = vunpack.c.l.b16 %v287
      %v428 = vunpack.c.l.b16 %v288
      %v429 = vunpack.c.l.b16 %v289
      %v430 = vunpack.c.l.b16 %v290
      %v431 = vunpack.c.l.b16 %v291
      %v432 = vunpack.c.l.b16 %v292
      %v433 = vunpack.c.l.b16 %v293
      %v434 = vunpack.c.l.b16 %v294
      %v435 = vunpack.c.l.b16 %v295
      %v436 = vunpack.c.l.b16 %v296
      %v437 = vunpack.c.l.b16 %v297
      %v438 = vunpack.c.l.b16 %v298
      %v439 = vunpack.c.l.b16 %v299
      %v440 = vunpack.c.l.b16 %v300
      %v441 = vunpack.c.l.b16 %v301
      %v442 = vunpack.c.l.b16 %v302
      %v443 = vunpack.c.l.b16 %v303
      %v444 = vunpack.c.l.b16 %v304
      %v445 = vunpack.c.l.b16 %v305
      %v446 = vunpack.c.l.b16 %v306
      %v447 = vunpack.c.l.b16 %v307
      %v448 = vunpack.c.l.b16 %v308
      %v449 = vunpack.c.l.b16 %v309
      %v450 = vunpack.c.l.b16 %v310
      %v451 = vunpack.c.l.b16 %v311
      %v452 = vunpack.c.l.b16 %v312
      %v453 = vunpack.c.l.b16 %v313
      %v454 = vunpack.c.l.b16 %v314
      %v455 = vunpack.c.l.b16 %v315
      %v456 = vunpack.c.l.b16 %v316
      %v457 = vunpack.c.l.b16 %v317
      %v458 = vunpack.c.l.b16 %v318
      %v459 = vunpack.c.l.b16 %v319
      %v460 = vunpack.c.l.b16 %v320
      %v461 = vunpack.c.l.b16 %v321
      %v462 = vunpack.c.l.b16 %v322
      %v463 = vunpack.c.l.b16 %v323
      %v464 = vunpack.c.l.b16 %v324
      %v465 = vunpack.c.l.b16 %v325
      %v466 = vunpack.c.l.b16 %v326
      %v467 = vunpack.c.l.b16 %v327
      %v468 = vunpack.c.l.b16 %v328
      %v469 = vunpack.c.l.b16 %v329
      %v470 = vunpack.c.l.b16 %v330
      %v471 = vunpack.c.l.b16 %v331
      %v472 = vpack.c.b16 %v413, %v412
      %v473 = vpack.c.b16 %v415, %v414
      %v474 = vpack.c.b16 %v417, %v416
      %v475 = vpack.c.b16 %v419, %v418
      %v476 = vpack.c.b16 %v421, %v420
      %v477 = vpack.c.b16 %v423, %v422
      %v478 = vpack.c.b16 %v425, %v424
      %v479 = vpack.c.b16 %v427, %v426
      %v480 = vpack.c.b16 %v429, %v428
      %v481 = vpack.c.b16 %v431, %v430
      %v482 = vpack.c.b16 %v433, %v432
      %v483 = vpack.c.b16 %v435, %v434
      %v484 = vpack.c.b16 %v437, %v436
      %v485 = vpack.c.b16 %v439, %v438
      %v486 = vpack.c.b16 %v441, %v440
      %v487 = vpack.c.b16 %v443, %v442
      %v488 = vpack.c.b16 %v445, %v444
      %v489 = vpack.c.b16 %v447, %v446
      %v490 = vpack.c.b16 %v449, %v448
      %v491 = vpack.c.b16 %v451, %v450
      %v492 = vpack.c.b16 %v453, %v452
      %v493 = vpack.c.b16 %v455, %v454
      %v494 = vpack.c.b16 %v457, %v456
      %v495 = vpack.c.b16 %v459, %v458
      %v496 = vpack.c.b16 %v461, %v460
      %v497 = vpack.c.b16 %v463, %v462
      %v498 = vpack.c.b16 %v465, %v464
      %v499 = vpack.c.b16 %v467, %v466
      %v500 = vpack.c.b16 %v469, %v468
      %v501 = vpack.c.b16 %v471, %v470
      %v548 = vunpack.c.l.b16 %v332
      %v549 = vunpack.c.l.b16 %v333
      %v550 = vunpack.c.l.b16 %v334
      %v551 = vunpack.c.l.b16 %v335
      %v552 = vunpack.c.l.b16 %v336
      %v553 = vunpack.c.l.b16 %v337
      %v554 = vunpack.c.l.b16 %v338
      %v555 = vunpack.c.l.b16 %v339
      %v556 = vunpack.c.l.b16 %v340
      %v557 = vunpack.c.l.b16 %v341
      %v558 = vunpack.c.l.b16 %v342
      %v559 = vunpack.c.l.b16 %v343
      %v560 = vunpack.c.l.b16 %v344
      %v561 = vunpack.c.l.b16 %v345
      %v562 = vunpack.c.l.b16 %v346
      %v563 = vunpack.c.l.b16 %v347
      %v564 = vpack.c.b16 %v549, %v548
      %v565 = vpack.c.b16 %v551, %v550
      %v566 = vpack.c.b16 %v553, %v552
      %v567 = vpack.c.b16 %v555, %v554
      %v568 = vpack.c.b16 %v557, %v556
      %v569 = vpack.c.b16 %v559, %v558
      %v570 = vpack.c.b16 %v561, %v560
      %v571 = vpack.c.b16 %v563, %v562
      %580 = vmatpush.bf16.msra.mxu0 %v571
      %581 = vmatpush.bf16.msra.mxu0 %v570
      %582 = vmatpush.bf16.msra.mxu0 %v569
      %583 = vmatpush.bf16.msra.mxu0 %v568
      %584 = vmatpush.bf16.msra.mxu0 %v567
      %585 = vmatpush.bf16.msra.mxu0 %v566
      %586 = vmatpush.bf16.msra.mxu0 %v565
      %587 = vmatpush.bf16.msra.mxu0 %v564
      %588 = vmatmul.bf16.gmra.mxu0 %v472
      %v589 = vpop.f32.mrf.mxu0
      %v590 = vadd.f32 %v350, %v589
      %v591 = vpop.f32.mrf.mxu0
      %v592 = vadd.f32 %v350, %v591
      %593 = vmatmul.bf16.gmra.mxu0 %v473
      %v594 = vpop.f32.mrf.mxu0
      %v595 = vadd.f32 %v350, %v594
      %v596 = vpop.f32.mrf.mxu0
      %v597 = vadd.f32 %v350, %v596
      %598 = vmatmul.bf16.gmra.mxu0 %v474
      %v599 = vpop.f32.mrf.mxu0
      %v600 = vadd.f32 %v350, %v599
      %v601 = vpop.f32.mrf.mxu0
      %v602 = vadd.f32 %v350, %v601
      %603 = vmatmul.bf16.gmra.mxu0 %v475
      %v604 = vpop.f32.mrf.mxu0
      %v605 = vadd.f32 %v350, %v604
      %v606 = vpop.f32.mrf.mxu0
      %v607 = vadd.f32 %v350, %v606
      %608 = vmatmul.bf16.gmra.mxu0 %v476
      %v609 = vpop.f32.mrf.mxu0
      %v610 = vadd.f32 %v350, %v609
      %v611 = vpop.f32.mrf.mxu0
      %v612 = vadd.f32 %v350, %v611
      %613 = vmatmul.bf16.gmra.mxu0 %v477
      %v614 = vpop.f32.mrf.mxu0
      %v615 = vadd.f32 %v350, %v614
      %v616 = vpop.f32.mrf.mxu0
      %v617 = vadd.f32 %v350, %v616
      %618 = vmatmul.bf16.gmra.mxu0 %v478
      %v619 = vpop.f32.mrf.mxu0
      %v620 = vadd.f32 %v350, %v619
      %v621 = vpop.f32.mrf.mxu0
      %v622 = vadd.f32 %v350, %v621
      %623 = vmatmul.bf16.gmra.mxu0 %v479
      %v624 = vpop.f32.mrf.mxu0
      %v625 = vadd.f32 %v350, %v624
      %v626 = vpop.f32.mrf.mxu0
      %v627 = vadd.f32 %v350, %v626
      %628 = vmatmul.bf16.gmra.mxu0 %v480
      %v629 = vpop.f32.mrf.mxu0
      %v630 = vadd.f32 %v350, %v629
      %v631 = vpop.f32.mrf.mxu0
      %v632 = vadd.f32 %v350, %v631
      %633 = vmatmul.bf16.gmra.mxu0 %v481
      %v634 = vpop.f32.mrf.mxu0
      %v635 = vadd.f32 %v350, %v634
      %v636 = vpop.f32.mrf.mxu0
      %v637 = vadd.f32 %v350, %v636
      %638 = vmatmul.bf16.gmra.mxu0 %v482
      %v639 = vpop.f32.mrf.mxu0
      %v640 = vadd.f32 %v350, %v639
      %v641 = vpop.f32.mrf.mxu0
      %v642 = vadd.f32 %v350, %v641
      %643 = vmatmul.bf16.gmra.mxu0 %v483
      %v644 = vpop.f32.mrf.mxu0
      %v645 = vadd.f32 %v350, %v644
      %v646 = vpop.f32.mrf.mxu0
      %v647 = vadd.f32 %v350, %v646
      %648 = vmatmul.bf16.gmra.mxu0 %v484
      %v649 = vpop.f32.mrf.mxu0
      %v650 = vadd.f32 %v350, %v649
      %v651 = vpop.f32.mrf.mxu0
      %v652 = vadd.f32 %v350, %v651
      %653 = vmatmul.bf16.gmra.mxu0 %v485
      %v654 = vpop.f32.mrf.mxu0
      %v655 = vadd.f32 %v350, %v654
      %v656 = vpop.f32.mrf.mxu0
      %v657 = vadd.f32 %v350, %v656
      %658 = vmatmul.bf16.gmra.mxu0 %v486
      %v659 = vpop.f32.mrf.mxu0
      %v660 = vadd.f32 %v350, %v659
      %v661 = vpop.f32.mrf.mxu0
      %v662 = vadd.f32 %v350, %v661
      %663 = vmatmul.bf16.gmra.mxu0 %v487
      %v664 = vpop.f32.mrf.mxu0
      %v665 = vadd.f32 %v350, %v664
      %v666 = vpop.f32.mrf.mxu0
      %v667 = vadd.f32 %v350, %v666
      %668 = vmatmul.bf16.gmra.mxu0 %v488
      %v669 = vpop.f32.mrf.mxu0
      %v670 = vadd.f32 %v350, %v669
      %v671 = vpop.f32.mrf.mxu0
      %v672 = vadd.f32 %v350, %v671
      %673 = vmatmul.bf16.gmra.mxu0 %v489
      %v674 = vpop.f32.mrf.mxu0
      %v675 = vadd.f32 %v350, %v674
      %v676 = vpop.f32.mrf.mxu0
      %v677 = vadd.f32 %v350, %v676
      %678 = vmatmul.bf16.gmra.mxu0 %v490
      %v679 = vpop.f32.mrf.mxu0
      %v680 = vadd.f32 %v350, %v679
      %v681 = vpop.f32.mrf.mxu0
      %v682 = vadd.f32 %v350, %v681
      %683 = vmatmul.bf16.gmra.mxu0 %v491
      %v684 = vpop.f32.mrf.mxu0
      %v685 = vadd.f32 %v350, %v684
      %v686 = vpop.f32.mrf.mxu0
      %v687 = vadd.f32 %v350, %v686
      %688 = vmatmul.bf16.gmra.mxu0 %v492
      %v689 = vpop.f32.mrf.mxu0
      %v690 = vadd.f32 %v350, %v689
      %v691 = vpop.f32.mrf.mxu0
      %v692 = vadd.f32 %v350, %v691
      %693 = vmatmul.bf16.gmra.mxu0 %v493
      %v694 = vpop.f32.mrf.mxu0
      %v695 = vadd.f32 %v350, %v694
      %v696 = vpop.f32.mrf.mxu0
      %v697 = vadd.f32 %v350, %v696
      %698 = vmatmul.bf16.gmra.mxu0 %v494
      %v699 = vpop.f32.mrf.mxu0
      %v700 = vadd.f32 %v350, %v699
      %v701 = vpop.f32.mrf.mxu0
      %v702 = vadd.f32 %v350, %v701
      %703 = vmatmul.bf16.gmra.mxu0 %v495
      %v704 = vpop.f32.mrf.mxu0
      %v705 = vadd.f32 %v350, %v704
      %v706 = vpop.f32.mrf.mxu0
      %v707 = vadd.f32 %v350, %v706
      %708 = vmatmul.bf16.gmra.mxu0 %v496
      %v709 = vpop.f32.mrf.mxu0
      %v710 = vadd.f32 %v350, %v709
      %v711 = vpop.f32.mrf.mxu0
      %v712 = vadd.f32 %v350, %v711
      %713 = vmatmul.bf16.gmra.mxu0 %v497
      %v714 = vpop.f32.mrf.mxu0
      %v715 = vadd.f32 %v350, %v714
      %v716 = vpop.f32.mrf.mxu0
      %v717 = vadd.f32 %v350, %v716
      %718 = vmatmul.bf16.gmra.mxu0 %v498
      %v719 = vpop.f32.mrf.mxu0
      %v720 = vadd.f32 %v350, %v719
      %v721 = vpop.f32.mrf.mxu0
      %v722 = vadd.f32 %v350, %v721
      %723 = vmatmul.bf16.gmra.mxu0 %v499
      %v724 = vpop.f32.mrf.mxu0
      %v725 = vadd.f32 %v350, %v724
      %v726 = vpop.f32.mrf.mxu0
      %v727 = vadd.f32 %v350, %v726
      %728 = vmatmul.bf16.gmra.mxu0 %v500
      %v729 = vpop.f32.mrf.mxu0
      %v730 = vadd.f32 %v350, %v729
      %v731 = vpop.f32.mrf.mxu0
      %v732 = vadd.f32 %v350, %v731
      %733 = vmatmul.bf16.gmra.mxu0 %v501
      %v734 = vpop.f32.mrf.mxu0
      %v735 = vadd.f32 %v350, %v734
      %v736 = vpop.f32.mrf.mxu0
      %v737 = vadd.f32 %v350, %v736
      %738 = vdwg.mxu0
      %v739 = vld [vmem:[%s261] sm:$0xf]
      %v740 = vld [vmem:[%s261 + $0x4] sm:$0xf]
      %v741 = vld [vmem:[%s261 + $0x8] sm:$0xf]
      %v742 = vld [vmem:[%s261 + $0xc] sm:$0xf]
      %v743 = vld [vmem:[%s261 + $0x10] sm:$0xf]
      %v744 = vld [vmem:[%s261 + $0x14] sm:$0xf]
      %v745 = vld [vmem:[%s261 + $0x18] sm:$0xf]
      %v746 = vld [vmem:[%s261 + $0x1c] sm:$0xf]
      %v747 = vld [vmem:[%s261 + $0x20] sm:$0xf]
      %v748 = vld [vmem:[%s261 + $0x24] sm:$0xf]
      %v749 = vld [vmem:[%s261 + $0x28] sm:$0xf]
      %v750 = vld [vmem:[%s261 + $0x2c] sm:$0xf]
      %v751 = vld [vmem:[%s261 + $0x30] sm:$0xf]
      %v752 = vld [vmem:[%s261 + $0x34] sm:$0xf]
      %v753 = vld [vmem:[%s261 + $0x38] sm:$0xf]
      %v754 = vld [vmem:[%s261 + $0x3c] sm:$0xf]
      %v755 = vld [vmem:[%s261 + $0x40] sm:$0xf]
      %v756 = vld [vmem:[%s261 + $0x44] sm:$0xf]
      %v757 = vld [vmem:[%s261 + $0x48] sm:$0xf]
      %v758 = vld [vmem:[%s261 + $0x4c] sm:$0xf]
      %v759 = vld [vmem:[%s261 + $0x50] sm:$0xf]
      %v760 = vld [vmem:[%s261 + $0x54] sm:$0xf]
      %v761 = vld [vmem:[%s261 + $0x58] sm:$0xf]
      %v762 = vld [vmem:[%s261 + $0x5c] sm:$0xf]
      %v763 = vld [vmem:[%s261 + $0x60] sm:$0xf]
      %v764 = vld [vmem:[%s261 + $0x64] sm:$0xf]
      %v765 = vld [vmem:[%s261 + $0x68] sm:$0xf]
      %v766 = vld [vmem:[%s261 + $0x6c] sm:$0xf]
      %v767 = vld [vmem:[%s261 + $0x70] sm:$0xf]
      %v768 = vld [vmem:[%s261 + $0x74] sm:$0xf]
      %v769 = vld [vmem:[%s261 + $0x78] sm:$0xf]
      %v770 = vld [vmem:[%s261 + $0x7c] sm:$0xf]
      %v771 = vld [vmem:[%s261 + $0x80] sm:$0xf]
      %v772 = vld [vmem:[%s261 + $0x84] sm:$0xf]
      %v773 = vld [vmem:[%s261 + $0x88] sm:$0xf]
      %v774 = vld [vmem:[%s261 + $0x8c] sm:$0xf]
      %v775 = vld [vmem:[%s261 + $0x90] sm:$0xf]
      %v776 = vld [vmem:[%s261 + $0x94] sm:$0xf]
      %v777 = vld [vmem:[%s261 + $0x98] sm:$0xf]
      %v778 = vld [vmem:[%s261 + $0x9c] sm:$0xf]
      %v779 = vld [vmem:[%s261 + $0xa0] sm:$0xf]
      %v780 = vld [vmem:[%s261 + $0xa4] sm:$0xf]
      %v781 = vld [vmem:[%s261 + $0xa8] sm:$0xf]
      %v782 = vld [vmem:[%s261 + $0xac] sm:$0xf]
      %v783 = vld [vmem:[%s261 + $0xb0] sm:$0xf]
      %v784 = vld [vmem:[%s261 + $0xb4] sm:$0xf]
      %v785 = vld [vmem:[%s261 + $0xb8] sm:$0xf]
      %v786 = vld [vmem:[%s261 + $0xbc] sm:$0xf]
      %v787 = vld [vmem:[%s261 + $0xc0] sm:$0xf]
      %v788 = vld [vmem:[%s261 + $0xc4] sm:$0xf]
      %v789 = vld [vmem:[%s261 + $0xc8] sm:$0xf]
      %v790 = vld [vmem:[%s261 + $0xcc] sm:$0xf]
      %v791 = vld [vmem:[%s261 + $0xd0] sm:$0xf]
      %v792 = vld [vmem:[%s261 + $0xd4] sm:$0xf]
      %v793 = vld [vmem:[%s261 + $0xd8] sm:$0xf]
      %v794 = vld [vmem:[%s261 + $0xdc] sm:$0xf]
      %v795 = vld [vmem:[%s261 + $0xe0] sm:$0xf]
      %v796 = vld [vmem:[%s261 + $0xe4] sm:$0xf]
      %v797 = vld [vmem:[%s261 + $0xe8] sm:$0xf]
      %v798 = vld [vmem:[%s261 + $0xec] sm:$0xf]
      %v799 = vunpack.c.l.bf16 %v739
      %v800 = vunpack.c.l.bf16 %v740
      %v801 = vunpack.c.l.bf16 %v741
      %v802 = vunpack.c.l.bf16 %v742
      %v803 = vunpack.c.l.bf16 %v743
      %v804 = vunpack.c.l.bf16 %v744
      %v805 = vunpack.c.l.bf16 %v745
      %v806 = vunpack.c.l.bf16 %v746
      %v807 = vunpack.c.l.bf16 %v747
      %v808 = vunpack.c.l.bf16 %v748
      %v809 = vunpack.c.l.bf16 %v749
      %v810 = vunpack.c.l.bf16 %v750
      %v811 = vunpack.c.l.bf16 %v751
      %v812 = vunpack.c.l.bf16 %v752
      %v813 = vunpack.c.l.bf16 %v753
      %v814 = vunpack.c.l.bf16 %v754
      %v815 = vunpack.c.l.bf16 %v755
      %v816 = vunpack.c.l.bf16 %v756
      %v817 = vunpack.c.l.bf16 %v757
      %v818 = vunpack.c.l.bf16 %v758
      %v819 = vunpack.c.l.bf16 %v759
      %v820 = vunpack.c.l.bf16 %v760
      %v821 = vunpack.c.l.bf16 %v761
      %v822 = vunpack.c.l.bf16 %v762
      %v823 = vunpack.c.l.bf16 %v763
      %v824 = vunpack.c.l.bf16 %v764
      %v825 = vunpack.c.l.bf16 %v765
      %v826 = vunpack.c.l.bf16 %v766
      %v827 = vunpack.c.l.bf16 %v767
      %v828 = vunpack.c.l.bf16 %v768
      %v829 = vunpack.c.l.bf16 %v769
      %v830 = vunpack.c.l.bf16 %v770
      %v831 = vunpack.c.l.bf16 %v771
      %v832 = vunpack.c.l.bf16 %v772
      %v833 = vunpack.c.l.bf16 %v773
      %v834 = vunpack.c.l.bf16 %v774
      %v835 = vunpack.c.l.bf16 %v775
      %v836 = vunpack.c.l.bf16 %v776
      %v837 = vunpack.c.l.bf16 %v777
      %v838 = vunpack.c.l.bf16 %v778
      %v839 = vunpack.c.l.bf16 %v779
      %v840 = vunpack.c.l.bf16 %v780
      %v841 = vunpack.c.l.bf16 %v781
      %v842 = vunpack.c.l.bf16 %v782
      %v843 = vunpack.c.l.bf16 %v783
      %v844 = vunpack.c.l.bf16 %v784
      %v845 = vunpack.c.l.bf16 %v785
      %v846 = vunpack.c.l.bf16 %v786
      %v847 = vunpack.c.l.bf16 %v787
      %v848 = vunpack.c.l.bf16 %v788
      %v849 = vunpack.c.l.bf16 %v789
      %v850 = vunpack.c.l.bf16 %v790
      %v851 = vunpack.c.l.bf16 %v791
      %v852 = vunpack.c.l.bf16 %v792
      %v853 = vunpack.c.l.bf16 %v793
      %v854 = vunpack.c.l.bf16 %v794
      %v855 = vunpack.c.l.bf16 %v795
      %v856 = vunpack.c.l.bf16 %v796
      %v857 = vunpack.c.l.bf16 %v797
      %v858 = vunpack.c.l.bf16 %v798
      %v859 = vld [vmem:[%s4] sm:$0x1]
      %v861 = vperm.slane %v859, 0
      %v863 = vmul.f32 %v799, %v861
      %v864 = vmul.f32 %v800, %v861
      %v865 = vmul.f32 %v801, %v861
      %v866 = vmul.f32 %v802, %v861
      %v867 = vmul.f32 %v803, %v861
      %v868 = vmul.f32 %v804, %v861
      %v869 = vmul.f32 %v805, %v861
      %v870 = vmul.f32 %v806, %v861
      %v871 = vmul.f32 %v807, %v861
      %v872 = vmul.f32 %v808, %v861
      %v873 = vmul.f32 %v809, %v861
      %v874 = vmul.f32 %v810, %v861
      %v875 = vmul.f32 %v811, %v861
      %v876 = vmul.f32 %v812, %v861
      %v877 = vmul.f32 %v813, %v861
      %v878 = vmul.f32 %v814, %v861
      %v879 = vmul.f32 %v815, %v861
      %v880 = vmul.f32 %v816, %v861
      %v881 = vmul.f32 %v817, %v861
      %v882 = vmul.f32 %v818, %v861
      %v883 = vmul.f32 %v819, %v861
      %v884 = vmul.f32 %v820, %v861
      %v885 = vmul.f32 %v821, %v861
      %v886 = vmul.f32 %v822, %v861
      %v887 = vmul.f32 %v823, %v861
      %v888 = vmul.f32 %v824, %v861
      %v889 = vmul.f32 %v825, %v861
      %v890 = vmul.f32 %v826, %v861
      %v891 = vmul.f32 %v827, %v861
      %v892 = vmul.f32 %v828, %v861
      %v893 = vmul.f32 %v829, %v861
      %v894 = vmul.f32 %v830, %v861
      %v895 = vmul.f32 %v831, %v861
      %v896 = vmul.f32 %v832, %v861
      %v897 = vmul.f32 %v833, %v861
      %v898 = vmul.f32 %v834, %v861
      %v899 = vmul.f32 %v835, %v861
      %v900 = vmul.f32 %v836, %v861
      %v901 = vmul.f32 %v837, %v861
      %v902 = vmul.f32 %v838, %v861
      %v903 = vmul.f32 %v839, %v861
      %v904 = vmul.f32 %v840, %v861
      %v905 = vmul.f32 %v841, %v861
      %v906 = vmul.f32 %v842, %v861
      %v907 = vmul.f32 %v843, %v861
      %v908 = vmul.f32 %v844, %v861
      %v909 = vmul.f32 %v845, %v861
      %v910 = vmul.f32 %v846, %v861
      %v911 = vmul.f32 %v847, %v861
      %v912 = vmul.f32 %v848, %v861
      %v913 = vmul.f32 %v849, %v861
      %v914 = vmul.f32 %v850, %v861
      %v915 = vmul.f32 %v851, %v861
      %v916 = vmul.f32 %v852, %v861
      %v917 = vmul.f32 %v853, %v861
      %v918 = vmul.f32 %v854, %v861
      %v919 = vmul.f32 %v855, %v861
      %v920 = vmul.f32 %v856, %v861
      %v921 = vmul.f32 %v857, %v861
      %v922 = vmul.f32 %v858, %v861
      %v923 = vld [vmem:[%s5] sm:$0x1]
      %v925 = vperm.slane %v923, 0
      %v927 = vadd.f32 %v863, %v925
      %v928 = vadd.f32 %v864, %v925
      %v929 = vadd.f32 %v865, %v925
      %v930 = vadd.f32 %v866, %v925
      %v931 = vadd.f32 %v867, %v925
      %v932 = vadd.f32 %v868, %v925
      %v933 = vadd.f32 %v869, %v925
      %v934 = vadd.f32 %v870, %v925
      %v935 = vadd.f32 %v871, %v925
      %v936 = vadd.f32 %v872, %v925
      %v937 = vadd.f32 %v873, %v925
      %v938 = vadd.f32 %v874, %v925
      %v939 = vadd.f32 %v875, %v925
      %v940 = vadd.f32 %v876, %v925
      %v941 = vadd.f32 %v877, %v925
      %v942 = vadd.f32 %v878, %v925
      %v943 = vadd.f32 %v879, %v925
      %v944 = vadd.f32 %v880, %v925
      %v945 = vadd.f32 %v881, %v925
      %v946 = vadd.f32 %v882, %v925
      %v947 = vadd.f32 %v883, %v925
      %v948 = vadd.f32 %v884, %v925
      %v949 = vadd.f32 %v885, %v925
      %v950 = vadd.f32 %v886, %v925
      %v951 = vadd.f32 %v887, %v925
      %v952 = vadd.f32 %v888, %v925
      %v953 = vadd.f32 %v889, %v925
      %v954 = vadd.f32 %v890, %v925
      %v955 = vadd.f32 %v891, %v925
      %v956 = vadd.f32 %v892, %v925
      %v957 = vadd.f32 %v893, %v925
      %v958 = vadd.f32 %v894, %v925
      %v959 = vadd.f32 %v895, %v925
      %v960 = vadd.f32 %v896, %v925
      %v961 = vadd.f32 %v897, %v925
      %v962 = vadd.f32 %v898, %v925
      %v963 = vadd.f32 %v899, %v925
      %v964 = vadd.f32 %v900, %v925
      %v965 = vadd.f32 %v901, %v925
      %v966 = vadd.f32 %v902, %v925
      %v967 = vadd.f32 %v903, %v925
      %v968 = vadd.f32 %v904, %v925
      %v969 = vadd.f32 %v905, %v925
      %v970 = vadd.f32 %v906, %v925
      %v971 = vadd.f32 %v907, %v925
      %v972 = vadd.f32 %v908, %v925
      %v973 = vadd.f32 %v909, %v925
      %v974 = vadd.f32 %v910, %v925
      %v975 = vadd.f32 %v911, %v925
      %v976 = vadd.f32 %v912, %v925
      %v977 = vadd.f32 %v913, %v925
      %v978 = vadd.f32 %v914, %v925
      %v979 = vadd.f32 %v915, %v925
      %v980 = vadd.f32 %v916, %v925
      %v981 = vadd.f32 %v917, %v925
      %v982 = vadd.f32 %v918, %v925
      %v983 = vadd.f32 %v919, %v925
      %v984 = vadd.f32 %v920, %v925
      %v985 = vadd.f32 %v921, %v925
      %v986 = vadd.f32 %v922, %v925
      %v987 = vadd.f32 %v927, %v590
      %v988 = vadd.f32 %v928, %v592
      %v989 = vadd.f32 %v929, %v595
      %v990 = vadd.f32 %v930, %v597
      %v991 = vadd.f32 %v931, %v600
      %v992 = vadd.f32 %v932, %v602
      %v993 = vadd.f32 %v933, %v605
      %v994 = vadd.f32 %v934, %v607
      %v995 = vadd.f32 %v935, %v610
      %v996 = vadd.f32 %v936, %v612
      %v997 = vadd.f32 %v937, %v615
      %v998 = vadd.f32 %v938, %v617
      %v999 = vadd.f32 %v939, %v620
      %v1000 = vadd.f32 %v940, %v622
      %v1001 = vadd.f32 %v941, %v625
      %v1002 = vadd.f32 %v942, %v627
      %v1003 = vadd.f32 %v943, %v630
      %v1004 = vadd.f32 %v944, %v632
      %v1005 = vadd.f32 %v945, %v635
      %v1006 = vadd.f32 %v946, %v637
      %v1007 = vadd.f32 %v947, %v640
      %v1008 = vadd.f32 %v948, %v642
      %v1009 = vadd.f32 %v949, %v645
      %v1010 = vadd.f32 %v950, %v647
      %v1011 = vadd.f32 %v951, %v650
      %v1012 = vadd.f32 %v952, %v652
      %v1013 = vadd.f32 %v953, %v655
      %v1014 = vadd.f32 %v954, %v657
      %v1015 = vadd.f32 %v955, %v660
      %v1016 = vadd.f32 %v956, %v662
      %v1017 = vadd.f32 %v957, %v665
      %v1018 = vadd.f32 %v958, %v667
      %v1019 = vadd.f32 %v959, %v670
      %v1020 = vadd.f32 %v960, %v672
      %v1021 = vadd.f32 %v961, %v675
      %v1022 = vadd.f32 %v962, %v677
      %v1023 = vadd.f32 %v963, %v680
      %v1024 = vadd.f32 %v964, %v682
      %v1025 = vadd.f32 %v965, %v685
      %v1026 = vadd.f32 %v966, %v687
      %v1027 = vadd.f32 %v967, %v690
      %v1028 = vadd.f32 %v968, %v692
      %v1029 = vadd.f32 %v969, %v695
      %v1030 = vadd.f32 %v970, %v697
      %v1031 = vadd.f32 %v971, %v700
      %v1032 = vadd.f32 %v972, %v702
      %v1033 = vadd.f32 %v973, %v705
      %v1034 = vadd.f32 %v974, %v707
      %v1035 = vadd.f32 %v975, %v710
      %v1036 = vadd.f32 %v976, %v712
      %v1037 = vadd.f32 %v977, %v715
      %v1038 = vadd.f32 %v978, %v717
      %v1039 = vadd.f32 %v979, %v720
      %v1040 = vadd.f32 %v980, %v722
      %v1041 = vadd.f32 %v981, %v725
      %v1042 = vadd.f32 %v982, %v727
      %v1043 = vadd.f32 %v983, %v730
      %v1044 = vadd.f32 %v984, %v732
      %v1045 = vadd.f32 %v985, %v735
      %v1046 = vadd.f32 %v986, %v737
      %v1047 = vmax.f32 %v987, 0.0
      %v1048 = vmax.f32 %v988, 0.0
      %v1049 = vmax.f32 %v989, 0.0
      %v1050 = vmax.f32 %v990, 0.0
      %v1051 = vmax.f32 %v991, 0.0
      %v1052 = vmax.f32 %v992, 0.0
      %v1053 = vmax.f32 %v993, 0.0
      %v1054 = vmax.f32 %v994, 0.0
      %v1055 = vmax.f32 %v995, 0.0
      %v1056 = vmax.f32 %v996, 0.0
      %v1057 = vmax.f32 %v997, 0.0
      %v1058 = vmax.f32 %v998, 0.0
      %v1059 = vmax.f32 %v999, 0.0
      %v1060 = vmax.f32 %v1000, 0.0
      %v1061 = vmax.f32 %v1001, 0.0
      %v1062 = vmax.f32 %v1002, 0.0
      %v1063 = vmax.f32 %v1003, 0.0
      %v1064 = vmax.f32 %v1004, 0.0
      %v1065 = vmax.f32 %v1005, 0.0
      %v1066 = vmax.f32 %v1006, 0.0
      %v1067 = vmax.f32 %v1007, 0.0
      %v1068 = vmax.f32 %v1008, 0.0
      %v1069 = vmax.f32 %v1009, 0.0
      %v1070 = vmax.f32 %v1010, 0.0
      %v1071 = vmax.f32 %v1011, 0.0
      %v1072 = vmax.f32 %v1012, 0.0
      %v1073 = vmax.f32 %v1013, 0.0
      %v1074 = vmax.f32 %v1014, 0.0
      %v1075 = vmax.f32 %v1015, 0.0
      %v1076 = vmax.f32 %v1016, 0.0
      %v1077 = vmax.f32 %v1017, 0.0
      %v1078 = vmax.f32 %v1018, 0.0
      %v1079 = vmax.f32 %v1019, 0.0
      %v1080 = vmax.f32 %v1020, 0.0
      %v1081 = vmax.f32 %v1021, 0.0
      %v1082 = vmax.f32 %v1022, 0.0
      %v1083 = vmax.f32 %v1023, 0.0
      %v1084 = vmax.f32 %v1024, 0.0
      %v1085 = vmax.f32 %v1025, 0.0
      %v1086 = vmax.f32 %v1026, 0.0
      %v1087 = vmax.f32 %v1027, 0.0
      %v1088 = vmax.f32 %v1028, 0.0
      %v1089 = vmax.f32 %v1029, 0.0
      %v1090 = vmax.f32 %v1030, 0.0
      %v1091 = vmax.f32 %v1031, 0.0
      %v1092 = vmax.f32 %v1032, 0.0
      %v1093 = vmax.f32 %v1033, 0.0
      %v1094 = vmax.f32 %v1034, 0.0
      %v1095 = vmax.f32 %v1035, 0.0
      %v1096 = vmax.f32 %v1036, 0.0
      %v1097 = vmax.f32 %v1037, 0.0
      %v1098 = vmax.f32 %v1038, 0.0
      %v1099 = vmax.f32 %v1039, 0.0
      %v1100 = vmax.f32 %v1040, 0.0
      %v1101 = vmax.f32 %v1041, 0.0
      %v1102 = vmax.f32 %v1042, 0.0
      %v1103 = vmax.f32 %v1043, 0.0
      %v1104 = vmax.f32 %v1044, 0.0
      %v1105 = vmax.f32 %v1045, 0.0
      %v1106 = vmax.f32 %v1046, 0.0
      %1107 = vst [vmem:[%s271] sm:$0xff] %v1047
      %1108 = vst [vmem:[%s271 + $0x8] sm:$0xff] %v1048
      %1109 = vst [vmem:[%s271 + $0x10] sm:$0xff] %v1049
      %1110 = vst [vmem:[%s271 + $0x18] sm:$0xff] %v1050
      %1111 = vst [vmem:[%s271 + $0x20] sm:$0xff] %v1051
      %1112 = vst [vmem:[%s271 + $0x28] sm:$0xff] %v1052
      %1113 = vst [vmem:[%s271 + $0x30] sm:$0xff] %v1053
      %1114 = vst [vmem:[%s271 + $0x38] sm:$0xff] %v1054
      %1115 = vst [vmem:[%s271 + $0x40] sm:$0xff] %v1055
      %1116 = vst [vmem:[%s271 + $0x48] sm:$0xff] %v1056
      %1117 = vst [vmem:[%s271 + $0x50] sm:$0xff] %v1057
      %1118 = vst [vmem:[%s271 + $0x58] sm:$0xff] %v1058
      %1119 = vst [vmem:[%s271 + $0x60] sm:$0xff] %v1059
      %1120 = vst [vmem:[%s271 + $0x68] sm:$0xff] %v1060
      %1121 = vst [vmem:[%s271 + $0x70] sm:$0xff] %v1061
      %1122 = vst [vmem:[%s271 + $0x78] sm:$0xff] %v1062
      %1123 = vst [vmem:[%s271 + $0x80] sm:$0xff] %v1063
      %1124 = vst [vmem:[%s271 + $0x88] sm:$0xff] %v1064
      %1125 = vst [vmem:[%s271 + $0x90] sm:$0xff] %v1065
      %1126 = vst [vmem:[%s271 + $0x98] sm:$0xff] %v1066
      %1127 = vst [vmem:[%s271 + $0xa0] sm:$0xff] %v1067
      %1128 = vst [vmem:[%s271 + $0xa8] sm:$0xff] %v1068
      %1129 = vst [vmem:[%s271 + $0xb0] sm:$0xff] %v1069
      %1130 = vst [vmem:[%s271 + $0xb8] sm:$0xff] %v1070
      %1131 = vst [vmem:[%s271 + $0xc0] sm:$0xff] %v1071
      %1132 = vst [vmem:[%s271 + $0xc8] sm:$0xff] %v1072
      %1133 = vst [vmem:[%s271 + $0xd0] sm:$0xff] %v1073
      %1134 = vst [vmem:[%s271 + $0xd8] sm:$0xff] %v1074
      %1135 = vst [vmem:[%s271 + $0xe0] sm:$0xff] %v1075
      %1136 = vst [vmem:[%s271 + $0xe8] sm:$0xff] %v1076
      %1137 = vst [vmem:[%s271 + $0xf0] sm:$0xff] %v1077
      %1138 = vst [vmem:[%s271 + $0xf8] sm:$0xff] %v1078
      %1139 = vst [vmem:[%s271 + $0x100] sm:$0xff] %v1079
      %1140 = vst [vmem:[%s271 + $0x108] sm:$0xff] %v1080
      %1141 = vst [vmem:[%s271 + $0x110] sm:$0xff] %v1081
      %1142 = vst [vmem:[%s271 + $0x118] sm:$0xff] %v1082
      %1143 = vst [vmem:[%s271 + $0x120] sm:$0xff] %v1083
      %1144 = vst [vmem:[%s271 + $0x128] sm:$0xff] %v1084
      %1145 = vst [vmem:[%s271 + $0x130] sm:$0xff] %v1085
      %1146 = vst [vmem:[%s271 + $0x138] sm:$0xff] %v1086
      %1147 = vst [vmem:[%s271 + $0x140] sm:$0xff] %v1087
      %1148 = vst [vmem:[%s271 + $0x148] sm:$0xff] %v1088
      %1149 = vst [vmem:[%s271 + $0x150] sm:$0xff] %v1089
      %1150 = vst [vmem:[%s271 + $0x158] sm:$0xff] %v1090
      %1151 = vst [vmem:[%s271 + $0x160] sm:$0xff] %v1091
      %1152 = vst [vmem:[%s271 + $0x168] sm:$0xff] %v1092
      %1153 = vst [vmem:[%s271 + $0x170] sm:$0xff] %v1093
      %1154 = vst [vmem:[%s271 + $0x178] sm:$0xff] %v1094
      %1155 = vst [vmem:[%s271 + $0x180] sm:$0xff] %v1095
      %1156 = vst [vmem:[%s271 + $0x188] sm:$0xff] %v1096
      %1157 = vst [vmem:[%s271 + $0x190] sm:$0xff] %v1097
      %1158 = vst [vmem:[%s271 + $0x198] sm:$0xff] %v1098
      %1159 = vst [vmem:[%s271 + $0x1a0] sm:$0xff] %v1099
      %1160 = vst [vmem:[%s271 + $0x1a8] sm:$0xff] %v1100
      %1161 = vst [vmem:[%s271 + $0x1b0] sm:$0xff] %v1101
      %1162 = vst [vmem:[%s271 + $0x1b8] sm:$0xff] %v1102
      %1163 = vst [vmem:[%s271 + $0x1c0] sm:$0xff] %v1103
      %1164 = vst [vmem:[%s271 + $0x1c8] sm:$0xff] %v1104
      %1165 = vst [vmem:[%s271 + $0x1d0] sm:$0xff] %v1105
      %1166 = vst [vmem:[%s271 + $0x1d8] sm:$0xff] %v1106
      %p1167 = scmp.lt.s32.totalorder %s17, 1
      %s1168 = scalar_select %p1167, %s17, 1
      %s1169 = smul.addr %s1168, 60
      %s1170 = smul.addr %s1169, 8
      %s1171 = scalar_lea.vmem %s6, %s1170
      // Predicated region
      $region45: #{residual_forward.5} parent=43 // pred_check
        %p1172 = pneg %p171
      $region46: #{residual_forward.5} parent=43 // pred_check_branch
        %1174 = sbr.rel (%p1172) target = $region48
      $region47: #{residual_forward.5} parent=43 // pred_region
        _
      $region48: #{residual_forward.5} parent=43 // pred_fallthru
        _
    $region44: #{residual_forward.5} parent=5 // pred_fallthru
      _
    %p1175 = scmp.le.s32.totalorder 2, %s12
    // Predicated region
    $region49: #{residual_forward.5} parent=5 // pred_check
      %p1176 = pneg %p1175
    $region50: #{residual_forward.5} parent=5 // pred_check_branch
      %1178 = sbr.rel (%p1176) target = $region52
    $region51: #{residual_forward.5} parent=5 // pred_region
      %s1179 = ssub.s32 %s12, 2
      // Predicated region
      $region53: #{residual_forward.5} parent=51 // pred_check
        %p1180 = pneg %p177
      $region54: #{residual_forward.5} parent=51 // pred_check_branch
        %1182 = sbr.rel (%p1180) target = $region56
      $region55: #{residual_forward.5} parent=51 // pred_region
        %p1183 = scmp.lt.s32.totalorder %s18, 1
        %s1184 = scalar_select %p1183, %s18, 1
        %s1185 = smul.addr %s1184, 60
        %s1186 = smul.addr %s1185, 8
        %s1187 = scalar_lea.vmem %s6, %s1186
      $region56: #{residual_forward.5} parent=51 // pred_fallthru
        _
    $region52: #{residual_forward.5} parent=5 // pred_fallthru
      _
  $region6: #{residual_forward.5} parent=0 // loop_footer
    %s16 = sadd.s32 1, %s12
  $region7: #{residual_forward.5} parent=0 // loop_footer_branch
    %11 = sbr.rel target = $region3
  $region8: #{residual_forward.5} parent=0 // loop_exit
    _

// kernel: residual_forward.3
$region0: #{residual_forward.3}
  #allocation0 [shape = 'u32[]', space=smem, size = 0x4, offset = 0x4, fixed_abs, tag = 'smem constant byte address 0x4 - core index']
  #allocation1 [shape = 'u32[72,128]{1,0:T(1,128)}', space=vmem, size = 0x9000, scoped, tag = 'internal scratch']
  %s0 = inlined_call_operand.vmem [shape: bf16[2,480,128], index: 0, kind: input, shape index: {}]
  %s1 = inlined_call_operand.vmem [shape: bf16[1152,128], index: 1, kind: input, shape index: {}]
  %s2 = inlined_call_operand.vmem [shape: f32[480,1], index: 2, kind: input, shape index: {}]
  %s3 = inlined_call_operand.vmem [shape: bf16[2,480,128], index: 3, kind: output, shape index: {0}]
  %s4 = inlined_call_operand.vmem [shape: f32[2,1,128], index: 4, kind: output, shape index: {1}]
  %s5 = inlined_call_operand.vmem [shape: f32[2,1,128], index: 5, kind: output, shape index: {2}]
  %6 = xla_tuple %s3, %s4, %s5
  %s7 = sld [smem:[#allocation0]]
  $region61: #{residual_forward.3} parent=0
    _
  %s9 = ssub.s32 1, %s7
  %s10 = scalar_select 0, %s9, %s7
  loop: start=0, step=1, limit=4
  $region2: #{residual_forward.3} parent=0 // loop_pre_header
    _
  $region3: #{residual_forward.3} parent=0 // loop_header
    %s12 = sphi 0, %s16
    %p13 = scmp.ge.s32.totalorder %s12, 4
    %s22 = sphi 0, %s24
    %s25 = sphi 0, %s22
    %s26 = sphi 0, %s25
    %s42 = sphi 0, %s26
    %s46 = sphi 0, %s46
    %s48 = sphi 0, %s46
    %s49 = sphi 0, %s48
    %s63 = sphi 0, %s49
    %s67 = sphi 0, %s67
    %s69 = sphi 0, %s67
    %s70 = sphi 0, %s69
    %s84 = sphi 0, %s70
    %s90 = sphi 0, %s92
    %s93 = sphi 0, %s90
    %s94 = sphi 0, %s93
    %s110 = sphi 0, %s94
    %s116 = sphi 0, %s118
    %s119 = sphi 0, %s116
    %s120 = sphi 0, %s119
    %s136 = sphi 0, %s120
    %s142 = sphi 0, %s144
    %s145 = sphi 0, %s142
    %s146 = sphi 0, %s145
    %s162 = sphi 0, %s146
  $region4: #{residual_forward.3} parent=0 // loop_header_branch
    %15 = sbr.rel (%p13) target = $region8
  $region5: #{residual_forward.3} parent=0 // loop_body
    %s17 = ssub.s32 %s12, 1
    %s18 = ssub.s32 %s12, 2
    %s19 = sadd.s32 %s12, 1
    %s20 = ssub.s32 %s12, %s19
    %p21 = scmp.eq.s32.totalorder %s20, 0
    %s23 = sadd.s32 %s22, 1
    %s24 = scalar_select %p21, %s22, %s23
    %p27 = pneg %p21
    %p28 = scmp.eq.s32.totalorder %s12, 1
    %p29 = por %p27, %p28
    %p30 = scmp.ne.s32.totalorder %s22, %s25
    %p31 = scmp.eq.s32.totalorder %s12, 0
    %p32 = por %p30, %p31
    %p33 = scmp.ne.s32.totalorder %s22, %s25
    %p34 = scmp.eq.s32.totalorder %s17, 1
    %p35 = por %p33, %p34
    %p36 = scmp.ne.s32.totalorder %s25, %s26
    %p37 = scmp.eq.s32.totalorder %s17, 0
    %p38 = por %p36, %p37
    %p39 = scmp.ne.s32.totalorder %s25, %s26
    %p40 = scmp.eq.s32.totalorder %s18, 1
    %p41 = por %p39, %p40
    %p43 = scmp.ne.s32.totalorder %s26, %s42
    %p44 = scmp.eq.s32.totalorder %s18, 0
    %p45 = por %p43, %p44
    %s47 = sadd.s32 %s46, 1
    %p50 = scmp.eq.s32.totalorder %s12, 1
    %p51 = scmp.ne.s32.totalorder %s46, %s48
    %p52 = scmp.eq.s32.totalorder %s12, 0
    %p53 = por %p51, %p52
    %p54 = scmp.ne.s32.totalorder %s46, %s48
    %p55 = scmp.eq.s32.totalorder %s17, 1
    %p56 = por %p54, %p55
    %p57 = scmp.ne.s32.totalorder %s48, %s49
    %p58 = scmp.eq.s32.totalorder %s17, 0
    %p59 = por %p57, %p58
    %p60 = scmp.ne.s32.totalorder %s48, %s49
    %p61 = scmp.eq.s32.totalorder %s18, 1
    %p62 = por %p60, %p61
    %p64 = scmp.ne.s32.totalorder %s49, %s63
    %p65 = scmp.eq.s32.totalorder %s18, 0
    %p66 = por %p64, %p65
    %s68 = sadd.s32 %s67, 1
    %p71 = scmp.eq.s32.totalorder %s12, 1
    %p72 = scmp.ne.s32.totalorder %s67, %s69
    %p73 = scmp.eq.s32.totalorder %s12, 0
    %p74 = por %p72, %p73
    %p75 = scmp.ne.s32.totalorder %s67, %s69
    %p76 = scmp.eq.s32.totalorder %s17, 1
    %p77 = por %p75, %p76
    %p78 = scmp.ne.s32.totalorder %s69, %s70
    %p79 = scmp.eq.s32.totalorder %s17, 0
    %p80 = por %p78, %p79
    %p81 = scmp.ne.s32.totalorder %s69, %s70
    %p82 = scmp.eq.s32.totalorder %s18, 1
    %p83 = por %p81, %p82
    %p85 = scmp.ne.s32.totalorder %s70, %s84
    %p86 = scmp.eq.s32.totalorder %s18, 0
    %p87 = por %p85, %p86
    %s88 = ssub.s32 %s12, %s19
    %p89 = scmp.eq.s32.totalorder %s88, 0
    %s91 = sadd.s32 %s90, 1
    %s92 = scalar_select %p89, %s90, %s91
    %p95 = pneg %p89
    %p96 = scmp.eq.s32.totalorder %s12, 1
    %p97 = por %p95, %p96
    %p98 = scmp.ne.s32.totalorder %s90, %s93
    %p99 = scmp.eq.s32.totalorder %s12, 0
    %p100 = por %p98, %p99
    %p101 = scmp.ne.s32.totalorder %s90, %s93
    %p102 = scmp.eq.s32.totalorder %s17, 1
    %p103 = por %p101, %p102
    %p104 = scmp.ne.s32.totalorder %s93, %s94
    %p105 = scmp.eq.s32.totalorder %s17, 0
    %p106 = por %p104, %p105
    %p107 = scmp.ne.s32.totalorder %s93, %s94
    %p108 = scmp.eq.s32.totalorder %s18, 1
    %p109 = por %p107, %p108
    %p111 = scmp.ne.s32.totalorder %s94, %s110
    %p112 = scmp.eq.s32.totalorder %s18, 0
    %p113 = por %p111, %p112
    %s114 = ssub.s32 %s12, %s19
    %p115 = scmp.eq.s32.totalorder %s114, 0
    %s117 = sadd.s32 %s116, 1
    %s118 = scalar_select %p115, %s116, %s117
    %p121 = pneg %p115
    %p122 = scmp.eq.s32.totalorder %s12, 1
    %p123 = por %p121, %p122
    %p124 = scmp.ne.s32.totalorder %s116, %s119
    %p125 = scmp.eq.s32.totalorder %s12, 0
    %p126 = por %p124, %p125
    %p127 = scmp.ne.s32.totalorder %s116, %s119
    %p128 = scmp.eq.s32.totalorder %s17, 1
    %p129 = por %p127, %p128
    %p130 = scmp.ne.s32.totalorder %s119, %s120
    %p131 = scmp.eq.s32.totalorder %s17, 0
    %p132 = por %p130, %p131
    %p133 = scmp.ne.s32.totalorder %s119, %s120
    %p134 = scmp.eq.s32.totalorder %s18, 1
    %p135 = por %p133, %p134
    %p137 = scmp.ne.s32.totalorder %s120, %s136
    %p138 = scmp.eq.s32.totalorder %s18, 0
    %p139 = por %p137, %p138
    %s140 = ssub.s32 %s12, %s19
    %p141 = scmp.eq.s32.totalorder %s140, 0
    %s143 = sadd.s32 %s142, 1
    %s144 = scalar_select %p141, %s142, %s143
    %p147 = pneg %p141
    %p148 = scmp.eq.s32.totalorder %s12, 1
    %p149 = por %p147, %p148
    %p150 = scmp.ne.s32.totalorder %s142, %s145
    %p151 = scmp.eq.s32.totalorder %s12, 0
    %p152 = por %p150, %p151
    %p153 = scmp.ne.s32.totalorder %s142, %s145
    %p154 = scmp.eq.s32.totalorder %s17, 1
    %p155 = por %p153, %p154
    %p156 = scmp.ne.s32.totalorder %s145, %s146
    %p157 = scmp.eq.s32.totalorder %s17, 0
    %p158 = por %p156, %p157
    %p159 = scmp.ne.s32.totalorder %s145, %s146
    %p160 = scmp.eq.s32.totalorder %s18, 1
    %p161 = por %p159, %p160
    %p163 = scmp.ne.s32.totalorder %s146, %s162
    %p164 = scmp.eq.s32.totalorder %s18, 0
    %p165 = por %p163, %p164
    %p166 = scmp.le.s32.totalorder 1, %s12
    %p167 = scmp.lt.s32.totalorder %s12, 3
    %p168 = pnand %p166, %p167
    %p169 = pneg %p168
    // Predicated region
    $region9: #{residual_forward.3} parent=5 // pred_check
      _
    $region10: #{residual_forward.3} parent=5 // pred_check_branch
      %171 = sbr.rel (%p168) target = $region12
    $region11: #{residual_forward.3} parent=5 // pred_region
      %s172 = ssub.s32 %s12, 1
      // Predicated region
      $region13: #{residual_forward.3} parent=11 // pred_check
        %p173 = pneg %p59
      $region14: #{residual_forward.3} parent=11 // pred_check_branch
        %175 = sbr.rel (%p173) target = $region16
      $region15: #{residual_forward.3} parent=11 // pred_region
        _
      $region16: #{residual_forward.3} parent=11 // pred_fallthru
        _
      // Predicated region
      $region17: #{residual_forward.3} parent=11 // pred_check
        %p176 = pneg %p80
      $region18: #{residual_forward.3} parent=11 // pred_check_branch
        %178 = sbr.rel (%p176) target = $region20
      $region19: #{residual_forward.3} parent=11 // pred_region
        _
      $region20: #{residual_forward.3} parent=11 // pred_fallthru
        _
    $region12: #{residual_forward.3} parent=5 // pred_fallthru
      _
    %p179 = scmp.lt.s32.totalorder %s12, 2
    // Predicated region
    $region21: #{residual_forward.3} parent=5 // pred_check
      %p180 = pneg %p179
    $region22: #{residual_forward.3} parent=5 // pred_check_branch
      %182 = sbr.rel (%p180) target = $region24
    $region23: #{residual_forward.3} parent=5 // pred_region
      // Predicated region
      $region25: #{residual_forward.3} parent=23 // pred_check
        %p183 = pneg %p32
      $region26: #{residual_forward.3} parent=23 // pred_check_branch
        %185 = sbr.rel (%p183) target = $region28
      $region27: #{residual_forward.3} parent=23 // pred_region
        %p186 = scmp.lt.s32.totalorder %s12, 1
        %s187 = scalar_select %p186, %s12, 1
        %s188 = smul.addr %s187, 60
        %s189 = smul.addr %s188, 4
        %s190 = scalar_lea.vmem %s0, %s189
      $region28: #{residual_forward.3} parent=23 // pred_fallthru
        _
    $region24: #{residual_forward.3} parent=5 // pred_fallthru
      _
    %p191 = scmp.le.s32.totalorder 1, %s12
    %p192 = scmp.lt.s32.totalorder %s12, 3
    %p193 = pnand %p191, %p192
    %p194 = pneg %p193
    // Predicated region
    $region29: #{residual_forward.3} parent=5 // pred_check
      _
    $region30: #{residual_forward.3} parent=5 // pred_check_branch
      %196 = sbr.rel (%p193) target = $region32
    $region31: #{residual_forward.3} parent=5 // pred_region
      %s197 = ssub.s32 %s12, 1
      %p198 = scmp.lt.s32.totalorder %s17, 1
      %s199 = scalar_select %p198, %s17, 1
      %s200 = smul.addr %s199, 60
      %s201 = smul.addr %s200, 4
      %s202 = scalar_lea.vmem %s0, %s201
      %p203 = pneg %p38
      %p204 = pneg %p35
      %p205 = pneg %p59
      %p206 = pneg %p56
      %p207 = pneg %p80
      %p208 = pneg %p77
      %p209 = pneg %p106
      %p210 = pneg %p103
      %p211 = scmp.lt.s32.totalorder %s17, 1
      %s212 = scalar_select %p211, %s17, 1
      %s213 = smul.addr %s212, 60
      %s214 = smul.addr %s213, 4
      %s215 = scalar_lea.vmem %s3, %s214
      %p216 = pneg %p132
      %p217 = pneg %p129
      %p218 = scmp.lt.s32.totalorder %s17, 1
      %s219 = scalar_select %p218, %s17, 1
      %s220 = scalar_lea.vmem %s4, %s219
      %p221 = pneg %p158
      %p222 = pneg %p155
      %p223 = scmp.lt.s32.totalorder %s17, 1
      %s224 = scalar_select %p223, %s17, 1
      %s225 = scalar_lea.vmem %s5, %s224
      %p226 = scmp.lt.s32.totalorder %s17, 1
      %s227 = scalar_select %p226, %s17, 1
      %s228 = smul.addr %s227, 60
      %s229 = smul.addr %s228, 4
      %s230 = scalar_lea.vmem %s0, %s229
      %p231 = scmp.lt.s32.totalorder %s17, 1
      %s232 = scalar_select %p231, %s17, 1
      %s233 = smul.addr %s232, 60
      %s234 = smul.addr %s233, 4
      %s235 = scalar_lea.vmem %s3, %s234
      %p236 = scmp.lt.s32.totalorder %s17, 1
      %s237 = scalar_select %p236, %s17, 1
      %s238 = scalar_lea.vmem %s4, %s237
      %p239 = scmp.lt.s32.totalorder %s17, 1
      %s240 = scalar_select %p239, %s17, 1
      %s241 = scalar_lea.vmem %s5, %s240
      %v243 = vld [vmem:[%s2 + $0x30] sm:$0xff]
      %v244 = vld [vmem:[%s2 + $0x38] sm:$0xff]
      %v245 = vld [vmem:[%s2 + $0x40] sm:$0xff]
      %v246 = vld [vmem:[%s2 + $0x48] sm:$0xff]
      %v247 = vld [vmem:[%s2 + $0x50] sm:$0xff]
      %v248 = vld [vmem:[%s2 + $0x58] sm:$0xff]
      %v249 = vld [vmem:[%s2 + $0x60] sm:$0xff]
      %v250 = vld [vmem:[%s2 + $0x68] sm:$0xff]
      %v251 = vld [vmem:[%s2 + $0x70] sm:$0xff]
      %v252 = vld [vmem:[%s2 + $0x78] sm:$0xff]
      %v253 = vld [vmem:[%s2 + $0x80] sm:$0xff]
      %v254 = vld [vmem:[%s2 + $0x88] sm:$0xff]
      %v255 = vld [vmem:[%s2 + $0x90] sm:$0xff]
      %v256 = vld [vmem:[%s2 + $0x98] sm:$0xff]
      %v257 = vld [vmem:[%s2 + $0xa0] sm:$0xff]
      %v258 = vld [vmem:[%s2 + $0xa8] sm:$0xff]
      %v259 = vld [vmem:[%s2 + $0xb0] sm:$0xff]
      %v260 = vld [vmem:[%s2 + $0xb8] sm:$0xff]
      %v261 = vld [vmem:[%s2 + $0xc0] sm:$0xff]
      %v262 = vld [vmem:[%s2 + $0xc8] sm:$0xff]
      %v263 = vld [vmem:[%s2 + $0xd0] sm:$0xff]
      %v264 = vld [vmem:[%s2 + $0xd8] sm:$0xff]
      %v265 = vld [vmem:[%s2 + $0xe0] sm:$0xff]
      %v266 = vld [vmem:[%s2 + $0xe8] sm:$0xff]
      %v267 = vld [vmem:[%s2 + $0xf0] sm:$0xff]
      %v268 = vld [vmem:[%s2 + $0xf8] sm:$0xff]
      %v269 = vld [vmem:[%s2 + $0x100] sm:$0xff]
      %v270 = vld [vmem:[%s2 + $0x108] sm:$0xff]
      %v271 = vld [vmem:[%s2 + $0x110] sm:$0xff]
      %v272 = vld [vmem:[%s2 + $0x118] sm:$0xff]
      %v273 = vld [vmem:[%s2 + $0x120] sm:$0xff]
      %v274 = vld [vmem:[%s2 + $0x128] sm:$0xff]
      %v275 = vld [vmem:[%s2 + $0x130] sm:$0xff]
      %v276 = vld [vmem:[%s2 + $0x138] sm:$0xff]
      %v277 = vld [vmem:[%s2 + $0x140] sm:$0xff]
      %v278 = vld [vmem:[%s2 + $0x148] sm:$0xff]
      %v279 = vld [vmem:[%s2 + $0x150] sm:$0xff]
      %v280 = vld [vmem:[%s2 + $0x158] sm:$0xff]
      %v281 = vld [vmem:[%s2 + $0x160] sm:$0xff]
      %v282 = vld [vmem:[%s2 + $0x168] sm:$0xff]
      %v283 = vld [vmem:[%s2 + $0x170] sm:$0xff]
      %v284 = vld [vmem:[%s2 + $0x178] sm:$0xff]
      %v285 = vld [vmem:[%s2 + $0x180] sm:$0xff]
      %v286 = vld [vmem:[%s2 + $0x188] sm:$0xff]
      %v287 = vld [vmem:[%s2 + $0x190] sm:$0xff]
      %v288 = vld [vmem:[%s2 + $0x198] sm:$0xff]
      %v289 = vld [vmem:[%s2 + $0x1a0] sm:$0xff]
      %v290 = vld [vmem:[%s2 + $0x1a8] sm:$0xff]
      %v291 = vld [vmem:[%s230 + $0x8] sm:$0xf]
      %v292 = vld [vmem:[%s230 + $0xc] sm:$0xf]
      %v293 = vld [vmem:[%s230 + $0x10] sm:$0xf]
      %v294 = vld [vmem:[%s230 + $0x14] sm:$0xf]
      %v295 = vld [vmem:[%s230 + $0x18] sm:$0xf]
      %v296 = vld [vmem:[%s230 + $0x1c] sm:$0xf]
      %v297 = vld [vmem:[%s230 + $0x20] sm:$0xf]
      %v298 = vld [vmem:[%s230 + $0x24] sm:$0xf]
      %v299 = vld [vmem:[%s230 + $0x28] sm:$0xf]
      %v300 = vld [vmem:[%s230 + $0x2c] sm:$0xf]
      %v301 = vld [vmem:[%s230 + $0x30] sm:$0xf]
      %v302 = vld [vmem:[%s230 + $0x34] sm:$0xf]
      %v303 = vld [vmem:[%s230 + $0x38] sm:$0xf]
      %v304 = vld [vmem:[%s230 + $0x3c] sm:$0xf]
      %v305 = vld [vmem:[%s230 + $0x40] sm:$0xf]
      %v306 = vld [vmem:[%s230 + $0x44] sm:$0xf]
      %v307 = vld [vmem:[%s230 + $0x48] sm:$0xf]
      %v308 = vld [vmem:[%s230 + $0x4c] sm:$0xf]
      %v309 = vld [vmem:[%s230 + $0x50] sm:$0xf]
      %v310 = vld [vmem:[%s230 + $0x54] sm:$0xf]
      %v311 = vld [vmem:[%s230 + $0x58] sm:$0xf]
      %v312 = vld [vmem:[%s230 + $0x5c] sm:$0xf]
      %v313 = vld [vmem:[%s230 + $0x60] sm:$0xf]
      %v314 = vld [vmem:[%s230 + $0x64] sm:$0xf]
      %v315 = vld [vmem:[%s230 + $0x68] sm:$0xf]
      %v316 = vld [vmem:[%s230 + $0x6c] sm:$0xf]
      %v317 = vld [vmem:[%s230 + $0x70] sm:$0xf]
      %v318 = vld [vmem:[%s230 + $0x74] sm:$0xf]
      %v319 = vld [vmem:[%s230 + $0x78] sm:$0xf]
      %v320 = vld [vmem:[%s230 + $0x7c] sm:$0xf]
      %v321 = vld [vmem:[%s230 + $0x80] sm:$0xf]
      %v322 = vld [vmem:[%s230 + $0x84] sm:$0xf]
      %v323 = vld [vmem:[%s230 + $0x88] sm:$0xf]
      %v324 = vld [vmem:[%s230 + $0x8c] sm:$0xf]
      %v325 = vld [vmem:[%s230 + $0x90] sm:$0xf]
      %v326 = vld [vmem:[%s230 + $0x94] sm:$0xf]
      %v327 = vld [vmem:[%s230 + $0x98] sm:$0xf]
      %v328 = vld [vmem:[%s230 + $0x9c] sm:$0xf]
      %v329 = vld [vmem:[%s230 + $0xa0] sm:$0xf]
      %v330 = vld [vmem:[%s230 + $0xa4] sm:$0xf]
      %v331 = vld [vmem:[%s230 + $0xa8] sm:$0xf]
      %v332 = vld [vmem:[%s230 + $0xac] sm:$0xf]
      %v333 = vld [vmem:[%s230 + $0xb0] sm:$0xf]
      %v334 = vld [vmem:[%s230 + $0xb4] sm:$0xf]
      %v335 = vld [vmem:[%s230 + $0xb8] sm:$0xf]
      %v336 = vld [vmem:[%s230 + $0xbc] sm:$0xf]
      %v337 = vld [vmem:[%s230 + $0xc0] sm:$0xf]
      %v338 = vld [vmem:[%s230 + $0xc4] sm:$0xf]
      %v339 = vld [vmem:[%s230 + $0xc8] sm:$0xf]
      %v340 = vld [vmem:[%s230 + $0xcc] sm:$0xf]
      %v341 = vld [vmem:[%s230 + $0xd0] sm:$0xf]
      %v342 = vld [vmem:[%s230 + $0xd4] sm:$0xf]
      %v343 = vld [vmem:[%s230 + $0xd8] sm:$0xf]
      %v344 = vld [vmem:[%s230 + $0xdc] sm:$0xf]
      %v345 = vld [vmem:[%s230 + $0xe0] sm:$0xf]
      %v346 = vld [vmem:[%s230 + $0xe4] sm:$0xf]
      %v396 = vunpack.c.l.b16 %v291
      %v397 = vunpack.c.l.b16 %v292
      %v398 = vunpack.c.l.b16 %v293
      %v399 = vunpack.c.l.b16 %v294
      %v400 = vunpack.c.l.b16 %v295
      %v401 = vunpack.c.l.b16 %v296
      %v402 = vunpack.c.l.b16 %v297
      %v403 = vunpack.c.l.b16 %v298
      %v404 = vunpack.c.l.b16 %v299
      %v405 = vunpack.c.l.b16 %v300
      %v406 = vunpack.c.l.b16 %v301
      %v407 = vunpack.c.l.b16 %v302
      %v408 = vunpack.c.l.b16 %v303
      %v409 = vunpack.c.l.b16 %v304
      %v410 = vunpack.c.l.b16 %v305
      %v411 = vunpack.c.l.b16 %v306
      %v412 = vunpack.c.l.b16 %v307
      %v413 = vunpack.c.l.b16 %v308
      %v414 = vunpack.c.l.b16 %v309
      %v415 = vunpack.c.l.b16 %v310
      %v416 = vunpack.c.l.b16 %v311
      %v417 = vunpack.c.l.b16 %v312
      %v418 = vunpack.c.l.b16 %v313
      %v419 = vunpack.c.l.b16 %v314
      %v420 = vunpack.c.l.b16 %v315
      %v421 = vunpack.c.l.b16 %v316
      %v422 = vunpack.c.l.b16 %v317
      %v423 = vunpack.c.l.b16 %v318
      %v424 = vunpack.c.l.b16 %v319
      %v425 = vunpack.c.l.b16 %v320
      %v426 = vunpack.c.l.b16 %v321
      %v427 = vunpack.c.l.b16 %v322
      %v428 = vunpack.c.l.b16 %v323
      %v429 = vunpack.c.l.b16 %v324
      %v430 = vunpack.c.l.b16 %v325
      %v431 = vunpack.c.l.b16 %v326
      %v432 = vunpack.c.l.b16 %v327
      %v433 = vunpack.c.l.b16 %v328
      %v434 = vunpack.c.l.b16 %v329
      %v435 = vunpack.c.l.b16 %v330
      %v436 = vunpack.c.l.b16 %v331
      %v437 = vunpack.c.l.b16 %v332
      %v438 = vunpack.c.l.b16 %v333
      %v439 = vunpack.c.l.b16 %v334
      %v440 = vunpack.c.l.b16 %v335
      %v441 = vunpack.c.l.b16 %v336
      %v442 = vunpack.c.l.b16 %v337
      %v443 = vunpack.c.l.b16 %v338
      %v444 = vunpack.c.l.b16 %v339
      %v445 = vpack.c.b16 %v397, %v396
      %v446 = vpack.c.b16 %v399, %v398
      %v447 = vpack.c.b16 %v401, %v400
      %v448 = vpack.c.b16 %v403, %v402
      %v449 = vpack.c.b16 %v405, %v404
      %v450 = vpack.c.b16 %v407, %v406
      %v451 = vpack.c.b16 %v409, %v408
      %v452 = vpack.c.b16 %v411, %v410
      %v453 = vpack.c.b16 %v413, %v412
      %v454 = vpack.c.b16 %v415, %v414
      %v455 = vpack.c.b16 %v417, %v416
      %v456 = vpack.c.b16 %v419, %v418
      %v457 = vpack.c.b16 %v421, %v420
      %v458 = vpack.c.b16 %v423, %v422
      %v459 = vpack.c.b16 %v425, %v424
      %v460 = vpack.c.b16 %v427, %v426
      %v461 = vpack.c.b16 %v429, %v428
      %v462 = vpack.c.b16 %v431, %v430
      %v463 = vpack.c.b16 %v433, %v432
      %v464 = vpack.c.b16 %v435, %v434
      %v465 = vpack.c.b16 %v437, %v436
      %v466 = vpack.c.b16 %v439, %v438
      %v467 = vpack.c.b16 %v441, %v440
      %v468 = vpack.c.b16 %v443, %v442
      %v469 = vpack.c.b16 %v444, %v444
      %v470 = vpack.c.b16 %v398, %v397
      %v471 = vpack.c.b16 %v400, %v399
      %v472 = vpack.c.b16 %v402, %v401
      %v473 = vpack.c.b16 %v404, %v403
      %v474 = vpack.c.b16 %v406, %v405
      %v475 = vpack.c.b16 %v408, %v407
      %v476 = vpack.c.b16 %v410, %v409
      %v477 = vpack.c.b16 %v412, %v411
      %v478 = vpack.c.b16 %v414, %v413
      %v479 = vpack.c.b16 %v416, %v415
      %v480 = vpack.c.b16 %v418, %v417
      %v481 = vpack.c.b16 %v420, %v419
      %v482 = vpack.c.b16 %v422, %v421
      %v483 = vpack.c.b16 %v424, %v423
      %v484 = vpack.c.b16 %v426, %v425
      %v485 = vpack.c.b16 %v428, %v427
      %v486 = vpack.c.b16 %v430, %v429
      %v487 = vpack.c.b16 %v432, %v431
      %v488 = vpack.c.b16 %v434, %v433
      %v489 = vpack.c.b16 %v436, %v435
      %v490 = vpack.c.b16 %v438, %v437
      %v491 = vpack.c.b16 %v440, %v439
      %v492 = vpack.c.b16 %v442, %v441
      %v493 = vpack.c.b16 %v444, %v443
      %vm494 = vsmask.f32 3328
      %v496 = vshrl.u32 %v470, 16
      %v498 = vrot.slane %v496, 4
      %v499 = vshll.u32 %v470, 16
      %v501 = vrot.slane %v499, 5
      %v502 = vor.u32 %v498, %v501
      %v504 = vshrl.u32 %v471, 16
      %v506 = vrot.slane %v504, 4
      %v507 = vshll.u32 %v471, 16
      %v509 = vrot.slane %v507, 5
      %v510 = vor.u32 %v506, %v509
      %v511 = vsel %vm494, %v502, %v510
      %v513 = vshrl.u32 %v472, 16
      %v515 = vrot.slane %v513, 4
      %v516 = vshll.u32 %v472, 16
      %v518 = vrot.slane %v516, 5
      %v519 = vor.u32 %v515, %v518
      %v520 = vsel %vm494, %v510, %v519
      %v522 = vshrl.u32 %v473, 16
      %v524 = vrot.slane %v522, 4
      %v525 = vshll.u32 %v473, 16
      %v527 = vrot.slane %v525, 5
      %v528 = vor.u32 %v524, %v527
      %v529 = vsel %vm494, %v519, %v528
      %v531 = vshrl.u32 %v474, 16
      %v533 = vrot.slane %v531, 4
      %v534 = vshll.u32 %v474, 16
      %v536 = vrot.slane %v534, 5
      %v537 = vor.u32 %v533, %v536
      %v538 = vsel %vm494, %v528, %v537
      %v540 = vshrl.u32 %v475, 16
      %v542 = vrot.slane %v540, 4
      %v543 = vshll.u32 %v475, 16
      %v545 = vrot.slane %v543, 5
      %v546 = vor.u32 %v542, %v545
      %v547 = vsel %vm494, %v537, %v546
      %v549 = vshrl.u32 %v476, 16
      %v551 = vrot.slane %v549, 4
      %v552 = vshll.u32 %v476, 16
      %v554 = vrot.slane %v552, 5
      %v555 = vor.u32 %v551, %v554
      %v556 = vsel %vm494, %v546, %v555
      %v558 = vshrl.u32 %v477, 16
      %v560 = vrot.slane %v558, 4
      %v561 = vshll.u32 %v477, 16
      %v563 = vrot.slane %v561, 5
      %v564 = vor.u32 %v560, %v563
      %v565 = vsel %vm494, %v555, %v564
      %v567 = vshrl.u32 %v478, 16
      %v569 = vrot.slane %v567, 4
      %v570 = vshll.u32 %v478, 16
      %v572 = vrot.slane %v570, 5
      %v573 = vor.u32 %v569, %v572
      %v574 = vsel %vm494, %v564, %v573
      %v576 = vshrl.u32 %v479, 16
      %v578 = vrot.slane %v576, 4
      %v579 = vshll.u32 %v479, 16
      %v581 = vrot.slane %v579, 5
      %v582 = vor.u32 %v578, %v581
      %v583 = vsel %vm494, %v573, %v582
      %v585 = vshrl.u32 %v480, 16
      %v587 = vrot.slane %v585, 4
      %v588 = vshll.u32 %v480, 16
      %v590 = vrot.slane %v588, 5
      %v591 = vor.u32 %v587, %v590
      %v592 = vsel %vm494, %v582, %v591
      %v594 = vshrl.u32 %v481, 16
      %v596 = vrot.slane %v594, 4
      %v597 = vshll.u32 %v481, 16
      %v599 = vrot.slane %v597, 5
      %v600 = vor.u32 %v596, %v599
      %v601 = vsel %vm494, %v591, %v600
      %v603 = vshrl.u32 %v482, 16
      %v605 = vrot.slane %v603, 4
      %v606 = vshll.u32 %v482, 16
      %v608 = vrot.slane %v606, 5
      %v609 = vor.u32 %v605, %v608
      %v610 = vsel %vm494, %v600, %v609
      %v612 = vshrl.u32 %v483, 16
      %v614 = vrot.slane %v612, 4
      %v615 = vshll.u32 %v483, 16
      %v617 = vrot.slane %v615, 5
      %v618 = vor.u32 %v614, %v617
      %v619 = vsel %vm494, %v609, %v618
      %v621 = vshrl.u32 %v484, 16
      %v623 = vrot.slane %v621, 4
      %v624 = vshll.u32 %v484, 16
      %v626 = vrot.slane %v624, 5
      %v627 = vor.u32 %v623, %v626
      %v628 = vsel %vm494, %v618, %v627
      %v630 = vshrl.u32 %v485, 16
      %v632 = vrot.slane %v630, 4
      %v633 = vshll.u32 %v485, 16
      %v635 = vrot.slane %v633, 5
      %v636 = vor.u32 %v632, %v635
      %v637 = vsel %vm494, %v627, %v636
      %v639 = vshrl.u32 %v486, 16
      %v641 = vrot.slane %v639, 4
      %v642 = vshll.u32 %v486, 16
      %v644 = vrot.slane %v642, 5
      %v645 = vor.u32 %v641, %v644
      %v646 = vsel %vm494, %v636, %v645
      %v648 = vshrl.u32 %v487, 16
      %v650 = vrot.slane %v648, 4
      %v651 = vshll.u32 %v487, 16
      %v653 = vrot.slane %v651, 5
      %v654 = vor.u32 %v650, %v653
      %v655 = vsel %vm494, %v645, %v654
      %v657 = vshrl.u32 %v488, 16
      %v659 = vrot.slane %v657, 4
      %v660 = vshll.u32 %v488, 16
      %v662 = vrot.slane %v660, 5
      %v663 = vor.u32 %v659, %v662
      %v664 = vsel %vm494, %v654, %v663
      %v666 = vshrl.u32 %v489, 16
      %v668 = vrot.slane %v666, 4
      %v669 = vshll.u32 %v489, 16
      %v671 = vrot.slane %v669, 5
      %v672 = vor.u32 %v668, %v671
      %v673 = vsel %vm494, %v663, %v672
      %v675 = vshrl.u32 %v490, 16
      %v677 = vrot.slane %v675, 4
      %v678 = vshll.u32 %v490, 16
      %v680 = vrot.slane %v678, 5
      %v681 = vor.u32 %v677, %v680
      %v682 = vsel %vm494, %v672, %v681
      %v684 = vshrl.u32 %v491, 16
      %v686 = vrot.slane %v684, 4
      %v687 = vshll.u32 %v491, 16
      %v689 = vrot.slane %v687, 5
      %v690 = vor.u32 %v686, %v689
      %v691 = vsel %vm494, %v681, %v690
      %v693 = vshrl.u32 %v492, 16
      %v695 = vrot.slane %v693, 4
      %v696 = vshll.u32 %v492, 16
      %v698 = vrot.slane %v696, 5
      %v699 = vor.u32 %v695, %v698
      %v700 = vsel %vm494, %v690, %v699
      %v702 = vshrl.u32 %v493, 16
      %v704 = vrot.slane %v702, 4
      %v705 = vshll.u32 %v493, 16
      %v707 = vrot.slane %v705, 5
      %v708 = vor.u32 %v704, %v707
      %v709 = vsel %vm494, %v699, %v708
      %v711 = vunpack.c.l.b16 %v340
      %v712 = vpack.c.b16 %v711, %v711
      %vm713 = vcmask 1042432
      %v714 = vrot.slane %v470, 5
      %v715 = vrot.slane %v471, 5
      %v716 = vsel %vm713, %v714, %v715
      %v717 = vrot.slane %v472, 5
      %v718 = vsel %vm713, %v715, %v717
      %v719 = vrot.slane %v473, 5
      %v720 = vsel %vm713, %v717, %v719
      %v721 = vrot.slane %v474, 5
      %v722 = vsel %vm713, %v719, %v721
      %v723 = vrot.slane %v475, 5
      %v724 = vsel %vm713, %v721, %v723
      %v725 = vrot.slane %v476, 5
      %v726 = vsel %vm713, %v723, %v725
      %v727 = vrot.slane %v477, 5
      %v728 = vsel %vm713, %v725, %v727
      %v729 = vrot.slane %v478, 5
      %v730 = vsel %vm713, %v727, %v729
      %v731 = vrot.slane %v479, 5
      %v732 = vsel %vm713, %v729, %v731
      %v733 = vrot.slane %v480, 5
      %v734 = vsel %vm713, %v731, %v733
      %v735 = vrot.slane %v481, 5
      %v736 = vsel %vm713, %v733, %v735
      %v737 = vrot.slane %v482, 5
      %v738 = vsel %vm713, %v735, %v737
      %v739 = vrot.slane %v483, 5
      %v740 = vsel %vm713, %v737, %v739
      %v741 = vrot.slane %v484, 5
      %v742 = vsel %vm713, %v739, %v741
      %v743 = vrot.slane %v485, 5
      %v744 = vsel %vm713, %v741, %v743
      %v745 = vrot.slane %v486, 5
      %v746 = vsel %vm713, %v743, %v745
      %v747 = vrot.slane %v487, 5
      %v748 = vsel %vm713, %v745, %v747
      %v749 = vrot.slane %v488, 5
      %v750 = vsel %vm713, %v747, %v749
      %v751 = vrot.slane %v489, 5
      %v752 = vsel %vm713, %v749, %v751
      %v753 = vrot.slane %v490, 5
      %v754 = vsel %vm713, %v751, %v753
      %v755 = vrot.slane %v491, 5
      %v756 = vsel %vm713, %v753, %v755
      %v757 = vrot.slane %v492, 5
      %v758 = vsel %vm713, %v755, %v757
      %v759 = vrot.slane %v493, 5
      %v760 = vsel %vm713, %v757, %v759
      %v761 = vrot.slane %v712, 5
      %v762 = vsel %vm713, %v759, %v761
      %v765 = vunpack.c.l.b16 %v341
      %v766 = vunpack.c.l.b16 %v342
      %v767 = vpack.c.b16 %v765, %v711
      %v768 = vpack.c.b16 %v766, %v766
      %v769 = vpack.c.b16 %v711, %v444
      %v770 = vpack.c.b16 %v766, %v765
      %v772 = vshrl.u32 %v447, 16
      %v774 = vrot.slane %v772, 4
      %v775 = vshll.u32 %v447, 16
      %v777 = vrot.slane %v775, 5
      %v778 = vor.u32 %v774, %v777
      %v780 = vshrl.u32 %v448, 16
      %v782 = vrot.slane %v780, 4
      %v783 = vshll.u32 %v448, 16
      %v785 = vrot.slane %v783, 5
      %v786 = vor.u32 %v782, %v785
      %v787 = vsel %vm494, %v778, %v786
      %v789 = vshrl.u32 %v449, 16
      %v791 = vrot.slane %v789, 4
      %v792 = vshll.u32 %v449, 16
      %v794 = vrot.slane %v792, 5
      %v795 = vor.u32 %v791, %v794
      %v796 = vsel %vm494, %v786, %v795
      %v798 = vshrl.u32 %v450, 16
      %v800 = vrot.slane %v798, 4
      %v801 = vshll.u32 %v450, 16
      %v803 = vrot.slane %v801, 5
      %v804 = vor.u32 %v800, %v803
      %v805 = vsel %vm494, %v795, %v804
      %v807 = vshrl.u32 %v451, 16
      %v809 = vrot.slane %v807, 4
      %v810 = vshll.u32 %v451, 16
      %v812 = vrot.slane %v810, 5
      %v813 = vor.u32 %v809, %v812
      %v814 = vsel %vm494, %v804, %v813
      %v816 = vshrl.u32 %v452, 16
      %v818 = vrot.slane %v816, 4
      %v819 = vshll.u32 %v452, 16
      %v821 = vrot.slane %v819, 5
      %v822 = vor.u32 %v818, %v821
      %v823 = vsel %vm494, %v813, %v822
      %v825 = vshrl.u32 %v453, 16
      %v827 = vrot.slane %v825, 4
      %v828 = vshll.u32 %v453, 16
      %v830 = vrot.slane %v828, 5
      %v831 = vor.u32 %v827, %v830
      %v832 = vsel %vm494, %v822, %v831
      %v834 = vshrl.u32 %v454, 16
      %v836 = vrot.slane %v834, 4
      %v837 = vshll.u32 %v454, 16
      %v839 = vrot.slane %v837, 5
      %v840 = vor.u32 %v836, %v839
      %v841 = vsel %vm494, %v831, %v840
      %v843 = vshrl.u32 %v455, 16
      %v845 = vrot.slane %v843, 4
      %v846 = vshll.u32 %v455, 16
      %v848 = vrot.slane %v846, 5
      %v849 = vor.u32 %v845, %v848
      %v850 = vsel %vm494, %v840, %v849
      %v852 = vshrl.u32 %v456, 16
      %v854 = vrot.slane %v852, 4
      %v855 = vshll.u32 %v456, 16
      %v857 = vrot.slane %v855, 5
      %v858 = vor.u32 %v854, %v857
      %v859 = vsel %vm494, %v849, %v858
      %v861 = vshrl.u32 %v457, 16
      %v863 = vrot.slane %v861, 4
      %v864 = vshll.u32 %v457, 16
      %v866 = vrot.slane %v864, 5
      %v867 = vor.u32 %v863, %v866
      %v868 = vsel %vm494, %v858, %v867
      %v870 = vshrl.u32 %v458, 16
      %v872 = vrot.slane %v870, 4
      %v873 = vshll.u32 %v458, 16
      %v875 = vrot.slane %v873, 5
      %v876 = vor.u32 %v872, %v875
      %v877 = vsel %vm494, %v867, %v876
      %v879 = vshrl.u32 %v459, 16
      %v881 = vrot.slane %v879, 4
      %v882 = vshll.u32 %v459, 16
      %v884 = vrot.slane %v882, 5
      %v885 = vor.u32 %v881, %v884
      %v886 = vsel %vm494, %v876, %v885
      %v888 = vshrl.u32 %v460, 16
      %v890 = vrot.slane %v888, 4
      %v891 = vshll.u32 %v460, 16
      %v893 = vrot.slane %v891, 5
      %v894 = vor.u32 %v890, %v893
      %v895 = vsel %vm494, %v885, %v894
      %v897 = vshrl.u32 %v461, 16
      %v899 = vrot.slane %v897, 4
      %v900 = vshll.u32 %v461, 16
      %v902 = vrot.slane %v900, 5
      %v903 = vor.u32 %v899, %v902
      %v904 = vsel %vm494, %v894, %v903
      %v906 = vshrl.u32 %v462, 16
      %v908 = vrot.slane %v906, 4
      %v909 = vshll.u32 %v462, 16
      %v911 = vrot.slane %v909, 5
      %v912 = vor.u32 %v908, %v911
      %v913 = vsel %vm494, %v903, %v912
      %v915 = vshrl.u32 %v463, 16
      %v917 = vrot.slane %v915, 4
      %v918 = vshll.u32 %v463, 16
      %v920 = vrot.slane %v918, 5
      %v921 = vor.u32 %v917, %v920
      %v922 = vsel %vm494, %v912, %v921
      %v924 = vshrl.u32 %v464, 16
      %v926 = vrot.slane %v924, 4
      %v927 = vshll.u32 %v464, 16
      %v929 = vrot.slane %v927, 5
      %v930 = vor.u32 %v926, %v929
      %v931 = vsel %vm494, %v921, %v930
      %v933 = vshrl.u32 %v465, 16
      %v935 = vrot.slane %v933, 4
      %v936 = vshll.u32 %v465, 16
      %v938 = vrot.slane %v936, 5
      %v939 = vor.u32 %v935, %v938
      %v940 = vsel %vm494, %v930, %v939
      %v942 = vshrl.u32 %v466, 16
      %v944 = vrot.slane %v942, 4
      %v945 = vshll.u32 %v466, 16
      %v947 = vrot.slane %v945, 5
      %v948 = vor.u32 %v944, %v947
      %v949 = vsel %vm494, %v939, %v948
      %v951 = vshrl.u32 %v467, 16
      %v953 = vrot.slane %v951, 4
      %v954 = vshll.u32 %v467, 16
      %v956 = vrot.slane %v954, 5
      %v957 = vor.u32 %v953, %v956
      %v958 = vsel %vm494, %v948, %v957
      %v960 = vshrl.u32 %v468, 16
      %v962 = vrot.slane %v960, 4
      %v963 = vshll.u32 %v468, 16
      %v965 = vrot.slane %v963, 5
      %v966 = vor.u32 %v962, %v965
      %v967 = vsel %vm494, %v957, %v966
      %v969 = vshrl.u32 %v769, 16
      %v971 = vrot.slane %v969, 4
      %v972 = vshll.u32 %v769, 16
      %v974 = vrot.slane %v972, 5
      %v975 = vor.u32 %v971, %v974
      %v976 = vsel %vm494, %v966, %v975
      %v978 = vshrl.u32 %v770, 16
      %v980 = vrot.slane %v978, 4
      %v981 = vshll.u32 %v770, 16
      %v983 = vrot.slane %v981, 5
      %v984 = vor.u32 %v980, %v983
      %v985 = vsel %vm494, %v975, %v984
      %v987 = vunpack.c.l.b16 %v343
      %v988 = vpack.c.b16 %v987, %v987
      %v989 = vrot.slane %v447, 5
      %v990 = vrot.slane %v448, 5
      %v991 = vsel %vm713, %v989, %v990
      %v992 = vrot.slane %v449, 5
      %v993 = vsel %vm713, %v990, %v992
      %v994 = vrot.slane %v450, 5
      %v995 = vsel %vm713, %v992, %v994
      %v996 = vrot.slane %v451, 5
      %v997 = vsel %vm713, %v994, %v996
      %v998 = vrot.slane %v452, 5
      %v999 = vsel %vm713, %v996, %v998
      %v1000 = vrot.slane %v453, 5
      %v1001 = vsel %vm713, %v998, %v1000
      %v1002 = vrot.slane %v454, 5
      %v1003 = vsel %vm713, %v1000, %v1002
      %v1004 = vrot.slane %v455, 5
      %v1005 = vsel %vm713, %v1002, %v1004
      %v1006 = vrot.slane %v456, 5
      %v1007 = vsel %vm713, %v1004, %v1006
      %v1008 = vrot.slane %v457, 5
      %v1009 = vsel %vm713, %v1006, %v1008
      %v1010 = vrot.slane %v458, 5
      %v1011 = vsel %vm713, %v1008, %v1010
      %v1012 = vrot.slane %v459, 5
      %v1013 = vsel %vm713, %v1010, %v1012
      %v1014 = vrot.slane %v460, 5
      %v1015 = vsel %vm713, %v1012, %v1014
      %v1016 = vrot.slane %v461, 5
      %v1017 = vsel %vm713, %v1014, %v1016
      %v1018 = vrot.slane %v462, 5
      %v1019 = vsel %vm713, %v1016, %v1018
      %v1020 = vrot.slane %v463, 5
      %v1021 = vsel %vm713, %v1018, %v1020
      %v1022 = vrot.slane %v464, 5
      %v1023 = vsel %vm713, %v1020, %v1022
      %v1024 = vrot.slane %v465, 5
      %v1025 = vsel %vm713, %v1022, %v1024
      %v1026 = vrot.slane %v466, 5
      %v1027 = vsel %vm713, %v1024, %v1026
      %v1028 = vrot.slane %v467, 5
      %v1029 = vsel %vm713, %v1026, %v1028
      %v1030 = vrot.slane %v468, 5
      %v1031 = vsel %vm713, %v1028, %v1030
      %v1032 = vrot.slane %v769, 5
      %v1033 = vsel %vm713, %v1030, %v1032
      %v1034 = vrot.slane %v770, 5
      %v1035 = vsel %vm713, %v1032, %v1034
      %v1036 = vrot.slane %v988, 5
      %v1037 = vsel %vm713, %v1034, %v1036
      %v1040 = vunpack.c.l.b16 %v344
      %v1041 = vunpack.c.l.b16 %v345
      %v1042 = vpack.c.b16 %v1040, %v987
      %v1043 = vpack.c.b16 %v1041, %v1041
      %v1044 = vpack.c.b16 %v987, %v766
      %v1045 = vpack.c.b16 %v1041, %v1040
      %v1047 = vshrl.u32 %v767, 16
      %v1049 = vrot.slane %v1047, 4
      %v1050 = vshll.u32 %v767, 16
      %v1052 = vrot.slane %v1050, 5
      %v1053 = vor.u32 %v1049, %v1052
      %v1054 = vsel %vm494, %v708, %v1053
      %v1056 = vshrl.u32 %v1044, 16
      %v1058 = vrot.slane %v1056, 4
      %v1059 = vshll.u32 %v1044, 16
      %v1061 = vrot.slane %v1059, 5
      %v1062 = vor.u32 %v1058, %v1061
      %v1063 = vsel %vm494, %v1053, %v1062
      %v1065 = vshrl.u32 %v1045, 16
      %v1067 = vrot.slane %v1065, 4
      %v1068 = vshll.u32 %v1045, 16
      %v1070 = vrot.slane %v1068, 5
      %v1071 = vor.u32 %v1067, %v1070
      %v1072 = vsel %vm494, %v1062, %v1071
      %v1074 = vunpack.c.l.b16 %v346
      %v1075 = vpack.c.b16 %v1074, %v1074
      %v1076 = vrot.slane %v767, 5
      %v1077 = vsel %vm713, %v759, %v1076
      %v1078 = vrot.slane %v1044, 5
      %v1079 = vsel %vm713, %v1076, %v1078
      %v1080 = vrot.slane %v1045, 5
      %v1081 = vsel %vm713, %v1078, %v1080
      %v1082 = vrot.slane %v1075, 5
      %v1083 = vsel %vm713, %v1080, %v1082
      %v1084 = vld [vmem:[%s1] sm:$0xf]
      %v1085 = vld [vmem:[%s1 + $0x4] sm:$0xf]
      %v1086 = vld [vmem:[%s1 + $0x8] sm:$0xf]
      %v1087 = vld [vmem:[%s1 + $0xc] sm:$0xf]
      %v1088 = vld [vmem:[%s1 + $0x10] sm:$0xf]
      %v1089 = vld [vmem:[%s1 + $0x14] sm:$0xf]
      %v1090 = vld [vmem:[%s1 + $0x18] sm:$0xf]
      %v1091 = vld [vmem:[%s1 + $0x1c] sm:$0xf]
      %v1092 = vld [vmem:[%s1 + $0x20] sm:$0xf]
      %v1093 = vld [vmem:[%s1 + $0x24] sm:$0xf]
      %v1094 = vld [vmem:[%s1 + $0x28] sm:$0xf]
      %v1095 = vld [vmem:[%s1 + $0x2c] sm:$0xf]
      %v1096 = vld [vmem:[%s1 + $0x30] sm:$0xf]
      %v1097 = vld [vmem:[%s1 + $0x34] sm:$0xf]
      %v1098 = vld [vmem:[%s1 + $0x38] sm:$0xf]
      %v1099 = vld [vmem:[%s1 + $0x3c] sm:$0xf]
      %v1100 = vld [vmem:[%s1 + $0x40] sm:$0xf]
      %v1101 = vld [vmem:[%s1 + $0x44] sm:$0xf]
      %v1102 = vld [vmem:[%s1 + $0x48] sm:$0xf]
      %v1103 = vld [vmem:[%s1 + $0x4c] sm:$0xf]
      %v1104 = vld [vmem:[%s1 + $0x50] sm:$0xf]
      %v1105 = vld [vmem:[%s1 + $0x54] sm:$0xf]
      %v1106 = vld [vmem:[%s1 + $0x58] sm:$0xf]
      %v1107 = vld [vmem:[%s1 + $0x5c] sm:$0xf]
      %v1108 = vld [vmem:[%s1 + $0x60] sm:$0xf]
      %v1109 = vld [vmem:[%s1 + $0x64] sm:$0xf]
      %v1110 = vld [vmem:[%s1 + $0x68] sm:$0xf]
      %v1111 = vld [vmem:[%s1 + $0x6c] sm:$0xf]
      %v1112 = vld [vmem:[%s1 + $0x70] sm:$0xf]
      %v1113 = vld [vmem:[%s1 + $0x74] sm:$0xf]
      %v1114 = vld [vmem:[%s1 + $0x78] sm:$0xf]
      %v1115 = vld [vmem:[%s1 + $0x7c] sm:$0xf]
      %v1116 = vld [vmem:[%s1 + $0x80] sm:$0xf]
      %v1117 = vld [vmem:[%s1 + $0x84] sm:$0xf]
      %v1118 = vld [vmem:[%s1 + $0x88] sm:$0xf]
      %v1119 = vld [vmem:[%s1 + $0x8c] sm:$0xf]
      %v1120 = vld [vmem:[%s1 + $0x90] sm:$0xf]
      %v1121 = vld [vmem:[%s1 + $0x94] sm:$0xf]
      %v1122 = vld [vmem:[%s1 + $0x98] sm:$0xf]
      %v1123 = vld [vmem:[%s1 + $0x9c] sm:$0xf]
      %v1124 = vld [vmem:[%s1 + $0xa0] sm:$0xf]
      %v1125 = vld [vmem:[%s1 + $0xa4] sm:$0xf]
      %v1126 = vld [vmem:[%s1 + $0xa8] sm:$0xf]
      %v1127 = vld [vmem:[%s1 + $0xac] sm:$0xf]
      %v1128 = vld [vmem:[%s1 + $0xb0] sm:$0xf]
      %v1129 = vld [vmem:[%s1 + $0xb4] sm:$0xf]
      %v1130 = vld [vmem:[%s1 + $0xb8] sm:$0xf]
      %v1131 = vld [vmem:[%s1 + $0xbc] sm:$0xf]
      %v1132 = vld [vmem:[%s1 + $0xc0] sm:$0xf]
      %v1133 = vld [vmem:[%s1 + $0xc4] sm:$0xf]
      %v1134 = vld [vmem:[%s1 + $0xc8] sm:$0xf]
      %v1135 = vld [vmem:[%s1 + $0xcc] sm:$0xf]
      %v1136 = vld [vmem:[%s1 + $0xd0] sm:$0xf]
      %v1137 = vld [vmem:[%s1 + $0xd4] sm:$0xf]
      %v1138 = vld [vmem:[%s1 + $0xd8] sm:$0xf]
      %v1139 = vld [vmem:[%s1 + $0xdc] sm:$0xf]
      %v1140 = vld [vmem:[%s1 + $0xe0] sm:$0xf]
      %v1141 = vld [vmem:[%s1 + $0xe4] sm:$0xf]
      %v1142 = vld [vmem:[%s1 + $0xe8] sm:$0xf]
      %v1143 = vld [vmem:[%s1 + $0xec] sm:$0xf]
      %v1144 = vld [vmem:[%s1 + $0xf0] sm:$0xf]
      %v1145 = vld [vmem:[%s1 + $0xf4] sm:$0xf]
      %v1146 = vld [vmem:[%s1 + $0xf8] sm:$0xf]
      %v1147 = vld [vmem:[%s1 + $0xfc] sm:$0xf]
      %v1148 = vld [vmem:[%s1 + $0x100] sm:$0xf]
      %v1149 = vld [vmem:[%s1 + $0x104] sm:$0xf]
      %v1150 = vld [vmem:[%s1 + $0x108] sm:$0xf]
      %v1151 = vld [vmem:[%s1 + $0x10c] sm:$0xf]
      %v1152 = vld [vmem:[%s1 + $0x110] sm:$0xf]
      %v1153 = vld [vmem:[%s1 + $0x114] sm:$0xf]
      %v1154 = vld [vmem:[%s1 + $0x118] sm:$0xf]
      %v1155 = vld [vmem:[%s1 + $0x11c] sm:$0xf]
      %v1156 = vld [vmem:[%s1 + $0x120] sm:$0xf]
      %v1157 = vld [vmem:[%s1 + $0x124] sm:$0xf]
      %v1158 = vld [vmem:[%s1 + $0x128] sm:$0xf]
      %v1159 = vld [vmem:[%s1 + $0x12c] sm:$0xf]
      %v1160 = vld [vmem:[%s1 + $0x130] sm:$0xf]
      %v1161 = vld [vmem:[%s1 + $0x134] sm:$0xf]
      %v1162 = vld [vmem:[%s1 + $0x138] sm:$0xf]
      %v1163 = vld [vmem:[%s1 + $0x13c] sm:$0xf]
      %v1164 = vld [vmem:[%s1 + $0x140] sm:$0xf]
      %v1165 = vld [vmem:[%s1 + $0x144] sm:$0xf]
      %v1166 = vld [vmem:[%s1 + $0x148] sm:$0xf]
      %v1167 = vld [vmem:[%s1 + $0x14c] sm:$0xf]
      %v1168 = vld [vmem:[%s1 + $0x150] sm:$0xf]
      %v1169 = vld [vmem:[%s1 + $0x154] sm:$0xf]
      %v1170 = vld [vmem:[%s1 + $0x158] sm:$0xf]
      %v1171 = vld [vmem:[%s1 + $0x15c] sm:$0xf]
      %v1172 = vld [vmem:[%s1 + $0x160] sm:$0xf]
      %v1173 = vld [vmem:[%s1 + $0x164] sm:$0xf]
      %v1174 = vld [vmem:[%s1 + $0x168] sm:$0xf]
      %v1175 = vld [vmem:[%s1 + $0x16c] sm:$0xf]
      %v1176 = vld [vmem:[%s1 + $0x170] sm:$0xf]
      %v1177 = vld [vmem:[%s1 + $0x174] sm:$0xf]
      %v1178 = vld [vmem:[%s1 + $0x178] sm:$0xf]
      %v1179 = vld [vmem:[%s1 + $0x17c] sm:$0xf]
      %v1180 = vld [vmem:[%s1 + $0x180] sm:$0xf]
      %v1181 = vld [vmem:[%s1 + $0x184] sm:$0xf]
      %v1182 = vld [vmem:[%s1 + $0x188] sm:$0xf]
      %v1183 = vld [vmem:[%s1 + $0x18c] sm:$0xf]
      %v1184 = vld [vmem:[%s1 + $0x190] sm:$0xf]
      %v1185 = vld [vmem:[%s1 + $0x194] sm:$0xf]
      %v1186 = vld [vmem:[%s1 + $0x198] sm:$0xf]
      %v1187 = vld [vmem:[%s1 + $0x19c] sm:$0xf]
      %v1188 = vld [vmem:[%s1 + $0x1a0] sm:$0xf]
      %v1189 = vld [vmem:[%s1 + $0x1a4] sm:$0xf]
      %v1190 = vld [vmem:[%s1 + $0x1a8] sm:$0xf]
      %v1191 = vld [vmem:[%s1 + $0x1ac] sm:$0xf]
      %v1192 = vld [vmem:[%s1 + $0x1b0] sm:$0xf]
      %v1193 = vld [vmem:[%s1 + $0x1b4] sm:$0xf]
      %v1194 = vld [vmem:[%s1 + $0x1b8] sm:$0xf]
      %v1195 = vld [vmem:[%s1 + $0x1bc] sm:$0xf]
      %v1196 = vld [vmem:[%s1 + $0x1c0] sm:$0xf]
      %v1197 = vld [vmem:[%s1 + $0x1c4] sm:$0xf]
      %v1198 = vld [vmem:[%s1 + $0x1c8] sm:$0xf]
      %v1199 = vld [vmem:[%s1 + $0x1cc] sm:$0xf]
      %v1200 = vld [vmem:[%s1 + $0x1d0] sm:$0xf]
      %v1201 = vld [vmem:[%s1 + $0x1d4] sm:$0xf]
      %v1202 = vld [vmem:[%s1 + $0x1d8] sm:$0xf]
      %v1203 = vld [vmem:[%s1 + $0x1dc] sm:$0xf]
      %v1204 = vld [vmem:[%s1 + $0x1e0] sm:$0xf]
      %v1205 = vld [vmem:[%s1 + $0x1e4] sm:$0xf]
      %v1206 = vld [vmem:[%s1 + $0x1e8] sm:$0xf]
      %v1207 = vld [vmem:[%s1 + $0x1ec] sm:$0xf]
      %v1208 = vld [vmem:[%s1 + $0x1f0] sm:$0xf]
      %v1209 = vld [vmem:[%s1 + $0x1f4] sm:$0xf]
      %v1210 = vld [vmem:[%s1 + $0x1f8] sm:$0xf]
      %v1211 = vld [vmem:[%s1 + $0x1fc] sm:$0xf]
      %v1212 = vld [vmem:[%s1 + $0x200] sm:$0xf]
      %v1213 = vld [vmem:[%s1 + $0x204] sm:$0xf]
      %v1214 = vld [vmem:[%s1 + $0x208] sm:$0xf]
      %v1215 = vld [vmem:[%s1 + $0x20c] sm:$0xf]
      %v1216 = vld [vmem:[%s1 + $0x210] sm:$0xf]
      %v1217 = vld [vmem:[%s1 + $0x214] sm:$0xf]
      %v1218 = vld [vmem:[%s1 + $0x218] sm:$0xf]
      %v1219 = vld [vmem:[%s1 + $0x21c] sm:$0xf]
      %v1220 = vld [vmem:[%s1 + $0x220] sm:$0xf]
      %v1221 = vld [vmem:[%s1 + $0x224] sm:$0xf]
      %v1222 = vld [vmem:[%s1 + $0x228] sm:$0xf]
      %v1223 = vld [vmem:[%s1 + $0x22c] sm:$0xf]
      %v1224 = vld [vmem:[%s1 + $0x230] sm:$0xf]
      %v1225 = vld [vmem:[%s1 + $0x234] sm:$0xf]
      %v1226 = vld [vmem:[%s1 + $0x238] sm:$0xf]
      %v1227 = vld [vmem:[%s1 + $0x23c] sm:$0xf]
      %vm1228 = vsmask.f32 4352
      %v1230 = vshrl.u32 %v445, 16
      %v1232 = vrot.slane %v1230, 3
      %v1233 = vshll.u32 %v445, 16
      %v1235 = vrot.slane %v1233, 4
      %v1236 = vor.u32 %v1232, %v1235
      %v1238 = vshrl.u32 %v446, 16
      %v1240 = vrot.slane %v1238, 3
      %v1241 = vshll.u32 %v446, 16
      %v1243 = vrot.slane %v1241, 4
      %v1244 = vor.u32 %v1240, %v1243
      %v1245 = vsel %vm1228, %v1236, %v1244
      %v1247 = vshrl.u32 %v502, 16
      %v1249 = vrot.slane %v1247, 3
      %v1250 = vshll.u32 %v502, 16
      %v1252 = vrot.slane %v1250, 4
      %v1253 = vor.u32 %v1249, %v1252
      %v1255 = vshrl.u32 %v511, 16
      %v1257 = vrot.slane %v1255, 3
      %v1258 = vshll.u32 %v511, 16
      %v1260 = vrot.slane %v1258, 4
      %v1261 = vor.u32 %v1257, %v1260
      %v1262 = vsel %vm1228, %v1253, %v1261
      %v1264 = vshrl.u32 %v714, 16
      %v1266 = vrot.slane %v1264, 3
      %v1267 = vshll.u32 %v714, 16
      %v1269 = vrot.slane %v1267, 4
      %v1270 = vor.u32 %v1266, %v1269
      %v1272 = vshrl.u32 %v716, 16
      %v1274 = vrot.slane %v1272, 3
      %v1275 = vshll.u32 %v716, 16
      %v1277 = vrot.slane %v1275, 4
      %v1278 = vor.u32 %v1274, %v1277
      %v1279 = vsel %vm1228, %v1270, %v1278
      %v1280 = vrot.slane %v504, 3
      %v1281 = vrot.slane %v507, 4
      %v1282 = vor.u32 %v1280, %v1281
      %v1283 = vrot.slane %v513, 3
      %v1284 = vrot.slane %v516, 4
      %v1285 = vor.u32 %v1283, %v1284
      %v1286 = vsel %vm1228, %v1282, %v1285
      %v1288 = vshrl.u32 %v778, 16
      %v1290 = vrot.slane %v1288, 3
      %v1291 = vshll.u32 %v778, 16
      %v1293 = vrot.slane %v1291, 4
      %v1294 = vor.u32 %v1290, %v1293
      %v1296 = vshrl.u32 %v787, 16
      %v1298 = vrot.slane %v1296, 3
      %v1299 = vshll.u32 %v787, 16
      %v1301 = vrot.slane %v1299, 4
      %v1302 = vor.u32 %v1298, %v1301
      %v1303 = vsel %vm1228, %v1294, %v1302
      %v1305 = vshrl.u32 %v989, 16
      %v1307 = vrot.slane %v1305, 3
      %v1308 = vshll.u32 %v989, 16
      %v1310 = vrot.slane %v1308, 4
      %v1311 = vor.u32 %v1307, %v1310
      %v1313 = vshrl.u32 %v991, 16
      %v1315 = vrot.slane %v1313, 3
      %v1316 = vshll.u32 %v991, 16
      %v1318 = vrot.slane %v1316, 4
      %v1319 = vor.u32 %v1315, %v1318
      %v1320 = vsel %vm1228, %v1311, %v1319
      %v1321 = vrot.slane %v780, 3
      %v1322 = vrot.slane %v783, 4
      %v1323 = vor.u32 %v1321, %v1322
      %v1324 = vrot.slane %v789, 3
      %v1325 = vrot.slane %v792, 4
      %v1326 = vor.u32 %v1324, %v1325
      %v1327 = vsel %vm1228, %v1323, %v1326
      %v1329 = vshrl.u32 %v528, 16
      %v1331 = vrot.slane %v1329, 3
      %v1332 = vshll.u32 %v528, 16
      %v1334 = vrot.slane %v1332, 4
      %v1335 = vor.u32 %v1331, %v1334
      %v1337 = vshrl.u32 %v538, 16
      %v1339 = vrot.slane %v1337, 3
      %v1340 = vshll.u32 %v538, 16
      %v1342 = vrot.slane %v1340, 4
      %v1343 = vor.u32 %v1339, %v1342
      %v1344 = vsel %vm1228, %v1335, %v1343
      %v1346 = vshrl.u32 %v719, 16
      %v1348 = vrot.slane %v1346, 3
      %v1349 = vshll.u32 %v719, 16
      %v1351 = vrot.slane %v1349, 4
      %v1352 = vor.u32 %v1348, %v1351
      %v1354 = vshrl.u32 %v722, 16
      %v1356 = vrot.slane %v1354, 3
      %v1357 = vshll.u32 %v722, 16
      %v1359 = vrot.slane %v1357, 4
      %v1360 = vor.u32 %v1356, %v1359
      %v1361 = vsel %vm1228, %v1352, %v1360
      %v1362 = vrot.slane %v772, 3
      %v1363 = vrot.slane %v775, 4
      %v1364 = vor.u32 %v1362, %v1363
      %v1365 = vsel %vm1228, %v1244, %v1364
      %v1367 = vshrl.u32 %v520, 16
      %v1369 = vrot.slane %v1367, 3
      %v1370 = vshll.u32 %v520, 16
      %v1372 = vrot.slane %v1370, 4
      %v1373 = vor.u32 %v1369, %v1372
      %v1374 = vsel %vm1228, %v1261, %v1373
      %v1376 = vshrl.u32 %v718, 16
      %v1378 = vrot.slane %v1376, 3
      %v1379 = vshll.u32 %v718, 16
      %v1381 = vrot.slane %v1379, 4
      %v1382 = vor.u32 %v1378, %v1381
      %v1383 = vsel %vm1228, %v1278, %v1382
      %v1384 = vrot.slane %v522, 3
      %v1385 = vrot.slane %v525, 4
      %v1386 = vor.u32 %v1384, %v1385
      %v1387 = vsel %vm1228, %v1285, %v1386
      %v1389 = vshrl.u32 %v796, 16
      %v1391 = vrot.slane %v1389, 3
      %v1392 = vshll.u32 %v796, 16
      %v1394 = vrot.slane %v1392, 4
      %v1395 = vor.u32 %v1391, %v1394
      %v1396 = vsel %vm1228, %v1302, %v1395
      %v1398 = vshrl.u32 %v993, 16
      %v1400 = vrot.slane %v1398, 3
      %v1401 = vshll.u32 %v993, 16
      %v1403 = vrot.slane %v1401, 4
      %v1404 = vor.u32 %v1400, %v1403
      %v1405 = vsel %vm1228, %v1319, %v1404
      %v1406 = vrot.slane %v798, 3
      %v1407 = vrot.slane %v801, 4
      %v1408 = vor.u32 %v1406, %v1407
      %v1409 = vsel %vm1228, %v1326, %v1408
      %v1411 = vshrl.u32 %v547, 16
      %v1413 = vrot.slane %v1411, 3
      %v1414 = vshll.u32 %v547, 16
      %v1416 = vrot.slane %v1414, 4
      %v1417 = vor.u32 %v1413, %v1416
      %v1418 = vsel %vm1228, %v1343, %v1417
      %v1420 = vshrl.u32 %v724, 16
      %v1422 = vrot.slane %v1420, 3
      %v1423 = vshll.u32 %v724, 16
      %v1425 = vrot.slane %v1423, 4
      %v1426 = vor.u32 %v1422, %v1425
      %v1427 = vsel %vm1228, %v1360, %v1426
      %v1428 = vsel %vm1228, %v1364, %v1323
      %v1430 = vshrl.u32 %v529, 16
      %v1432 = vrot.slane %v1430, 3
      %v1433 = vshll.u32 %v529, 16
      %v1435 = vrot.slane %v1433, 4
      %v1436 = vor.u32 %v1432, %v1435
      %v1437 = vsel %vm1228, %v1373, %v1436
      %v1439 = vshrl.u32 %v720, 16
      %v1441 = vrot.slane %v1439, 3
      %v1442 = vshll.u32 %v720, 16
      %v1444 = vrot.slane %v1442, 4
      %v1445 = vor.u32 %v1441, %v1444
      %v1446 = vsel %vm1228, %v1382, %v1445
      %v1447 = vrot.slane %v531, 3
      %v1448 = vrot.slane %v534, 4
      %v1449 = vor.u32 %v1447, %v1448
      %v1450 = vsel %vm1228, %v1386, %v1449
      %v1452 = vshrl.u32 %v805, 16
      %v1454 = vrot.slane %v1452, 3
      %v1455 = vshll.u32 %v805, 16
      %v1457 = vrot.slane %v1455, 4
      %v1458 = vor.u32 %v1454, %v1457
      %v1459 = vsel %vm1228, %v1395, %v1458
      %v1461 = vshrl.u32 %v995, 16
      %v1463 = vrot.slane %v1461, 3
      %v1464 = vshll.u32 %v995, 16
      %v1466 = vrot.slane %v1464, 4
      %v1467 = vor.u32 %v1463, %v1466
      %v1468 = vsel %vm1228, %v1404, %v1467
      %v1469 = vrot.slane %v807, 3
      %v1470 = vrot.slane %v810, 4
      %v1471 = vor.u32 %v1469, %v1470
      %v1472 = vsel %vm1228, %v1408, %v1471
      %v1474 = vshrl.u32 %v556, 16
      %v1476 = vrot.slane %v1474, 3
      %v1477 = vshll.u32 %v556, 16
      %v1479 = vrot.slane %v1477, 4
      %v1480 = vor.u32 %v1476, %v1479
      %v1481 = vsel %vm1228, %v1417, %v1480
      %v1483 = vshrl.u32 %v726, 16
      %v1485 = vrot.slane %v1483, 3
      %v1486 = vshll.u32 %v726, 16
      %v1488 = vrot.slane %v1486, 4
      %v1489 = vor.u32 %v1485, %v1488
      %v1490 = vsel %vm1228, %v1426, %v1489
      %v1491 = vsel %vm1228, %v1436, %v1343
      %v1492 = vsel %vm1228, %v1445, %v1360
      %v1493 = vrot.slane %v540, 3
      %v1494 = vrot.slane %v543, 4
      %v1495 = vor.u32 %v1493, %v1494
      %v1496 = vsel %vm1228, %v1449, %v1495
      %v1498 = vshrl.u32 %v814, 16
      %v1500 = vrot.slane %v1498, 3
      %v1501 = vshll.u32 %v814, 16
      %v1503 = vrot.slane %v1501, 4
      %v1504 = vor.u32 %v1500, %v1503
      %v1505 = vsel %vm1228, %v1458, %v1504
      %v1507 = vshrl.u32 %v997, 16
      %v1509 = vrot.slane %v1507, 3
      %v1510 = vshll.u32 %v997, 16
      %v1512 = vrot.slane %v1510, 4
      %v1513 = vor.u32 %v1509, %v1512
      %v1514 = vsel %vm1228, %v1467, %v1513
      %v1515 = vrot.slane %v816, 3
      %v1516 = vrot.slane %v819, 4
      %v1517 = vor.u32 %v1515, %v1516
      %v1518 = vsel %vm1228, %v1471, %v1517
      %v1520 = vshrl.u32 %v565, 16
      %v1522 = vrot.slane %v1520, 3
      %v1523 = vshll.u32 %v565, 16
      %v1525 = vrot.slane %v1523, 4
      %v1526 = vor.u32 %v1522, %v1525
      %v1527 = vsel %vm1228, %v1480, %v1526
      %v1529 = vshrl.u32 %v728, 16
      %v1531 = vrot.slane %v1529, 3
      %v1532 = vshll.u32 %v728, 16
      %v1534 = vrot.slane %v1532, 4
      %v1535 = vor.u32 %v1531, %v1534
      %v1536 = vsel %vm1228, %v1489, %v1535
      %v1537 = vrot.slane %v549, 3
      %v1538 = vrot.slane %v552, 4
      %v1539 = vor.u32 %v1537, %v1538
      %v1540 = vsel %vm1228, %v1495, %v1539
      %v1542 = vshrl.u32 %v823, 16
      %v1544 = vrot.slane %v1542, 3
      %v1545 = vshll.u32 %v823, 16
      %v1547 = vrot.slane %v1545, 4
      %v1548 = vor.u32 %v1544, %v1547
      %v1549 = vsel %vm1228, %v1504, %v1548
      %v1551 = vshrl.u32 %v999, 16
      %v1553 = vrot.slane %v1551, 3
      %v1554 = vshll.u32 %v999, 16
      %v1556 = vrot.slane %v1554, 4
      %v1557 = vor.u32 %v1553, %v1556
      %v1558 = vsel %vm1228, %v1513, %v1557
      %v1559 = vrot.slane %v825, 3
      %v1560 = vrot.slane %v828, 4
      %v1561 = vor.u32 %v1559, %v1560
      %v1562 = vsel %vm1228, %v1517, %v1561
      %v1564 = vshrl.u32 %v574, 16
      %v1566 = vrot.slane %v1564, 3
      %v1567 = vshll.u32 %v574, 16
      %v1569 = vrot.slane %v1567, 4
      %v1570 = vor.u32 %v1566, %v1569
      %v1571 = vsel %vm1228, %v1526, %v1570
      %v1573 = vshrl.u32 %v730, 16
      %v1575 = vrot.slane %v1573, 3
      %v1576 = vshll.u32 %v730, 16
      %v1578 = vrot.slane %v1576, 4
      %v1579 = vor.u32 %v1575, %v1578
      %v1580 = vsel %vm1228, %v1535, %v1579
      %v1581 = vrot.slane %v558, 3
      %v1582 = vrot.slane %v561, 4
      %v1583 = vor.u32 %v1581, %v1582
      %v1584 = vsel %vm1228, %v1539, %v1583
      %v1586 = vshrl.u32 %v832, 16
      %v1588 = vrot.slane %v1586, 3
      %v1589 = vshll.u32 %v832, 16
      %v1591 = vrot.slane %v1589, 4
      %v1592 = vor.u32 %v1588, %v1591
      %v1593 = vsel %vm1228, %v1548, %v1592
      %v1595 = vshrl.u32 %v1001, 16
      %v1597 = vrot.slane %v1595, 3
      %v1598 = vshll.u32 %v1001, 16
      %v1600 = vrot.slane %v1598, 4
      %v1601 = vor.u32 %v1597, %v1600
      %v1602 = vsel %vm1228, %v1557, %v1601
      %v1603 = vrot.slane %v834, 3
      %v1604 = vrot.slane %v837, 4
      %v1605 = vor.u32 %v1603, %v1604
      %v1606 = vsel %vm1228, %v1561, %v1605
      %v1608 = vshrl.u32 %v583, 16
      %v1610 = vrot.slane %v1608, 3
      %v1611 = vshll.u32 %v583, 16
      %v1613 = vrot.slane %v1611, 4
      %v1614 = vor.u32 %v1610, %v1613
      %v1615 = vsel %vm1228, %v1570, %v1614
      %v1617 = vshrl.u32 %v732, 16
      %v1619 = vrot.slane %v1617, 3
      %v1620 = vshll.u32 %v732, 16
      %v1622 = vrot.slane %v1620, 4
      %v1623 = vor.u32 %v1619, %v1622
      %v1624 = vsel %vm1228, %v1579, %v1623
      %v1625 = vrot.slane %v567, 3
      %v1626 = vrot.slane %v570, 4
      %v1627 = vor.u32 %v1625, %v1626
      %v1628 = vsel %vm1228, %v1583, %v1627
      %v1630 = vshrl.u32 %v841, 16
      %v1632 = vrot.slane %v1630, 3
      %v1633 = vshll.u32 %v841, 16
      %v1635 = vrot.slane %v1633, 4
      %v1636 = vor.u32 %v1632, %v1635
      %v1637 = vsel %vm1228, %v1592, %v1636
      %v1639 = vshrl.u32 %v1003, 16
      %v1641 = vrot.slane %v1639, 3
      %v1642 = vshll.u32 %v1003, 16
      %v1644 = vrot.slane %v1642, 4
      %v1645 = vor.u32 %v1641, %v1644
      %v1646 = vsel %vm1228, %v1601, %v1645
      %v1647 = vrot.slane %v843, 3
      %v1648 = vrot.slane %v846, 4
      %v1649 = vor.u32 %v1647, %v1648
      %v1650 = vsel %vm1228, %v1605, %v1649
      %v1652 = vshrl.u32 %v592, 16
      %v1654 = vrot.slane %v1652, 3
      %v1655 = vshll.u32 %v592, 16
      %v1657 = vrot.slane %v1655, 4
      %v1658 = vor.u32 %v1654, %v1657
      %v1659 = vsel %vm1228, %v1614, %v1658
      %v1661 = vshrl.u32 %v734, 16
      %v1663 = vrot.slane %v1661, 3
      %v1664 = vshll.u32 %v734, 16
      %v1666 = vrot.slane %v1664, 4
      %v1667 = vor.u32 %v1663, %v1666
      %v1668 = vsel %vm1228, %v1623, %v1667
      %v1669 = vrot.slane %v576, 3
      %v1670 = vrot.slane %v579, 4
      %v1671 = vor.u32 %v1669, %v1670
      %v1672 = vsel %vm1228, %v1627, %v1671
      %v1674 = vshrl.u32 %v850, 16
      %v1676 = vrot.slane %v1674, 3
      %v1677 = vshll.u32 %v850, 16
      %v1679 = vrot.slane %v1677, 4
      %v1680 = vor.u32 %v1676, %v1679
      %v1681 = vsel %vm1228, %v1636, %v1680
      %v1683 = vshrl.u32 %v1005, 16
      %v1685 = vrot.slane %v1683, 3
      %v1686 = vshll.u32 %v1005, 16
      %v1688 = vrot.slane %v1686, 4
      %v1689 = vor.u32 %v1685, %v1688
      %v1690 = vsel %vm1228, %v1645, %v1689
      %v1691 = vrot.slane %v852, 3
      %v1692 = vrot.slane %v855, 4
      %v1693 = vor.u32 %v1691, %v1692
      %v1694 = vsel %vm1228, %v1649, %v1693
      %v1696 = vshrl.u32 %v601, 16
      %v1698 = vrot.slane %v1696, 3
      %v1699 = vshll.u32 %v601, 16
      %v1701 = vrot.slane %v1699, 4
      %v1702 = vor.u32 %v1698, %v1701
      %v1703 = vsel %vm1228, %v1658, %v1702
      %v1705 = vshrl.u32 %v736, 16
      %v1707 = vrot.slane %v1705, 3
      %v1708 = vshll.u32 %v736, 16
      %v1710 = vrot.slane %v1708, 4
      %v1711 = vor.u32 %v1707, %v1710
      %v1712 = vsel %vm1228, %v1667, %v1711
      %v1713 = vrot.slane %v585, 3
      %v1714 = vrot.slane %v588, 4
      %v1715 = vor.u32 %v1713, %v1714
      %v1716 = vsel %vm1228, %v1671, %v1715
      %v1718 = vshrl.u32 %v859, 16
      %v1720 = vrot.slane %v1718, 3
      %v1721 = vshll.u32 %v859, 16
      %v1723 = vrot.slane %v1721, 4
      %v1724 = vor.u32 %v1720, %v1723
      %v1725 = vsel %vm1228, %v1680, %v1724
      %v1727 = vshrl.u32 %v1007, 16
      %v1729 = vrot.slane %v1727, 3
      %v1730 = vshll.u32 %v1007, 16
      %v1732 = vrot.slane %v1730, 4
      %v1733 = vor.u32 %v1729, %v1732
      %v1734 = vsel %vm1228, %v1689, %v1733
      %v1735 = vrot.slane %v861, 3
      %v1736 = vrot.slane %v864, 4
      %v1737 = vor.u32 %v1735, %v1736
      %v1738 = vsel %vm1228, %v1693, %v1737
      %v1740 = vshrl.u32 %v610, 16
      %v1742 = vrot.slane %v1740, 3
      %v1743 = vshll.u32 %v610, 16
      %v1745 = vrot.slane %v1743, 4
      %v1746 = vor.u32 %v1742, %v1745
      %v1747 = vsel %vm1228, %v1702, %v1746
      %v1749 = vshrl.u32 %v738, 16
      %v1751 = vrot.slane %v1749, 3
      %v1752 = vshll.u32 %v738, 16
      %v1754 = vrot.slane %v1752, 4
      %v1755 = vor.u32 %v1751, %v1754
      %v1756 = vsel %vm1228, %v1711, %v1755
      %v1757 = vrot.slane %v594, 3
      %v1758 = vrot.slane %v597, 4
      %v1759 = vor.u32 %v1757, %v1758
      %v1760 = vsel %vm1228, %v1715, %v1759
      %v1762 = vshrl.u32 %v868, 16
      %v1764 = vrot.slane %v1762, 3
      %v1765 = vshll.u32 %v868, 16
      %v1767 = vrot.slane %v1765, 4
      %v1768 = vor.u32 %v1764, %v1767
      %v1769 = vsel %vm1228, %v1724, %v1768
      %v1771 = vshrl.u32 %v1009, 16
      %v1773 = vrot.slane %v1771, 3
      %v1774 = vshll.u32 %v1009, 16
      %v1776 = vrot.slane %v1774, 4
      %v1777 = vor.u32 %v1773, %v1776
      %v1778 = vsel %vm1228, %v1733, %v1777
      %v1779 = vrot.slane %v870, 3
      %v1780 = vrot.slane %v873, 4
      %v1781 = vor.u32 %v1779, %v1780
      %v1782 = vsel %vm1228, %v1737, %v1781
      %v1784 = vshrl.u32 %v619, 16
      %v1786 = vrot.slane %v1784, 3
      %v1787 = vshll.u32 %v619, 16
      %v1789 = vrot.slane %v1787, 4
      %v1790 = vor.u32 %v1786, %v1789
      %v1791 = vsel %vm1228, %v1746, %v1790
      %v1793 = vshrl.u32 %v740, 16
      %v1795 = vrot.slane %v1793, 3
      %v1796 = vshll.u32 %v740, 16
      %v1798 = vrot.slane %v1796, 4
      %v1799 = vor.u32 %v1795, %v1798
      %v1800 = vsel %vm1228, %v1755, %v1799
      %v1801 = vrot.slane %v603, 3
      %v1802 = vrot.slane %v606, 4
      %v1803 = vor.u32 %v1801, %v1802
      %v1804 = vsel %vm1228, %v1759, %v1803
      %v1806 = vshrl.u32 %v877, 16
      %v1808 = vrot.slane %v1806, 3
      %v1809 = vshll.u32 %v877, 16
      %v1811 = vrot.slane %v1809, 4
      %v1812 = vor.u32 %v1808, %v1811
      %v1813 = vsel %vm1228, %v1768, %v1812
      %v1815 = vshrl.u32 %v1011, 16
      %v1817 = vrot.slane %v1815, 3
      %v1818 = vshll.u32 %v1011, 16
      %v1820 = vrot.slane %v1818, 4
      %v1821 = vor.u32 %v1817, %v1820
      %v1822 = vsel %vm1228, %v1777, %v1821
      %v1823 = vrot.slane %v879, 3
      %v1824 = vrot.slane %v882, 4
      %v1825 = vor.u32 %v1823, %v1824
      %v1826 = vsel %vm1228, %v1781, %v1825
      %v1828 = vshrl.u32 %v628, 16
      %v1830 = vrot.slane %v1828, 3
      %v1831 = vshll.u32 %v628, 16
      %v1833 = vrot.slane %v1831, 4
      %v1834 = vor.u32 %v1830, %v1833
      %v1835 = vsel %vm1228, %v1790, %v1834
      %v1837 = vshrl.u32 %v742, 16
      %v1839 = vrot.slane %v1837, 3
      %v1840 = vshll.u32 %v742, 16
      %v1842 = vrot.slane %v1840, 4
      %v1843 = vor.u32 %v1839, %v1842
      %v1844 = vsel %vm1228, %v1799, %v1843
      %v1845 = vrot.slane %v612, 3
      %v1846 = vrot.slane %v615, 4
      %v1847 = vor.u32 %v1845, %v1846
      %v1848 = vsel %vm1228, %v1803, %v1847
      %v1850 = vshrl.u32 %v886, 16
      %v1852 = vrot.slane %v1850, 3
      %v1853 = vshll.u32 %v886, 16
      %v1855 = vrot.slane %v1853, 4
      %v1856 = vor.u32 %v1852, %v1855
      %v1857 = vsel %vm1228, %v1812, %v1856
      %v1859 = vshrl.u32 %v1013, 16
      %v1861 = vrot.slane %v1859, 3
      %v1862 = vshll.u32 %v1013, 16
      %v1864 = vrot.slane %v1862, 4
      %v1865 = vor.u32 %v1861, %v1864
      %v1866 = vsel %vm1228, %v1821, %v1865
      %v1867 = vrot.slane %v888, 3
      %v1868 = vrot.slane %v891, 4
      %v1869 = vor.u32 %v1867, %v1868
      %v1870 = vsel %vm1228, %v1825, %v1869
      %v1872 = vshrl.u32 %v637, 16
      %v1874 = vrot.slane %v1872, 3
      %v1875 = vshll.u32 %v637, 16
      %v1877 = vrot.slane %v1875, 4
      %v1878 = vor.u32 %v1874, %v1877
      %v1879 = vsel %vm1228, %v1834, %v1878
      %v1881 = vshrl.u32 %v744, 16
      %v1883 = vrot.slane %v1881, 3
      %v1884 = vshll.u32 %v744, 16
      %v1886 = vrot.slane %v1884, 4
      %v1887 = vor.u32 %v1883, %v1886
      %v1888 = vsel %vm1228, %v1843, %v1887
      %v1889 = vrot.slane %v621, 3
      %v1890 = vrot.slane %v624, 4
      %v1891 = vor.u32 %v1889, %v1890
      %v1892 = vsel %vm1228, %v1847, %v1891
      %v1894 = vshrl.u32 %v895, 16
      %v1896 = vrot.slane %v1894, 3
      %v1897 = vshll.u32 %v895, 16
      %v1899 = vrot.slane %v1897, 4
      %v1900 = vor.u32 %v1896, %v1899
      %v1901 = vsel %vm1228, %v1856, %v1900
      %v1903 = vshrl.u32 %v1015, 16
      %v1905 = vrot.slane %v1903, 3
      %v1906 = vshll.u32 %v1015, 16
      %v1908 = vrot.slane %v1906, 4
      %v1909 = vor.u32 %v1905, %v1908
      %v1910 = vsel %vm1228, %v1865, %v1909
      %v1911 = vrot.slane %v897, 3
      %v1912 = vrot.slane %v900, 4
      %v1913 = vor.u32 %v1911, %v1912
      %v1914 = vsel %vm1228, %v1869, %v1913
      %v1916 = vshrl.u32 %v646, 16
      %v1918 = vrot.slane %v1916, 3
      %v1919 = vshll.u32 %v646, 16
      %v1921 = vrot.slane %v1919, 4
      %v1922 = vor.u32 %v1918, %v1921
      %v1923 = vsel %vm1228, %v1878, %v1922
      %v1925 = vshrl.u32 %v746, 16
      %v1927 = vrot.slane %v1925, 3
      %v1928 = vshll.u32 %v746, 16
      %v1930 = vrot.slane %v1928, 4
      %v1931 = vor.u32 %v1927, %v1930
      %v1932 = vsel %vm1228, %v1887, %v1931
      %v1933 = vrot.slane %v630, 3
      %v1934 = vrot.slane %v633, 4
      %v1935 = vor.u32 %v1933, %v1934
      %v1936 = vsel %vm1228, %v1891, %v1935
      %v1938 = vshrl.u32 %v904, 16
      %v1940 = vrot.slane %v1938, 3
      %v1941 = vshll.u32 %v904, 16
      %v1943 = vrot.slane %v1941, 4
      %v1944 = vor.u32 %v1940, %v1943
      %v1945 = vsel %vm1228, %v1900, %v1944
      %v1947 = vshrl.u32 %v1017, 16
      %v1949 = vrot.slane %v1947, 3
      %v1950 = vshll.u32 %v1017, 16
      %v1952 = vrot.slane %v1950, 4
      %v1953 = vor.u32 %v1949, %v1952
      %v1954 = vsel %vm1228, %v1909, %v1953
      %v1955 = vrot.slane %v906, 3
      %v1956 = vrot.slane %v909, 4
      %v1957 = vor.u32 %v1955, %v1956
      %v1958 = vsel %vm1228, %v1913, %v1957
      %v1960 = vshrl.u32 %v655, 16
      %v1962 = vrot.slane %v1960, 3
      %v1963 = vshll.u32 %v655, 16
      %v1965 = vrot.slane %v1963, 4
      %v1966 = vor.u32 %v1962, %v1965
      %v1967 = vsel %vm1228, %v1922, %v1966
      %v1969 = vshrl.u32 %v748, 16
      %v1971 = vrot.slane %v1969, 3
      %v1972 = vshll.u32 %v748, 16
      %v1974 = vrot.slane %v1972, 4
      %v1975 = vor.u32 %v1971, %v1974
      %v1976 = vsel %vm1228, %v1931, %v1975
      %v1977 = vrot.slane %v639, 3
      %v1978 = vrot.slane %v642, 4
      %v1979 = vor.u32 %v1977, %v1978
      %v1980 = vsel %vm1228, %v1935, %v1979
      %v1982 = vshrl.u32 %v913, 16
      %v1984 = vrot.slane %v1982, 3
      %v1985 = vshll.u32 %v913, 16
      %v1987 = vrot.slane %v1985, 4
      %v1988 = vor.u32 %v1984, %v1987
      %v1989 = vsel %vm1228, %v1944, %v1988
      %v1991 = vshrl.u32 %v1019, 16
      %v1993 = vrot.slane %v1991, 3
      %v1994 = vshll.u32 %v1019, 16
      %v1996 = vrot.slane %v1994, 4
      %v1997 = vor.u32 %v1993, %v1996
      %v1998 = vsel %vm1228, %v1953, %v1997
      %v1999 = vrot.slane %v915, 3
      %v2000 = vrot.slane %v918, 4
      %v2001 = vor.u32 %v1999, %v2000
      %v2002 = vsel %vm1228, %v1957, %v2001
      %v2004 = vshrl.u32 %v664, 16
      %v2006 = vrot.slane %v2004, 3
      %v2007 = vshll.u32 %v664, 16
      %v2009 = vrot.slane %v2007, 4
      %v2010 = vor.u32 %v2006, %v2009
      %v2011 = vsel %vm1228, %v1966, %v2010
      %v2013 = vshrl.u32 %v750, 16
      %v2015 = vrot.slane %v2013, 3
      %v2016 = vshll.u32 %v750, 16
      %v2018 = vrot.slane %v2016, 4
      %v2019 = vor.u32 %v2015, %v2018
      %v2020 = vsel %vm1228, %v1975, %v2019
      %v2021 = vrot.slane %v648, 3
      %v2022 = vrot.slane %v651, 4
      %v2023 = vor.u32 %v2021, %v2022
      %v2024 = vsel %vm1228, %v1979, %v2023
      %v2026 = vshrl.u32 %v922, 16
      %v2028 = vrot.slane %v2026, 3
      %v2029 = vshll.u32 %v922, 16
      %v2031 = vrot.slane %v2029, 4
      %v2032 = vor.u32 %v2028, %v2031
      %v2033 = vsel %vm1228, %v1988, %v2032
      %v2035 = vshrl.u32 %v1021, 16
      %v2037 = vrot.slane %v2035, 3
      %v2038 = vshll.u32 %v1021, 16
      %v2040 = vrot.slane %v2038, 4
      %v2041 = vor.u32 %v2037, %v2040
      %v2042 = vsel %vm1228, %v1997, %v2041
      %v2043 = vrot.slane %v924, 3
      %v2044 = vrot.slane %v927, 4
      %v2045 = vor.u32 %v2043, %v2044
      %v2046 = vsel %vm1228, %v2001, %v2045
      %v2048 = vshrl.u32 %v673, 16
      %v2050 = vrot.slane %v2048, 3
      %v2051 = vshll.u32 %v673, 16
      %v2053 = vrot.slane %v2051, 4
      %v2054 = vor.u32 %v2050, %v2053
      %v2055 = vsel %vm1228, %v2010, %v2054
      %v2057 = vshrl.u32 %v752, 16
      %v2059 = vrot.slane %v2057, 3
      %v2060 = vshll.u32 %v752, 16
      %v2062 = vrot.slane %v2060, 4
      %v2063 = vor.u32 %v2059, %v2062
      %v2064 = vsel %vm1228, %v2019, %v2063
      %v2065 = vrot.slane %v657, 3
      %v2066 = vrot.slane %v660, 4
      %v2067 = vor.u32 %v2065, %v2066
      %v2068 = vsel %vm1228, %v2023, %v2067
      %v2070 = vshrl.u32 %v931, 16
      %v2072 = vrot.slane %v2070, 3
      %v2073 = vshll.u32 %v931, 16
      %v2075 = vrot.slane %v2073, 4
      %v2076 = vor.u32 %v2072, %v2075
      %v2077 = vsel %vm1228, %v2032, %v2076
      %v2079 = vshrl.u32 %v1023, 16
      %v2081 = vrot.slane %v2079, 3
      %v2082 = vshll.u32 %v1023, 16
      %v2084 = vrot.slane %v2082, 4
      %v2085 = vor.u32 %v2081, %v2084
      %v2086 = vsel %vm1228, %v2041, %v2085
      %v2087 = vrot.slane %v933, 3
      %v2088 = vrot.slane %v936, 4
      %v2089 = vor.u32 %v2087, %v2088
      %v2090 = vsel %vm1228, %v2045, %v2089
      %v2092 = vshrl.u32 %v682, 16
      %v2094 = vrot.slane %v2092, 3
      %v2095 = vshll.u32 %v682, 16
      %v2097 = vrot.slane %v2095, 4
      %v2098 = vor.u32 %v2094, %v2097
      %v2099 = vsel %vm1228, %v2054, %v2098
      %v2101 = vshrl.u32 %v754, 16
      %v2103 = vrot.slane %v2101, 3
      %v2104 = vshll.u32 %v754, 16
      %v2106 = vrot.slane %v2104, 4
      %v2107 = vor.u32 %v2103, %v2106
      %v2108 = vsel %vm1228, %v2063, %v2107
      %v2109 = vrot.slane %v666, 3
      %v2110 = vrot.slane %v669, 4
      %v2111 = vor.u32 %v2109, %v2110
      %v2112 = vsel %vm1228, %v2067, %v2111
      %v2114 = vshrl.u32 %v940, 16
      %v2116 = vrot.slane %v2114, 3
      %v2117 = vshll.u32 %v940, 16
      %v2119 = vrot.slane %v2117, 4
      %v2120 = vor.u32 %v2116, %v2119
      %v2121 = vsel %vm1228, %v2076, %v2120
      %v2123 = vshrl.u32 %v1025, 16
      %v2125 = vrot.slane %v2123, 3
      %v2126 = vshll.u32 %v1025, 16
      %v2128 = vrot.slane %v2126, 4
      %v2129 = vor.u32 %v2125, %v2128
      %v2130 = vsel %vm1228, %v2085, %v2129
      %v2131 = vrot.slane %v942, 3
      %v2132 = vrot.slane %v945, 4
      %v2133 = vor.u32 %v2131, %v2132
      %v2134 = vsel %vm1228, %v2089, %v2133
      %v2136 = vshrl.u32 %v691, 16
      %v2138 = vrot.slane %v2136, 3
      %v2139 = vshll.u32 %v691, 16
      %v2141 = vrot.slane %v2139, 4
      %v2142 = vor.u32 %v2138, %v2141
      %v2143 = vsel %vm1228, %v2098, %v2142
      %v2145 = vshrl.u32 %v756, 16
      %v2147 = vrot.slane %v2145, 3
      %v2148 = vshll.u32 %v756, 16
      %v2150 = vrot.slane %v2148, 4
      %v2151 = vor.u32 %v2147, %v2150
      %v2152 = vsel %vm1228, %v2107, %v2151
      %v2153 = vrot.slane %v675, 3
      %v2154 = vrot.slane %v678, 4
      %v2155 = vor.u32 %v2153, %v2154
      %v2156 = vsel %vm1228, %v2111, %v2155
      %v2158 = vshrl.u32 %v949, 16
      %v2160 = vrot.slane %v2158, 3
      %v2161 = vshll.u32 %v949, 16
      %v2163 = vrot.slane %v2161, 4
      %v2164 = vor.u32 %v2160, %v2163
      %v2165 = vsel %vm1228, %v2120, %v2164
      %v2167 = vshrl.u32 %v1027, 16
      %v2169 = vrot.slane %v2167, 3
      %v2170 = vshll.u32 %v1027, 16
      %v2172 = vrot.slane %v2170, 4
      %v2173 = vor.u32 %v2169, %v2172
      %v2174 = vsel %vm1228, %v2129, %v2173
      %v2175 = vrot.slane %v951, 3
      %v2176 = vrot.slane %v954, 4
      %v2177 = vor.u32 %v2175, %v2176
      %v2178 = vsel %vm1228, %v2133, %v2177
      %v2180 = vshrl.u32 %v700, 16
      %v2182 = vrot.slane %v2180, 3
      %v2183 = vshll.u32 %v700, 16
      %v2185 = vrot.slane %v2183, 4
      %v2186 = vor.u32 %v2182, %v2185
      %v2187 = vsel %vm1228, %v2142, %v2186
      %v2189 = vshrl.u32 %v758, 16
      %v2191 = vrot.slane %v2189, 3
      %v2192 = vshll.u32 %v758, 16
      %v2194 = vrot.slane %v2192, 4
      %v2195 = vor.u32 %v2191, %v2194
      %v2196 = vsel %vm1228, %v2151, %v2195
      %v2197 = vrot.slane %v684, 3
      %v2198 = vrot.slane %v687, 4
      %v2199 = vor.u32 %v2197, %v2198
      %v2200 = vsel %vm1228, %v2155, %v2199
      %v2202 = vshrl.u32 %v958, 16
      %v2204 = vrot.slane %v2202, 3
      %v2205 = vshll.u32 %v958, 16
      %v2207 = vrot.slane %v2205, 4
      %v2208 = vor.u32 %v2204, %v2207
      %v2209 = vsel %vm1228, %v2164, %v2208
      %v2211 = vshrl.u32 %v1029, 16
      %v2213 = vrot.slane %v2211, 3
      %v2214 = vshll.u32 %v1029, 16
      %v2216 = vrot.slane %v2214, 4
      %v2217 = vor.u32 %v2213, %v2216
      %v2218 = vsel %vm1228, %v2173, %v2217
      %v2219 = vrot.slane %v960, 3
      %v2220 = vrot.slane %v963, 4
      %v2221 = vor.u32 %v2219, %v2220
      %v2222 = vsel %vm1228, %v2177, %v2221
      %v2224 = vshrl.u32 %v709, 16
      %v2226 = vrot.slane %v2224, 3
      %v2227 = vshll.u32 %v709, 16
      %v2229 = vrot.slane %v2227, 4
      %v2230 = vor.u32 %v2226, %v2229
      %v2231 = vsel %vm1228, %v2186, %v2230
      %v2233 = vshrl.u32 %v760, 16
      %v2235 = vrot.slane %v2233, 3
      %v2236 = vshll.u32 %v760, 16
      %v2238 = vrot.slane %v2236, 4
      %v2239 = vor.u32 %v2235, %v2238
      %v2240 = vsel %vm1228, %v2195, %v2239
      %v2241 = vrot.slane %v693, 3
      %v2242 = vrot.slane %v696, 4
      %v2243 = vor.u32 %v2241, %v2242
      %v2244 = vsel %vm1228, %v2199, %v2243
      %v2246 = vshrl.u32 %v967, 16
      %v2248 = vrot.slane %v2246, 3
      %v2249 = vshll.u32 %v967, 16
      %v2251 = vrot.slane %v2249, 4
      %v2252 = vor.u32 %v2248, %v2251
      %v2253 = vsel %vm1228, %v2208, %v2252
      %v2255 = vshrl.u32 %v1031, 16
      %v2257 = vrot.slane %v2255, 3
      %v2258 = vshll.u32 %v1031, 16
      %v2260 = vrot.slane %v2258, 4
      %v2261 = vor.u32 %v2257, %v2260
      %v2262 = vsel %vm1228, %v2217, %v2261
      %v2263 = vrot.slane %v969, 3
      %v2264 = vrot.slane %v972, 4
      %v2265 = vor.u32 %v2263, %v2264
      %v2266 = vsel %vm1228, %v2221, %v2265
      %v2268 = vshrl.u32 %v1054, 16
      %v2270 = vrot.slane %v2268, 3
      %v2271 = vshll.u32 %v1054, 16
      %v2273 = vrot.slane %v2271, 4
      %v2274 = vor.u32 %v2270, %v2273
      %v2275 = vsel %vm1228, %v2230, %v2274
      %v2277 = vshrl.u32 %v1077, 16
      %v2279 = vrot.slane %v2277, 3
      %v2280 = vshll.u32 %v1077, 16
      %v2282 = vrot.slane %v2280, 4
      %v2283 = vor.u32 %v2279, %v2282
      %v2284 = vsel %vm1228, %v2239, %v2283
      %v2285 = vrot.slane %v702, 3
      %v2286 = vrot.slane %v705, 4
      %v2287 = vor.u32 %v2285, %v2286
      %v2288 = vsel %vm1228, %v2243, %v2287
      %v2290 = vshrl.u32 %v976, 16
      %v2292 = vrot.slane %v2290, 3
      %v2293 = vshll.u32 %v976, 16
      %v2295 = vrot.slane %v2293, 4
      %v2296 = vor.u32 %v2292, %v2295
      %v2297 = vsel %vm1228, %v2252, %v2296
      %v2299 = vshrl.u32 %v1033, 16
      %v2301 = vrot.slane %v2299, 3
      %v2302 = vshll.u32 %v1033, 16
      %v2304 = vrot.slane %v2302, 4
      %v2305 = vor.u32 %v2301, %v2304
      %v2306 = vsel %vm1228, %v2261, %v2305
      %v2307 = vrot.slane %v978, 3
      %v2308 = vrot.slane %v981, 4
      %v2309 = vor.u32 %v2307, %v2308
      %v2310 = vsel %vm1228, %v2265, %v2309
      %v2312 = vshrl.u32 %v1063, 16
      %v2314 = vrot.slane %v2312, 3
      %v2315 = vshll.u32 %v1063, 16
      %v2317 = vrot.slane %v2315, 4
      %v2318 = vor.u32 %v2314, %v2317
      %v2319 = vsel %vm1228, %v2274, %v2318
      %v2321 = vshrl.u32 %v1079, 16
      %v2323 = vrot.slane %v2321, 3
      %v2324 = vshll.u32 %v1079, 16
      %v2326 = vrot.slane %v2324, 4
      %v2327 = vor.u32 %v2323, %v2326
      %v2328 = vsel %vm1228, %v2283, %v2327
      %v2329 = vrot.slane %v1047, 3
      %v2330 = vrot.slane %v1050, 4
      %v2331 = vor.u32 %v2329, %v2330
      %v2332 = vsel %vm1228, %v2287, %v2331
      %v2334 = vshrl.u32 %v985, 16
      %v2336 = vrot.slane %v2334, 3
      %v2337 = vshll.u32 %v985, 16
      %v2339 = vrot.slane %v2337, 4
      %v2340 = vor.u32 %v2336, %v2339
      %v2341 = vsel %vm1228, %v2296, %v2340
      %v2343 = vshrl.u32 %v1035, 16
      %v2345 = vrot.slane %v2343, 3
      %v2346 = vshll.u32 %v1035, 16
      %v2348 = vrot.slane %v2346, 4
      %v2349 = vor.u32 %v2345, %v2348
      %v2350 = vsel %vm1228, %v2305, %v2349
      %v2352 = vshrl.u32 %v1042, 16
      %v2354 = vrot.slane %v2352, 3
      %v2355 = vshll.u32 %v1042, 16
      %v2357 = vrot.slane %v2355, 4
      %v2358 = vor.u32 %v2354, %v2357
      %v2359 = vsel %vm1228, %v2309, %v2358
      %v2361 = vshrl.u32 %v1072, 16
      %v2363 = vrot.slane %v2361, 3
      %v2364 = vshll.u32 %v1072, 16
      %v2366 = vrot.slane %v2364, 4
      %v2367 = vor.u32 %v2363, %v2366
      %v2368 = vsel %vm1228, %v2318, %v2367
      %v2370 = vshrl.u32 %v1081, 16
      %v2372 = vrot.slane %v2370, 3
      %v2373 = vshll.u32 %v1081, 16
      %v2375 = vrot.slane %v2373, 4
      %v2376 = vor.u32 %v2372, %v2375
      %v2377 = vsel %vm1228, %v2327, %v2376
      %v2379 = vshrl.u32 %v469, 16
      %v2381 = vrot.slane %v2379, 3
      %v2382 = vshll.u32 %v469, 16
      %v2384 = vrot.slane %v2382, 4
      %v2385 = vor.u32 %v2381, %v2384
      %v2386 = vsel %vm1228, %v2221, %v2385
      %v2388 = vshrl.u32 %v708, 16
      %v2390 = vrot.slane %v2388, 3
      %v2391 = vshll.u32 %v708, 16
      %v2393 = vrot.slane %v2391, 4
      %v2394 = vor.u32 %v2390, %v2393
      %v2395 = vsel %vm1228, %v2230, %v2394
      %v2397 = vshrl.u32 %v762, 16
      %v2399 = vrot.slane %v2397, 3
      %v2400 = vshll.u32 %v762, 16
      %v2402 = vrot.slane %v2400, 4
      %v2403 = vor.u32 %v2399, %v2402
      %v2404 = vsel %vm1228, %v2239, %v2403
      %v2406 = vshrl.u32 %v768, 16
      %v2408 = vrot.slane %v2406, 3
      %v2409 = vshll.u32 %v768, 16
      %v2411 = vrot.slane %v2409, 4
      %v2412 = vor.u32 %v2408, %v2411
      %v2413 = vsel %vm1228, %v2331, %v2412
      %v2415 = vshrl.u32 %v984, 16
      %v2417 = vrot.slane %v2415, 3
      %v2418 = vshll.u32 %v984, 16
      %v2420 = vrot.slane %v2418, 4
      %v2421 = vor.u32 %v2417, %v2420
      %v2422 = vsel %vm1228, %v2340, %v2421
      %v2424 = vshrl.u32 %v1037, 16
      %v2426 = vrot.slane %v2424, 3
      %v2427 = vshll.u32 %v1037, 16
      %v2429 = vrot.slane %v2427, 4
      %v2430 = vor.u32 %v2426, %v2429
      %v2431 = vsel %vm1228, %v2349, %v2430
      %v2433 = vshrl.u32 %v1043, 16
      %v2435 = vrot.slane %v2433, 3
      %v2436 = vshll.u32 %v1043, 16
      %v2438 = vrot.slane %v2436, 4
      %v2439 = vor.u32 %v2435, %v2438
      %v2440 = vsel %vm1228, %v2358, %v2439
      %v2442 = vshrl.u32 %v1071, 16
      %v2444 = vrot.slane %v2442, 3
      %v2445 = vshll.u32 %v1071, 16
      %v2447 = vrot.slane %v2445, 4
      %v2448 = vor.u32 %v2444, %v2447
      %v2449 = vsel %vm1228, %v2367, %v2448
      %v2451 = vshrl.u32 %v1083, 16
      %v2453 = vrot.slane %v2451, 3
      %v2454 = vshll.u32 %v1083, 16
      %v2456 = vrot.slane %v2454, 4
      %v2457 = vor.u32 %v2453, %v2456
      %v2458 = vsel %vm1228, %v2376, %v2457
      %v2761 = vunpack.c.l.b16 %v1084
      %v2762 = vunpack.c.l.b16 %v1085
      %v2763 = vunpack.c.l.b16 %v1086
      %v2764 = vunpack.c.l.b16 %v1087
      %v2765 = vunpack.c.l.b16 %v1088
      %v2766 = vunpack.c.l.b16 %v1089
      %v2767 = vunpack.c.l.b16 %v1090
      %v2768 = vunpack.c.l.b16 %v1091
      %v2769 = vunpack.c.l.b16 %v1092
      %v2770 = vunpack.c.l.b16 %v1093
      %v2771 = vunpack.c.l.b16 %v1094
      %v2772 = vunpack.c.l.b16 %v1095
      %v2773 = vunpack.c.l.b16 %v1096
      %v2774 = vunpack.c.l.b16 %v1097
      %v2775 = vunpack.c.l.b16 %v1098
      %v2776 = vunpack.c.l.b16 %v1099
      %v2777 = vunpack.c.l.b16 %v1100
      %v2778 = vunpack.c.l.b16 %v1101
      %v2779 = vunpack.c.l.b16 %v1102
      %v2780 = vunpack.c.l.b16 %v1103
      %v2781 = vunpack.c.l.b16 %v1104
      %v2782 = vunpack.c.l.b16 %v1105
      %v2783 = vunpack.c.l.b16 %v1106
      %v2784 = vunpack.c.l.b16 %v1107
      %v2785 = vunpack.c.l.b16 %v1108
      %v2786 = vunpack.c.l.b16 %v1109
      %v2787 = vunpack.c.l.b16 %v1110
      %v2788 = vunpack.c.l.b16 %v1111
      %v2789 = vunpack.c.l.b16 %v1112
      %v2790 = vunpack.c.l.b16 %v1113
      %v2791 = vunpack.c.l.b16 %v1114
      %v2792 = vunpack.c.l.b16 %v1115
      %v2793 = vunpack.c.l.b16 %v1116
      %v2794 = vunpack.c.l.b16 %v1117
      %v2795 = vunpack.c.l.b16 %v1118
      %v2796 = vunpack.c.l.b16 %v1119
      %v2797 = vunpack.c.l.b16 %v1120
      %v2798 = vunpack.c.l.b16 %v1121
      %v2799 = vunpack.c.l.b16 %v1122
      %v2800 = vunpack.c.l.b16 %v1123
      %v2801 = vunpack.c.l.b16 %v1124
      %v2802 = vunpack.c.l.b16 %v1125
      %v2803 = vunpack.c.l.b16 %v1126
      %v2804 = vunpack.c.l.b16 %v1127
      %v2805 = vunpack.c.l.b16 %v1128
      %v2806 = vunpack.c.l.b16 %v1129
      %v2807 = vunpack.c.l.b16 %v1130
      %v2808 = vunpack.c.l.b16 %v1131
      %v2809 = vunpack.c.l.b16 %v1132
      %v2810 = vunpack.c.l.b16 %v1133
      %v2811 = vunpack.c.l.b16 %v1134
      %v2812 = vunpack.c.l.b16 %v1135
      %v2813 = vunpack.c.l.b16 %v1136
      %v2814 = vunpack.c.l.b16 %v1137
      %v2815 = vunpack.c.l.b16 %v1138
      %v2816 = vunpack.c.l.b16 %v1139
      %v2817 = vunpack.c.l.b16 %v1140
      %v2818 = vunpack.c.l.b16 %v1141
      %v2819 = vunpack.c.l.b16 %v1142
      %v2820 = vunpack.c.l.b16 %v1143
      %v2821 = vunpack.c.l.b16 %v1144
      %v2822 = vunpack.c.l.b16 %v1145
      %v2823 = vunpack.c.l.b16 %v1146
      %v2824 = vunpack.c.l.b16 %v1147
      %v2825 = vunpack.c.l.b16 %v1148
      %v2826 = vunpack.c.l.b16 %v1149
      %v2827 = vunpack.c.l.b16 %v1150
      %v2828 = vunpack.c.l.b16 %v1151
      %v2829 = vunpack.c.l.b16 %v1152
      %v2830 = vunpack.c.l.b16 %v1153
      %v2831 = vunpack.c.l.b16 %v1154
      %v2832 = vunpack.c.l.b16 %v1155
      %v2833 = vunpack.c.l.b16 %v1156
      %v2834 = vunpack.c.l.b16 %v1157
      %v2835 = vunpack.c.l.b16 %v1158
      %v2836 = vunpack.c.l.b16 %v1159
      %v2837 = vunpack.c.l.b16 %v1160
      %v2838 = vunpack.c.l.b16 %v1161
      %v2839 = vunpack.c.l.b16 %v1162
      %v2840 = vunpack.c.l.b16 %v1163
      %v2841 = vunpack.c.l.b16 %v1164
      %v2842 = vunpack.c.l.b16 %v1165
      %v2843 = vunpack.c.l.b16 %v1166
      %v2844 = vunpack.c.l.b16 %v1167
      %v2845 = vunpack.c.l.b16 %v1168
      %v2846 = vunpack.c.l.b16 %v1169
      %v2847 = vunpack.c.l.b16 %v1170
      %v2848 = vunpack.c.l.b16 %v1171
      %v2849 = vunpack.c.l.b16 %v1172
      %v2850 = vunpack.c.l.b16 %v1173
      %v2851 = vunpack.c.l.b16 %v1174
      %v2852 = vunpack.c.l.b16 %v1175
      %v2853 = vunpack.c.l.b16 %v1176
      %v2854 = vunpack.c.l.b16 %v1177
      %v2855 = vunpack.c.l.b16 %v1178
      %v2856 = vunpack.c.l.b16 %v1179
      %v2857 = vunpack.c.l.b16 %v1180
      %v2858 = vunpack.c.l.b16 %v1181
      %v2859 = vunpack.c.l.b16 %v1182
      %v2860 = vunpack.c.l.b16 %v1183
      %v2861 = vunpack.c.l.b16 %v1184
      %v2862 = vunpack.c.l.b16 %v1185
      %v2863 = vunpack.c.l.b16 %v1186
      %v2864 = vunpack.c.l.b16 %v1187
      %v2865 = vunpack.c.l.b16 %v1188
      %v2866 = vunpack.c.l.b16 %v1189
      %v2867 = vunpack.c.l.b16 %v1190
      %v2868 = vunpack.c.l.b16 %v1191
      %v2869 = vunpack.c.l.b16 %v1192
      %v2870 = vunpack.c.l.b16 %v1193
      %v2871 = vunpack.c.l.b16 %v1194
      %v2872 = vunpack.c.l.b16 %v1195
      %v2873 = vunpack.c.l.b16 %v1196
      %v2874 = vunpack.c.l.b16 %v1197
      %v2875 = vunpack.c.l.b16 %v1198
      %v2876 = vunpack.c.l.b16 %v1199
      %v2877 = vunpack.c.l.b16 %v1200
      %v2878 = vunpack.c.l.b16 %v1201
      %v2879 = vunpack.c.l.b16 %v1202
      %v2880 = vunpack.c.l.b16 %v1203
      %v2881 = vunpack.c.l.b16 %v1204
      %v2882 = vunpack.c.l.b16 %v1205
      %v2883 = vunpack.c.l.b16 %v1206
      %v2884 = vunpack.c.l.b16 %v1207
      %v2885 = vunpack.c.l.b16 %v1208
      %v2886 = vunpack.c.l.b16 %v1209
      %v2887 = vunpack.c.l.b16 %v1210
      %v2888 = vunpack.c.l.b16 %v1211
      %v2889 = vunpack.c.l.b16 %v1212
      %v2890 = vunpack.c.l.b16 %v1213
      %v2891 = vunpack.c.l.b16 %v1214
      %v2892 = vunpack.c.l.b16 %v1215
      %v2893 = vunpack.c.l.b16 %v1216
      %v2894 = vunpack.c.l.b16 %v1217
      %v2895 = vunpack.c.l.b16 %v1218
      %v2896 = vunpack.c.l.b16 %v1219
      %v2897 = vunpack.c.l.b16 %v1220
      %v2898 = vunpack.c.l.b16 %v1221
      %v2899 = vunpack.c.l.b16 %v1222
      %v2900 = vunpack.c.l.b16 %v1223
      %v2901 = vunpack.c.l.b16 %v1224
      %v2902 = vunpack.c.l.b16 %v1225
      %v2903 = vunpack.c.l.b16 %v1226
      %v2904 = vunpack.c.l.b16 %v1227
      %v2905 = vpack.c.b16 %v2762, %v2761
      %v2906 = vpack.c.b16 %v2764, %v2763
      %v2907 = vpack.c.b16 %v2766, %v2765
      %v2908 = vpack.c.b16 %v2768, %v2767
      %v2909 = vpack.c.b16 %v2770, %v2769
      %v2910 = vpack.c.b16 %v2772, %v2771
      %v2911 = vpack.c.b16 %v2774, %v2773
      %v2912 = vpack.c.b16 %v2776, %v2775
      %v2913 = vpack.c.b16 %v2778, %v2777
      %v2914 = vpack.c.b16 %v2780, %v2779
      %v2915 = vpack.c.b16 %v2782, %v2781
      %v2916 = vpack.c.b16 %v2784, %v2783
      %v2917 = vpack.c.b16 %v2786, %v2785
      %v2918 = vpack.c.b16 %v2788, %v2787
      %v2919 = vpack.c.b16 %v2790, %v2789
      %v2920 = vpack.c.b16 %v2792, %v2791
      %v2921 = vpack.c.b16 %v2794, %v2793
      %v2922 = vpack.c.b16 %v2796, %v2795
      %v2923 = vpack.c.b16 %v2798, %v2797
      %v2924 = vpack.c.b16 %v2800, %v2799
      %v2925 = vpack.c.b16 %v2802, %v2801
      %v2926 = vpack.c.b16 %v2804, %v2803
      %v2927 = vpack.c.b16 %v2806, %v2805
      %v2928 = vpack.c.b16 %v2808, %v2807
      %v2929 = vpack.c.b16 %v2810, %v2809
      %v2930 = vpack.c.b16 %v2812, %v2811
      %v2931 = vpack.c.b16 %v2814, %v2813
      %v2932 = vpack.c.b16 %v2816, %v2815
      %v2933 = vpack.c.b16 %v2818, %v2817
      %v2934 = vpack.c.b16 %v2820, %v2819
      %v2935 = vpack.c.b16 %v2822, %v2821
      %v2936 = vpack.c.b16 %v2824, %v2823
      %v2937 = vpack.c.b16 %v2826, %v2825
      %v2938 = vpack.c.b16 %v2828, %v2827
      %v2939 = vpack.c.b16 %v2830, %v2829
      %v2940 = vpack.c.b16 %v2832, %v2831
      %v2941 = vpack.c.b16 %v2834, %v2833
      %v2942 = vpack.c.b16 %v2836, %v2835
      %v2943 = vpack.c.b16 %v2838, %v2837
      %v2944 = vpack.c.b16 %v2840, %v2839
      %v2945 = vpack.c.b16 %v2842, %v2841
      %v2946 = vpack.c.b16 %v2844, %v2843
      %v2947 = vpack.c.b16 %v2846, %v2845
      %v2948 = vpack.c.b16 %v2848, %v2847
      %v2949 = vpack.c.b16 %v2850, %v2849
      %v2950 = vpack.c.b16 %v2852, %v2851
      %v2951 = vpack.c.b16 %v2854, %v2853
      %v2952 = vpack.c.b16 %v2856, %v2855
      %v2953 = vpack.c.b16 %v2858, %v2857
      %v2954 = vpack.c.b16 %v2860, %v2859
      %v2955 = vpack.c.b16 %v2862, %v2861
      %v2956 = vpack.c.b16 %v2864, %v2863
      %v2957 = vpack.c.b16 %v2866, %v2865
      %v2958 = vpack.c.b16 %v2868, %v2867
      %v2959 = vpack.c.b16 %v2870, %v2869
      %v2960 = vpack.c.b16 %v2872, %v2871
      %v2961 = vpack.c.b16 %v2874, %v2873
      %v2962 = vpack.c.b16 %v2876, %v2875
      %v2963 = vpack.c.b16 %v2878, %v2877
      %v2964 = vpack.c.b16 %v2880, %v2879
      %v2965 = vpack.c.b16 %v2882, %v2881
      %v2966 = vpack.c.b16 %v2884, %v2883
      %v2967 = vpack.c.b16 %v2886, %v2885
      %v2968 = vpack.c.b16 %v2888, %v2887
      %v2969 = vpack.c.b16 %v2890, %v2889
      %v2970 = vpack.c.b16 %v2892, %v2891
      %v2971 = vpack.c.b16 %v2894, %v2893
      %v2972 = vpack.c.b16 %v2896, %v2895
      %v2973 = vpack.c.b16 %v2898, %v2897
      %v2974 = vpack.c.b16 %v2900, %v2899
      %v2975 = vpack.c.b16 %v2902, %v2901
      %v2976 = vpack.c.b16 %v2904, %v2903
      %3049 = vmatpush.bf16.msra.mxu0 %v2912
      %3050 = vmatpush.bf16.msra.mxu0 %v2911
      %3051 = vmatpush.bf16.msra.mxu0 %v2910
      %3052 = vmatpush.bf16.msra.mxu0 %v2909
      %3053 = vmatpush.bf16.msra.mxu0 %v2908
      %3054 = vmatpush.bf16.msra.mxu0 %v2907
      %3055 = vmatpush.bf16.msra.mxu0 %v2906
      %3056 = vmatpush.bf16.msra.mxu0 %v2905
      %3057 = vmatmul.bf16.gmra.mxu0 %v1245
      %v3058 = vpop.f32.mrf.mxu0
      %v3059 = vadd.f32 0.0, %v3058
      %v3060 = vpop.f32.mrf.mxu0
      %v3061 = vadd.f32 0.0, %v3060
      %3062 = vmatmul.bf16.gmra.mxu0 %v1365
      %v3063 = vpop.f32.mrf.mxu0
      %v3064 = vadd.f32 0.0, %v3063
      %v3065 = vpop.f32.mrf.mxu0
      %v3066 = vadd.f32 0.0, %v3065
      %3067 = vmatmul.bf16.gmra.mxu0 %v1428
      %v3068 = vpop.f32.mrf.mxu0
      %v3069 = vadd.f32 0.0, %v3068
      %v3070 = vpop.f32.mrf.mxu0
      %v3071 = vadd.f32 0.0, %v3070
      %3072 = vmatmul.bf16.gmra.mxu0 %v1327
      %v3073 = vpop.f32.mrf.mxu0
      %v3074 = vadd.f32 0.0, %v3073
      %v3075 = vpop.f32.mrf.mxu0
      %v3076 = vadd.f32 0.0, %v3075
      %3077 = vmatmul.bf16.gmra.mxu0 %v1409
      %v3078 = vpop.f32.mrf.mxu0
      %v3079 = vadd.f32 0.0, %v3078
      %v3080 = vpop.f32.mrf.mxu0
      %v3081 = vadd.f32 0.0, %v3080
      %3082 = vmatmul.bf16.gmra.mxu0 %v1472
      %v3083 = vpop.f32.mrf.mxu0
      %v3084 = vadd.f32 0.0, %v3083
      %v3085 = vpop.f32.mrf.mxu0
      %v3086 = vadd.f32 0.0, %v3085
      %3087 = vmatmul.bf16.gmra.mxu0 %v1518
      %v3088 = vpop.f32.mrf.mxu0
      %v3089 = vadd.f32 0.0, %v3088
      %v3090 = vpop.f32.mrf.mxu0
      %v3091 = vadd.f32 0.0, %v3090
      %3092 = vmatmul.bf16.gmra.mxu0 %v1562
      %v3093 = vpop.f32.mrf.mxu0
      %v3094 = vadd.f32 0.0, %v3093
      %v3095 = vpop.f32.mrf.mxu0
      %v3096 = vadd.f32 0.0, %v3095
      %3097 = vmatmul.bf16.gmra.mxu0 %v1606
      %v3098 = vpop.f32.mrf.mxu0
      %v3099 = vadd.f32 0.0, %v3098
      %v3100 = vpop.f32.mrf.mxu0
      %v3101 = vadd.f32 0.0, %v3100
      %3102 = vmatmul.bf16.gmra.mxu0 %v1650
      %v3103 = vpop.f32.mrf.mxu0
      %v3104 = vadd.f32 0.0, %v3103
      %v3105 = vpop.f32.mrf.mxu0
      %v3106 = vadd.f32 0.0, %v3105
      %3107 = vmatmul.bf16.gmra.mxu0 %v1694
      %v3108 = vpop.f32.mrf.mxu0
      %v3109 = vadd.f32 0.0, %v3108
      %v3110 = vpop.f32.mrf.mxu0
      %v3111 = vadd.f32 0.0, %v3110
      %3112 = vmatmul.bf16.gmra.mxu0 %v1738
      %v3113 = vpop.f32.mrf.mxu0
      %v3114 = vadd.f32 0.0, %v3113
      %v3115 = vpop.f32.mrf.mxu0
      %v3116 = vadd.f32 0.0, %v3115
      %3117 = vmatmul.bf16.gmra.mxu0 %v1782
      %v3118 = vpop.f32.mrf.mxu0
      %v3119 = vadd.f32 0.0, %v3118
      %v3120 = vpop.f32.mrf.mxu0
      %v3121 = vadd.f32 0.0, %v3120
      %3122 = vmatmul.bf16.gmra.mxu0 %v1826
      %v3123 = vpop.f32.mrf.mxu0
      %v3124 = vadd.f32 0.0, %v3123
      %v3125 = vpop.f32.mrf.mxu0
      %v3126 = vadd.f32 0.0, %v3125
      %3127 = vmatmul.bf16.gmra.mxu0 %v1870
      %v3128 = vpop.f32.mrf.mxu0
      %v3129 = vadd.f32 0.0, %v3128
      %v3130 = vpop.f32.mrf.mxu0
      %v3131 = vadd.f32 0.0, %v3130
      %3132 = vmatmul.bf16.gmra.mxu0 %v1914
      %v3133 = vpop.f32.mrf.mxu0
      %v3134 = vadd.f32 0.0, %v3133
      %v3135 = vpop.f32.mrf.mxu0
      %v3136 = vadd.f32 0.0, %v3135
      %3137 = vmatmul.bf16.gmra.mxu0 %v1958
      %v3138 = vpop.f32.mrf.mxu0
      %v3139 = vadd.f32 0.0, %v3138
      %v3140 = vpop.f32.mrf.mxu0
      %v3141 = vadd.f32 0.0, %v3140
      %3142 = vmatmul.bf16.gmra.mxu0 %v2002
      %v3143 = vpop.f32.mrf.mxu0
      %v3144 = vadd.f32 0.0, %v3143
      %v3145 = vpop.f32.mrf.mxu0
      %v3146 = vadd.f32 0.0, %v3145
      %3147 = vmatmul.bf16.gmra.mxu0 %v2046
      %v3148 = vpop.f32.mrf.mxu0
      %v3149 = vadd.f32 0.0, %v3148
      %v3150 = vpop.f32.mrf.mxu0
      %v3151 = vadd.f32 0.0, %v3150
      %3152 = vmatmul.bf16.gmra.mxu0 %v2090
      %v3153 = vpop.f32.mrf.mxu0
      %v3154 = vadd.f32 0.0, %v3153
      %v3155 = vpop.f32.mrf.mxu0
      %v3156 = vadd.f32 0.0, %v3155
      %3157 = vmatmul.bf16.gmra.mxu0 %v2134
      %v3158 = vpop.f32.mrf.mxu0
      %v3159 = vadd.f32 0.0, %v3158
      %v3160 = vpop.f32.mrf.mxu0
      %v3161 = vadd.f32 0.0, %v3160
      %3162 = vmatmul.bf16.gmra.mxu0 %v2178
      %v3163 = vpop.f32.mrf.mxu0
      %v3164 = vadd.f32 0.0, %v3163
      %v3165 = vpop.f32.mrf.mxu0
      %v3166 = vadd.f32 0.0, %v3165
      %3167 = vmatmul.bf16.gmra.mxu0 %v2222
      %v3168 = vpop.f32.mrf.mxu0
      %v3169 = vadd.f32 0.0, %v3168
      %v3170 = vpop.f32.mrf.mxu0
      %v3171 = vadd.f32 0.0, %v3170
      %3172 = vmatmul.bf16.gmra.mxu0 %v2386
      %v3173 = vpop.f32.mrf.mxu0
      %v3174 = vadd.f32 0.0, %v3173
      %v3175 = vpop.f32.mrf.mxu0
      %v3176 = vadd.f32 0.0, %v3175
      %3177 = vdwg.mxu0
      %3178 = vmatpush.bf16.msra.mxu0 %v2920
      %3179 = vmatpush.bf16.msra.mxu0 %v2919
      %3180 = vmatpush.bf16.msra.mxu0 %v2918
      %3181 = vmatpush.bf16.msra.mxu0 %v2917
      %3182 = vmatpush.bf16.msra.mxu0 %v2916
      %3183 = vmatpush.bf16.msra.mxu0 %v2915
      %3184 = vmatpush.bf16.msra.mxu0 %v2914
      %3185 = vmatpush.bf16.msra.mxu0 %v2913
      %3186 = vmatmul.bf16.gmra.mxu0 %v1262
      %v3187 = vpop.f32.mrf.mxu0
      %v3188 = vadd.f32 %v3059, %v3187
      %v3189 = vpop.f32.mrf.mxu0
      %v3190 = vadd.f32 %v3061, %v3189
      %3191 = vmatmul.bf16.gmra.mxu0 %v1374
      %v3192 = vpop.f32.mrf.mxu0
      %v3193 = vadd.f32 %v3064, %v3192
      %v3194 = vpop.f32.mrf.mxu0
      %v3195 = vadd.f32 %v3066, %v3194
      %3196 = vmatmul.bf16.gmra.mxu0 %v1437
      %v3197 = vpop.f32.mrf.mxu0
      %v3198 = vadd.f32 %v3069, %v3197
      %v3199 = vpop.f32.mrf.mxu0
      %v3200 = vadd.f32 %v3071, %v3199
      %3201 = vmatmul.bf16.gmra.mxu0 %v1491
      %v3202 = vpop.f32.mrf.mxu0
      %v3203 = vadd.f32 %v3074, %v3202
      %v3204 = vpop.f32.mrf.mxu0
      %v3205 = vadd.f32 %v3076, %v3204
      %3206 = vmatmul.bf16.gmra.mxu0 %v1418
      %v3207 = vpop.f32.mrf.mxu0
      %v3208 = vadd.f32 %v3079, %v3207
      %v3209 = vpop.f32.mrf.mxu0
      %v3210 = vadd.f32 %v3081, %v3209
      %3211 = vmatmul.bf16.gmra.mxu0 %v1481
      %v3212 = vpop.f32.mrf.mxu0
      %v3213 = vadd.f32 %v3084, %v3212
      %v3214 = vpop.f32.mrf.mxu0
      %v3215 = vadd.f32 %v3086, %v3214
      %3216 = vmatmul.bf16.gmra.mxu0 %v1527
      %v3217 = vpop.f32.mrf.mxu0
      %v3218 = vadd.f32 %v3089, %v3217
      %v3219 = vpop.f32.mrf.mxu0
      %v3220 = vadd.f32 %v3091, %v3219
      %3221 = vmatmul.bf16.gmra.mxu0 %v1571
      %v3222 = vpop.f32.mrf.mxu0
      %v3223 = vadd.f32 %v3094, %v3222
      %v3224 = vpop.f32.mrf.mxu0
      %v3225 = vadd.f32 %v3096, %v3224
      %3226 = vmatmul.bf16.gmra.mxu0 %v1615
      %v3227 = vpop.f32.mrf.mxu0
      %v3228 = vadd.f32 %v3099, %v3227
      %v3229 = vpop.f32.mrf.mxu0
      %v3230 = vadd.f32 %v3101, %v3229
      %3231 = vmatmul.bf16.gmra.mxu0 %v1659
      %v3232 = vpop.f32.mrf.mxu0
      %v3233 = vadd.f32 %v3104, %v3232
      %v3234 = vpop.f32.mrf.mxu0
      %v3235 = vadd.f32 %v3106, %v3234
      %3236 = vmatmul.bf16.gmra.mxu0 %v1703
      %v3237 = vpop.f32.mrf.mxu0
      %v3238 = vadd.f32 %v3109, %v3237
      %v3239 = vpop.f32.mrf.mxu0
      %v3240 = vadd.f32 %v3111, %v3239
      %3241 = vmatmul.bf16.gmra.mxu0 %v1747
      %v3242 = vpop.f32.mrf.mxu0
      %v3243 = vadd.f32 %v3114, %v3242
      %v3244 = vpop.f32.mrf.mxu0
      %v3245 = vadd.f32 %v3116, %v3244
      %3246 = vmatmul.bf16.gmra.mxu0 %v1791
      %v3247 = vpop.f32.mrf.mxu0
      %v3248 = vadd.f32 %v3119, %v3247
      %v3249 = vpop.f32.mrf.mxu0
      %v3250 = vadd.f32 %v3121, %v3249
      %3251 = vmatmul.bf16.gmra.mxu0 %v1835
      %v3252 = vpop.f32.mrf.mxu0
      %v3253 = vadd.f32 %v3124, %v3252
      %v3254 = vpop.f32.mrf.mxu0
      %v3255 = vadd.f32 %v3126, %v3254
      %3256 = vmatmul.bf16.gmra.mxu0 %v1879
      %v3257 = vpop.f32.mrf.mxu0
      %v3258 = vadd.f32 %v3129, %v3257
      %v3259 = vpop.f32.mrf.mxu0
      %v3260 = vadd.f32 %v3131, %v3259
      %3261 = vmatmul.bf16.gmra.mxu0 %v1923
      %v3262 = vpop.f32.mrf.mxu0
      %v3263 = vadd.f32 %v3134, %v3262
      %v3264 = vpop.f32.mrf.mxu0
      %v3265 = vadd.f32 %v3136, %v3264
      %3266 = vmatmul.bf16.gmra.mxu0 %v1967
      %v3267 = vpop.f32.mrf.mxu0
      %v3268 = vadd.f32 %v3139, %v3267
      %v3269 = vpop.f32.mrf.mxu0
      %v3270 = vadd.f32 %v3141, %v3269
      %3271 = vmatmul.bf16.gmra.mxu0 %v2011
      %v3272 = vpop.f32.mrf.mxu0
      %v3273 = vadd.f32 %v3144, %v3272
      %v3274 = vpop.f32.mrf.mxu0
      %v3275 = vadd.f32 %v3146, %v3274
      %3276 = vmatmul.bf16.gmra.mxu0 %v2055
      %v3277 = vpop.f32.mrf.mxu0
      %v3278 = vadd.f32 %v3149, %v3277
      %v3279 = vpop.f32.mrf.mxu0
      %v3280 = vadd.f32 %v3151, %v3279
      %3281 = vmatmul.bf16.gmra.mxu0 %v2099
      %v3282 = vpop.f32.mrf.mxu0
      %v3283 = vadd.f32 %v3154, %v3282
      %v3284 = vpop.f32.mrf.mxu0
      %v3285 = vadd.f32 %v3156, %v3284
      %3286 = vmatmul.bf16.gmra.mxu0 %v2143
      %v3287 = vpop.f32.mrf.mxu0
      %v3288 = vadd.f32 %v3159, %v3287
      %v3289 = vpop.f32.mrf.mxu0
      %v3290 = vadd.f32 %v3161, %v3289
      %3291 = vmatmul.bf16.gmra.mxu0 %v2187
      %v3292 = vpop.f32.mrf.mxu0
      %v3293 = vadd.f32 %v3164, %v3292
      %v3294 = vpop.f32.mrf.mxu0
      %v3295 = vadd.f32 %v3166, %v3294
      %3296 = vmatmul.bf16.gmra.mxu0 %v2231
      %v3297 = vpop.f32.mrf.mxu0
      %v3298 = vadd.f32 %v3169, %v3297
      %v3299 = vpop.f32.mrf.mxu0
      %v3300 = vadd.f32 %v3171, %v3299
      %3301 = vmatmul.bf16.gmra.mxu0 %v2395
      %v3302 = vpop.f32.mrf.mxu0
      %v3303 = vadd.f32 %v3174, %v3302
      %v3304 = vpop.f32.mrf.mxu0
      %v3305 = vadd.f32 %v3176, %v3304
      %3306 = vdwg.mxu0
      %3307 = vmatpush.bf16.msra.mxu0 %v2928
      %3308 = vmatpush.bf16.msra.mxu0 %v2927
      %3309 = vmatpush.bf16.msra.mxu0 %v2926
      %3310 = vmatpush.bf16.msra.mxu0 %v2925
      %3311 = vmatpush.bf16.msra.mxu0 %v2924
      %3312 = vmatpush.bf16.msra.mxu0 %v2923
      %3313 = vmatpush.bf16.msra.mxu0 %v2922
      %3314 = vmatpush.bf16.msra.mxu0 %v2921
      %3315 = vmatmul.bf16.gmra.mxu0 %v1279
      %v3316 = vpop.f32.mrf.mxu0
      %v3317 = vadd.f32 %v3188, %v3316
      %v3318 = vpop.f32.mrf.mxu0
      %v3319 = vadd.f32 %v3190, %v3318
      %3320 = vmatmul.bf16.gmra.mxu0 %v1383
      %v3321 = vpop.f32.mrf.mxu0
      %v3322 = vadd.f32 %v3193, %v3321
      %v3323 = vpop.f32.mrf.mxu0
      %v3324 = vadd.f32 %v3195, %v3323
      %3325 = vmatmul.bf16.gmra.mxu0 %v1446
      %v3326 = vpop.f32.mrf.mxu0
      %v3327 = vadd.f32 %v3198, %v3326
      %v3328 = vpop.f32.mrf.mxu0
      %v3329 = vadd.f32 %v3200, %v3328
      %3330 = vmatmul.bf16.gmra.mxu0 %v1492
      %v3331 = vpop.f32.mrf.mxu0
      %v3332 = vadd.f32 %v3203, %v3331
      %v3333 = vpop.f32.mrf.mxu0
      %v3334 = vadd.f32 %v3205, %v3333
      %3335 = vmatmul.bf16.gmra.mxu0 %v1427
      %v3336 = vpop.f32.mrf.mxu0
      %v3337 = vadd.f32 %v3208, %v3336
      %v3338 = vpop.f32.mrf.mxu0
      %v3339 = vadd.f32 %v3210, %v3338
      %3340 = vmatmul.bf16.gmra.mxu0 %v1490
      %v3341 = vpop.f32.mrf.mxu0
      %v3342 = vadd.f32 %v3213, %v3341
      %v3343 = vpop.f32.mrf.mxu0
      %v3344 = vadd.f32 %v3215, %v3343
      %3345 = vmatmul.bf16.gmra.mxu0 %v1536
      %v3346 = vpop.f32.mrf.mxu0
      %v3347 = vadd.f32 %v3218, %v3346
      %v3348 = vpop.f32.mrf.mxu0
      %v3349 = vadd.f32 %v3220, %v3348
      %3350 = vmatmul.bf16.gmra.mxu0 %v1580
      %v3351 = vpop.f32.mrf.mxu0
      %v3352 = vadd.f32 %v3223, %v3351
      %v3353 = vpop.f32.mrf.mxu0
      %v3354 = vadd.f32 %v3225, %v3353
      %3355 = vmatmul.bf16.gmra.mxu0 %v1624
      %v3356 = vpop.f32.mrf.mxu0
      %v3357 = vadd.f32 %v3228, %v3356
      %v3358 = vpop.f32.mrf.mxu0
      %v3359 = vadd.f32 %v3230, %v3358
      %3360 = vmatmul.bf16.gmra.mxu0 %v1668
      %v3361 = vpop.f32.mrf.mxu0
      %v3362 = vadd.f32 %v3233, %v3361
      %v3363 = vpop.f32.mrf.mxu0
      %v3364 = vadd.f32 %v3235, %v3363
      %3365 = vmatmul.bf16.gmra.mxu0 %v1712
      %v3366 = vpop.f32.mrf.mxu0
      %v3367 = vadd.f32 %v3238, %v3366
      %v3368 = vpop.f32.mrf.mxu0
      %v3369 = vadd.f32 %v3240, %v3368
      %3370 = vmatmul.bf16.gmra.mxu0 %v1756
      %v3371 = vpop.f32.mrf.mxu0
      %v3372 = vadd.f32 %v3243, %v3371
      %v3373 = vpop.f32.mrf.mxu0
      %v3374 = vadd.f32 %v3245, %v3373
      %3375 = vmatmul.bf16.gmra.mxu0 %v1800
      %v3376 = vpop.f32.mrf.mxu0
      %v3377 = vadd.f32 %v3248, %v3376
      %v3378 = vpop.f32.mrf.mxu0
      %v3379 = vadd.f32 %v3250, %v3378
      %3380 = vmatmul.bf16.gmra.mxu0 %v1844
      %v3381 = vpop.f32.mrf.mxu0
      %v3382 = vadd.f32 %v3253, %v3381
      %v3383 = vpop.f32.mrf.mxu0
      %v3384 = vadd.f32 %v3255, %v3383
      %3385 = vmatmul.bf16.gmra.mxu0 %v1888
      %v3386 = vpop.f32.mrf.mxu0
      %v3387 = vadd.f32 %v3258, %v3386
      %v3388 = vpop.f32.mrf.mxu0
      %v3389 = vadd.f32 %v3260, %v3388
      %3390 = vmatmul.bf16.gmra.mxu0 %v1932
      %v3391 = vpop.f32.mrf.mxu0
      %v3392 = vadd.f32 %v3263, %v3391
      %v3393 = vpop.f32.mrf.mxu0
      %v3394 = vadd.f32 %v3265, %v3393
      %3395 = vmatmul.bf16.gmra.mxu0 %v1976
      %v3396 = vpop.f32.mrf.mxu0
      %v3397 = vadd.f32 %v3268, %v3396
      %v3398 = vpop.f32.mrf.mxu0
      %v3399 = vadd.f32 %v3270, %v3398
      %3400 = vmatmul.bf16.gmra.mxu0 %v2020
      %v3401 = vpop.f32.mrf.mxu0
      %v3402 = vadd.f32 %v3273, %v3401
      %v3403 = vpop.f32.mrf.mxu0
      %v3404 = vadd.f32 %v3275, %v3403
      %3405 = vmatmul.bf16.gmra.mxu0 %v2064
      %v3406 = vpop.f32.mrf.mxu0
      %v3407 = vadd.f32 %v3278, %v3406
      %v3408 = vpop.f32.mrf.mxu0
      %v3409 = vadd.f32 %v3280, %v3408
      %3410 = vmatmul.bf16.gmra.mxu0 %v2108
      %v3411 = vpop.f32.mrf.mxu0
      %v3412 = vadd.f32 %v3283, %v3411
      %v3413 = vpop.f32.mrf.mxu0
      %v3414 = vadd.f32 %v3285, %v3413
      %3415 = vmatmul.bf16.gmra.mxu0 %v2152
      %v3416 = vpop.f32.mrf.mxu0
      %v3417 = vadd.f32 %v3288, %v3416
      %v3418 = vpop.f32.mrf.mxu0
      %v3419 = vadd.f32 %v3290, %v3418
      %3420 = vmatmul.bf16.gmra.mxu0 %v2196
      %v3421 = vpop.f32.mrf.mxu0
      %v3422 = vadd.f32 %v3293, %v3421
      %v3423 = vpop.f32.mrf.mxu0
      %v3424 = vadd.f32 %v3295, %v3423
      %3425 = vmatmul.bf16.gmra.mxu0 %v2240
      %v3426 = vpop.f32.mrf.mxu0
      %v3427 = vadd.f32 %v3298, %v3426
      %v3428 = vpop.f32.mrf.mxu0
      %v3429 = vadd.f32 %v3300, %v3428
      %3430 = vmatmul.bf16.gmra.mxu0 %v2404
      %v3431 = vpop.f32.mrf.mxu0
      %v3432 = vadd.f32 %v3303, %v3431
      %v3433 = vpop.f32.mrf.mxu0
      %v3434 = vadd.f32 %v3305, %v3433
      %3435 = vdwg.mxu0
      %3436 = vmatpush.bf16.msra.mxu0 %v2936
      %3437 = vmatpush.bf16.msra.mxu0 %v2935
      %3438 = vmatpush.bf16.msra.mxu0 %v2934
      %3439 = vmatpush.bf16.msra.mxu0 %v2933
      %3440 = vmatpush.bf16.msra.mxu0 %v2932
      %3441 = vmatpush.bf16.msra.mxu0 %v2931
      %3442 = vmatpush.bf16.msra.mxu0 %v2930
      %3443 = vmatpush.bf16.msra.mxu0 %v2929
      %3444 = vmatmul.bf16.gmra.mxu0 %v1286
      %v3445 = vpop.f32.mrf.mxu0
      %v3446 = vadd.f32 %v3317, %v3445
      %v3447 = vpop.f32.mrf.mxu0
      %v3448 = vadd.f32 %v3319, %v3447
      %3449 = vmatmul.bf16.gmra.mxu0 %v1387
      %v3450 = vpop.f32.mrf.mxu0
      %v3451 = vadd.f32 %v3322, %v3450
      %v3452 = vpop.f32.mrf.mxu0
      %v3453 = vadd.f32 %v3324, %v3452
      %3454 = vmatmul.bf16.gmra.mxu0 %v1450
      %v3455 = vpop.f32.mrf.mxu0
      %v3456 = vadd.f32 %v3327, %v3455
      %v3457 = vpop.f32.mrf.mxu0
      %v3458 = vadd.f32 %v3329, %v3457
      %3459 = vmatmul.bf16.gmra.mxu0 %v1496
      %v3460 = vpop.f32.mrf.mxu0
      %v3461 = vadd.f32 %v3332, %v3460
      %v3462 = vpop.f32.mrf.mxu0
      %v3463 = vadd.f32 %v3334, %v3462
      %3464 = vmatmul.bf16.gmra.mxu0 %v1540
      %v3465 = vpop.f32.mrf.mxu0
      %v3466 = vadd.f32 %v3337, %v3465
      %v3467 = vpop.f32.mrf.mxu0
      %v3468 = vadd.f32 %v3339, %v3467
      %3469 = vmatmul.bf16.gmra.mxu0 %v1584
      %v3470 = vpop.f32.mrf.mxu0
      %v3471 = vadd.f32 %v3342, %v3470
      %v3472 = vpop.f32.mrf.mxu0
      %v3473 = vadd.f32 %v3344, %v3472
      %3474 = vmatmul.bf16.gmra.mxu0 %v1628
      %v3475 = vpop.f32.mrf.mxu0
      %v3476 = vadd.f32 %v3347, %v3475
      %v3477 = vpop.f32.mrf.mxu0
      %v3478 = vadd.f32 %v3349, %v3477
      %3479 = vmatmul.bf16.gmra.mxu0 %v1672
      %v3480 = vpop.f32.mrf.mxu0
      %v3481 = vadd.f32 %v3352, %v3480
      %v3482 = vpop.f32.mrf.mxu0
      %v3483 = vadd.f32 %v3354, %v3482
      %3484 = vmatmul.bf16.gmra.mxu0 %v1716
      %v3485 = vpop.f32.mrf.mxu0
      %v3486 = vadd.f32 %v3357, %v3485
      %v3487 = vpop.f32.mrf.mxu0
      %v3488 = vadd.f32 %v3359, %v3487
      %3489 = vmatmul.bf16.gmra.mxu0 %v1760
      %v3490 = vpop.f32.mrf.mxu0
      %v3491 = vadd.f32 %v3362, %v3490
      %v3492 = vpop.f32.mrf.mxu0
      %v3493 = vadd.f32 %v3364, %v3492
      %3494 = vmatmul.bf16.gmra.mxu0 %v1804
      %v3495 = vpop.f32.mrf.mxu0
      %v3496 = vadd.f32 %v3367, %v3495
      %v3497 = vpop.f32.mrf.mxu0
      %v3498 = vadd.f32 %v3369, %v3497
      %3499 = vmatmul.bf16.gmra.mxu0 %v1848
      %v3500 = vpop.f32.mrf.mxu0
      %v3501 = vadd.f32 %v3372, %v3500
      %v3502 = vpop.f32.mrf.mxu0
      %v3503 = vadd.f32 %v3374, %v3502
      %3504 = vmatmul.bf16.gmra.mxu0 %v1892
      %v3505 = vpop.f32.mrf.mxu0
      %v3506 = vadd.f32 %v3377, %v3505
      %v3507 = vpop.f32.mrf.mxu0
      %v3508 = vadd.f32 %v3379, %v3507
      %3509 = vmatmul.bf16.gmra.mxu0 %v1936
      %v3510 = vpop.f32.mrf.mxu0
      %v3511 = vadd.f32 %v3382, %v3510
      %v3512 = vpop.f32.mrf.mxu0
      %v3513 = vadd.f32 %v3384, %v3512
      %3514 = vmatmul.bf16.gmra.mxu0 %v1980
      %v3515 = vpop.f32.mrf.mxu0
      %v3516 = vadd.f32 %v3387, %v3515
      %v3517 = vpop.f32.mrf.mxu0
      %v3518 = vadd.f32 %v3389, %v3517
      %3519 = vmatmul.bf16.gmra.mxu0 %v2024
      %v3520 = vpop.f32.mrf.mxu0
      %v3521 = vadd.f32 %v3392, %v3520
      %v3522 = vpop.f32.mrf.mxu0
      %v3523 = vadd.f32 %v3394, %v3522
      %3524 = vmatmul.bf16.gmra.mxu0 %v2068
      %v3525 = vpop.f32.mrf.mxu0
      %v3526 = vadd.f32 %v3397, %v3525
      %v3527 = vpop.f32.mrf.mxu0
      %v3528 = vadd.f32 %v3399, %v3527
      %3529 = vmatmul.bf16.gmra.mxu0 %v2112
      %v3530 = vpop.f32.mrf.mxu0
      %v3531 = vadd.f32 %v3402, %v3530
      %v3532 = vpop.f32.mrf.mxu0
      %v3533 = vadd.f32 %v3404, %v3532
      %3534 = vmatmul.bf16.gmra.mxu0 %v2156
      %v3535 = vpop.f32.mrf.mxu0
      %v3536 = vadd.f32 %v3407, %v3535
      %v3537 = vpop.f32.mrf.mxu0
      %v3538 = vadd.f32 %v3409, %v3537
      %3539 = vmatmul.bf16.gmra.mxu0 %v2200
      %v3540 = vpop.f32.mrf.mxu0
      %v3541 = vadd.f32 %v3412, %v3540
      %v3542 = vpop.f32.mrf.mxu0
      %v3543 = vadd.f32 %v3414, %v3542
      %3544 = vmatmul.bf16.gmra.mxu0 %v2244
      %v3545 = vpop.f32.mrf.mxu0
      %v3546 = vadd.f32 %v3417, %v3545
      %v3547 = vpop.f32.mrf.mxu0
      %v3548 = vadd.f32 %v3419, %v3547
      %3549 = vmatmul.bf16.gmra.mxu0 %v2288
      %v3550 = vpop.f32.mrf.mxu0
      %v3551 = vadd.f32 %v3422, %v3550
      %v3552 = vpop.f32.mrf.mxu0
      %v3553 = vadd.f32 %v3424, %v3552
      %3554 = vmatmul.bf16.gmra.mxu0 %v2332
      %v3555 = vpop.f32.mrf.mxu0
      %v3556 = vadd.f32 %v3427, %v3555
      %v3557 = vpop.f32.mrf.mxu0
      %v3558 = vadd.f32 %v3429, %v3557
      %3559 = vmatmul.bf16.gmra.mxu0 %v2413
      %v3560 = vpop.f32.mrf.mxu0
      %v3561 = vadd.f32 %v3432, %v3560
      %v3562 = vpop.f32.mrf.mxu0
      %v3563 = vadd.f32 %v3434, %v3562
      %3564 = vdwg.mxu0
      %3565 = vmatpush.bf16.msra.mxu0 %v2944
      %3566 = vmatpush.bf16.msra.mxu0 %v2943
      %3567 = vmatpush.bf16.msra.mxu0 %v2942
      %3568 = vmatpush.bf16.msra.mxu0 %v2941
      %3569 = vmatpush.bf16.msra.mxu0 %v2940
      %3570 = vmatpush.bf16.msra.mxu0 %v2939
      %3571 = vmatpush.bf16.msra.mxu0 %v2938
      %3572 = vmatpush.bf16.msra.mxu0 %v2937
      %3573 = vmatmul.bf16.gmra.mxu0 %v1303
      %v3574 = vpop.f32.mrf.mxu0
      %v3575 = vadd.f32 %v3446, %v3574
      %v3576 = vpop.f32.mrf.mxu0
      %v3577 = vadd.f32 %v3448, %v3576
      %3578 = vmatmul.bf16.gmra.mxu0 %v1396
      %v3579 = vpop.f32.mrf.mxu0
      %v3580 = vadd.f32 %v3451, %v3579
      %v3581 = vpop.f32.mrf.mxu0
      %v3582 = vadd.f32 %v3453, %v3581
      %3583 = vmatmul.bf16.gmra.mxu0 %v1459
      %v3584 = vpop.f32.mrf.mxu0
      %v3585 = vadd.f32 %v3456, %v3584
      %v3586 = vpop.f32.mrf.mxu0
      %v3587 = vadd.f32 %v3458, %v3586
      %3588 = vmatmul.bf16.gmra.mxu0 %v1505
      %v3589 = vpop.f32.mrf.mxu0
      %v3590 = vadd.f32 %v3461, %v3589
      %v3591 = vpop.f32.mrf.mxu0
      %v3592 = vadd.f32 %v3463, %v3591
      %3593 = vmatmul.bf16.gmra.mxu0 %v1549
      %v3594 = vpop.f32.mrf.mxu0
      %v3595 = vadd.f32 %v3466, %v3594
      %v3596 = vpop.f32.mrf.mxu0
      %v3597 = vadd.f32 %v3468, %v3596
      %3598 = vmatmul.bf16.gmra.mxu0 %v1593
      %v3599 = vpop.f32.mrf.mxu0
      %v3600 = vadd.f32 %v3471, %v3599
      %v3601 = vpop.f32.mrf.mxu0
      %v3602 = vadd.f32 %v3473, %v3601
      %3603 = vmatmul.bf16.gmra.mxu0 %v1637
      %v3604 = vpop.f32.mrf.mxu0
      %v3605 = vadd.f32 %v3476, %v3604
      %v3606 = vpop.f32.mrf.mxu0
      %v3607 = vadd.f32 %v3478, %v3606
      %3608 = vmatmul.bf16.gmra.mxu0 %v1681
      %v3609 = vpop.f32.mrf.mxu0
      %v3610 = vadd.f32 %v3481, %v3609
      %v3611 = vpop.f32.mrf.mxu0
      %v3612 = vadd.f32 %v3483, %v3611
      %3613 = vmatmul.bf16.gmra.mxu0 %v1725
      %v3614 = vpop.f32.mrf.mxu0
      %v3615 = vadd.f32 %v3486, %v3614
      %v3616 = vpop.f32.mrf.mxu0
      %v3617 = vadd.f32 %v3488, %v3616
      %3618 = vmatmul.bf16.gmra.mxu0 %v1769
      %v3619 = vpop.f32.mrf.mxu0
      %v3620 = vadd.f32 %v3491, %v3619
      %v3621 = vpop.f32.mrf.mxu0
      %v3622 = vadd.f32 %v3493, %v3621
      %3623 = vmatmul.bf16.gmra.mxu0 %v1813
      %v3624 = vpop.f32.mrf.mxu0
      %v3625 = vadd.f32 %v3496, %v3624
      %v3626 = vpop.f32.mrf.mxu0
      %v3627 = vadd.f32 %v3498, %v3626
      %3628 = vmatmul.bf16.gmra.mxu0 %v1857
      %v3629 = vpop.f32.mrf.mxu0
      %v3630 = vadd.f32 %v3501, %v3629
      %v3631 = vpop.f32.mrf.mxu0
      %v3632 = vadd.f32 %v3503, %v3631
      %3633 = vmatmul.bf16.gmra.mxu0 %v1901
      %v3634 = vpop.f32.mrf.mxu0
      %v3635 = vadd.f32 %v3506, %v3634
      %v3636 = vpop.f32.mrf.mxu0
      %v3637 = vadd.f32 %v3508, %v3636
      %3638 = vmatmul.bf16.gmra.mxu0 %v1945
      %v3639 = vpop.f32.mrf.mxu0
      %v3640 = vadd.f32 %v3511, %v3639
      %v3641 = vpop.f32.mrf.mxu0
      %v3642 = vadd.f32 %v3513, %v3641
      %3643 = vmatmul.bf16.gmra.mxu0 %v1989
      %v3644 = vpop.f32.mrf.mxu0
      %v3645 = vadd.f32 %v3516, %v3644
      %v3646 = vpop.f32.mrf.mxu0
      %v3647 = vadd.f32 %v3518, %v3646
      %3648 = vmatmul.bf16.gmra.mxu0 %v2033
      %v3649 = vpop.f32.mrf.mxu0
      %v3650 = vadd.f32 %v3521, %v3649
      %v3651 = vpop.f32.mrf.mxu0
      %v3652 = vadd.f32 %v3523, %v3651
      %3653 = vmatmul.bf16.gmra.mxu0 %v2077
      %v3654 = vpop.f32.mrf.mxu0
      %v3655 = vadd.f32 %v3526, %v3654
      %v3656 = vpop.f32.mrf.mxu0
      %v3657 = vadd.f32 %v3528, %v3656
      %3658 = vmatmul.bf16.gmra.mxu0 %v2121
      %v3659 = vpop.f32.mrf.mxu0
      %v3660 = vadd.f32 %v3531, %v3659
      %v3661 = vpop.f32.mrf.mxu0
      %v3662 = vadd.f32 %v3533, %v3661
      %3663 = vmatmul.bf16.gmra.mxu0 %v2165
      %v3664 = vpop.f32.mrf.mxu0
      %v3665 = vadd.f32 %v3536, %v3664
      %v3666 = vpop.f32.mrf.mxu0
      %v3667 = vadd.f32 %v3538, %v3666
      %3668 = vmatmul.bf16.gmra.mxu0 %v2209
      %v3669 = vpop.f32.mrf.mxu0
      %v3670 = vadd.f32 %v3541, %v3669
      %v3671 = vpop.f32.mrf.mxu0
      %v3672 = vadd.f32 %v3543, %v3671
      %3673 = vmatmul.bf16.gmra.mxu0 %v2253
      %v3674 = vpop.f32.mrf.mxu0
      %v3675 = vadd.f32 %v3546, %v3674
      %v3676 = vpop.f32.mrf.mxu0
      %v3677 = vadd.f32 %v3548, %v3676
      %3678 = vmatmul.bf16.gmra.mxu0 %v2297
      %v3679 = vpop.f32.mrf.mxu0
      %v3680 = vadd.f32 %v3551, %v3679
      %v3681 = vpop.f32.mrf.mxu0
      %v3682 = vadd.f32 %v3553, %v3681
      %3683 = vmatmul.bf16.gmra.mxu0 %v2341
      %v3684 = vpop.f32.mrf.mxu0
      %v3685 = vadd.f32 %v3556, %v3684
      %v3686 = vpop.f32.mrf.mxu0
      %v3687 = vadd.f32 %v3558, %v3686
      %3688 = vmatmul.bf16.gmra.mxu0 %v2422
      %v3689 = vpop.f32.mrf.mxu0
      %v3690 = vadd.f32 %v3561, %v3689
      %v3691 = vpop.f32.mrf.mxu0
      %v3692 = vadd.f32 %v3563, %v3691
      %3693 = vdwg.mxu0
      %3694 = vmatpush.bf16.msra.mxu0 %v2952
      %3695 = vmatpush.bf16.msra.mxu0 %v2951
      %3696 = vmatpush.bf16.msra.mxu0 %v2950
      %3697 = vmatpush.bf16.msra.mxu0 %v2949
      %3698 = vmatpush.bf16.msra.mxu0 %v2948
      %3699 = vmatpush.bf16.msra.mxu0 %v2947
      %3700 = vmatpush.bf16.msra.mxu0 %v2946
      %3701 = vmatpush.bf16.msra.mxu0 %v2945
      %3702 = vmatmul.bf16.gmra.mxu0 %v1320
      %v3703 = vpop.f32.mrf.mxu0
      %v3704 = vadd.f32 %v3575, %v3703
      %v3705 = vpop.f32.mrf.mxu0
      %v3706 = vadd.f32 %v3577, %v3705
      %3707 = vmatmul.bf16.gmra.mxu0 %v1405
      %v3708 = vpop.f32.mrf.mxu0
      %v3709 = vadd.f32 %v3580, %v3708
      %v3710 = vpop.f32.mrf.mxu0
      %v3711 = vadd.f32 %v3582, %v3710
      %3712 = vmatmul.bf16.gmra.mxu0 %v1468
      %v3713 = vpop.f32.mrf.mxu0
      %v3714 = vadd.f32 %v3585, %v3713
      %v3715 = vpop.f32.mrf.mxu0
      %v3716 = vadd.f32 %v3587, %v3715
      %3717 = vmatmul.bf16.gmra.mxu0 %v1514
      %v3718 = vpop.f32.mrf.mxu0
      %v3719 = vadd.f32 %v3590, %v3718
      %v3720 = vpop.f32.mrf.mxu0
      %v3721 = vadd.f32 %v3592, %v3720
      %3722 = vmatmul.bf16.gmra.mxu0 %v1558
      %v3723 = vpop.f32.mrf.mxu0
      %v3724 = vadd.f32 %v3595, %v3723
      %v3725 = vpop.f32.mrf.mxu0
      %v3726 = vadd.f32 %v3597, %v3725
      %3727 = vmatmul.bf16.gmra.mxu0 %v1602
      %v3728 = vpop.f32.mrf.mxu0
      %v3729 = vadd.f32 %v3600, %v3728
      %v3730 = vpop.f32.mrf.mxu0
      %v3731 = vadd.f32 %v3602, %v3730
      %3732 = vmatmul.bf16.gmra.mxu0 %v1646
      %v3733 = vpop.f32.mrf.mxu0
      %v3734 = vadd.f32 %v3605, %v3733
      %v3735 = vpop.f32.mrf.mxu0
      %v3736 = vadd.f32 %v3607, %v3735
      %3737 = vmatmul.bf16.gmra.mxu0 %v1690
      %v3738 = vpop.f32.mrf.mxu0
      %v3739 = vadd.f32 %v3610, %v3738
      %v3740 = vpop.f32.mrf.mxu0
      %v3741 = vadd.f32 %v3612, %v3740
      %3742 = vmatmul.bf16.gmra.mxu0 %v1734
      %v3743 = vpop.f32.mrf.mxu0
      %v3744 = vadd.f32 %v3615, %v3743
      %v3745 = vpop.f32.mrf.mxu0
      %v3746 = vadd.f32 %v3617, %v3745
      %3747 = vmatmul.bf16.gmra.mxu0 %v1778
      %v3748 = vpop.f32.mrf.mxu0
      %v3749 = vadd.f32 %v3620, %v3748
      %v3750 = vpop.f32.mrf.mxu0
      %v3751 = vadd.f32 %v3622, %v3750
      %3752 = vmatmul.bf16.gmra.mxu0 %v1822
      %v3753 = vpop.f32.mrf.mxu0
      %v3754 = vadd.f32 %v3625, %v3753
      %v3755 = vpop.f32.mrf.mxu0
      %v3756 = vadd.f32 %v3627, %v3755
      %3757 = vmatmul.bf16.gmra.mxu0 %v1866
      %v3758 = vpop.f32.mrf.mxu0
      %v3759 = vadd.f32 %v3630, %v3758
      %v3760 = vpop.f32.mrf.mxu0
      %v3761 = vadd.f32 %v3632, %v3760
      %3762 = vmatmul.bf16.gmra.mxu0 %v1910
      %v3763 = vpop.f32.mrf.mxu0
      %v3764 = vadd.f32 %v3635, %v3763
      %v3765 = vpop.f32.mrf.mxu0
      %v3766 = vadd.f32 %v3637, %v3765
      %3767 = vmatmul.bf16.gmra.mxu0 %v1954
      %v3768 = vpop.f32.mrf.mxu0
      %v3769 = vadd.f32 %v3640, %v3768
      %v3770 = vpop.f32.mrf.mxu0
      %v3771 = vadd.f32 %v3642, %v3770
      %3772 = vmatmul.bf16.gmra.mxu0 %v1998
      %v3773 = vpop.f32.mrf.mxu0
      %v3774 = vadd.f32 %v3645, %v3773
      %v3775 = vpop.f32.mrf.mxu0
      %v3776 = vadd.f32 %v3647, %v3775
      %3777 = vmatmul.bf16.gmra.mxu0 %v2042
      %v3778 = vpop.f32.mrf.mxu0
      %v3779 = vadd.f32 %v3650, %v3778
      %v3780 = vpop.f32.mrf.mxu0
      %v3781 = vadd.f32 %v3652, %v3780
      %3782 = vmatmul.bf16.gmra.mxu0 %v2086
      %v3783 = vpop.f32.mrf.mxu0
      %v3784 = vadd.f32 %v3655, %v3783
      %v3785 = vpop.f32.mrf.mxu0
      %v3786 = vadd.f32 %v3657, %v3785
      %3787 = vmatmul.bf16.gmra.mxu0 %v2130
      %v3788 = vpop.f32.mrf.mxu0
      %v3789 = vadd.f32 %v3660, %v3788
      %v3790 = vpop.f32.mrf.mxu0
      %v3791 = vadd.f32 %v3662, %v3790
      %3792 = vmatmul.bf16.gmra.mxu0 %v2174
      %v3793 = vpop.f32.mrf.mxu0
      %v3794 = vadd.f32 %v3665, %v3793
      %v3795 = vpop.f32.mrf.mxu0
      %v3796 = vadd.f32 %v3667, %v3795
      %3797 = vmatmul.bf16.gmra.mxu0 %v2218
      %v3798 = vpop.f32.mrf.mxu0
      %v3799 = vadd.f32 %v3670, %v3798
      %v3800 = vpop.f32.mrf.mxu0
      %v3801 = vadd.f32 %v3672, %v3800
      %3802 = vmatmul.bf16.gmra.mxu0 %v2262
      %v3803 = vpop.f32.mrf.mxu0
      %v3804 = vadd.f32 %v3675, %v3803
      %v3805 = vpop.f32.mrf.mxu0
      %v3806 = vadd.f32 %v3677, %v3805
      %3807 = vmatmul.bf16.gmra.mxu0 %v2306
      %v3808 = vpop.f32.mrf.mxu0
      %v3809 = vadd.f32 %v3680, %v3808
      %v3810 = vpop.f32.mrf.mxu0
      %v3811 = vadd.f32 %v3682, %v3810
      %3812 = vmatmul.bf16.gmra.mxu0 %v2350
      %v3813 = vpop.f32.mrf.mxu0
      %v3814 = vadd.f32 %v3685, %v3813
      %v3815 = vpop.f32.mrf.mxu0
      %v3816 = vadd.f32 %v3687, %v3815
      %3817 = vmatmul.bf16.gmra.mxu0 %v2431
      %v3818 = vpop.f32.mrf.mxu0
      %v3819 = vadd.f32 %v3690, %v3818
      %v3820 = vpop.f32.mrf.mxu0
      %v3821 = vadd.f32 %v3692, %v3820
      %3822 = vdwg.mxu0
      %3823 = vmatpush.bf16.msra.mxu0 %v2960
      %3824 = vmatpush.bf16.msra.mxu0 %v2959
      %3825 = vmatpush.bf16.msra.mxu0 %v2958
      %3826 = vmatpush.bf16.msra.mxu0 %v2957
      %3827 = vmatpush.bf16.msra.mxu0 %v2956
      %3828 = vmatpush.bf16.msra.mxu0 %v2955
      %3829 = vmatpush.bf16.msra.mxu0 %v2954
      %3830 = vmatpush.bf16.msra.mxu0 %v2953
      %3831 = vmatmul.bf16.gmra.mxu0 %v1327
      %v3832 = vpop.f32.mrf.mxu0
      %v3833 = vadd.f32 %v3704, %v3832
      %v3834 = vpop.f32.mrf.mxu0
      %v3835 = vadd.f32 %v3706, %v3834
      %3836 = vmatmul.bf16.gmra.mxu0 %v1409
      %v3837 = vpop.f32.mrf.mxu0
      %v3838 = vadd.f32 %v3709, %v3837
      %v3839 = vpop.f32.mrf.mxu0
      %v3840 = vadd.f32 %v3711, %v3839
      %3841 = vmatmul.bf16.gmra.mxu0 %v1472
      %v3842 = vpop.f32.mrf.mxu0
      %v3843 = vadd.f32 %v3714, %v3842
      %v3844 = vpop.f32.mrf.mxu0
      %v3845 = vadd.f32 %v3716, %v3844
      %3846 = vmatmul.bf16.gmra.mxu0 %v1518
      %v3847 = vpop.f32.mrf.mxu0
      %v3848 = vadd.f32 %v3719, %v3847
      %v3849 = vpop.f32.mrf.mxu0
      %v3850 = vadd.f32 %v3721, %v3849
      %3851 = vmatmul.bf16.gmra.mxu0 %v1562
      %v3852 = vpop.f32.mrf.mxu0
      %v3853 = vadd.f32 %v3724, %v3852
      %v3854 = vpop.f32.mrf.mxu0
      %v3855 = vadd.f32 %v3726, %v3854
      %3856 = vmatmul.bf16.gmra.mxu0 %v1606
      %v3857 = vpop.f32.mrf.mxu0
      %v3858 = vadd.f32 %v3729, %v3857
      %v3859 = vpop.f32.mrf.mxu0
      %v3860 = vadd.f32 %v3731, %v3859
      %3861 = vmatmul.bf16.gmra.mxu0 %v1650
      %v3862 = vpop.f32.mrf.mxu0
      %v3863 = vadd.f32 %v3734, %v3862
      %v3864 = vpop.f32.mrf.mxu0
      %v3865 = vadd.f32 %v3736, %v3864
      %3866 = vmatmul.bf16.gmra.mxu0 %v1694
      %v3867 = vpop.f32.mrf.mxu0
      %v3868 = vadd.f32 %v3739, %v3867
      %v3869 = vpop.f32.mrf.mxu0
      %v3870 = vadd.f32 %v3741, %v3869
      %3871 = vmatmul.bf16.gmra.mxu0 %v1738
      %v3872 = vpop.f32.mrf.mxu0
      %v3873 = vadd.f32 %v3744, %v3872
      %v3874 = vpop.f32.mrf.mxu0
      %v3875 = vadd.f32 %v3746, %v3874
      %3876 = vmatmul.bf16.gmra.mxu0 %v1782
      %v3877 = vpop.f32.mrf.mxu0
      %v3878 = vadd.f32 %v3749, %v3877
      %v3879 = vpop.f32.mrf.mxu0
      %v3880 = vadd.f32 %v3751, %v3879
      %3881 = vmatmul.bf16.gmra.mxu0 %v1826
      %v3882 = vpop.f32.mrf.mxu0
      %v3883 = vadd.f32 %v3754, %v3882
      %v3884 = vpop.f32.mrf.mxu0
      %v3885 = vadd.f32 %v3756, %v3884
      %3886 = vmatmul.bf16.gmra.mxu0 %v1870
      %v3887 = vpop.f32.mrf.mxu0
      %v3888 = vadd.f32 %v3759, %v3887
      %v3889 = vpop.f32.mrf.mxu0
      %v3890 = vadd.f32 %v3761, %v3889
      %3891 = vmatmul.bf16.gmra.mxu0 %v1914
      %v3892 = vpop.f32.mrf.mxu0
      %v3893 = vadd.f32 %v3764, %v3892
      %v3894 = vpop.f32.mrf.mxu0
      %v3895 = vadd.f32 %v3766, %v3894
      %3896 = vmatmul.bf16.gmra.mxu0 %v1958
      %v3897 = vpop.f32.mrf.mxu0
      %v3898 = vadd.f32 %v3769, %v3897
      %v3899 = vpop.f32.mrf.mxu0
      %v3900 = vadd.f32 %v3771, %v3899
      %3901 = vmatmul.bf16.gmra.mxu0 %v2002
      %v3902 = vpop.f32.mrf.mxu0
      %v3903 = vadd.f32 %v3774, %v3902
      %v3904 = vpop.f32.mrf.mxu0
      %v3905 = vadd.f32 %v3776, %v3904
      %3906 = vmatmul.bf16.gmra.mxu0 %v2046
      %v3907 = vpop.f32.mrf.mxu0
      %v3908 = vadd.f32 %v3779, %v3907
      %v3909 = vpop.f32.mrf.mxu0
      %v3910 = vadd.f32 %v3781, %v3909
      %3911 = vmatmul.bf16.gmra.mxu0 %v2090
      %v3912 = vpop.f32.mrf.mxu0
      %v3913 = vadd.f32 %v3784, %v3912
      %v3914 = vpop.f32.mrf.mxu0
      %v3915 = vadd.f32 %v3786, %v3914
      %3916 = vmatmul.bf16.gmra.mxu0 %v2134
      %v3917 = vpop.f32.mrf.mxu0
      %v3918 = vadd.f32 %v3789, %v3917
      %v3919 = vpop.f32.mrf.mxu0
      %v3920 = vadd.f32 %v3791, %v3919
      %3921 = vmatmul.bf16.gmra.mxu0 %v2178
      %v3922 = vpop.f32.mrf.mxu0
      %v3923 = vadd.f32 %v3794, %v3922
      %v3924 = vpop.f32.mrf.mxu0
      %v3925 = vadd.f32 %v3796, %v3924
      %3926 = vmatmul.bf16.gmra.mxu0 %v2222
      %v3927 = vpop.f32.mrf.mxu0
      %v3928 = vadd.f32 %v3799, %v3927
      %v3929 = vpop.f32.mrf.mxu0
      %v3930 = vadd.f32 %v3801, %v3929
      %3931 = vmatmul.bf16.gmra.mxu0 %v2266
      %v3932 = vpop.f32.mrf.mxu0
      %v3933 = vadd.f32 %v3804, %v3932
      %v3934 = vpop.f32.mrf.mxu0
      %v3935 = vadd.f32 %v3806, %v3934
      %3936 = vmatmul.bf16.gmra.mxu0 %v2310
      %v3937 = vpop.f32.mrf.mxu0
      %v3938 = vadd.f32 %v3809, %v3937
      %v3939 = vpop.f32.mrf.mxu0
      %v3940 = vadd.f32 %v3811, %v3939
      %3941 = vmatmul.bf16.gmra.mxu0 %v2359
      %v3942 = vpop.f32.mrf.mxu0
      %v3943 = vadd.f32 %v3814, %v3942
      %v3944 = vpop.f32.mrf.mxu0
      %v3945 = vadd.f32 %v3816, %v3944
      %3946 = vmatmul.bf16.gmra.mxu0 %v2440
      %v3947 = vpop.f32.mrf.mxu0
      %v3948 = vadd.f32 %v3819, %v3947
      %v3949 = vpop.f32.mrf.mxu0
      %v3950 = vadd.f32 %v3821, %v3949
      %3951 = vdwg.mxu0
      %3952 = vmatpush.bf16.msra.mxu0 %v2968
      %3953 = vmatpush.bf16.msra.mxu0 %v2967
      %3954 = vmatpush.bf16.msra.mxu0 %v2966
      %3955 = vmatpush.bf16.msra.mxu0 %v2965
      %3956 = vmatpush.bf16.msra.mxu0 %v2964
      %3957 = vmatpush.bf16.msra.mxu0 %v2963
      %3958 = vmatpush.bf16.msra.mxu0 %v2962
      %3959 = vmatpush.bf16.msra.mxu0 %v2961
      %3960 = vmatmul.bf16.gmra.mxu0 %v1344
      %v3961 = vpop.f32.mrf.mxu0
      %v3962 = vadd.f32 %v3833, %v3961
      %v3963 = vpop.f32.mrf.mxu0
      %v3964 = vadd.f32 %v3835, %v3963
      %3965 = vmatmul.bf16.gmra.mxu0 %v1418
      %v3966 = vpop.f32.mrf.mxu0
      %v3967 = vadd.f32 %v3838, %v3966
      %v3968 = vpop.f32.mrf.mxu0
      %v3969 = vadd.f32 %v3840, %v3968
      %3970 = vmatmul.bf16.gmra.mxu0 %v1481
      %v3971 = vpop.f32.mrf.mxu0
      %v3972 = vadd.f32 %v3843, %v3971
      %v3973 = vpop.f32.mrf.mxu0
      %v3974 = vadd.f32 %v3845, %v3973
      %3975 = vmatmul.bf16.gmra.mxu0 %v1527
      %v3976 = vpop.f32.mrf.mxu0
      %v3977 = vadd.f32 %v3848, %v3976
      %v3978 = vpop.f32.mrf.mxu0
      %v3979 = vadd.f32 %v3850, %v3978
      %3980 = vmatmul.bf16.gmra.mxu0 %v1571
      %v3981 = vpop.f32.mrf.mxu0
      %v3982 = vadd.f32 %v3853, %v3981
      %v3983 = vpop.f32.mrf.mxu0
      %v3984 = vadd.f32 %v3855, %v3983
      %3985 = vmatmul.bf16.gmra.mxu0 %v1615
      %v3986 = vpop.f32.mrf.mxu0
      %v3987 = vadd.f32 %v3858, %v3986
      %v3988 = vpop.f32.mrf.mxu0
      %v3989 = vadd.f32 %v3860, %v3988
      %3990 = vmatmul.bf16.gmra.mxu0 %v1659
      %v3991 = vpop.f32.mrf.mxu0
      %v3992 = vadd.f32 %v3863, %v3991
      %v3993 = vpop.f32.mrf.mxu0
      %v3994 = vadd.f32 %v3865, %v3993
      %3995 = vmatmul.bf16.gmra.mxu0 %v1703
      %v3996 = vpop.f32.mrf.mxu0
      %v3997 = vadd.f32 %v3868, %v3996
      %v3998 = vpop.f32.mrf.mxu0
      %v3999 = vadd.f32 %v3870, %v3998
      %4000 = vmatmul.bf16.gmra.mxu0 %v1747
      %v4001 = vpop.f32.mrf.mxu0
      %v4002 = vadd.f32 %v3873, %v4001
      %v4003 = vpop.f32.mrf.mxu0
      %v4004 = vadd.f32 %v3875, %v4003
      %4005 = vmatmul.bf16.gmra.mxu0 %v1791
      %v4006 = vpop.f32.mrf.mxu0
      %v4007 = vadd.f32 %v3878, %v4006
      %v4008 = vpop.f32.mrf.mxu0
      %v4009 = vadd.f32 %v3880, %v4008
      %4010 = vmatmul.bf16.gmra.mxu0 %v1835
      %v4011 = vpop.f32.mrf.mxu0
      %v4012 = vadd.f32 %v3883, %v4011
      %v4013 = vpop.f32.mrf.mxu0
      %v4014 = vadd.f32 %v3885, %v4013
      %4015 = vmatmul.bf16.gmra.mxu0 %v1879
      %v4016 = vpop.f32.mrf.mxu0
      %v4017 = vadd.f32 %v3888, %v4016
      %v4018 = vpop.f32.mrf.mxu0
      %v4019 = vadd.f32 %v3890, %v4018
      %4020 = vmatmul.bf16.gmra.mxu0 %v1923
      %v4021 = vpop.f32.mrf.mxu0
      %v4022 = vadd.f32 %v3893, %v4021
      %v4023 = vpop.f32.mrf.mxu0
      %v4024 = vadd.f32 %v3895, %v4023
      %4025 = vmatmul.bf16.gmra.mxu0 %v1967
      %v4026 = vpop.f32.mrf.mxu0
      %v4027 = vadd.f32 %v3898, %v4026
      %v4028 = vpop.f32.mrf.mxu0
      %v4029 = vadd.f32 %v3900, %v4028
      %4030 = vmatmul.bf16.gmra.mxu0 %v2011
      %v4031 = vpop.f32.mrf.mxu0
      %v4032 = vadd.f32 %v3903, %v4031
      %v4033 = vpop.f32.mrf.mxu0
      %v4034 = vadd.f32 %v3905, %v4033
      %4035 = vmatmul.bf16.gmra.mxu0 %v2055
      %v4036 = vpop.f32.mrf.mxu0
      %v4037 = vadd.f32 %v3908, %v4036
      %v4038 = vpop.f32.mrf.mxu0
      %v4039 = vadd.f32 %v3910, %v4038
      %4040 = vmatmul.bf16.gmra.mxu0 %v2099
      %v4041 = vpop.f32.mrf.mxu0
      %v4042 = vadd.f32 %v3913, %v4041
      %v4043 = vpop.f32.mrf.mxu0
      %v4044 = vadd.f32 %v3915, %v4043
      %4045 = vmatmul.bf16.gmra.mxu0 %v2143
      %v4046 = vpop.f32.mrf.mxu0
      %v4047 = vadd.f32 %v3918, %v4046
      %v4048 = vpop.f32.mrf.mxu0
      %v4049 = vadd.f32 %v3920, %v4048
      %4050 = vmatmul.bf16.gmra.mxu0 %v2187
      %v4051 = vpop.f32.mrf.mxu0
      %v4052 = vadd.f32 %v3923, %v4051
      %v4053 = vpop.f32.mrf.mxu0
      %v4054 = vadd.f32 %v3925, %v4053
      %4055 = vmatmul.bf16.gmra.mxu0 %v2231
      %v4056 = vpop.f32.mrf.mxu0
      %v4057 = vadd.f32 %v3928, %v4056
      %v4058 = vpop.f32.mrf.mxu0
      %v4059 = vadd.f32 %v3930, %v4058
      %4060 = vmatmul.bf16.gmra.mxu0 %v2275
      %v4061 = vpop.f32.mrf.mxu0
      %v4062 = vadd.f32 %v3933, %v4061
      %v4063 = vpop.f32.mrf.mxu0
      %v4064 = vadd.f32 %v3935, %v4063
      %4065 = vmatmul.bf16.gmra.mxu0 %v2319
      %v4066 = vpop.f32.mrf.mxu0
      %v4067 = vadd.f32 %v3938, %v4066
      %v4068 = vpop.f32.mrf.mxu0
      %v4069 = vadd.f32 %v3940, %v4068
      %4070 = vmatmul.bf16.gmra.mxu0 %v2368
      %v4071 = vpop.f32.mrf.mxu0
      %v4072 = vadd.f32 %v3943, %v4071
      %v4073 = vpop.f32.mrf.mxu0
      %v4074 = vadd.f32 %v3945, %v4073
      %4075 = vmatmul.bf16.gmra.mxu0 %v2449
      %v4076 = vpop.f32.mrf.mxu0
      %v4077 = vadd.f32 %v3948, %v4076
      %v4078 = vpop.f32.mrf.mxu0
      %v4079 = vadd.f32 %v3950, %v4078
      %4080 = vdwg.mxu0
      %4081 = vmatpush.bf16.msra.mxu0 %v2976
      %4082 = vmatpush.bf16.msra.mxu0 %v2975
      %4083 = vmatpush.bf16.msra.mxu0 %v2974
      %4084 = vmatpush.bf16.msra.mxu0 %v2973
      %4085 = vmatpush.bf16.msra.mxu0 %v2972
      %4086 = vmatpush.bf16.msra.mxu0 %v2971
      %4087 = vmatpush.bf16.msra.mxu0 %v2970
      %4088 = vmatpush.bf16.msra.mxu0 %v2969
      %4089 = vmatmul.bf16.gmra.mxu0 %v1361
      %v4090 = vpop.f32.mrf.mxu0
      %v4091 = vadd.f32 %v3962, %v4090
      %v4092 = vpop.f32.mrf.mxu0
      %v4093 = vadd.f32 %v3964, %v4092
      %4094 = vmatmul.bf16.gmra.mxu0 %v1427
      %v4095 = vpop.f32.mrf.mxu0
      %v4096 = vadd.f32 %v3967, %v4095
      %v4097 = vpop.f32.mrf.mxu0
      %v4098 = vadd.f32 %v3969, %v4097
      %4099 = vmatmul.bf16.gmra.mxu0 %v1490
      %v4100 = vpop.f32.mrf.mxu0
      %v4101 = vadd.f32 %v3972, %v4100
      %v4102 = vpop.f32.mrf.mxu0
      %v4103 = vadd.f32 %v3974, %v4102
      %4104 = vmatmul.bf16.gmra.mxu0 %v1536
      %v4105 = vpop.f32.mrf.mxu0
      %v4106 = vadd.f32 %v3977, %v4105
      %v4107 = vpop.f32.mrf.mxu0
      %v4108 = vadd.f32 %v3979, %v4107
      %4109 = vmatmul.bf16.gmra.mxu0 %v1580
      %v4110 = vpop.f32.mrf.mxu0
      %v4111 = vadd.f32 %v3982, %v4110
      %v4112 = vpop.f32.mrf.mxu0
      %v4113 = vadd.f32 %v3984, %v4112
      %4114 = vmatmul.bf16.gmra.mxu0 %v1624
      %v4115 = vpop.f32.mrf.mxu0
      %v4116 = vadd.f32 %v3987, %v4115
      %v4117 = vpop.f32.mrf.mxu0
      %v4118 = vadd.f32 %v3989, %v4117
      %4119 = vmatmul.bf16.gmra.mxu0 %v1668
      %v4120 = vpop.f32.mrf.mxu0
      %v4121 = vadd.f32 %v3992, %v4120
      %v4122 = vpop.f32.mrf.mxu0
      %v4123 = vadd.f32 %v3994, %v4122
      %4124 = vmatmul.bf16.gmra.mxu0 %v1712
      %v4125 = vpop.f32.mrf.mxu0
      %v4126 = vadd.f32 %v3997, %v4125
      %v4127 = vpop.f32.mrf.mxu0
      %v4128 = vadd.f32 %v3999, %v4127
      %4129 = vmatmul.bf16.gmra.mxu0 %v1756
      %v4130 = vpop.f32.mrf.mxu0
      %v4131 = vadd.f32 %v4002, %v4130
      %v4132 = vpop.f32.mrf.mxu0
      %v4133 = vadd.f32 %v4004, %v4132
      %4134 = vmatmul.bf16.gmra.mxu0 %v1800
      %v4135 = vpop.f32.mrf.mxu0
      %v4136 = vadd.f32 %v4007, %v4135
      %v4137 = vpop.f32.mrf.mxu0
      %v4138 = vadd.f32 %v4009, %v4137
      %4139 = vmatmul.bf16.gmra.mxu0 %v1844
      %v4140 = vpop.f32.mrf.mxu0
      %v4141 = vadd.f32 %v4012, %v4140
      %v4142 = vpop.f32.mrf.mxu0
      %v4143 = vadd.f32 %v4014, %v4142
      %4144 = vmatmul.bf16.gmra.mxu0 %v1888
      %v4145 = vpop.f32.mrf.mxu0
      %v4146 = vadd.f32 %v4017, %v4145
      %v4147 = vpop.f32.mrf.mxu0
      %v4148 = vadd.f32 %v4019, %v4147
      %4149 = vmatmul.bf16.gmra.mxu0 %v1932
      %v4150 = vpop.f32.mrf.mxu0
      %v4151 = vadd.f32 %v4022, %v4150
      %v4152 = vpop.f32.mrf.mxu0
      %v4153 = vadd.f32 %v4024, %v4152
      %4154 = vmatmul.bf16.gmra.mxu0 %v1976
      %v4155 = vpop.f32.mrf.mxu0
      %v4156 = vadd.f32 %v4027, %v4155
      %v4157 = vpop.f32.mrf.mxu0
      %v4158 = vadd.f32 %v4029, %v4157
      %4159 = vmatmul.bf16.gmra.mxu0 %v2020
      %v4160 = vpop.f32.mrf.mxu0
      %v4161 = vadd.f32 %v4032, %v4160
      %v4162 = vpop.f32.mrf.mxu0
      %v4163 = vadd.f32 %v4034, %v4162
      %4164 = vmatmul.bf16.gmra.mxu0 %v2064
      %v4165 = vpop.f32.mrf.mxu0
      %v4166 = vadd.f32 %v4037, %v4165
      %v4167 = vpop.f32.mrf.mxu0
      %v4168 = vadd.f32 %v4039, %v4167
      %4169 = vmatmul.bf16.gmra.mxu0 %v2108
      %v4170 = vpop.f32.mrf.mxu0
      %v4171 = vadd.f32 %v4042, %v4170
      %v4172 = vpop.f32.mrf.mxu0
      %v4173 = vadd.f32 %v4044, %v4172
      %4174 = vmatmul.bf16.gmra.mxu0 %v2152
      %v4175 = vpop.f32.mrf.mxu0
      %v4176 = vadd.f32 %v4047, %v4175
      %v4177 = vpop.f32.mrf.mxu0
      %v4178 = vadd.f32 %v4049, %v4177
      %4179 = vmatmul.bf16.gmra.mxu0 %v2196
      %v4180 = vpop.f32.mrf.mxu0
      %v4181 = vadd.f32 %v4052, %v4180
      %v4182 = vpop.f32.mrf.mxu0
      %v4183 = vadd.f32 %v4054, %v4182
      %4184 = vmatmul.bf16.gmra.mxu0 %v2240
      %v4185 = vpop.f32.mrf.mxu0
      %v4186 = vadd.f32 %v4057, %v4185
      %v4187 = vpop.f32.mrf.mxu0
      %v4188 = vadd.f32 %v4059, %v4187
      %4189 = vmatmul.bf16.gmra.mxu0 %v2284
      %v4190 = vpop.f32.mrf.mxu0
      %v4191 = vadd.f32 %v4062, %v4190
      %v4192 = vpop.f32.mrf.mxu0
      %v4193 = vadd.f32 %v4064, %v4192
      %4194 = vmatmul.bf16.gmra.mxu0 %v2328
      %v4195 = vpop.f32.mrf.mxu0
      %v4196 = vadd.f32 %v4067, %v4195
      %v4197 = vpop.f32.mrf.mxu0
      %v4198 = vadd.f32 %v4069, %v4197
      %4199 = vmatmul.bf16.gmra.mxu0 %v2377
      %v4200 = vpop.f32.mrf.mxu0
      %v4201 = vadd.f32 %v4072, %v4200
      %v4202 = vpop.f32.mrf.mxu0
      %v4203 = vadd.f32 %v4074, %v4202
      %4204 = vmatmul.bf16.gmra.mxu0 %v2458
      %v4205 = vpop.f32.mrf.mxu0
      %v4206 = vadd.f32 %v4077, %v4205
      %v4207 = vpop.f32.mrf.mxu0
      %v4208 = vadd.f32 %v4079, %v4207
      %4209 = vdwg.mxu0
      %4211 = vset.pattern.permute.xlu0 0
      %4212 = vperm.xlu0 %4211, %v243
      %v4213 = vpop.permute.xlu0 %4212
      %4216 = vset.pattern.permute.xlu0 0
      %4217 = vperm.xlu0 %4216, %v244
      %v4218 = vpop.permute.xlu0 %4217
      %4221 = vset.pattern.permute.xlu0 0
      %4222 = vperm.xlu0 %4221, %v245
      %v4223 = vpop.permute.xlu0 %4222
      %4226 = vset.pattern.permute.xlu0 0
      %4227 = vperm.xlu0 %4226, %v246
      %v4228 = vpop.permute.xlu0 %4227
      %4231 = vset.pattern.permute.xlu0 0
      %4232 = vperm.xlu0 %4231, %v247
      %v4233 = vpop.permute.xlu0 %4232
      %4236 = vset.pattern.permute.xlu0 0
      %4237 = vperm.xlu0 %4236, %v248
      %v4238 = vpop.permute.xlu0 %4237
      %4241 = vset.pattern.permute.xlu0 0
      %4242 = vperm.xlu0 %4241, %v249
      %v4243 = vpop.permute.xlu0 %4242
      %4246 = vset.pattern.permute.xlu0 0
      %4247 = vperm.xlu0 %4246, %v250
      %v4248 = vpop.permute.xlu0 %4247
      %4251 = vset.pattern.permute.xlu0 0
      %4252 = vperm.xlu0 %4251, %v251
      %v4253 = vpop.permute.xlu0 %4252
      %4256 = vset.pattern.permute.xlu0 0
      %4257 = vperm.xlu0 %4256, %v252
      %v4258 = vpop.permute.xlu0 %4257
      %4261 = vset.pattern.permute.xlu0 0
      %4262 = vperm.xlu0 %4261, %v253
      %v4263 = vpop.permute.xlu0 %4262
      %4266 = vset.pattern.permute.xlu0 0
      %4267 = vperm.xlu0 %4266, %v254
      %v4268 = vpop.permute.xlu0 %4267
      %4271 = vset.pattern.permute.xlu0 0
      %4272 = vperm.xlu0 %4271, %v255
      %v4273 = vpop.permute.xlu0 %4272
      %4276 = vset.pattern.permute.xlu0 0
      %4277 = vperm.xlu0 %4276, %v256
      %v4278 = vpop.permute.xlu0 %4277
      %4281 = vset.pattern.permute.xlu0 0
      %4282 = vperm.xlu0 %4281, %v257
      %v4283 = vpop.permute.xlu0 %4282
      %4286 = vset.pattern.permute.xlu0 0
      %4287 = vperm.xlu0 %4286, %v258
      %v4288 = vpop.permute.xlu0 %4287
      %4291 = vset.pattern.permute.xlu0 0
      %4292 = vperm.xlu0 %4291, %v259
      %v4293 = vpop.permute.xlu0 %4292
      %4296 = vset.pattern.permute.xlu0 0
      %4297 = vperm.xlu0 %4296, %v260
      %v4298 = vpop.permute.xlu0 %4297
      %4301 = vset.pattern.permute.xlu0 0
      %4302 = vperm.xlu0 %4301, %v261
      %v4303 = vpop.permute.xlu0 %4302
      %4306 = vset.pattern.permute.xlu0 0
      %4307 = vperm.xlu0 %4306, %v262
      %v4308 = vpop.permute.xlu0 %4307
      %4311 = vset.pattern.permute.xlu0 0
      %4312 = vperm.xlu0 %4311, %v263
      %v4313 = vpop.permute.xlu0 %4312
      %4316 = vset.pattern.permute.xlu0 0
      %4317 = vperm.xlu0 %4316, %v264
      %v4318 = vpop.permute.xlu0 %4317
      %4321 = vset.pattern.permute.xlu0 0
      %4322 = vperm.xlu0 %4321, %v265
      %v4323 = vpop.permute.xlu0 %4322
      %4326 = vset.pattern.permute.xlu0 0
      %4327 = vperm.xlu0 %4326, %v266
      %v4328 = vpop.permute.xlu0 %4327
      %4331 = vset.pattern.permute.xlu0 0
      %4332 = vperm.xlu0 %4331, %v267
      %v4333 = vpop.permute.xlu0 %4332
      %4336 = vset.pattern.permute.xlu0 0
      %4337 = vperm.xlu0 %4336, %v268
      %v4338 = vpop.permute.xlu0 %4337
      %4341 = vset.pattern.permute.xlu0 0
      %4342 = vperm.xlu0 %4341, %v269
      %v4343 = vpop.permute.xlu0 %4342
      %4346 = vset.pattern.permute.xlu0 0
      %4347 = vperm.xlu0 %4346, %v270
      %v4348 = vpop.permute.xlu0 %4347
      %4351 = vset.pattern.permute.xlu0 0
      %4352 = vperm.xlu0 %4351, %v271
      %v4353 = vpop.permute.xlu0 %4352
      %4356 = vset.pattern.permute.xlu0 0
      %4357 = vperm.xlu0 %4356, %v272
      %v4358 = vpop.permute.xlu0 %4357
      %4361 = vset.pattern.permute.xlu0 0
      %4362 = vperm.xlu0 %4361, %v273
      %v4363 = vpop.permute.xlu0 %4362
      %4366 = vset.pattern.permute.xlu0 0
      %4367 = vperm.xlu0 %4366, %v274
      %v4368 = vpop.permute.xlu0 %4367
      %4371 = vset.pattern.permute.xlu0 0
      %4372 = vperm.xlu0 %4371, %v275
      %v4373 = vpop.permute.xlu0 %4372
      %4376 = vset.pattern.permute.xlu0 0
      %4377 = vperm.xlu0 %4376, %v276
      %v4378 = vpop.permute.xlu0 %4377
      %4381 = vset.pattern.permute.xlu0 0
      %4382 = vperm.xlu0 %4381, %v277
      %v4383 = vpop.permute.xlu0 %4382
      %4386 = vset.pattern.permute.xlu0 0
      %4387 = vperm.xlu0 %4386, %v278
      %v4388 = vpop.permute.xlu0 %4387
      %4391 = vset.pattern.permute.xlu0 0
      %4392 = vperm.xlu0 %4391, %v279
      %v4393 = vpop.permute.xlu0 %4392
      %4396 = vset.pattern.permute.xlu0 0
      %4397 = vperm.xlu0 %4396, %v280
      %v4398 = vpop.permute.xlu0 %4397
      %4401 = vset.pattern.permute.xlu0 0
      %4402 = vperm.xlu0 %4401, %v281
      %v4403 = vpop.permute.xlu0 %4402
      %4406 = vset.pattern.permute.xlu0 0
      %4407 = vperm.xlu0 %4406, %v282
      %v4408 = vpop.permute.xlu0 %4407
      %4411 = vset.pattern.permute.xlu0 0
      %4412 = vperm.xlu0 %4411, %v283
      %v4413 = vpop.permute.xlu0 %4412
      %4416 = vset.pattern.permute.xlu0 0
      %4417 = vperm.xlu0 %4416, %v284
      %v4418 = vpop.permute.xlu0 %4417
      %4421 = vset.pattern.permute.xlu0 0
      %4422 = vperm.xlu0 %4421, %v285
      %v4423 = vpop.permute.xlu0 %4422
      %4426 = vset.pattern.permute.xlu0 0
      %4427 = vperm.xlu0 %4426, %v286
      %v4428 = vpop.permute.xlu0 %4427
      %4431 = vset.pattern.permute.xlu0 0
      %4432 = vperm.xlu0 %4431, %v287
      %v4433 = vpop.permute.xlu0 %4432
      %4436 = vset.pattern.permute.xlu0 0
      %4437 = vperm.xlu0 %4436, %v288
      %v4438 = vpop.permute.xlu0 %4437
      %4441 = vset.pattern.permute.xlu0 0
      %4442 = vperm.xlu0 %4441, %v289
      %v4443 = vpop.permute.xlu0 %4442
      %4446 = vset.pattern.permute.xlu0 0
      %4447 = vperm.xlu0 %4446, %v290
      %v4448 = vpop.permute.xlu0 %4447
      %v4450 = vmul.f32 %v4091, %v4213
      %v4451 = vmul.f32 %v4093, %v4218
      %v4452 = vmul.f32 %v4096, %v4223
      %v4453 = vmul.f32 %v4098, %v4228
      %v4454 = vmul.f32 %v4101, %v4233
      %v4455 = vmul.f32 %v4103, %v4238
      %v4456 = vmul.f32 %v4106, %v4243
      %v4457 = vmul.f32 %v4108, %v4248
      %v4458 = vmul.f32 %v4111, %v4253
      %v4459 = vmul.f32 %v4113, %v4258
      %v4460 = vmul.f32 %v4116, %v4263
      %v4461 = vmul.f32 %v4118, %v4268
      %v4462 = vmul.f32 %v4121, %v4273
      %v4463 = vmul.f32 %v4123, %v4278
      %v4464 = vmul.f32 %v4126, %v4283
      %v4465 = vmul.f32 %v4128, %v4288
      %v4466 = vmul.f32 %v4131, %v4293
      %v4467 = vmul.f32 %v4133, %v4298
      %v4468 = vmul.f32 %v4136, %v4303
      %v4469 = vmul.f32 %v4138, %v4308
      %v4470 = vmul.f32 %v4141, %v4313
      %v4471 = vmul.f32 %v4143, %v4318
      %v4472 = vmul.f32 %v4146, %v4323
      %v4473 = vmul.f32 %v4148, %v4328
      %v4474 = vmul.f32 %v4151, %v4333
      %v4475 = vmul.f32 %v4153, %v4338
      %v4476 = vmul.f32 %v4156, %v4343
      %v4477 = vmul.f32 %v4158, %v4348
      %v4478 = vmul.f32 %v4161, %v4353
      %v4479 = vmul.f32 %v4163, %v4358
      %v4480 = vmul.f32 %v4166, %v4363
      %v4481 = vmul.f32 %v4168, %v4368
      %v4482 = vmul.f32 %v4171, %v4373
      %v4483 = vmul.f32 %v4173, %v4378
      %v4484 = vmul.f32 %v4176, %v4383
      %v4485 = vmul.f32 %v4178, %v4388
      %v4486 = vmul.f32 %v4181, %v4393
      %v4487 = vmul.f32 %v4183, %v4398
      %v4488 = vmul.f32 %v4186, %v4403
      %v4489 = vmul.f32 %v4188, %v4408
      %v4490 = vmul.f32 %v4191, %v4413
      %v4491 = vmul.f32 %v4193, %v4418
      %v4492 = vmul.f32 %v4196, %v4423
      %v4493 = vmul.f32 %v4198, %v4428
      %v4494 = vmul.f32 %v4201, %v4433
      %v4495 = vmul.f32 %v4203, %v4438
      %v4496 = vmul.f32 %v4206, %v4443
      %v4497 = vmul.f32 %v4208, %v4448
      %v4498 = vadd.f32 %v4450, %v4451
      %v4499 = vadd.f32 %v4498, %v4452
      %v4500 = vadd.f32 %v4499, %v4453
      %v4501 = vadd.f32 %v4500, %v4454
      %v4502 = vadd.f32 %v4501, %v4455
      %v4503 = vadd.f32 %v4502, %v4456
      %v4504 = vadd.f32 %v4503, %v4457
      %v4505 = vadd.f32 %v4504, %v4458
      %v4506 = vadd.f32 %v4505, %v4459
      %v4507 = vadd.f32 %v4506, %v4460
      %v4508 = vadd.f32 %v4507, %v4461
      %v4509 = vadd.f32 %v4508, %v4462
      %v4510 = vadd.f32 %v4509, %v4463
      %v4511 = vadd.f32 %v4510, %v4464
      %v4512 = vadd.f32 %v4511, %v4465
      %v4513 = vadd.f32 %v4512, %v4466
      %v4514 = vadd.f32 %v4513, %v4467
      %v4515 = vadd.f32 %v4514, %v4468
      %v4516 = vadd.f32 %v4515, %v4469
      %v4517 = vadd.f32 %v4516, %v4470
      %v4518 = vadd.f32 %v4517, %v4471
      %v4519 = vadd.f32 %v4518, %v4472
      %v4520 = vadd.f32 %v4519, %v4473
      %v4521 = vadd.f32 %v4520, %v4474
      %v4522 = vadd.f32 %v4521, %v4475
      %v4523 = vadd.f32 %v4522, %v4476
      %v4524 = vadd.f32 %v4523, %v4477
      %v4525 = vadd.f32 %v4524, %v4478
      %v4526 = vadd.f32 %v4525, %v4479
      %v4527 = vadd.f32 %v4526, %v4480
      %v4528 = vadd.f32 %v4527, %v4481
      %v4529 = vadd.f32 %v4528, %v4482
      %v4530 = vadd.f32 %v4529, %v4483
      %v4531 = vadd.f32 %v4530, %v4484
      %v4532 = vadd.f32 %v4531, %v4485
      %v4533 = vadd.f32 %v4532, %v4486
      %v4534 = vadd.f32 %v4533, %v4487
      %v4535 = vadd.f32 %v4534, %v4488
      %v4536 = vadd.f32 %v4535, %v4489
      %v4537 = vadd.f32 %v4536, %v4490
      %v4538 = vadd.f32 %v4537, %v4491
      %v4539 = vadd.f32 %v4538, %v4492
      %v4540 = vadd.f32 %v4539, %v4493
      %v4541 = vadd.f32 %v4540, %v4494
      %v4542 = vadd.f32 %v4541, %v4495
      %v4543 = vadd.f32 %v4542, %v4496
      %v4544 = vadd.f32 %v4543, %v4497
      %v4545 = vrot.slane %v4544, 4
      %v4546 = vadd.f32 %v4544, %v4545
      %v4547 = vrot.slane %v4546, 2
      %v4548 = vadd.f32 %v4546, %v4547
      %v4549 = vrot.slane %v4548, 1
      %v4550 = vadd.f32 %v4548, %v4549
      %4551 = vst [vmem:[%s238] sm:$0x1] %v4550
      %v4552 = vmul.f32 %v4450, %v4091
      %v4553 = vmul.f32 %v4451, %v4093
      %v4554 = vmul.f32 %v4452, %v4096
      %v4555 = vmul.f32 %v4453, %v4098
      %v4556 = vmul.f32 %v4454, %v4101
      %v4557 = vmul.f32 %v4455, %v4103
      %v4558 = vmul.f32 %v4456, %v4106
      %v4559 = vmul.f32 %v4457, %v4108
      %v4560 = vmul.f32 %v4458, %v4111
      %v4561 = vmul.f32 %v4459, %v4113
      %v4562 = vmul.f32 %v4460, %v4116
      %v4563 = vmul.f32 %v4461, %v4118
      %v4564 = vmul.f32 %v4462, %v4121
      %v4565 = vmul.f32 %v4463, %v4123
      %v4566 = vmul.f32 %v4464, %v4126
      %v4567 = vmul.f32 %v4465, %v4128
      %v4568 = vmul.f32 %v4466, %v4131
      %v4569 = vmul.f32 %v4467, %v4133
      %v4570 = vmul.f32 %v4468, %v4136
      %v4571 = vmul.f32 %v4469, %v4138
      %v4572 = vmul.f32 %v4470, %v4141
      %v4573 = vmul.f32 %v4471, %v4143
      %v4574 = vmul.f32 %v4472, %v4146
      %v4575 = vmul.f32 %v4473, %v4148
      %v4576 = vmul.f32 %v4474, %v4151
      %v4577 = vmul.f32 %v4475, %v4153
      %v4578 = vmul.f32 %v4476, %v4156
      %v4579 = vmul.f32 %v4477, %v4158
      %v4580 = vmul.f32 %v4478, %v4161
      %v4581 = vmul.f32 %v4479, %v4163
      %v4582 = vmul.f32 %v4480, %v4166
      %v4583 = vmul.f32 %v4481, %v4168
      %v4584 = vmul.f32 %v4482, %v4171
      %v4585 = vmul.f32 %v4483, %v4173
      %v4586 = vmul.f32 %v4484, %v4176
      %v4587 = vmul.f32 %v4485, %v4178
      %v4588 = vmul.f32 %v4486, %v4181
      %v4589 = vmul.f32 %v4487, %v4183
      %v4590 = vmul.f32 %v4488, %v4186
      %v4591 = vmul.f32 %v4489, %v4188
      %v4592 = vmul.f32 %v4490, %v4191
      %v4593 = vmul.f32 %v4491, %v4193
      %v4594 = vmul.f32 %v4492, %v4196
      %v4595 = vmul.f32 %v4493, %v4198
      %v4596 = vmul.f32 %v4494, %v4201
      %v4597 = vmul.f32 %v4495, %v4203
      %v4598 = vmul.f32 %v4496, %v4206
      %v4599 = vmul.f32 %v4497, %v4208
      %v4600 = vadd.f32 %v4552, %v4553
      %v4601 = vadd.f32 %v4600, %v4554
      %v4602 = vadd.f32 %v4601, %v4555
      %v4603 = vadd.f32 %v4602, %v4556
      %v4604 = vadd.f32 %v4603, %v4557
      %v4605 = vadd.f32 %v4604, %v4558
      %v4606 = vadd.f32 %v4605, %v4559
      %v4607 = vadd.f32 %v4606, %v4560
      %v4608 = vadd.f32 %v4607, %v4561
      %v4609 = vadd.f32 %v4608, %v4562
      %v4610 = vadd.f32 %v4609, %v4563
      %v4611 = vadd.f32 %v4610, %v4564
      %v4612 = vadd.f32 %v4611, %v4565
      %v4613 = vadd.f32 %v4612, %v4566
      %v4614 = vadd.f32 %v4613, %v4567
      %v4615 = vadd.f32 %v4614, %v4568
      %v4616 = vadd.f32 %v4615, %v4569
      %v4617 = vadd.f32 %v4616, %v4570
      %v4618 = vadd.f32 %v4617, %v4571
      %v4619 = vadd.f32 %v4618, %v4572
      %v4620 = vadd.f32 %v4619, %v4573
      %v4621 = vadd.f32 %v4620, %v4574
      %v4622 = vadd.f32 %v4621, %v4575
      %v4623 = vadd.f32 %v4622, %v4576
      %v4624 = vadd.f32 %v4623, %v4577
      %v4625 = vadd.f32 %v4624, %v4578
      %v4626 = vadd.f32 %v4625, %v4579
      %v4627 = vadd.f32 %v4626, %v4580
      %v4628 = vadd.f32 %v4627, %v4581
      %v4629 = vadd.f32 %v4628, %v4582
      %v4630 = vadd.f32 %v4629, %v4583
      %v4631 = vadd.f32 %v4630, %v4584
      %v4632 = vadd.f32 %v4631, %v4585
      %v4633 = vadd.f32 %v4632, %v4586
      %v4634 = vadd.f32 %v4633, %v4587
      %v4635 = vadd.f32 %v4634, %v4588
      %v4636 = vadd.f32 %v4635, %v4589
      %v4637 = vadd.f32 %v4636, %v4590
      %v4638 = vadd.f32 %v4637, %v4591
      %v4639 = vadd.f32 %v4638, %v4592
      %v4640 = vadd.f32 %v4639, %v4593
      %v4641 = vadd.f32 %v4640, %v4594
      %v4642 = vadd.f32 %v4641, %v4595
      %v4643 = vadd.f32 %v4642, %v4596
      %v4644 = vadd.f32 %v4643, %v4597
      %v4645 = vadd.f32 %v4644, %v4598
      %v4646 = vadd.f32 %v4645, %v4599
      %v4647 = vrot.slane %v4646, 4
      %v4648 = vadd.f32 %v4646, %v4647
      %v4649 = vrot.slane %v4648, 2
      %v4650 = vadd.f32 %v4648, %v4649
      %v4651 = vrot.slane %v4650, 1
      %v4652 = vadd.f32 %v4650, %v4651
      %4653 = vst [vmem:[%s241] sm:$0x1] %v4652
      %4654 = vst [vmem:[%s235] sm:$0xf] 0
      %4655 = vst [vmem:[%s235 + $0x4] sm:$0xf] 0
      %4656 = vst [vmem:[%s235 + $0x8] sm:$0xf] 0
      %4657 = vst [vmem:[%s235 + $0xc] sm:$0xf] 0
      %4658 = vst [vmem:[%s235 + $0x10] sm:$0xf] 0
      %4659 = vst [vmem:[%s235 + $0x14] sm:$0xf] 0
      %v4660 = vpack.c.bf16 %v4091, %v4091
      %v4661 = vpack.c.bf16 %v4093, %v4093
      %v4662 = vpack.c.bf16 %v4096, %v4096
      %v4663 = vpack.c.bf16 %v4098, %v4098
      %v4664 = vpack.c.bf16 %v4101, %v4101
      %v4665 = vpack.c.bf16 %v4103, %v4103
      %v4666 = vpack.c.bf16 %v4106, %v4106
      %v4667 = vpack.c.bf16 %v4108, %v4108
      %v4668 = vpack.c.bf16 %v4111, %v4111
      %v4669 = vpack.c.bf16 %v4113, %v4113
      %v4670 = vpack.c.bf16 %v4116, %v4116
      %v4671 = vpack.c.bf16 %v4118, %v4118
      %v4672 = vpack.c.bf16 %v4121, %v4121
      %v4673 = vpack.c.bf16 %v4123, %v4123
      %v4674 = vpack.c.bf16 %v4126, %v4126
      %v4675 = vpack.c.bf16 %v4128, %v4128
      %v4676 = vpack.c.bf16 %v4131, %v4131
      %v4677 = vpack.c.bf16 %v4133, %v4133
      %v4678 = vpack.c.bf16 %v4136, %v4136
      %v4679 = vpack.c.bf16 %v4138, %v4138
      %v4680 = vpack.c.bf16 %v4141, %v4141
      %v4681 = vpack.c.bf16 %v4143, %v4143
      %v4682 = vpack.c.bf16 %v4146, %v4146
      %v4683 = vpack.c.bf16 %v4148, %v4148
      %v4684 = vpack.c.bf16 %v4151, %v4151
      %v4685 = vpack.c.bf16 %v4153, %v4153
      %v4686 = vpack.c.bf16 %v4156, %v4156
      %v4687 = vpack.c.bf16 %v4158, %v4158
      %v4688 = vpack.c.bf16 %v4161, %v4161
      %v4689 = vpack.c.bf16 %v4163, %v4163
      %v4690 = vpack.c.bf16 %v4166, %v4166
      %v4691 = vpack.c.bf16 %v4168, %v4168
      %v4692 = vpack.c.bf16 %v4171, %v4171
      %v4693 = vpack.c.bf16 %v4173, %v4173
      %v4694 = vpack.c.bf16 %v4176, %v4176
      %v4695 = vpack.c.bf16 %v4178, %v4178
      %v4696 = vpack.c.bf16 %v4181, %v4181
      %v4697 = vpack.c.bf16 %v4183, %v4183
      %v4698 = vpack.c.bf16 %v4186, %v4186
      %v4699 = vpack.c.bf16 %v4188, %v4188
      %v4700 = vpack.c.bf16 %v4191, %v4191
      %v4701 = vpack.c.bf16 %v4193, %v4193
      %v4702 = vpack.c.bf16 %v4196, %v4196
      %v4703 = vpack.c.bf16 %v4198, %v4198
      %v4704 = vpack.c.bf16 %v4201, %v4201
      %v4705 = vpack.c.bf16 %v4203, %v4203
      %v4706 = vpack.c.bf16 %v4206, %v4206
      %v4707 = vpack.c.bf16 %v4208, %v4208
      %4708 = vst [vmem:[%s235 + $0x18] sm:$0xf] %v4660
      %4709 = vst [vmem:[%s235 + $0x1c] sm:$0xf] %v4661
      %4710 = vst [vmem:[%s235 + $0x20] sm:$0xf] %v4662
      %4711 = vst [vmem:[%s235 + $0x24] sm:$0xf] %v4663
      %4712 = vst [vmem:[%s235 + $0x28] sm:$0xf] %v4664
      %4713 = vst [vmem:[%s235 + $0x2c] sm:$0xf] %v4665
      %4714 = vst [vmem:[%s235 + $0x30] sm:$0xf] %v4666
      %4715 = vst [vmem:[%s235 + $0x34] sm:$0xf] %v4667
      %4716 = vst [vmem:[%s235 + $0x38] sm:$0xf] %v4668
      %4717 = vst [vmem:[%s235 + $0x3c] sm:$0xf] %v4669
      %4718 = vst [vmem:[%s235 + $0x40] sm:$0xf] %v4670
      %4719 = vst [vmem:[%s235 + $0x44] sm:$0xf] %v4671
      %4720 = vst [vmem:[%s235 + $0x48] sm:$0xf] %v4672
      %4721 = vst [vmem:[%s235 + $0x4c] sm:$0xf] %v4673
      %4722 = vst [vmem:[%s235 + $0x50] sm:$0xf] %v4674
      %4723 = vst [vmem:[%s235 + $0x54] sm:$0xf] %v4675
      %4724 = vst [vmem:[%s235 + $0x58] sm:$0xf] %v4676
      %4725 = vst [vmem:[%s235 + $0x5c] sm:$0xf] %v4677
      %4726 = vst [vmem:[%s235 + $0x60] sm:$0xf] %v4678
      %4727 = vst [vmem:[%s235 + $0x64] sm:$0xf] %v4679
      %4728 = vst [vmem:[%s235 + $0x68] sm:$0xf] %v4680
      %4729 = vst [vmem:[%s235 + $0x6c] sm:$0xf] %v4681
      %4730 = vst [vmem:[%s235 + $0x70] sm:$0xf] %v4682
      %4731 = vst [vmem:[%s235 + $0x74] sm:$0xf] %v4683
      %4732 = vst [vmem:[%s235 + $0x78] sm:$0xf] %v4684
      %4733 = vst [vmem:[%s235 + $0x7c] sm:$0xf] %v4685
      %4734 = vst [vmem:[%s235 + $0x80] sm:$0xf] %v4686
      %4735 = vst [vmem:[%s235 + $0x84] sm:$0xf] %v4687
      %4736 = vst [vmem:[%s235 + $0x88] sm:$0xf] %v4688
      %4737 = vst [vmem:[%s235 + $0x8c] sm:$0xf] %v4689
      %4738 = vst [vmem:[%s235 + $0x90] sm:$0xf] %v4690
      %4739 = vst [vmem:[%s235 + $0x94] sm:$0xf] %v4691
      %4740 = vst [vmem:[%s235 + $0x98] sm:$0xf] %v4692
      %4741 = vst [vmem:[%s235 + $0x9c] sm:$0xf] %v4693
      %4742 = vst [vmem:[%s235 + $0xa0] sm:$0xf] %v4694
      %4743 = vst [vmem:[%s235 + $0xa4] sm:$0xf] %v4695
      %4744 = vst [vmem:[%s235 + $0xa8] sm:$0xf] %v4696
      %4745 = vst [vmem:[%s235 + $0xac] sm:$0xf] %v4697
      %4746 = vst [vmem:[%s235 + $0xb0] sm:$0xf] %v4698
      %4747 = vst [vmem:[%s235 + $0xb4] sm:$0xf] %v4699
      %4748 = vst [vmem:[%s235 + $0xb8] sm:$0xf] %v4700
      %4749 = vst [vmem:[%s235 + $0xbc] sm:$0xf] %v4701
      %4750 = vst [vmem:[%s235 + $0xc0] sm:$0xf] %v4702
      %4751 = vst [vmem:[%s235 + $0xc4] sm:$0xf] %v4703
      %4752 = vst [vmem:[%s235 + $0xc8] sm:$0xf] %v4704
      %4753 = vst [vmem:[%s235 + $0xcc] sm:$0xf] %v4705
      %4754 = vst [vmem:[%s235 + $0xd0] sm:$0xf] %v4706
      %4755 = vst [vmem:[%s235 + $0xd4] sm:$0xf] %v4707
      %4756 = vst [vmem:[%s235 + $0xd8] sm:$0xf] 0
      %4757 = vst [vmem:[%s235 + $0xdc] sm:$0xf] 0
      %4758 = vst [vmem:[%s235 + $0xe0] sm:$0xf] 0
      %4759 = vst [vmem:[%s235 + $0xe4] sm:$0xf] 0
      %4760 = vst [vmem:[%s235 + $0xe8] sm:$0xf] 0
      %4761 = vst [vmem:[%s235 + $0xec] sm:$0xf] 0
      %p4762 = scmp.lt.s32.totalorder %s17, 1
      %s4763 = scalar_select %p4762, %s17, 1
      %s4764 = smul.addr %s4763, 60
      %s4765 = smul.addr %s4764, 4
      %s4766 = scalar_lea.vmem %s3, %s4765
      %p4767 = scmp.lt.s32.totalorder %s17, 1
      %s4768 = scalar_select %p4767, %s17, 1
      %s4769 = scalar_lea.vmem %s4, %s4768
      %p4770 = scmp.lt.s32.totalorder %s17, 1
      %s4771 = scalar_select %p4770, %s17, 1
      %s4772 = scalar_lea.vmem %s5, %s4771
      // Predicated region
      $region33: #{residual_forward.3} parent=31 // pred_check
        %p4773 = pneg %p103
      $region34: #{residual_forward.3} parent=31 // pred_check_branch
        %4775 = sbr.rel (%p4773) target = $region36
      $region35: #{residual_forward.3} parent=31 // pred_region
        _
      $region36: #{residual_forward.3} parent=31 // pred_fallthru
        _
      // Predicated region
      $region37: #{residual_forward.3} parent=31 // pred_check
        %p4776 = pneg %p129
      $region38: #{residual_forward.3} parent=31 // pred_check_branch
        %4778 = sbr.rel (%p4776) target = $region40
      $region39: #{residual_forward.3} parent=31 // pred_region
        _
      $region40: #{residual_forward.3} parent=31 // pred_fallthru
        _
      // Predicated region
      $region41: #{residual_forward.3} parent=31 // pred_check
        %p4779 = pneg %p155
      $region42: #{residual_forward.3} parent=31 // pred_check_branch
        %4781 = sbr.rel (%p4779) target = $region44
      $region43: #{residual_forward.3} parent=31 // pred_region
        _
      $region44: #{residual_forward.3} parent=31 // pred_fallthru
        _
    $region32: #{residual_forward.3} parent=5 // pred_fallthru
      _
    %p4782 = scmp.le.s32.totalorder 2, %s12
    // Predicated region
    $region45: #{residual_forward.3} parent=5 // pred_check
      %p4783 = pneg %p4782
    $region46: #{residual_forward.3} parent=5 // pred_check_branch
      %4785 = sbr.rel (%p4783) target = $region48
    $region47: #{residual_forward.3} parent=5 // pred_region
      %s4786 = ssub.s32 %s12, 2
      // Predicated region
      $region49: #{residual_forward.3} parent=47 // pred_check
        %p4787 = pneg %p109
      $region50: #{residual_forward.3} parent=47 // pred_check_branch
        %4789 = sbr.rel (%p4787) target = $region52
      $region51: #{residual_forward.3} parent=47 // pred_region
        %p4790 = scmp.lt.s32.totalorder %s18, 1
        %s4791 = scalar_select %p4790, %s18, 1
        %s4792 = smul.addr %s4791, 60
        %s4793 = smul.addr %s4792, 4
        %s4794 = scalar_lea.vmem %s3, %s4793
      $region52: #{residual_forward.3} parent=47 // pred_fallthru
        _
      // Predicated region
      $region53: #{residual_forward.3} parent=47 // pred_check
        %p4795 = pneg %p135
      $region54: #{residual_forward.3} parent=47 // pred_check_branch
        %4797 = sbr.rel (%p4795) target = $region56
      $region55: #{residual_forward.3} parent=47 // pred_region
        %p4798 = scmp.lt.s32.totalorder %s18, 1
        %s4799 = scalar_select %p4798, %s18, 1
        %s4800 = scalar_lea.vmem %s4, %s4799
      $region56: #{residual_forward.3} parent=47 // pred_fallthru
        _
      // Predicated region
      $region57: #{residual_forward.3} parent=47 // pred_check
        %p4801 = pneg %p161
      $region58: #{residual_forward.3} parent=47 // pred_check_branch
        %4803 = sbr.rel (%p4801) target = $region60
      $region59: #{residual_forward.3} parent=47 // pred_region
        %p4804 = scmp.lt.s32.totalorder %s18, 1
        %s4805 = scalar_select %p4804, %s18, 1
        %s4806 = scalar_lea.vmem %s5, %s4805
      $region60: #{residual_forward.3} parent=47 // pred_fallthru
        _
    $region48: #{residual_forward.3} parent=5 // pred_fallthru
      _
  $region6: #{residual_forward.3} parent=0 // loop_footer
    %s16 = sadd.s32 1, %s12
  $region7: #{residual_forward.3} parent=0 // loop_footer_branch
    %11 = sbr.rel target = $region3
  $region8: #{residual_forward.3} parent=0 // loop_exit
    _

// kernel: residual_forward.4
$region0: #{residual_forward.4}
  #allocation0 [shape = 'u32[]', space=smem, size = 0x4, offset = 0x4, fixed_abs, tag = 'smem constant byte address 0x4 - core index']
  #allocation1 [shape = 'u32[72,128]{1,0:T(1,128)}', space=vmem, size = 0x9000, scoped, tag = 'internal scratch']
  %s0 = inlined_call_operand.vmem [shape: bf16[2,480,128], index: 0, kind: input, shape index: {}]
  %s1 = inlined_call_operand.vmem [shape: bf16[1152,128], index: 1, kind: input, shape index: {}]
  %s2 = inlined_call_operand.vmem [shape: f32[1,128], index: 2, kind: input, shape index: {}]
  %s3 = inlined_call_operand.vmem [shape: f32[1,128], index: 3, kind: input, shape index: {}]
  %s4 = inlined_call_operand.vmem [shape: f32[480,1], index: 4, kind: input, shape index: {}]
  %s5 = inlined_call_operand.vmem [shape: bf16[2,480,128], index: 5, kind: output, shape index: {0}]
  %s6 = inlined_call_operand.vmem [shape: f32[2,1,128], index: 6, kind: output, shape index: {1}]
  %s7 = inlined_call_operand.vmem [shape: f32[2,1,128], index: 7, kind: output, shape index: {2}]
  %8 = xla_tuple %s5, %s6, %s7
  %s9 = sld [smem:[#allocation0]]
  $region69: #{residual_forward.4} parent=0
    _
  %s11 = ssub.s32 1, %s9
  %s12 = scalar_select 0, %s11, %s9
  loop: start=0, step=1, limit=4
  $region2: #{residual_forward.4} parent=0 // loop_pre_header
    _
  $region3: #{residual_forward.4} parent=0 // loop_header
    %s14 = sphi 0, %s18
    %p15 = scmp.ge.s32.totalorder %s14, 4
    %s24 = sphi 0, %s26
    %s27 = sphi 0, %s24
    %s28 = sphi 0, %s27
    %s44 = sphi 0, %s28
    %s48 = sphi 0, %s48
    %s50 = sphi 0, %s48
    %s51 = sphi 0, %s50
    %s65 = sphi 0, %s51
    %s69 = sphi 0, %s69
    %s71 = sphi 0, %s69
    %s72 = sphi 0, %s71
    %s86 = sphi 0, %s72
    %s90 = sphi 0, %s90
    %s92 = sphi 0, %s90
    %s93 = sphi 0, %s92
    %s107 = sphi 0, %s93
    %s111 = sphi 0, %s111
    %s113 = sphi 0, %s111
    %s114 = sphi 0, %s113
    %s128 = sphi 0, %s114
    %s134 = sphi 0, %s136
    %s137 = sphi 0, %s134
    %s138 = sphi 0, %s137
    %s154 = sphi 0, %s138
    %s160 = sphi 0, %s162
    %s163 = sphi 0, %s160
    %s164 = sphi 0, %s163
    %s180 = sphi 0, %s164
    %s186 = sphi 0, %s188
    %s189 = sphi 0, %s186
    %s190 = sphi 0, %s189
    %s206 = sphi 0, %s190
  $region4: #{residual_forward.4} parent=0 // loop_header_branch
    %17 = sbr.rel (%p15) target = $region8
  $region5: #{residual_forward.4} parent=0 // loop_body
    %s19 = ssub.s32 %s14, 1
    %s20 = ssub.s32 %s14, 2
    %s21 = sadd.s32 %s14, 1
    %s22 = ssub.s32 %s14, %s21
    %p23 = scmp.eq.s32.totalorder %s22, 0
    %s25 = sadd.s32 %s24, 1
    %s26 = scalar_select %p23, %s24, %s25
    %p29 = pneg %p23
    %p30 = scmp.eq.s32.totalorder %s14, 1
    %p31 = por %p29, %p30
    %p32 = scmp.ne.s32.totalorder %s24, %s27
    %p33 = scmp.eq.s32.totalorder %s14, 0
    %p34 = por %p32, %p33
    %p35 = scmp.ne.s32.totalorder %s24, %s27
    %p36 = scmp.eq.s32.totalorder %s19, 1
    %p37 = por %p35, %p36
    %p38 = scmp.ne.s32.totalorder %s27, %s28
    %p39 = scmp.eq.s32.totalorder %s19, 0
    %p40 = por %p38, %p39
    %p41 = scmp.ne.s32.totalorder %s27, %s28
    %p42 = scmp.eq.s32.totalorder %s20, 1
    %p43 = por %p41, %p42
    %p45 = scmp.ne.s32.totalorder %s28, %s44
    %p46 = scmp.eq.s32.totalorder %s20, 0
    %p47 = por %p45, %p46
    %s49 = sadd.s32 %s48, 1
    %p52 = scmp.eq.s32.totalorder %s14, 1
    %p53 = scmp.ne.s32.totalorder %s48, %s50
    %p54 = scmp.eq.s32.totalorder %s14, 0
    %p55 = por %p53, %p54
    %p56 = scmp.ne.s32.totalorder %s48, %s50
    %p57 = scmp.eq.s32.totalorder %s19, 1
    %p58 = por %p56, %p57
    %p59 = scmp.ne.s32.totalorder %s50, %s51
    %p60 = scmp.eq.s32.totalorder %s19, 0
    %p61 = por %p59, %p60
    %p62 = scmp.ne.s32.totalorder %s50, %s51
    %p63 = scmp.eq.s32.totalorder %s20, 1
    %p64 = por %p62, %p63
    %p66 = scmp.ne.s32.totalorder %s51, %s65
    %p67 = scmp.eq.s32.totalorder %s20, 0
    %p68 = por %p66, %p67
    %s70 = sadd.s32 %s69, 1
    %p73 = scmp.eq.s32.totalorder %s14, 1
    %p74 = scmp.ne.s32.totalorder %s69, %s71
    %p75 = scmp.eq.s32.totalorder %s14, 0
    %p76 = por %p74, %p75
    %p77 = scmp.ne.s32.totalorder %s69, %s71
    %p78 = scmp.eq.s32.totalorder %s19, 1
    %p79 = por %p77, %p78
    %p80 = scmp.ne.s32.totalorder %s71, %s72
    %p81 = scmp.eq.s32.totalorder %s19, 0
    %p82 = por %p80, %p81
    %p83 = scmp.ne.s32.totalorder %s71, %s72
    %p84 = scmp.eq.s32.totalorder %s20, 1
    %p85 = por %p83, %p84
    %p87 = scmp.ne.s32.totalorder %s72, %s86
    %p88 = scmp.eq.s32.totalorder %s20, 0
    %p89 = por %p87, %p88
    %s91 = sadd.s32 %s90, 1
    %p94 = scmp.eq.s32.totalorder %s14, 1
    %p95 = scmp.ne.s32.totalorder %s90, %s92
    %p96 = scmp.eq.s32.totalorder %s14, 0
    %p97 = por %p95, %p96
    %p98 = scmp.ne.s32.totalorder %s90, %s92
    %p99 = scmp.eq.s32.totalorder %s19, 1
    %p100 = por %p98, %p99
    %p101 = scmp.ne.s32.totalorder %s92, %s93
    %p102 = scmp.eq.s32.totalorder %s19, 0
    %p103 = por %p101, %p102
    %p104 = scmp.ne.s32.totalorder %s92, %s93
    %p105 = scmp.eq.s32.totalorder %s20, 1
    %p106 = por %p104, %p105
    %p108 = scmp.ne.s32.totalorder %s93, %s107
    %p109 = scmp.eq.s32.totalorder %s20, 0
    %p110 = por %p108, %p109
    %s112 = sadd.s32 %s111, 1
    %p115 = scmp.eq.s32.totalorder %s14, 1
    %p116 = scmp.ne.s32.totalorder %s111, %s113
    %p117 = scmp.eq.s32.totalorder %s14, 0
    %p118 = por %p116, %p117
    %p119 = scmp.ne.s32.totalorder %s111, %s113
    %p120 = scmp.eq.s32.totalorder %s19, 1
    %p121 = por %p119, %p120
    %p122 = scmp.ne.s32.totalorder %s113, %s114
    %p123 = scmp.eq.s32.totalorder %s19, 0
    %p124 = por %p122, %p123
    %p125 = scmp.ne.s32.totalorder %s113, %s114
    %p126 = scmp.eq.s32.totalorder %s20, 1
    %p127 = por %p125, %p126
    %p129 = scmp.ne.s32.totalorder %s114, %s128
    %p130 = scmp.eq.s32.totalorder %s20, 0
    %p131 = por %p129, %p130
    %s132 = ssub.s32 %s14, %s21
    %p133 = scmp.eq.s32.totalorder %s132, 0
    %s135 = sadd.s32 %s134, 1
    %s136 = scalar_select %p133, %s134, %s135
    %p139 = pneg %p133
    %p140 = scmp.eq.s32.totalorder %s14, 1
    %p141 = por %p139, %p140
    %p142 = scmp.ne.s32.totalorder %s134, %s137
    %p143 = scmp.eq.s32.totalorder %s14, 0
    %p144 = por %p142, %p143
    %p145 = scmp.ne.s32.totalorder %s134, %s137
    %p146 = scmp.eq.s32.totalorder %s19, 1
    %p147 = por %p145, %p146
    %p148 = scmp.ne.s32.totalorder %s137, %s138
    %p149 = scmp.eq.s32.totalorder %s19, 0
    %p150 = por %p148, %p149
    %p151 = scmp.ne.s32.totalorder %s137, %s138
    %p152 = scmp.eq.s32.totalorder %s20, 1
    %p153 = por %p151, %p152
    %p155 = scmp.ne.s32.totalorder %s138, %s154
    %p156 = scmp.eq.s32.totalorder %s20, 0
    %p157 = por %p155, %p156
    %s158 = ssub.s32 %s14, %s21
    %p159 = scmp.eq.s32.totalorder %s158, 0
    %s161 = sadd.s32 %s160, 1
    %s162 = scalar_select %p159, %s160, %s161
    %p165 = pneg %p159
    %p166 = scmp.eq.s32.totalorder %s14, 1
    %p167 = por %p165, %p166
    %p168 = scmp.ne.s32.totalorder %s160, %s163
    %p169 = scmp.eq.s32.totalorder %s14, 0
    %p170 = por %p168, %p169
    %p171 = scmp.ne.s32.totalorder %s160, %s163
    %p172 = scmp.eq.s32.totalorder %s19, 1
    %p173 = por %p171, %p172
    %p174 = scmp.ne.s32.totalorder %s163, %s164
    %p175 = scmp.eq.s32.totalorder %s19, 0
    %p176 = por %p174, %p175
    %p177 = scmp.ne.s32.totalorder %s163, %s164
    %p178 = scmp.eq.s32.totalorder %s20, 1
    %p179 = por %p177, %p178
    %p181 = scmp.ne.s32.totalorder %s164, %s180
    %p182 = scmp.eq.s32.totalorder %s20, 0
    %p183 = por %p181, %p182
    %s184 = ssub.s32 %s14, %s21
    %p185 = scmp.eq.s32.totalorder %s184, 0
    %s187 = sadd.s32 %s186, 1
    %s188 = scalar_select %p185, %s186, %s187
    %p191 = pneg %p185
    %p192 = scmp.eq.s32.totalorder %s14, 1
    %p193 = por %p191, %p192
    %p194 = scmp.ne.s32.totalorder %s186, %s189
    %p195 = scmp.eq.s32.totalorder %s14, 0
    %p196 = por %p194, %p195
    %p197 = scmp.ne.s32.totalorder %s186, %s189
    %p198 = scmp.eq.s32.totalorder %s19, 1
    %p199 = por %p197, %p198
    %p200 = scmp.ne.s32.totalorder %s189, %s190
    %p201 = scmp.eq.s32.totalorder %s19, 0
    %p202 = por %p200, %p201
    %p203 = scmp.ne.s32.totalorder %s189, %s190
    %p204 = scmp.eq.s32.totalorder %s20, 1
    %p205 = por %p203, %p204
    %p207 = scmp.ne.s32.totalorder %s190, %s206
    %p208 = scmp.eq.s32.totalorder %s20, 0
    %p209 = por %p207, %p208
    %p210 = scmp.le.s32.totalorder 1, %s14
    %p211 = scmp.lt.s32.totalorder %s14, 3
    %p212 = pnand %p210, %p211
    %p213 = pneg %p212
    // Predicated region
    $region9: #{residual_forward.4} parent=5 // pred_check
      _
    $region10: #{residual_forward.4} parent=5 // pred_check_branch
      %215 = sbr.rel (%p212) target = $region12
    $region11: #{residual_forward.4} parent=5 // pred_region
      %s216 = ssub.s32 %s14, 1
      // Predicated region
      $region13: #{residual_forward.4} parent=11 // pred_check
        %p217 = pneg %p61
      $region14: #{residual_forward.4} parent=11 // pred_check_branch
        %219 = sbr.rel (%p217) target = $region16
      $region15: #{residual_forward.4} parent=11 // pred_region
        _
      $region16: #{residual_forward.4} parent=11 // pred_fallthru
        _
      // Predicated region
      $region17: #{residual_forward.4} parent=11 // pred_check
        %p220 = pneg %p82
      $region18: #{residual_forward.4} parent=11 // pred_check_branch
        %222 = sbr.rel (%p220) target = $region20
      $region19: #{residual_forward.4} parent=11 // pred_region
        _
      $region20: #{residual_forward.4} parent=11 // pred_fallthru
        _
      // Predicated region
      $region21: #{residual_forward.4} parent=11 // pred_check
        %p223 = pneg %p103
      $region22: #{residual_forward.4} parent=11 // pred_check_branch
        %225 = sbr.rel (%p223) target = $region24
      $region23: #{residual_forward.4} parent=11 // pred_region
        _
      $region24: #{residual_forward.4} parent=11 // pred_fallthru
        _
      // Predicated region
      $region25: #{residual_forward.4} parent=11 // pred_check
        %p226 = pneg %p124
      $region26: #{residual_forward.4} parent=11 // pred_check_branch
        %228 = sbr.rel (%p226) target = $region28
      $region27: #{residual_forward.4} parent=11 // pred_region
        _
      $region28: #{residual_forward.4} parent=11 // pred_fallthru
        _
    $region12: #{residual_forward.4} parent=5 // pred_fallthru
      _
    %p229 = scmp.lt.s32.totalorder %s14, 2
    // Predicated region
    $region29: #{residual_forward.4} parent=5 // pred_check
      %p230 = pneg %p229
    $region30: #{residual_forward.4} parent=5 // pred_check_branch
      %232 = sbr.rel (%p230) target = $region32
    $region31: #{residual_forward.4} parent=5 // pred_region
      // Predicated region
      $region33: #{residual_forward.4} parent=31 // pred_check
        %p233 = pneg %p34
      $region34: #{residual_forward.4} parent=31 // pred_check_branch
        %235 = sbr.rel (%p233) target = $region36
      $region35: #{residual_forward.4} parent=31 // pred_region
        %p236 = scmp.lt.s32.totalorder %s14, 1
        %s237 = scalar_select %p236, %s14, 1
        %s238 = smul.addr %s237, 60
        %s239 = smul.addr %s238, 4
        %s240 = scalar_lea.vmem %s0, %s239
      $region36: #{residual_forward.4} parent=31 // pred_fallthru
        _
    $region32: #{residual_forward.4} parent=5 // pred_fallthru
      _
    %p241 = scmp.le.s32.totalorder 1, %s14
    %p242 = scmp.lt.s32.totalorder %s14, 3
    %p243 = pnand %p241, %p242
    %p244 = pneg %p243
    // Predicated region
    $region37: #{residual_forward.4} parent=5 // pred_check
      _
    $region38: #{residual_forward.4} parent=5 // pred_check_branch
      %246 = sbr.rel (%p243) target = $region40
    $region39: #{residual_forward.4} parent=5 // pred_region
      %s247 = ssub.s32 %s14, 1
      %p248 = scmp.lt.s32.totalorder %s19, 1
      %s249 = scalar_select %p248, %s19, 1
      %s250 = smul.addr %s249, 60
      %s251 = smul.addr %s250, 4
      %s252 = scalar_lea.vmem %s0, %s251
      %p253 = pneg %p40
      %p254 = pneg %p37
      %p255 = pneg %p61
      %p256 = pneg %p58
      %p257 = pneg %p82
      %p258 = pneg %p79
      %p259 = pneg %p103
      %p260 = pneg %p100
      %p261 = pneg %p124
      %p262 = pneg %p121
      %p263 = pneg %p150
      %p264 = pneg %p147
      %p265 = scmp.lt.s32.totalorder %s19, 1
      %s266 = scalar_select %p265, %s19, 1
      %s267 = smul.addr %s266, 60
      %s268 = smul.addr %s267, 4
      %s269 = scalar_lea.vmem %s5, %s268
      %p270 = pneg %p176
      %p271 = pneg %p173
      %p272 = scmp.lt.s32.totalorder %s19, 1
      %s273 = scalar_select %p272, %s19, 1
      %s274 = scalar_lea.vmem %s6, %s273
      %p275 = pneg %p202
      %p276 = pneg %p199
      %p277 = scmp.lt.s32.totalorder %s19, 1
      %s278 = scalar_select %p277, %s19, 1
      %s279 = scalar_lea.vmem %s7, %s278
      %p280 = scmp.lt.s32.totalorder %s19, 1
      %s281 = scalar_select %p280, %s19, 1
      %s282 = smul.addr %s281, 60
      %s283 = smul.addr %s282, 4
      %s284 = scalar_lea.vmem %s0, %s283
      %p285 = scmp.lt.s32.totalorder %s19, 1
      %s286 = scalar_select %p285, %s19, 1
      %s287 = smul.addr %s286, 60
      %s288 = smul.addr %s287, 4
      %s289 = scalar_lea.vmem %s5, %s288
      %p290 = scmp.lt.s32.totalorder %s19, 1
      %s291 = scalar_select %p290, %s19, 1
      %s292 = scalar_lea.vmem %s6, %s291
      %p293 = scmp.lt.s32.totalorder %s19, 1
      %s294 = scalar_select %p293, %s19, 1
      %s295 = scalar_lea.vmem %s7, %s294
      %v297 = vld [vmem:[%s4 + $0x10] sm:$0xff]
      %v298 = vld [vmem:[%s4 + $0x18] sm:$0xff]
      %v299 = vld [vmem:[%s4 + $0x20] sm:$0xff]
      %v300 = vld [vmem:[%s4 + $0x28] sm:$0xff]
      %v301 = vld [vmem:[%s4 + $0x30] sm:$0xff]
      %v302 = vld [vmem:[%s4 + $0x38] sm:$0xff]
      %v303 = vld [vmem:[%s4 + $0x40] sm:$0xff]
      %v304 = vld [vmem:[%s4 + $0x48] sm:$0xff]
      %v305 = vld [vmem:[%s4 + $0x50] sm:$0xff]
      %v306 = vld [vmem:[%s4 + $0x58] sm:$0xff]
      %v307 = vld [vmem:[%s4 + $0x60] sm:$0xff]
      %v308 = vld [vmem:[%s4 + $0x68] sm:$0xff]
      %v309 = vld [vmem:[%s4 + $0x70] sm:$0xff]
      %v310 = vld [vmem:[%s4 + $0x78] sm:$0xff]
      %v311 = vld [vmem:[%s4 + $0x80] sm:$0xff]
      %v312 = vld [vmem:[%s4 + $0x88] sm:$0xff]
      %v313 = vld [vmem:[%s4 + $0x90] sm:$0xff]
      %v314 = vld [vmem:[%s4 + $0x98] sm:$0xff]
      %v315 = vld [vmem:[%s4 + $0xa0] sm:$0xff]
      %v316 = vld [vmem:[%s4 + $0xa8] sm:$0xff]
      %v317 = vld [vmem:[%s4 + $0xb0] sm:$0xff]
      %v318 = vld [vmem:[%s4 + $0xb8] sm:$0xff]
      %v319 = vld [vmem:[%s4 + $0xc0] sm:$0xff]
      %v320 = vld [vmem:[%s4 + $0xc8] sm:$0xff]
      %v321 = vld [vmem:[%s4 + $0xd0] sm:$0xff]
      %v322 = vld [vmem:[%s4 + $0xd8] sm:$0xff]
      %v323 = vld [vmem:[%s4 + $0xe0] sm:$0xff]
      %v324 = vld [vmem:[%s4 + $0xe8] sm:$0xff]
      %v325 = vld [vmem:[%s4 + $0xf0] sm:$0xff]
      %v326 = vld [vmem:[%s4 + $0xf8] sm:$0xff]
      %v327 = vld [vmem:[%s4 + $0x100] sm:$0xff]
      %v328 = vld [vmem:[%s4 + $0x108] sm:$0xff]
      %v329 = vld [vmem:[%s4 + $0x110] sm:$0xff]
      %v330 = vld [vmem:[%s4 + $0x118] sm:$0xff]
      %v331 = vld [vmem:[%s4 + $0x120] sm:$0xff]
      %v332 = vld [vmem:[%s4 + $0x128] sm:$0xff]
      %v333 = vld [vmem:[%s4 + $0x130] sm:$0xff]
      %v334 = vld [vmem:[%s4 + $0x138] sm:$0xff]
      %v335 = vld [vmem:[%s4 + $0x140] sm:$0xff]
      %v336 = vld [vmem:[%s4 + $0x148] sm:$0xff]
      %v337 = vld [vmem:[%s4 + $0x150] sm:$0xff]
      %v338 = vld [vmem:[%s4 + $0x158] sm:$0xff]
      %v339 = vld [vmem:[%s4 + $0x160] sm:$0xff]
      %v340 = vld [vmem:[%s4 + $0x168] sm:$0xff]
      %v341 = vld [vmem:[%s4 + $0x170] sm:$0xff]
      %v342 = vld [vmem:[%s4 + $0x178] sm:$0xff]
      %v343 = vld [vmem:[%s4 + $0x180] sm:$0xff]
      %v344 = vld [vmem:[%s4 + $0x188] sm:$0xff]
      %v345 = vld [vmem:[%s4 + $0x190] sm:$0xff]
      %v346 = vld [vmem:[%s4 + $0x198] sm:$0xff]
      %v347 = vld [vmem:[%s4 + $0x1a0] sm:$0xff]
      %v348 = vld [vmem:[%s4 + $0x1a8] sm:$0xff]
      %v349 = vld [vmem:[%s4 + $0x1b0] sm:$0xff]
      %v350 = vld [vmem:[%s4 + $0x1b8] sm:$0xff]
      %v351 = vld [vmem:[%s4 + $0x1c0] sm:$0xff]
      %v352 = vld [vmem:[%s4 + $0x1c8] sm:$0xff]
      %v353 = vld [vmem:[%s284 + $0x8] sm:$0xf]
      %v354 = vld [vmem:[%s284 + $0xc] sm:$0xf]
      %v355 = vld [vmem:[%s284 + $0x10] sm:$0xf]
      %v356 = vld [vmem:[%s284 + $0x14] sm:$0xf]
      %v357 = vld [vmem:[%s284 + $0x18] sm:$0xf]
      %v358 = vld [vmem:[%s284 + $0x1c] sm:$0xf]
      %v359 = vld [vmem:[%s284 + $0x20] sm:$0xf]
      %v360 = vld [vmem:[%s284 + $0x24] sm:$0xf]
      %v361 = vld [vmem:[%s284 + $0x28] sm:$0xf]
      %v362 = vld [vmem:[%s284 + $0x2c] sm:$0xf]
      %v363 = vld [vmem:[%s284 + $0x30] sm:$0xf]
      %v364 = vld [vmem:[%s284 + $0x34] sm:$0xf]
      %v365 = vld [vmem:[%s284 + $0x38] sm:$0xf]
      %v366 = vld [vmem:[%s284 + $0x3c] sm:$0xf]
      %v367 = vld [vmem:[%s284 + $0x40] sm:$0xf]
      %v368 = vld [vmem:[%s284 + $0x44] sm:$0xf]
      %v369 = vld [vmem:[%s284 + $0x48] sm:$0xf]
      %v370 = vld [vmem:[%s284 + $0x4c] sm:$0xf]
      %v371 = vld [vmem:[%s284 + $0x50] sm:$0xf]
      %v372 = vld [vmem:[%s284 + $0x54] sm:$0xf]
      %v373 = vld [vmem:[%s284 + $0x58] sm:$0xf]
      %v374 = vld [vmem:[%s284 + $0x5c] sm:$0xf]
      %v375 = vld [vmem:[%s284 + $0x60] sm:$0xf]
      %v376 = vld [vmem:[%s284 + $0x64] sm:$0xf]
      %v377 = vld [vmem:[%s284 + $0x68] sm:$0xf]
      %v378 = vld [vmem:[%s284 + $0x6c] sm:$0xf]
      %v379 = vld [vmem:[%s284 + $0x70] sm:$0xf]
      %v380 = vld [vmem:[%s284 + $0x74] sm:$0xf]
      %v381 = vld [vmem:[%s284 + $0x78] sm:$0xf]
      %v382 = vld [vmem:[%s284 + $0x7c] sm:$0xf]
      %v383 = vld [vmem:[%s284 + $0x80] sm:$0xf]
      %v384 = vld [vmem:[%s284 + $0x84] sm:$0xf]
      %v385 = vld [vmem:[%s284 + $0x88] sm:$0xf]
      %v386 = vld [vmem:[%s284 + $0x8c] sm:$0xf]
      %v387 = vld [vmem:[%s284 + $0x90] sm:$0xf]
      %v388 = vld [vmem:[%s284 + $0x94] sm:$0xf]
      %v389 = vld [vmem:[%s284 + $0x98] sm:$0xf]
      %v390 = vld [vmem:[%s284 + $0x9c] sm:$0xf]
      %v391 = vld [vmem:[%s284 + $0xa0] sm:$0xf]
      %v392 = vld [vmem:[%s284 + $0xa4] sm:$0xf]
      %v393 = vld [vmem:[%s284 + $0xa8] sm:$0xf]
      %v394 = vld [vmem:[%s284 + $0xac] sm:$0xf]
      %v395 = vld [vmem:[%s284 + $0xb0] sm:$0xf]
      %v396 = vld [vmem:[%s284 + $0xb4] sm:$0xf]
      %v397 = vld [vmem:[%s284 + $0xb8] sm:$0xf]
      %v398 = vld [vmem:[%s284 + $0xbc] sm:$0xf]
      %v399 = vld [vmem:[%s284 + $0xc0] sm:$0xf]
      %v400 = vld [vmem:[%s284 + $0xc4] sm:$0xf]
      %v401 = vld [vmem:[%s284 + $0xc8] sm:$0xf]
      %v402 = vld [vmem:[%s284 + $0xcc] sm:$0xf]
      %v403 = vld [vmem:[%s284 + $0xd0] sm:$0xf]
      %v404 = vld [vmem:[%s284 + $0xd4] sm:$0xf]
      %v405 = vld [vmem:[%s284 + $0xd8] sm:$0xf]
      %v406 = vld [vmem:[%s284 + $0xdc] sm:$0xf]
      %v407 = vld [vmem:[%s284 + $0xe0] sm:$0xf]
      %v408 = vld [vmem:[%s284 + $0xe4] sm:$0xf]
      %v409 = vunpack.c.l.bf16 %v353
      %v410 = vunpack.c.l.bf16 %v354
      %v411 = vunpack.c.l.bf16 %v355
      %v412 = vunpack.c.l.bf16 %v356
      %v413 = vunpack.c.l.bf16 %v357
      %v414 = vunpack.c.l.bf16 %v358
      %v415 = vunpack.c.l.bf16 %v359
      %v416 = vunpack.c.l.bf16 %v360
      %v417 = vunpack.c.l.bf16 %v361
      %v418 = vunpack.c.l.bf16 %v362
      %v419 = vunpack.c.l.bf16 %v363
      %v420 = vunpack.c.l.bf16 %v364
      %v421 = vunpack.c.l.bf16 %v365
      %v422 = vunpack.c.l.bf16 %v366
      %v423 = vunpack.c.l.bf16 %v367
      %v424 = vunpack.c.l.bf16 %v368
      %v425 = vunpack.c.l.bf16 %v369
      %v426 = vunpack.c.l.bf16 %v370
      %v427 = vunpack.c.l.bf16 %v371
      %v428 = vunpack.c.l.bf16 %v372
      %v429 = vunpack.c.l.bf16 %v373
      %v430 = vunpack.c.l.bf16 %v374
      %v431 = vunpack.c.l.bf16 %v375
      %v432 = vunpack.c.l.bf16 %v376
      %v433 = vunpack.c.l.bf16 %v377
      %v434 = vunpack.c.l.bf16 %v378
      %v435 = vunpack.c.l.bf16 %v379
      %v436 = vunpack.c.l.bf16 %v380
      %v437 = vunpack.c.l.bf16 %v381
      %v438 = vunpack.c.l.bf16 %v382
      %v439 = vunpack.c.l.bf16 %v383
      %v440 = vunpack.c.l.bf16 %v384
      %v441 = vunpack.c.l.bf16 %v385
      %v442 = vunpack.c.l.bf16 %v386
      %v443 = vunpack.c.l.bf16 %v387
      %v444 = vunpack.c.l.bf16 %v388
      %v445 = vunpack.c.l.bf16 %v389
      %v446 = vunpack.c.l.bf16 %v390
      %v447 = vunpack.c.l.bf16 %v391
      %v448 = vunpack.c.l.bf16 %v392
      %v449 = vunpack.c.l.bf16 %v393
      %v450 = vunpack.c.l.bf16 %v394
      %v451 = vunpack.c.l.bf16 %v395
      %v452 = vunpack.c.l.bf16 %v396
      %v453 = vunpack.c.l.bf16 %v397
      %v454 = vunpack.c.l.bf16 %v398
      %v455 = vunpack.c.l.bf16 %v399
      %v456 = vunpack.c.l.bf16 %v400
      %v457 = vunpack.c.l.bf16 %v401
      %v458 = vunpack.c.l.bf16 %v402
      %v459 = vunpack.c.l.bf16 %v403
      %v460 = vunpack.c.l.bf16 %v404
      %v461 = vunpack.c.l.bf16 %v405
      %v462 = vunpack.c.l.bf16 %v406
      %v463 = vunpack.c.l.bf16 %v407
      %v464 = vunpack.c.l.bf16 %v408
      %v465 = vld [vmem:[%s2] sm:$0x1]
      %v467 = vperm.slane %v465, 0
      %v469 = vmul.f32 %v409, %v467
      %v470 = vmul.f32 %v410, %v467
      %v471 = vmul.f32 %v411, %v467
      %v472 = vmul.f32 %v412, %v467
      %v473 = vmul.f32 %v413, %v467
      %v474 = vmul.f32 %v414, %v467
      %v475 = vmul.f32 %v415, %v467
      %v476 = vmul.f32 %v416, %v467
      %v477 = vmul.f32 %v417, %v467
      %v478 = vmul.f32 %v418, %v467
      %v479 = vmul.f32 %v419, %v467
      %v480 = vmul.f32 %v420, %v467
      %v481 = vmul.f32 %v421, %v467
      %v482 = vmul.f32 %v422, %v467
      %v483 = vmul.f32 %v423, %v467
      %v484 = vmul.f32 %v424, %v467
      %v485 = vmul.f32 %v425, %v467
      %v486 = vmul.f32 %v426, %v467
      %v487 = vmul.f32 %v427, %v467
      %v488 = vmul.f32 %v428, %v467
      %v489 = vmul.f32 %v429, %v467
      %v490 = vmul.f32 %v430, %v467
      %v491 = vmul.f32 %v431, %v467
      %v492 = vmul.f32 %v432, %v467
      %v493 = vmul.f32 %v433, %v467
      %v494 = vmul.f32 %v434, %v467
      %v495 = vmul.f32 %v435, %v467
      %v496 = vmul.f32 %v436, %v467
      %v497 = vmul.f32 %v437, %v467
      %v498 = vmul.f32 %v438, %v467
      %v499 = vmul.f32 %v439, %v467
      %v500 = vmul.f32 %v440, %v467
      %v501 = vmul.f32 %v441, %v467
      %v502 = vmul.f32 %v442, %v467
      %v503 = vmul.f32 %v443, %v467
      %v504 = vmul.f32 %v444, %v467
      %v505 = vmul.f32 %v445, %v467
      %v506 = vmul.f32 %v446, %v467
      %v507 = vmul.f32 %v447, %v467
      %v508 = vmul.f32 %v448, %v467
      %v509 = vmul.f32 %v449, %v467
      %v510 = vmul.f32 %v450, %v467
      %v511 = vmul.f32 %v451, %v467
      %v512 = vmul.f32 %v452, %v467
      %v513 = vmul.f32 %v453, %v467
      %v514 = vmul.f32 %v454, %v467
      %v515 = vmul.f32 %v455, %v467
      %v516 = vmul.f32 %v456, %v467
      %v517 = vmul.f32 %v457, %v467
      %v518 = vmul.f32 %v458, %v467
      %v519 = vmul.f32 %v459, %v467
      %v520 = vmul.f32 %v460, %v467
      %v521 = vmul.f32 %v461, %v467
      %v522 = vmul.f32 %v462, %v467
      %v523 = vmul.f32 %v463, %v467
      %v524 = vmul.f32 %v464, %v467
      %v525 = vld [vmem:[%s3] sm:$0x1]
      %v527 = vperm.slane %v525, 0
      %v529 = vadd.f32 %v469, %v527
      %v530 = vadd.f32 %v470, %v527
      %v531 = vadd.f32 %v471, %v527
      %v532 = vadd.f32 %v472, %v527
      %v533 = vadd.f32 %v473, %v527
      %v534 = vadd.f32 %v474, %v527
      %v535 = vadd.f32 %v475, %v527
      %v536 = vadd.f32 %v476, %v527
      %v537 = vadd.f32 %v477, %v527
      %v538 = vadd.f32 %v478, %v527
      %v539 = vadd.f32 %v479, %v527
      %v540 = vadd.f32 %v480, %v527
      %v541 = vadd.f32 %v481, %v527
      %v542 = vadd.f32 %v482, %v527
      %v543 = vadd.f32 %v483, %v527
      %v544 = vadd.f32 %v484, %v527
      %v545 = vadd.f32 %v485, %v527
      %v546 = vadd.f32 %v486, %v527
      %v547 = vadd.f32 %v487, %v527
      %v548 = vadd.f32 %v488, %v527
      %v549 = vadd.f32 %v489, %v527
      %v550 = vadd.f32 %v490, %v527
      %v551 = vadd.f32 %v491, %v527
      %v552 = vadd.f32 %v492, %v527
      %v553 = vadd.f32 %v493, %v527
      %v554 = vadd.f32 %v494, %v527
      %v555 = vadd.f32 %v495, %v527
      %v556 = vadd.f32 %v496, %v527
      %v557 = vadd.f32 %v497, %v527
      %v558 = vadd.f32 %v498, %v527
      %v559 = vadd.f32 %v499, %v527
      %v560 = vadd.f32 %v500, %v527
      %v561 = vadd.f32 %v501, %v527
      %v562 = vadd.f32 %v502, %v527
      %v563 = vadd.f32 %v503, %v527
      %v564 = vadd.f32 %v504, %v527
      %v565 = vadd.f32 %v505, %v527
      %v566 = vadd.f32 %v506, %v527
      %v567 = vadd.f32 %v507, %v527
      %v568 = vadd.f32 %v508, %v527
      %v569 = vadd.f32 %v509, %v527
      %v570 = vadd.f32 %v510, %v527
      %v571 = vadd.f32 %v511, %v527
      %v572 = vadd.f32 %v512, %v527
      %v573 = vadd.f32 %v513, %v527
      %v574 = vadd.f32 %v514, %v527
      %v575 = vadd.f32 %v515, %v527
      %v576 = vadd.f32 %v516, %v527
      %v577 = vadd.f32 %v517, %v527
      %v578 = vadd.f32 %v518, %v527
      %v579 = vadd.f32 %v519, %v527
      %v580 = vadd.f32 %v520, %v527
      %v581 = vadd.f32 %v521, %v527
      %v582 = vadd.f32 %v522, %v527
      %v583 = vadd.f32 %v523, %v527
      %v584 = vadd.f32 %v524, %v527
      %v585 = vmax.f32 %v529, 0.0
      %v586 = vmax.f32 %v530, 0.0
      %v587 = vmax.f32 %v531, 0.0
      %v588 = vmax.f32 %v532, 0.0
      %v589 = vmax.f32 %v533, 0.0
      %v590 = vmax.f32 %v534, 0.0
      %v591 = vmax.f32 %v535, 0.0
      %v592 = vmax.f32 %v536, 0.0
      %v593 = vmax.f32 %v537, 0.0
      %v594 = vmax.f32 %v538, 0.0
      %v595 = vmax.f32 %v539, 0.0
      %v596 = vmax.f32 %v540, 0.0
      %v597 = vmax.f32 %v541, 0.0
      %v598 = vmax.f32 %v542, 0.0
      %v599 = vmax.f32 %v543, 0.0
      %v600 = vmax.f32 %v544, 0.0
      %v601 = vmax.f32 %v545, 0.0
      %v602 = vmax.f32 %v546, 0.0
      %v603 = vmax.f32 %v547, 0.0
      %v604 = vmax.f32 %v548, 0.0
      %v605 = vmax.f32 %v549, 0.0
      %v606 = vmax.f32 %v550, 0.0
      %v607 = vmax.f32 %v551, 0.0
      %v608 = vmax.f32 %v552, 0.0
      %v609 = vmax.f32 %v553, 0.0
      %v610 = vmax.f32 %v554, 0.0
      %v611 = vmax.f32 %v555, 0.0
      %v612 = vmax.f32 %v556, 0.0
      %v613 = vmax.f32 %v557, 0.0
      %v614 = vmax.f32 %v558, 0.0
      %v615 = vmax.f32 %v559, 0.0
      %v616 = vmax.f32 %v560, 0.0
      %v617 = vmax.f32 %v561, 0.0
      %v618 = vmax.f32 %v562, 0.0
      %v619 = vmax.f32 %v563, 0.0
      %v620 = vmax.f32 %v564, 0.0
      %v621 = vmax.f32 %v565, 0.0
      %v622 = vmax.f32 %v566, 0.0
      %v623 = vmax.f32 %v567, 0.0
      %v624 = vmax.f32 %v568, 0.0
      %v625 = vmax.f32 %v569, 0.0
      %v626 = vmax.f32 %v570, 0.0
      %v627 = vmax.f32 %v571, 0.0
      %v628 = vmax.f32 %v572, 0.0
      %v629 = vmax.f32 %v573, 0.0
      %v630 = vmax.f32 %v574, 0.0
      %v631 = vmax.f32 %v575, 0.0
      %v632 = vmax.f32 %v576, 0.0
      %v633 = vmax.f32 %v577, 0.0
      %v634 = vmax.f32 %v578, 0.0
      %v635 = vmax.f32 %v579, 0.0
      %v636 = vmax.f32 %v580, 0.0
      %v637 = vmax.f32 %v581, 0.0
      %v638 = vmax.f32 %v582, 0.0
      %v639 = vmax.f32 %v583, 0.0
      %v640 = vmax.f32 %v584, 0.0
      %642 = vset.pattern.permute.xlu0 0
      %643 = vperm.xlu0 %642, %v297
      %v644 = vpop.permute.xlu0 %643
      %647 = vset.pattern.permute.xlu0 0
      %648 = vperm.xlu0 %647, %v298
      %v649 = vpop.permute.xlu0 %648
      %652 = vset.pattern.permute.xlu0 0
      %653 = vperm.xlu0 %652, %v299
      %v654 = vpop.permute.xlu0 %653
      %657 = vset.pattern.permute.xlu0 0
      %658 = vperm.xlu0 %657, %v300
      %v659 = vpop.permute.xlu0 %658
      %662 = vset.pattern.permute.xlu0 0
      %663 = vperm.xlu0 %662, %v301
      %v664 = vpop.permute.xlu0 %663
      %667 = vset.pattern.permute.xlu0 0
      %668 = vperm.xlu0 %667, %v302
      %v669 = vpop.permute.xlu0 %668
      %672 = vset.pattern.permute.xlu0 0
      %673 = vperm.xlu0 %672, %v303
      %v674 = vpop.permute.xlu0 %673
      %677 = vset.pattern.permute.xlu0 0
      %678 = vperm.xlu0 %677, %v304
      %v679 = vpop.permute.xlu0 %678
      %682 = vset.pattern.permute.xlu0 0
      %683 = vperm.xlu0 %682, %v305
      %v684 = vpop.permute.xlu0 %683
      %687 = vset.pattern.permute.xlu0 0
      %688 = vperm.xlu0 %687, %v306
      %v689 = vpop.permute.xlu0 %688
      %692 = vset.pattern.permute.xlu0 0
      %693 = vperm.xlu0 %692, %v307
      %v694 = vpop.permute.xlu0 %693
      %697 = vset.pattern.permute.xlu0 0
      %698 = vperm.xlu0 %697, %v308
      %v699 = vpop.permute.xlu0 %698
      %702 = vset.pattern.permute.xlu0 0
      %703 = vperm.xlu0 %702, %v309
      %v704 = vpop.permute.xlu0 %703
      %707 = vset.pattern.permute.xlu0 0
      %708 = vperm.xlu0 %707, %v310
      %v709 = vpop.permute.xlu0 %708
      %712 = vset.pattern.permute.xlu0 0
      %713 = vperm.xlu0 %712, %v311
      %v714 = vpop.permute.xlu0 %713
      %717 = vset.pattern.permute.xlu0 0
      %718 = vperm.xlu0 %717, %v312
      %v719 = vpop.permute.xlu0 %718
      %722 = vset.pattern.permute.xlu0 0
      %723 = vperm.xlu0 %722, %v313
      %v724 = vpop.permute.xlu0 %723
      %727 = vset.pattern.permute.xlu0 0
      %728 = vperm.xlu0 %727, %v314
      %v729 = vpop.permute.xlu0 %728
      %732 = vset.pattern.permute.xlu0 0
      %733 = vperm.xlu0 %732, %v315
      %v734 = vpop.permute.xlu0 %733
      %737 = vset.pattern.permute.xlu0 0
      %738 = vperm.xlu0 %737, %v316
      %v739 = vpop.permute.xlu0 %738
      %742 = vset.pattern.permute.xlu0 0
      %743 = vperm.xlu0 %742, %v317
      %v744 = vpop.permute.xlu0 %743
      %747 = vset.pattern.permute.xlu0 0
      %748 = vperm.xlu0 %747, %v318
      %v749 = vpop.permute.xlu0 %748
      %752 = vset.pattern.permute.xlu0 0
      %753 = vperm.xlu0 %752, %v319
      %v754 = vpop.permute.xlu0 %753
      %757 = vset.pattern.permute.xlu0 0
      %758 = vperm.xlu0 %757, %v320
      %v759 = vpop.permute.xlu0 %758
      %762 = vset.pattern.permute.xlu0 0
      %763 = vperm.xlu0 %762, %v321
      %v764 = vpop.permute.xlu0 %763
      %767 = vset.pattern.permute.xlu0 0
      %768 = vperm.xlu0 %767, %v322
      %v769 = vpop.permute.xlu0 %768
      %772 = vset.pattern.permute.xlu0 0
      %773 = vperm.xlu0 %772, %v323
      %v774 = vpop.permute.xlu0 %773
      %777 = vset.pattern.permute.xlu0 0
      %778 = vperm.xlu0 %777, %v324
      %v779 = vpop.permute.xlu0 %778
      %782 = vset.pattern.permute.xlu0 0
      %783 = vperm.xlu0 %782, %v325
      %v784 = vpop.permute.xlu0 %783
      %787 = vset.pattern.permute.xlu0 0
      %788 = vperm.xlu0 %787, %v326
      %v789 = vpop.permute.xlu0 %788
      %792 = vset.pattern.permute.xlu0 0
      %793 = vperm.xlu0 %792, %v327
      %v794 = vpop.permute.xlu0 %793
      %797 = vset.pattern.permute.xlu0 0
      %798 = vperm.xlu0 %797, %v328
      %v799 = vpop.permute.xlu0 %798
      %802 = vset.pattern.permute.xlu0 0
      %803 = vperm.xlu0 %802, %v329
      %v804 = vpop.permute.xlu0 %803
      %807 = vset.pattern.permute.xlu0 0
      %808 = vperm.xlu0 %807, %v330
      %v809 = vpop.permute.xlu0 %808
      %812 = vset.pattern.permute.xlu0 0
      %813 = vperm.xlu0 %812, %v331
      %v814 = vpop.permute.xlu0 %813
      %817 = vset.pattern.permute.xlu0 0
      %818 = vperm.xlu0 %817, %v332
      %v819 = vpop.permute.xlu0 %818
      %822 = vset.pattern.permute.xlu0 0
      %823 = vperm.xlu0 %822, %v333
      %v824 = vpop.permute.xlu0 %823
      %827 = vset.pattern.permute.xlu0 0
      %828 = vperm.xlu0 %827, %v334
      %v829 = vpop.permute.xlu0 %828
      %832 = vset.pattern.permute.xlu0 0
      %833 = vperm.xlu0 %832, %v335
      %v834 = vpop.permute.xlu0 %833
      %837 = vset.pattern.permute.xlu0 0
      %838 = vperm.xlu0 %837, %v336
      %v839 = vpop.permute.xlu0 %838
      %842 = vset.pattern.permute.xlu0 0
      %843 = vperm.xlu0 %842, %v337
      %v844 = vpop.permute.xlu0 %843
      %847 = vset.pattern.permute.xlu0 0
      %848 = vperm.xlu0 %847, %v338
      %v849 = vpop.permute.xlu0 %848
      %852 = vset.pattern.permute.xlu0 0
      %853 = vperm.xlu0 %852, %v339
      %v854 = vpop.permute.xlu0 %853
      %857 = vset.pattern.permute.xlu0 0
      %858 = vperm.xlu0 %857, %v340
      %v859 = vpop.permute.xlu0 %858
      %862 = vset.pattern.permute.xlu0 0
      %863 = vperm.xlu0 %862, %v341
      %v864 = vpop.permute.xlu0 %863
      %867 = vset.pattern.permute.xlu0 0
      %868 = vperm.xlu0 %867, %v342
      %v869 = vpop.permute.xlu0 %868
      %872 = vset.pattern.permute.xlu0 0
      %873 = vperm.xlu0 %872, %v343
      %v874 = vpop.permute.xlu0 %873
      %877 = vset.pattern.permute.xlu0 0
      %878 = vperm.xlu0 %877, %v344
      %v879 = vpop.permute.xlu0 %878
      %882 = vset.pattern.permute.xlu0 0
      %883 = vperm.xlu0 %882, %v345
      %v884 = vpop.permute.xlu0 %883
      %887 = vset.pattern.permute.xlu0 0
      %888 = vperm.xlu0 %887, %v346
      %v889 = vpop.permute.xlu0 %888
      %892 = vset.pattern.permute.xlu0 0
      %893 = vperm.xlu0 %892, %v347
      %v894 = vpop.permute.xlu0 %893
      %897 = vset.pattern.permute.xlu0 0
      %898 = vperm.xlu0 %897, %v348
      %v899 = vpop.permute.xlu0 %898
      %902 = vset.pattern.permute.xlu0 0
      %903 = vperm.xlu0 %902, %v349
      %v904 = vpop.permute.xlu0 %903
      %907 = vset.pattern.permute.xlu0 0
      %908 = vperm.xlu0 %907, %v350
      %v909 = vpop.permute.xlu0 %908
      %912 = vset.pattern.permute.xlu0 0
      %913 = vperm.xlu0 %912, %v351
      %v914 = vpop.permute.xlu0 %913
      %917 = vset.pattern.permute.xlu0 0
      %918 = vperm.xlu0 %917, %v352
      %v919 = vpop.permute.xlu0 %918
      %v921 = vmul.f32 %v585, %v644
      %v922 = vmul.f32 %v586, %v649
      %v923 = vmul.f32 %v587, %v654
      %v924 = vmul.f32 %v588, %v659
      %v925 = vmul.f32 %v589, %v664
      %v926 = vmul.f32 %v590, %v669
      %v927 = vmul.f32 %v591, %v674
      %v928 = vmul.f32 %v592, %v679
      %v929 = vmul.f32 %v593, %v684
      %v930 = vmul.f32 %v594, %v689
      %v931 = vmul.f32 %v595, %v694
      %v932 = vmul.f32 %v596, %v699
      %v933 = vmul.f32 %v597, %v704
      %v934 = vmul.f32 %v598, %v709
      %v935 = vmul.f32 %v599, %v714
      %v936 = vmul.f32 %v600, %v719
      %v937 = vmul.f32 %v601, %v724
      %v938 = vmul.f32 %v602, %v729
      %v939 = vmul.f32 %v603, %v734
      %v940 = vmul.f32 %v604, %v739
      %v941 = vmul.f32 %v605, %v744
      %v942 = vmul.f32 %v606, %v749
      %v943 = vmul.f32 %v607, %v754
      %v944 = vmul.f32 %v608, %v759
      %v945 = vmul.f32 %v609, %v764
      %v946 = vmul.f32 %v610, %v769
      %v947 = vmul.f32 %v611, %v774
      %v948 = vmul.f32 %v612, %v779
      %v949 = vmul.f32 %v613, %v784
      %v950 = vmul.f32 %v614, %v789
      %v951 = vmul.f32 %v615, %v794
      %v952 = vmul.f32 %v616, %v799
      %v953 = vmul.f32 %v617, %v804
      %v954 = vmul.f32 %v618, %v809
      %v955 = vmul.f32 %v619, %v814
      %v956 = vmul.f32 %v620, %v819
      %v957 = vmul.f32 %v621, %v824
      %v958 = vmul.f32 %v622, %v829
      %v959 = vmul.f32 %v623, %v834
      %v960 = vmul.f32 %v624, %v839
      %v961 = vmul.f32 %v625, %v844
      %v962 = vmul.f32 %v626, %v849
      %v963 = vmul.f32 %v627, %v854
      %v964 = vmul.f32 %v628, %v859
      %v965 = vmul.f32 %v629, %v864
      %v966 = vmul.f32 %v630, %v869
      %v967 = vmul.f32 %v631, %v874
      %v968 = vmul.f32 %v632, %v879
      %v969 = vmul.f32 %v633, %v884
      %v970 = vmul.f32 %v634, %v889
      %v971 = vmul.f32 %v635, %v894
      %v972 = vmul.f32 %v636, %v899
      %v973 = vmul.f32 %v637, %v904
      %v974 = vmul.f32 %v638, %v909
      %v975 = vmul.f32 %v639, %v914
      %v976 = vmul.f32 %v640, %v919
      %v977 = vpack.c.bf16 %v921, %v921
      %v978 = vpack.c.bf16 %v922, %v922
      %v979 = vpack.c.bf16 %v923, %v923
      %v980 = vpack.c.bf16 %v924, %v924
      %v981 = vpack.c.bf16 %v925, %v925
      %v982 = vpack.c.bf16 %v926, %v926
      %v983 = vpack.c.bf16 %v927, %v927
      %v984 = vpack.c.bf16 %v928, %v928
      %v985 = vpack.c.bf16 %v929, %v929
      %v986 = vpack.c.bf16 %v930, %v930
      %v987 = vpack.c.bf16 %v931, %v931
      %v988 = vpack.c.bf16 %v932, %v932
      %v989 = vpack.c.bf16 %v933, %v933
      %v990 = vpack.c.bf16 %v934, %v934
      %v991 = vpack.c.bf16 %v935, %v935
      %v992 = vpack.c.bf16 %v936, %v936
      %v993 = vpack.c.bf16 %v937, %v937
      %v994 = vpack.c.bf16 %v938, %v938
      %v995 = vpack.c.bf16 %v939, %v939
      %v996 = vpack.c.bf16 %v940, %v940
      %v997 = vpack.c.bf16 %v941, %v941
      %v998 = vpack.c.bf16 %v942, %v942
      %v999 = vpack.c.bf16 %v943, %v943
      %v1000 = vpack.c.bf16 %v944, %v944
      %v1001 = vpack.c.bf16 %v945, %v945
      %v1002 = vpack.c.bf16 %v946, %v946
      %v1003 = vpack.c.bf16 %v947, %v947
      %v1004 = vpack.c.bf16 %v948, %v948
      %v1005 = vpack.c.bf16 %v949, %v949
      %v1006 = vpack.c.bf16 %v950, %v950
      %v1007 = vpack.c.bf16 %v951, %v951
      %v1008 = vpack.c.bf16 %v952, %v952
      %v1009 = vpack.c.bf16 %v953, %v953
      %v1010 = vpack.c.bf16 %v954, %v954
      %v1011 = vpack.c.bf16 %v955, %v955
      %v1012 = vpack.c.bf16 %v956, %v956
      %v1013 = vpack.c.bf16 %v957, %v957
      %v1014 = vpack.c.bf16 %v958, %v958
      %v1015 = vpack.c.bf16 %v959, %v959
      %v1016 = vpack.c.bf16 %v960, %v960
      %v1017 = vpack.c.bf16 %v961, %v961
      %v1018 = vpack.c.bf16 %v962, %v962
      %v1019 = vpack.c.bf16 %v963, %v963
      %v1020 = vpack.c.bf16 %v964, %v964
      %v1021 = vpack.c.bf16 %v965, %v965
      %v1022 = vpack.c.bf16 %v966, %v966
      %v1023 = vpack.c.bf16 %v967, %v967
      %v1024 = vpack.c.bf16 %v968, %v968
      %v1025 = vpack.c.bf16 %v969, %v969
      %v1026 = vpack.c.bf16 %v970, %v970
      %v1027 = vpack.c.bf16 %v971, %v971
      %v1028 = vpack.c.bf16 %v972, %v972
      %v1029 = vpack.c.bf16 %v973, %v973
      %v1030 = vpack.c.bf16 %v974, %v974
      %v1031 = vpack.c.bf16 %v975, %v975
      %v1032 = vpack.c.bf16 %v976, %v976
      %v1082 = vunpack.c.l.b16 %v977
      %v1083 = vunpack.c.l.b16 %v978
      %v1084 = vunpack.c.l.b16 %v979
      %v1085 = vunpack.c.l.b16 %v980
      %v1086 = vunpack.c.l.b16 %v981
      %v1087 = vunpack.c.l.b16 %v982
      %v1088 = vunpack.c.l.b16 %v983
      %v1089 = vunpack.c.l.b16 %v984
      %v1090 = vunpack.c.l.b16 %v985
      %v1091 = vunpack.c.l.b16 %v986
      %v1092 = vunpack.c.l.b16 %v987
      %v1093 = vunpack.c.l.b16 %v988
      %v1094 = vunpack.c.l.b16 %v989
      %v1095 = vunpack.c.l.b16 %v990
      %v1096 = vunpack.c.l.b16 %v991
      %v1097 = vunpack.c.l.b16 %v992
      %v1098 = vunpack.c.l.b16 %v993
      %v1099 = vunpack.c.l.b16 %v994
      %v1100 = vunpack.c.l.b16 %v995
      %v1101 = vunpack.c.l.b16 %v996
      %v1102 = vunpack.c.l.b16 %v997
      %v1103 = vunpack.c.l.b16 %v998
      %v1104 = vunpack.c.l.b16 %v999
      %v1105 = vunpack.c.l.b16 %v1000
      %v1106 = vunpack.c.l.b16 %v1001
      %v1107 = vunpack.c.l.b16 %v1002
      %v1108 = vunpack.c.l.b16 %v1003
      %v1109 = vunpack.c.l.b16 %v1004
      %v1110 = vunpack.c.l.b16 %v1005
      %v1111 = vunpack.c.l.b16 %v1006
      %v1112 = vunpack.c.l.b16 %v1007
      %v1113 = vunpack.c.l.b16 %v1008
      %v1114 = vunpack.c.l.b16 %v1009
      %v1115 = vunpack.c.l.b16 %v1010
      %v1116 = vunpack.c.l.b16 %v1011
      %v1117 = vunpack.c.l.b16 %v1012
      %v1118 = vunpack.c.l.b16 %v1013
      %v1119 = vunpack.c.l.b16 %v1014
      %v1120 = vunpack.c.l.b16 %v1015
      %v1121 = vunpack.c.l.b16 %v1016
      %v1122 = vunpack.c.l.b16 %v1017
      %v1123 = vunpack.c.l.b16 %v1018
      %v1124 = vunpack.c.l.b16 %v1019
      %v1125 = vunpack.c.l.b16 %v1020
      %v1126 = vunpack.c.l.b16 %v1021
      %v1127 = vunpack.c.l.b16 %v1022
      %v1128 = vunpack.c.l.b16 %v1023
      %v1129 = vunpack.c.l.b16 %v1024
      %v1130 = vunpack.c.l.b16 %v1025
      %v1131 = vpack.c.b16 %v1083, %v1082
      %v1132 = vpack.c.b16 %v1085, %v1084
      %v1133 = vpack.c.b16 %v1087, %v1086
      %v1134 = vpack.c.b16 %v1089, %v1088
      %v1135 = vpack.c.b16 %v1091, %v1090
      %v1136 = vpack.c.b16 %v1093, %v1092
      %v1137 = vpack.c.b16 %v1095, %v1094
      %v1138 = vpack.c.b16 %v1097, %v1096
      %v1139 = vpack.c.b16 %v1099, %v1098
      %v1140 = vpack.c.b16 %v1101, %v1100
      %v1141 = vpack.c.b16 %v1103, %v1102
      %v1142 = vpack.c.b16 %v1105, %v1104
      %v1143 = vpack.c.b16 %v1107, %v1106
      %v1144 = vpack.c.b16 %v1109, %v1108
      %v1145 = vpack.c.b16 %v1111, %v1110
      %v1146 = vpack.c.b16 %v1113, %v1112
      %v1147 = vpack.c.b16 %v1115, %v1114
      %v1148 = vpack.c.b16 %v1117, %v1116
      %v1149 = vpack.c.b16 %v1119, %v1118
      %v1150 = vpack.c.b16 %v1121, %v1120
      %v1151 = vpack.c.b16 %v1123, %v1122
      %v1152 = vpack.c.b16 %v1125, %v1124
      %v1153 = vpack.c.b16 %v1127, %v1126
      %v1154 = vpack.c.b16 %v1129, %v1128
      %v1155 = vpack.c.b16 %v1130, %v1130
      %v1156 = vpack.c.b16 %v1084, %v1083
      %v1157 = vpack.c.b16 %v1086, %v1085
      %v1158 = vpack.c.b16 %v1088, %v1087
      %v1159 = vpack.c.b16 %v1090, %v1089
      %v1160 = vpack.c.b16 %v1092, %v1091
      %v1161 = vpack.c.b16 %v1094, %v1093
      %v1162 = vpack.c.b16 %v1096, %v1095
      %v1163 = vpack.c.b16 %v1098, %v1097
      %v1164 = vpack.c.b16 %v1100, %v1099
      %v1165 = vpack.c.b16 %v1102, %v1101
      %v1166 = vpack.c.b16 %v1104, %v1103
      %v1167 = vpack.c.b16 %v1106, %v1105
      %v1168 = vpack.c.b16 %v1108, %v1107
      %v1169 = vpack.c.b16 %v1110, %v1109
      %v1170 = vpack.c.b16 %v1112, %v1111
      %v1171 = vpack.c.b16 %v1114, %v1113
      %v1172 = vpack.c.b16 %v1116, %v1115
      %v1173 = vpack.c.b16 %v1118, %v1117
      %v1174 = vpack.c.b16 %v1120, %v1119
      %v1175 = vpack.c.b16 %v1122, %v1121
      %v1176 = vpack.c.b16 %v1124, %v1123
      %v1177 = vpack.c.b16 %v1126, %v1125
      %v1178 = vpack.c.b16 %v1128, %v1127
      %v1179 = vpack.c.b16 %v1130, %v1129
      %vm1180 = vsmask.f32 3328
      %v1182 = vshrl.u32 %v1156, 16
      %v1184 = vrot.slane %v1182, 4
      %v1185 = vshll.u32 %v1156, 16
      %v1187 = vrot.slane %v1185, 5
      %v1188 = vor.u32 %v1184, %v1187
      %v1190 = vshrl.u32 %v1157, 16
      %v1192 = vrot.slane %v1190, 4
      %v1193 = vshll.u32 %v1157, 16
      %v1195 = vrot.slane %v1193, 5
      %v1196 = vor.u32 %v1192, %v1195
      %v1197 = vsel %vm1180, %v1188, %v1196
      %v1199 = vshrl.u32 %v1158, 16
      %v1201 = vrot.slane %v1199, 4
      %v1202 = vshll.u32 %v1158, 16
      %v1204 = vrot.slane %v1202, 5
      %v1205 = vor.u32 %v1201, %v1204
      %v1206 = vsel %vm1180, %v1196, %v1205
      %v1208 = vshrl.u32 %v1159, 16
      %v1210 = vrot.slane %v1208, 4
      %v1211 = vshll.u32 %v1159, 16
      %v1213 = vrot.slane %v1211, 5
      %v1214 = vor.u32 %v1210, %v1213
      %v1215 = vsel %vm1180, %v1205, %v1214
      %v1217 = vshrl.u32 %v1160, 16
      %v1219 = vrot.slane %v1217, 4
      %v1220 = vshll.u32 %v1160, 16
      %v1222 = vrot.slane %v1220, 5
      %v1223 = vor.u32 %v1219, %v1222
      %v1224 = vsel %vm1180, %v1214, %v1223
      %v1226 = vshrl.u32 %v1161, 16
      %v1228 = vrot.slane %v1226, 4
      %v1229 = vshll.u32 %v1161, 16
      %v1231 = vrot.slane %v1229, 5
      %v1232 = vor.u32 %v1228, %v1231
      %v1233 = vsel %vm1180, %v1223, %v1232
      %v1235 = vshrl.u32 %v1162, 16
      %v1237 = vrot.slane %v1235, 4
      %v1238 = vshll.u32 %v1162, 16
      %v1240 = vrot.slane %v1238, 5
      %v1241 = vor.u32 %v1237, %v1240
      %v1242 = vsel %vm1180, %v1232, %v1241
      %v1244 = vshrl.u32 %v1163, 16
      %v1246 = vrot.slane %v1244, 4
      %v1247 = vshll.u32 %v1163, 16
      %v1249 = vrot.slane %v1247, 5
      %v1250 = vor.u32 %v1246, %v1249
      %v1251 = vsel %vm1180, %v1241, %v1250
      %v1253 = vshrl.u32 %v1164, 16
      %v1255 = vrot.slane %v1253, 4
      %v1256 = vshll.u32 %v1164, 16
      %v1258 = vrot.slane %v1256, 5
      %v1259 = vor.u32 %v1255, %v1258
      %v1260 = vsel %vm1180, %v1250, %v1259
      %v1262 = vshrl.u32 %v1165, 16
      %v1264 = vrot.slane %v1262, 4
      %v1265 = vshll.u32 %v1165, 16
      %v1267 = vrot.slane %v1265, 5
      %v1268 = vor.u32 %v1264, %v1267
      %v1269 = vsel %vm1180, %v1259, %v1268
      %v1271 = vshrl.u32 %v1166, 16
      %v1273 = vrot.slane %v1271, 4
      %v1274 = vshll.u32 %v1166, 16
      %v1276 = vrot.slane %v1274, 5
      %v1277 = vor.u32 %v1273, %v1276
      %v1278 = vsel %vm1180, %v1268, %v1277
      %v1280 = vshrl.u32 %v1167, 16
      %v1282 = vrot.slane %v1280, 4
      %v1283 = vshll.u32 %v1167, 16
      %v1285 = vrot.slane %v1283, 5
      %v1286 = vor.u32 %v1282, %v1285
      %v1287 = vsel %vm1180, %v1277, %v1286
      %v1289 = vshrl.u32 %v1168, 16
      %v1291 = vrot.slane %v1289, 4
      %v1292 = vshll.u32 %v1168, 16
      %v1294 = vrot.slane %v1292, 5
      %v1295 = vor.u32 %v1291, %v1294
      %v1296 = vsel %vm1180, %v1286, %v1295
      %v1298 = vshrl.u32 %v1169, 16
      %v1300 = vrot.slane %v1298, 4
      %v1301 = vshll.u32 %v1169, 16
      %v1303 = vrot.slane %v1301, 5
      %v1304 = vor.u32 %v1300, %v1303
      %v1305 = vsel %vm1180, %v1295, %v1304
      %v1307 = vshrl.u32 %v1170, 16
      %v1309 = vrot.slane %v1307, 4
      %v1310 = vshll.u32 %v1170, 16
      %v1312 = vrot.slane %v1310, 5
      %v1313 = vor.u32 %v1309, %v1312
      %v1314 = vsel %vm1180, %v1304, %v1313
      %v1316 = vshrl.u32 %v1171, 16
      %v1318 = vrot.slane %v1316, 4
      %v1319 = vshll.u32 %v1171, 16
      %v1321 = vrot.slane %v1319, 5
      %v1322 = vor.u32 %v1318, %v1321
      %v1323 = vsel %vm1180, %v1313, %v1322
      %v1325 = vshrl.u32 %v1172, 16
      %v1327 = vrot.slane %v1325, 4
      %v1328 = vshll.u32 %v1172, 16
      %v1330 = vrot.slane %v1328, 5
      %v1331 = vor.u32 %v1327, %v1330
      %v1332 = vsel %vm1180, %v1322, %v1331
      %v1334 = vshrl.u32 %v1173, 16
      %v1336 = vrot.slane %v1334, 4
      %v1337 = vshll.u32 %v1173, 16
      %v1339 = vrot.slane %v1337, 5
      %v1340 = vor.u32 %v1336, %v1339
      %v1341 = vsel %vm1180, %v1331, %v1340
      %v1343 = vshrl.u32 %v1174, 16
      %v1345 = vrot.slane %v1343, 4
      %v1346 = vshll.u32 %v1174, 16
      %v1348 = vrot.slane %v1346, 5
      %v1349 = vor.u32 %v1345, %v1348
      %v1350 = vsel %vm1180, %v1340, %v1349
      %v1352 = vshrl.u32 %v1175, 16
      %v1354 = vrot.slane %v1352, 4
      %v1355 = vshll.u32 %v1175, 16
      %v1357 = vrot.slane %v1355, 5
      %v1358 = vor.u32 %v1354, %v1357
      %v1359 = vsel %vm1180, %v1349, %v1358
      %v1361 = vshrl.u32 %v1176, 16
      %v1363 = vrot.slane %v1361, 4
      %v1364 = vshll.u32 %v1176, 16
      %v1366 = vrot.slane %v1364, 5
      %v1367 = vor.u32 %v1363, %v1366
      %v1368 = vsel %vm1180, %v1358, %v1367
      %v1370 = vshrl.u32 %v1177, 16
      %v1372 = vrot.slane %v1370, 4
      %v1373 = vshll.u32 %v1177, 16
      %v1375 = vrot.slane %v1373, 5
      %v1376 = vor.u32 %v1372, %v1375
      %v1377 = vsel %vm1180, %v1367, %v1376
      %v1379 = vshrl.u32 %v1178, 16
      %v1381 = vrot.slane %v1379, 4
      %v1382 = vshll.u32 %v1178, 16
      %v1384 = vrot.slane %v1382, 5
      %v1385 = vor.u32 %v1381, %v1384
      %v1386 = vsel %vm1180, %v1376, %v1385
      %v1388 = vshrl.u32 %v1179, 16
      %v1390 = vrot.slane %v1388, 4
      %v1391 = vshll.u32 %v1179, 16
      %v1393 = vrot.slane %v1391, 5
      %v1394 = vor.u32 %v1390, %v1393
      %v1395 = vsel %vm1180, %v1385, %v1394
      %v1397 = vunpack.c.l.b16 %v1026
      %v1398 = vpack.c.b16 %v1397, %v1397
      %vm1399 = vcmask 1042432
      %v1400 = vrot.slane %v1156, 5
      %v1401 = vrot.slane %v1157, 5
      %v1402 = vsel %vm1399, %v1400, %v1401
      %v1403 = vrot.slane %v1158, 5
      %v1404 = vsel %vm1399, %v1401, %v1403
      %v1405 = vrot.slane %v1159, 5
      %v1406 = vsel %vm1399, %v1403, %v1405
      %v1407 = vrot.slane %v1160, 5
      %v1408 = vsel %vm1399, %v1405, %v1407
      %v1409 = vrot.slane %v1161, 5
      %v1410 = vsel %vm1399, %v1407, %v1409
      %v1411 = vrot.slane %v1162, 5
      %v1412 = vsel %vm1399, %v1409, %v1411
      %v1413 = vrot.slane %v1163, 5
      %v1414 = vsel %vm1399, %v1411, %v1413
      %v1415 = vrot.slane %v1164, 5
      %v1416 = vsel %vm1399, %v1413, %v1415
      %v1417 = vrot.slane %v1165, 5
      %v1418 = vsel %vm1399, %v1415, %v1417
      %v1419 = vrot.slane %v1166, 5
      %v1420 = vsel %vm1399, %v1417, %v1419
      %v1421 = vrot.slane %v1167, 5
      %v1422 = vsel %vm1399, %v1419, %v1421
      %v1423 = vrot.slane %v1168, 5
      %v1424 = vsel %vm1399, %v1421, %v1423
      %v1425 = vrot.slane %v1169, 5
      %v1426 = vsel %vm1399, %v1423, %v1425
      %v1427 = vrot.slane %v1170, 5
      %v1428 = vsel %vm1399, %v1425, %v1427
      %v1429 = vrot.slane %v1171, 5
      %v1430 = vsel %vm1399, %v1427, %v1429
      %v1431 = vrot.slane %v1172, 5
      %v1432 = vsel %vm1399, %v1429, %v1431
      %v1433 = vrot.slane %v1173, 5
      %v1434 = vsel %vm1399, %v1431, %v1433
      %v1435 = vrot.slane %v1174, 5
      %v1436 = vsel %vm1399, %v1433, %v1435
      %v1437 = vrot.slane %v1175, 5
      %v1438 = vsel %vm1399, %v1435, %v1437
      %v1439 = vrot.slane %v1176, 5
      %v1440 = vsel %vm1399, %v1437, %v1439
      %v1441 = vrot.slane %v1177, 5
      %v1442 = vsel %vm1399, %v1439, %v1441
      %v1443 = vrot.slane %v1178, 5
      %v1444 = vsel %vm1399, %v1441, %v1443
      %v1445 = vrot.slane %v1179, 5
      %v1446 = vsel %vm1399, %v1443, %v1445
      %v1447 = vrot.slane %v1398, 5
      %v1448 = vsel %vm1399, %v1445, %v1447
      %v1451 = vunpack.c.l.b16 %v1027
      %v1452 = vunpack.c.l.b16 %v1028
      %v1453 = vpack.c.b16 %v1451, %v1397
      %v1454 = vpack.c.b16 %v1452, %v1452
      %v1455 = vpack.c.b16 %v1397, %v1130
      %v1456 = vpack.c.b16 %v1452, %v1451
      %v1458 = vshrl.u32 %v1133, 16
      %v1460 = vrot.slane %v1458, 4
      %v1461 = vshll.u32 %v1133, 16
      %v1463 = vrot.slane %v1461, 5
      %v1464 = vor.u32 %v1460, %v1463
      %v1466 = vshrl.u32 %v1134, 16
      %v1468 = vrot.slane %v1466, 4
      %v1469 = vshll.u32 %v1134, 16
      %v1471 = vrot.slane %v1469, 5
      %v1472 = vor.u32 %v1468, %v1471
      %v1473 = vsel %vm1180, %v1464, %v1472
      %v1475 = vshrl.u32 %v1135, 16
      %v1477 = vrot.slane %v1475, 4
      %v1478 = vshll.u32 %v1135, 16
      %v1480 = vrot.slane %v1478, 5
      %v1481 = vor.u32 %v1477, %v1480
      %v1482 = vsel %vm1180, %v1472, %v1481
      %v1484 = vshrl.u32 %v1136, 16
      %v1486 = vrot.slane %v1484, 4
      %v1487 = vshll.u32 %v1136, 16
      %v1489 = vrot.slane %v1487, 5
      %v1490 = vor.u32 %v1486, %v1489
      %v1491 = vsel %vm1180, %v1481, %v1490
      %v1493 = vshrl.u32 %v1137, 16
      %v1495 = vrot.slane %v1493, 4
      %v1496 = vshll.u32 %v1137, 16
      %v1498 = vrot.slane %v1496, 5
      %v1499 = vor.u32 %v1495, %v1498
      %v1500 = vsel %vm1180, %v1490, %v1499
      %v1502 = vshrl.u32 %v1138, 16
      %v1504 = vrot.slane %v1502, 4
      %v1505 = vshll.u32 %v1138, 16
      %v1507 = vrot.slane %v1505, 5
      %v1508 = vor.u32 %v1504, %v1507
      %v1509 = vsel %vm1180, %v1499, %v1508
      %v1511 = vshrl.u32 %v1139, 16
      %v1513 = vrot.slane %v1511, 4
      %v1514 = vshll.u32 %v1139, 16
      %v1516 = vrot.slane %v1514, 5
      %v1517 = vor.u32 %v1513, %v1516
      %v1518 = vsel %vm1180, %v1508, %v1517
      %v1520 = vshrl.u32 %v1140, 16
      %v1522 = vrot.slane %v1520, 4
      %v1523 = vshll.u32 %v1140, 16
      %v1525 = vrot.slane %v1523, 5
      %v1526 = vor.u32 %v1522, %v1525
      %v1527 = vsel %vm1180, %v1517, %v1526
      %v1529 = vshrl.u32 %v1141, 16
      %v1531 = vrot.slane %v1529, 4
      %v1532 = vshll.u32 %v1141, 16
      %v1534 = vrot.slane %v1532, 5
      %v1535 = vor.u32 %v1531, %v1534
      %v1536 = vsel %vm1180, %v1526, %v1535
      %v1538 = vshrl.u32 %v1142, 16
      %v1540 = vrot.slane %v1538, 4
      %v1541 = vshll.u32 %v1142, 16
      %v1543 = vrot.slane %v1541, 5
      %v1544 = vor.u32 %v1540, %v1543
      %v1545 = vsel %vm1180, %v1535, %v1544
      %v1547 = vshrl.u32 %v1143, 16
      %v1549 = vrot.slane %v1547, 4
      %v1550 = vshll.u32 %v1143, 16
      %v1552 = vrot.slane %v1550, 5
      %v1553 = vor.u32 %v1549, %v1552
      %v1554 = vsel %vm1180, %v1544, %v1553
      %v1556 = vshrl.u32 %v1144, 16
      %v1558 = vrot.slane %v1556, 4
      %v1559 = vshll.u32 %v1144, 16
      %v1561 = vrot.slane %v1559, 5
      %v1562 = vor.u32 %v1558, %v1561
      %v1563 = vsel %vm1180, %v1553, %v1562
      %v1565 = vshrl.u32 %v1145, 16
      %v1567 = vrot.slane %v1565, 4
      %v1568 = vshll.u32 %v1145, 16
      %v1570 = vrot.slane %v1568, 5
      %v1571 = vor.u32 %v1567, %v1570
      %v1572 = vsel %vm1180, %v1562, %v1571
      %v1574 = vshrl.u32 %v1146, 16
      %v1576 = vrot.slane %v1574, 4
      %v1577 = vshll.u32 %v1146, 16
      %v1579 = vrot.slane %v1577, 5
      %v1580 = vor.u32 %v1576, %v1579
      %v1581 = vsel %vm1180, %v1571, %v1580
      %v1583 = vshrl.u32 %v1147, 16
      %v1585 = vrot.slane %v1583, 4
      %v1586 = vshll.u32 %v1147, 16
      %v1588 = vrot.slane %v1586, 5
      %v1589 = vor.u32 %v1585, %v1588
      %v1590 = vsel %vm1180, %v1580, %v1589
      %v1592 = vshrl.u32 %v1148, 16
      %v1594 = vrot.slane %v1592, 4
      %v1595 = vshll.u32 %v1148, 16
      %v1597 = vrot.slane %v1595, 5
      %v1598 = vor.u32 %v1594, %v1597
      %v1599 = vsel %vm1180, %v1589, %v1598
      %v1601 = vshrl.u32 %v1149, 16
      %v1603 = vrot.slane %v1601, 4
      %v1604 = vshll.u32 %v1149, 16
      %v1606 = vrot.slane %v1604, 5
      %v1607 = vor.u32 %v1603, %v1606
      %v1608 = vsel %vm1180, %v1598, %v1607
      %v1610 = vshrl.u32 %v1150, 16
      %v1612 = vrot.slane %v1610, 4
      %v1613 = vshll.u32 %v1150, 16
      %v1615 = vrot.slane %v1613, 5
      %v1616 = vor.u32 %v1612, %v1615
      %v1617 = vsel %vm1180, %v1607, %v1616
      %v1619 = vshrl.u32 %v1151, 16
      %v1621 = vrot.slane %v1619, 4
      %v1622 = vshll.u32 %v1151, 16
      %v1624 = vrot.slane %v1622, 5
      %v1625 = vor.u32 %v1621, %v1624
      %v1626 = vsel %vm1180, %v1616, %v1625
      %v1628 = vshrl.u32 %v1152, 16
      %v1630 = vrot.slane %v1628, 4
      %v1631 = vshll.u32 %v1152, 16
      %v1633 = vrot.slane %v1631, 5
      %v1634 = vor.u32 %v1630, %v1633
      %v1635 = vsel %vm1180, %v1625, %v1634
      %v1637 = vshrl.u32 %v1153, 16
      %v1639 = vrot.slane %v1637, 4
      %v1640 = vshll.u32 %v1153, 16
      %v1642 = vrot.slane %v1640, 5
      %v1643 = vor.u32 %v1639, %v1642
      %v1644 = vsel %vm1180, %v1634, %v1643
      %v1646 = vshrl.u32 %v1154, 16
      %v1648 = vrot.slane %v1646, 4
      %v1649 = vshll.u32 %v1154, 16
      %v1651 = vrot.slane %v1649, 5
      %v1652 = vor.u32 %v1648, %v1651
      %v1653 = vsel %vm1180, %v1643, %v1652
      %v1655 = vshrl.u32 %v1455, 16
      %v1657 = vrot.slane %v1655, 4
      %v1658 = vshll.u32 %v1455, 16
      %v1660 = vrot.slane %v1658, 5
      %v1661 = vor.u32 %v1657, %v1660
      %v1662 = vsel %vm1180, %v1652, %v1661
      %v1664 = vshrl.u32 %v1456, 16
      %v1666 = vrot.slane %v1664, 4
      %v1667 = vshll.u32 %v1456, 16
      %v1669 = vrot.slane %v1667, 5
      %v1670 = vor.u32 %v1666, %v1669
      %v1671 = vsel %vm1180, %v1661, %v1670
      %v1673 = vunpack.c.l.b16 %v1029
      %v1674 = vpack.c.b16 %v1673, %v1673
      %v1675 = vrot.slane %v1133, 5
      %v1676 = vrot.slane %v1134, 5
      %v1677 = vsel %vm1399, %v1675, %v1676
      %v1678 = vrot.slane %v1135, 5
      %v1679 = vsel %vm1399, %v1676, %v1678
      %v1680 = vrot.slane %v1136, 5
      %v1681 = vsel %vm1399, %v1678, %v1680
      %v1682 = vrot.slane %v1137, 5
      %v1683 = vsel %vm1399, %v1680, %v1682
      %v1684 = vrot.slane %v1138, 5
      %v1685 = vsel %vm1399, %v1682, %v1684
      %v1686 = vrot.slane %v1139, 5
      %v1687 = vsel %vm1399, %v1684, %v1686
      %v1688 = vrot.slane %v1140, 5
      %v1689 = vsel %vm1399, %v1686, %v1688
      %v1690 = vrot.slane %v1141, 5
      %v1691 = vsel %vm1399, %v1688, %v1690
      %v1692 = vrot.slane %v1142, 5
      %v1693 = vsel %vm1399, %v1690, %v1692
      %v1694 = vrot.slane %v1143, 5
      %v1695 = vsel %vm1399, %v1692, %v1694
      %v1696 = vrot.slane %v1144, 5
      %v1697 = vsel %vm1399, %v1694, %v1696
      %v1698 = vrot.slane %v1145, 5
      %v1699 = vsel %vm1399, %v1696, %v1698
      %v1700 = vrot.slane %v1146, 5
      %v1701 = vsel %vm1399, %v1698, %v1700
      %v1702 = vrot.slane %v1147, 5
      %v1703 = vsel %vm1399, %v1700, %v1702
      %v1704 = vrot.slane %v1148, 5
      %v1705 = vsel %vm1399, %v1702, %v1704
      %v1706 = vrot.slane %v1149, 5
      %v1707 = vsel %vm1399, %v1704, %v1706
      %v1708 = vrot.slane %v1150, 5
      %v1709 = vsel %vm1399, %v1706, %v1708
      %v1710 = vrot.slane %v1151, 5
      %v1711 = vsel %vm1399, %v1708, %v1710
      %v1712 = vrot.slane %v1152, 5
      %v1713 = vsel %vm1399, %v1710, %v1712
      %v1714 = vrot.slane %v1153, 5
      %v1715 = vsel %vm1399, %v1712, %v1714
      %v1716 = vrot.slane %v1154, 5
      %v1717 = vsel %vm1399, %v1714, %v1716
      %v1718 = vrot.slane %v1455, 5
      %v1719 = vsel %vm1399, %v1716, %v1718
      %v1720 = vrot.slane %v1456, 5
      %v1721 = vsel %vm1399, %v1718, %v1720
      %v1722 = vrot.slane %v1674, 5
      %v1723 = vsel %vm1399, %v1720, %v1722
      %v1726 = vunpack.c.l.b16 %v1030
      %v1727 = vunpack.c.l.b16 %v1031
      %v1728 = vpack.c.b16 %v1726, %v1673
      %v1729 = vpack.c.b16 %v1727, %v1727
      %v1730 = vpack.c.b16 %v1673, %v1452
      %v1731 = vpack.c.b16 %v1727, %v1726
      %v1733 = vshrl.u32 %v1453, 16
      %v1735 = vrot.slane %v1733, 4
      %v1736 = vshll.u32 %v1453, 16
      %v1738 = vrot.slane %v1736, 5
      %v1739 = vor.u32 %v1735, %v1738
      %v1740 = vsel %vm1180, %v1394, %v1739
      %v1742 = vshrl.u32 %v1730, 16
      %v1744 = vrot.slane %v1742, 4
      %v1745 = vshll.u32 %v1730, 16
      %v1747 = vrot.slane %v1745, 5
      %v1748 = vor.u32 %v1744, %v1747
      %v1749 = vsel %vm1180, %v1739, %v1748
      %v1751 = vshrl.u32 %v1731, 16
      %v1753 = vrot.slane %v1751, 4
      %v1754 = vshll.u32 %v1731, 16
      %v1756 = vrot.slane %v1754, 5
      %v1757 = vor.u32 %v1753, %v1756
      %v1758 = vsel %vm1180, %v1748, %v1757
      %v1760 = vunpack.c.l.b16 %v1032
      %v1761 = vpack.c.b16 %v1760, %v1760
      %v1762 = vrot.slane %v1453, 5
      %v1763 = vsel %vm1399, %v1445, %v1762
      %v1764 = vrot.slane %v1730, 5
      %v1765 = vsel %vm1399, %v1762, %v1764
      %v1766 = vrot.slane %v1731, 5
      %v1767 = vsel %vm1399, %v1764, %v1766
      %v1768 = vrot.slane %v1761, 5
      %v1769 = vsel %vm1399, %v1766, %v1768
      %v1770 = vld [vmem:[%s1] sm:$0xf]
      %v1771 = vld [vmem:[%s1 + $0x4] sm:$0xf]
      %v1772 = vld [vmem:[%s1 + $0x8] sm:$0xf]
      %v1773 = vld [vmem:[%s1 + $0xc] sm:$0xf]
      %v1774 = vld [vmem:[%s1 + $0x10] sm:$0xf]
      %v1775 = vld [vmem:[%s1 + $0x14] sm:$0xf]
      %v1776 = vld [vmem:[%s1 + $0x18] sm:$0xf]
      %v1777 = vld [vmem:[%s1 + $0x1c] sm:$0xf]
      %v1778 = vld [vmem:[%s1 + $0x20] sm:$0xf]
      %v1779 = vld [vmem:[%s1 + $0x24] sm:$0xf]
      %v1780 = vld [vmem:[%s1 + $0x28] sm:$0xf]
      %v1781 = vld [vmem:[%s1 + $0x2c] sm:$0xf]
      %v1782 = vld [vmem:[%s1 + $0x30] sm:$0xf]
      %v1783 = vld [vmem:[%s1 + $0x34] sm:$0xf]
      %v1784 = vld [vmem:[%s1 + $0x38] sm:$0xf]
      %v1785 = vld [vmem:[%s1 + $0x3c] sm:$0xf]
      %v1786 = vld [vmem:[%s1 + $0x40] sm:$0xf]
      %v1787 = vld [vmem:[%s1 + $0x44] sm:$0xf]
      %v1788 = vld [vmem:[%s1 + $0x48] sm:$0xf]
      %v1789 = vld [vmem:[%s1 + $0x4c] sm:$0xf]
      %v1790 = vld [vmem:[%s1 + $0x50] sm:$0xf]
      %v1791 = vld [vmem:[%s1 + $0x54] sm:$0xf]
      %v1792 = vld [vmem:[%s1 + $0x58] sm:$0xf]
      %v1793 = vld [vmem:[%s1 + $0x5c] sm:$0xf]
      %v1794 = vld [vmem:[%s1 + $0x60] sm:$0xf]
      %v1795 = vld [vmem:[%s1 + $0x64] sm:$0xf]
      %v1796 = vld [vmem:[%s1 + $0x68] sm:$0xf]
      %v1797 = vld [vmem:[%s1 + $0x6c] sm:$0xf]
      %v1798 = vld [vmem:[%s1 + $0x70] sm:$0xf]
      %v1799 = vld [vmem:[%s1 + $0x74] sm:$0xf]
      %v1800 = vld [vmem:[%s1 + $0x78] sm:$0xf]
      %v1801 = vld [vmem:[%s1 + $0x7c] sm:$0xf]
      %v1802 = vld [vmem:[%s1 + $0x80] sm:$0xf]
      %v1803 = vld [vmem:[%s1 + $0x84] sm:$0xf]
      %v1804 = vld [vmem:[%s1 + $0x88] sm:$0xf]
      %v1805 = vld [vmem:[%s1 + $0x8c] sm:$0xf]
      %v1806 = vld [vmem:[%s1 + $0x90] sm:$0xf]
      %v1807 = vld [vmem:[%s1 + $0x94] sm:$0xf]
      %v1808 = vld [vmem:[%s1 + $0x98] sm:$0xf]
      %v1809 = vld [vmem:[%s1 + $0x9c] sm:$0xf]
      %v1810 = vld [vmem:[%s1 + $0xa0] sm:$0xf]
      %v1811 = vld [vmem:[%s1 + $0xa4] sm:$0xf]
      %v1812 = vld [vmem:[%s1 + $0xa8] sm:$0xf]
      %v1813 = vld [vmem:[%s1 + $0xac] sm:$0xf]
      %v1814 = vld [vmem:[%s1 + $0xb0] sm:$0xf]
      %v1815 = vld [vmem:[%s1 + $0xb4] sm:$0xf]
      %v1816 = vld [vmem:[%s1 + $0xb8] sm:$0xf]
      %v1817 = vld [vmem:[%s1 + $0xbc] sm:$0xf]
      %v1818 = vld [vmem:[%s1 + $0xc0] sm:$0xf]
      %v1819 = vld [vmem:[%s1 + $0xc4] sm:$0xf]
      %v1820 = vld [vmem:[%s1 + $0xc8] sm:$0xf]
      %v1821 = vld [vmem:[%s1 + $0xcc] sm:$0xf]
      %v1822 = vld [vmem:[%s1 + $0xd0] sm:$0xf]
      %v1823 = vld [vmem:[%s1 + $0xd4] sm:$0xf]
      %v1824 = vld [vmem:[%s1 + $0xd8] sm:$0xf]
      %v1825 = vld [vmem:[%s1 + $0xdc] sm:$0xf]
      %v1826 = vld [vmem:[%s1 + $0xe0] sm:$0xf]
      %v1827 = vld [vmem:[%s1 + $0xe4] sm:$0xf]
      %v1828 = vld [vmem:[%s1 + $0xe8] sm:$0xf]
      %v1829 = vld [vmem:[%s1 + $0xec] sm:$0xf]
      %v1830 = vld [vmem:[%s1 + $0xf0] sm:$0xf]
      %v1831 = vld [vmem:[%s1 + $0xf4] sm:$0xf]
      %v1832 = vld [vmem:[%s1 + $0xf8] sm:$0xf]
      %v1833 = vld [vmem:[%s1 + $0xfc] sm:$0xf]
      %v1834 = vld [vmem:[%s1 + $0x100] sm:$0xf]
      %v1835 = vld [vmem:[%s1 + $0x104] sm:$0xf]
      %v1836 = vld [vmem:[%s1 + $0x108] sm:$0xf]
      %v1837 = vld [vmem:[%s1 + $0x10c] sm:$0xf]
      %v1838 = vld [vmem:[%s1 + $0x110] sm:$0xf]
      %v1839 = vld [vmem:[%s1 + $0x114] sm:$0xf]
      %v1840 = vld [vmem:[%s1 + $0x118] sm:$0xf]
      %v1841 = vld [vmem:[%s1 + $0x11c] sm:$0xf]
      %v1842 = vld [vmem:[%s1 + $0x120] sm:$0xf]
      %v1843 = vld [vmem:[%s1 + $0x124] sm:$0xf]
      %v1844 = vld [vmem:[%s1 + $0x128] sm:$0xf]
      %v1845 = vld [vmem:[%s1 + $0x12c] sm:$0xf]
      %v1846 = vld [vmem:[%s1 + $0x130] sm:$0xf]
      %v1847 = vld [vmem:[%s1 + $0x134] sm:$0xf]
      %v1848 = vld [vmem:[%s1 + $0x138] sm:$0xf]
      %v1849 = vld [vmem:[%s1 + $0x13c] sm:$0xf]
      %v1850 = vld [vmem:[%s1 + $0x140] sm:$0xf]
      %v1851 = vld [vmem:[%s1 + $0x144] sm:$0xf]
      %v1852 = vld [vmem:[%s1 + $0x148] sm:$0xf]
      %v1853 = vld [vmem:[%s1 + $0x14c] sm:$0xf]
      %v1854 = vld [vmem:[%s1 + $0x150] sm:$0xf]
      %v1855 = vld [vmem:[%s1 + $0x154] sm:$0xf]
      %v1856 = vld [vmem:[%s1 + $0x158] sm:$0xf]
      %v1857 = vld [vmem:[%s1 + $0x15c] sm:$0xf]
      %v1858 = vld [vmem:[%s1 + $0x160] sm:$0xf]
      %v1859 = vld [vmem:[%s1 + $0x164] sm:$0xf]
      %v1860 = vld [vmem:[%s1 + $0x168] sm:$0xf]
      %v1861 = vld [vmem:[%s1 + $0x16c] sm:$0xf]
      %v1862 = vld [vmem:[%s1 + $0x170] sm:$0xf]
      %v1863 = vld [vmem:[%s1 + $0x174] sm:$0xf]
      %v1864 = vld [vmem:[%s1 + $0x178] sm:$0xf]
      %v1865 = vld [vmem:[%s1 + $0x17c] sm:$0xf]
      %v1866 = vld [vmem:[%s1 + $0x180] sm:$0xf]
      %v1867 = vld [vmem:[%s1 + $0x184] sm:$0xf]
      %v1868 = vld [vmem:[%s1 + $0x188] sm:$0xf]
      %v1869 = vld [vmem:[%s1 + $0x18c] sm:$0xf]
      %v1870 = vld [vmem:[%s1 + $0x190] sm:$0xf]
      %v1871 = vld [vmem:[%s1 + $0x194] sm:$0xf]
      %v1872 = vld [vmem:[%s1 + $0x198] sm:$0xf]
      %v1873 = vld [vmem:[%s1 + $0x19c] sm:$0xf]
      %v1874 = vld [vmem:[%s1 + $0x1a0] sm:$0xf]
      %v1875 = vld [vmem:[%s1 + $0x1a4] sm:$0xf]
      %v1876 = vld [vmem:[%s1 + $0x1a8] sm:$0xf]
      %v1877 = vld [vmem:[%s1 + $0x1ac] sm:$0xf]
      %v1878 = vld [vmem:[%s1 + $0x1b0] sm:$0xf]
      %v1879 = vld [vmem:[%s1 + $0x1b4] sm:$0xf]
      %v1880 = vld [vmem:[%s1 + $0x1b8] sm:$0xf]
      %v1881 = vld [vmem:[%s1 + $0x1bc] sm:$0xf]
      %v1882 = vld [vmem:[%s1 + $0x1c0] sm:$0xf]
      %v1883 = vld [vmem:[%s1 + $0x1c4] sm:$0xf]
      %v1884 = vld [vmem:[%s1 + $0x1c8] sm:$0xf]
      %v1885 = vld [vmem:[%s1 + $0x1cc] sm:$0xf]
      %v1886 = vld [vmem:[%s1 + $0x1d0] sm:$0xf]
      %v1887 = vld [vmem:[%s1 + $0x1d4] sm:$0xf]
      %v1888 = vld [vmem:[%s1 + $0x1d8] sm:$0xf]
      %v1889 = vld [vmem:[%s1 + $0x1dc] sm:$0xf]
      %v1890 = vld [vmem:[%s1 + $0x1e0] sm:$0xf]
      %v1891 = vld [vmem:[%s1 + $0x1e4] sm:$0xf]
      %v1892 = vld [vmem:[%s1 + $0x1e8] sm:$0xf]
      %v1893 = vld [vmem:[%s1 + $0x1ec] sm:$0xf]
      %v1894 = vld [vmem:[%s1 + $0x1f0] sm:$0xf]
      %v1895 = vld [vmem:[%s1 + $0x1f4] sm:$0xf]
      %v1896 = vld [vmem:[%s1 + $0x1f8] sm:$0xf]
      %v1897 = vld [vmem:[%s1 + $0x1fc] sm:$0xf]
      %v1898 = vld [vmem:[%s1 + $0x200] sm:$0xf]
      %v1899 = vld [vmem:[%s1 + $0x204] sm:$0xf]
      %v1900 = vld [vmem:[%s1 + $0x208] sm:$0xf]
      %v1901 = vld [vmem:[%s1 + $0x20c] sm:$0xf]
      %v1902 = vld [vmem:[%s1 + $0x210] sm:$0xf]
      %v1903 = vld [vmem:[%s1 + $0x214] sm:$0xf]
      %v1904 = vld [vmem:[%s1 + $0x218] sm:$0xf]
      %v1905 = vld [vmem:[%s1 + $0x21c] sm:$0xf]
      %v1906 = vld [vmem:[%s1 + $0x220] sm:$0xf]
      %v1907 = vld [vmem:[%s1 + $0x224] sm:$0xf]
      %v1908 = vld [vmem:[%s1 + $0x228] sm:$0xf]
      %v1909 = vld [vmem:[%s1 + $0x22c] sm:$0xf]
      %v1910 = vld [vmem:[%s1 + $0x230] sm:$0xf]
      %v1911 = vld [vmem:[%s1 + $0x234] sm:$0xf]
      %v1912 = vld [vmem:[%s1 + $0x238] sm:$0xf]
      %v1913 = vld [vmem:[%s1 + $0x23c] sm:$0xf]
      %vm1914 = vsmask.f32 4352
      %v1916 = vshrl.u32 %v1131, 16
      %v1918 = vrot.slane %v1916, 3
      %v1919 = vshll.u32 %v1131, 16
      %v1921 = vrot.slane %v1919, 4
      %v1922 = vor.u32 %v1918, %v1921
      %v1924 = vshrl.u32 %v1132, 16
      %v1926 = vrot.slane %v1924, 3
      %v1927 = vshll.u32 %v1132, 16
      %v1929 = vrot.slane %v1927, 4
      %v1930 = vor.u32 %v1926, %v1929
      %v1931 = vsel %vm1914, %v1922, %v1930
      %v1933 = vshrl.u32 %v1188, 16
      %v1935 = vrot.slane %v1933, 3
      %v1936 = vshll.u32 %v1188, 16
      %v1938 = vrot.slane %v1936, 4
      %v1939 = vor.u32 %v1935, %v1938
      %v1941 = vshrl.u32 %v1197, 16
      %v1943 = vrot.slane %v1941, 3
      %v1944 = vshll.u32 %v1197, 16
      %v1946 = vrot.slane %v1944, 4
      %v1947 = vor.u32 %v1943, %v1946
      %v1948 = vsel %vm1914, %v1939, %v1947
      %v1950 = vshrl.u32 %v1400, 16
      %v1952 = vrot.slane %v1950, 3
      %v1953 = vshll.u32 %v1400, 16
      %v1955 = vrot.slane %v1953, 4
      %v1956 = vor.u32 %v1952, %v1955
      %v1958 = vshrl.u32 %v1402, 16
      %v1960 = vrot.slane %v1958, 3
      %v1961 = vshll.u32 %v1402, 16
      %v1963 = vrot.slane %v1961, 4
      %v1964 = vor.u32 %v1960, %v1963
      %v1965 = vsel %vm1914, %v1956, %v1964
      %v1966 = vrot.slane %v1190, 3
      %v1967 = vrot.slane %v1193, 4
      %v1968 = vor.u32 %v1966, %v1967
      %v1969 = vrot.slane %v1199, 3
      %v1970 = vrot.slane %v1202, 4
      %v1971 = vor.u32 %v1969, %v1970
      %v1972 = vsel %vm1914, %v1968, %v1971
      %v1974 = vshrl.u32 %v1464, 16
      %v1976 = vrot.slane %v1974, 3
      %v1977 = vshll.u32 %v1464, 16
      %v1979 = vrot.slane %v1977, 4
      %v1980 = vor.u32 %v1976, %v1979
      %v1982 = vshrl.u32 %v1473, 16
      %v1984 = vrot.slane %v1982, 3
      %v1985 = vshll.u32 %v1473, 16
      %v1987 = vrot.slane %v1985, 4
      %v1988 = vor.u32 %v1984, %v1987
      %v1989 = vsel %vm1914, %v1980, %v1988
      %v1991 = vshrl.u32 %v1675, 16
      %v1993 = vrot.slane %v1991, 3
      %v1994 = vshll.u32 %v1675, 16
      %v1996 = vrot.slane %v1994, 4
      %v1997 = vor.u32 %v1993, %v1996
      %v1999 = vshrl.u32 %v1677, 16
      %v2001 = vrot.slane %v1999, 3
      %v2002 = vshll.u32 %v1677, 16
      %v2004 = vrot.slane %v2002, 4
      %v2005 = vor.u32 %v2001, %v2004
      %v2006 = vsel %vm1914, %v1997, %v2005
      %v2007 = vrot.slane %v1466, 3
      %v2008 = vrot.slane %v1469, 4
      %v2009 = vor.u32 %v2007, %v2008
      %v2010 = vrot.slane %v1475, 3
      %v2011 = vrot.slane %v1478, 4
      %v2012 = vor.u32 %v2010, %v2011
      %v2013 = vsel %vm1914, %v2009, %v2012
      %v2015 = vshrl.u32 %v1214, 16
      %v2017 = vrot.slane %v2015, 3
      %v2018 = vshll.u32 %v1214, 16
      %v2020 = vrot.slane %v2018, 4
      %v2021 = vor.u32 %v2017, %v2020
      %v2023 = vshrl.u32 %v1224, 16
      %v2025 = vrot.slane %v2023, 3
      %v2026 = vshll.u32 %v1224, 16
      %v2028 = vrot.slane %v2026, 4
      %v2029 = vor.u32 %v2025, %v2028
      %v2030 = vsel %vm1914, %v2021, %v2029
      %v2032 = vshrl.u32 %v1405, 16
      %v2034 = vrot.slane %v2032, 3
      %v2035 = vshll.u32 %v1405, 16
      %v2037 = vrot.slane %v2035, 4
      %v2038 = vor.u32 %v2034, %v2037
      %v2040 = vshrl.u32 %v1408, 16
      %v2042 = vrot.slane %v2040, 3
      %v2043 = vshll.u32 %v1408, 16
      %v2045 = vrot.slane %v2043, 4
      %v2046 = vor.u32 %v2042, %v2045
      %v2047 = vsel %vm1914, %v2038, %v2046
      %v2048 = vrot.slane %v1458, 3
      %v2049 = vrot.slane %v1461, 4
      %v2050 = vor.u32 %v2048, %v2049
      %v2051 = vsel %vm1914, %v1930, %v2050
      %v2053 = vshrl.u32 %v1206, 16
      %v2055 = vrot.slane %v2053, 3
      %v2056 = vshll.u32 %v1206, 16
      %v2058 = vrot.slane %v2056, 4
      %v2059 = vor.u32 %v2055, %v2058
      %v2060 = vsel %vm1914, %v1947, %v2059
      %v2062 = vshrl.u32 %v1404, 16
      %v2064 = vrot.slane %v2062, 3
      %v2065 = vshll.u32 %v1404, 16
      %v2067 = vrot.slane %v2065, 4
      %v2068 = vor.u32 %v2064, %v2067
      %v2069 = vsel %vm1914, %v1964, %v2068
      %v2070 = vrot.slane %v1208, 3
      %v2071 = vrot.slane %v1211, 4
      %v2072 = vor.u32 %v2070, %v2071
      %v2073 = vsel %vm1914, %v1971, %v2072
      %v2075 = vshrl.u32 %v1482, 16
      %v2077 = vrot.slane %v2075, 3
      %v2078 = vshll.u32 %v1482, 16
      %v2080 = vrot.slane %v2078, 4
      %v2081 = vor.u32 %v2077, %v2080
      %v2082 = vsel %vm1914, %v1988, %v2081
      %v2084 = vshrl.u32 %v1679, 16
      %v2086 = vrot.slane %v2084, 3
      %v2087 = vshll.u32 %v1679, 16
      %v2089 = vrot.slane %v2087, 4
      %v2090 = vor.u32 %v2086, %v2089
      %v2091 = vsel %vm1914, %v2005, %v2090
      %v2092 = vrot.slane %v1484, 3
      %v2093 = vrot.slane %v1487, 4
      %v2094 = vor.u32 %v2092, %v2093
      %v2095 = vsel %vm1914, %v2012, %v2094
      %v2097 = vshrl.u32 %v1233, 16
      %v2099 = vrot.slane %v2097, 3
      %v2100 = vshll.u32 %v1233, 16
      %v2102 = vrot.slane %v2100, 4
      %v2103 = vor.u32 %v2099, %v2102
      %v2104 = vsel %vm1914, %v2029, %v2103
      %v2106 = vshrl.u32 %v1410, 16
      %v2108 = vrot.slane %v2106, 3
      %v2109 = vshll.u32 %v1410, 16
      %v2111 = vrot.slane %v2109, 4
      %v2112 = vor.u32 %v2108, %v2111
      %v2113 = vsel %vm1914, %v2046, %v2112
      %v2114 = vsel %vm1914, %v2050, %v2009
      %v2116 = vshrl.u32 %v1215, 16
      %v2118 = vrot.slane %v2116, 3
      %v2119 = vshll.u32 %v1215, 16
      %v2121 = vrot.slane %v2119, 4
      %v2122 = vor.u32 %v2118, %v2121
      %v2123 = vsel %vm1914, %v2059, %v2122
      %v2125 = vshrl.u32 %v1406, 16
      %v2127 = vrot.slane %v2125, 3
      %v2128 = vshll.u32 %v1406, 16
      %v2130 = vrot.slane %v2128, 4
      %v2131 = vor.u32 %v2127, %v2130
      %v2132 = vsel %vm1914, %v2068, %v2131
      %v2133 = vrot.slane %v1217, 3
      %v2134 = vrot.slane %v1220, 4
      %v2135 = vor.u32 %v2133, %v2134
      %v2136 = vsel %vm1914, %v2072, %v2135
      %v2138 = vshrl.u32 %v1491, 16
      %v2140 = vrot.slane %v2138, 3
      %v2141 = vshll.u32 %v1491, 16
      %v2143 = vrot.slane %v2141, 4
      %v2144 = vor.u32 %v2140, %v2143
      %v2145 = vsel %vm1914, %v2081, %v2144
      %v2147 = vshrl.u32 %v1681, 16
      %v2149 = vrot.slane %v2147, 3
      %v2150 = vshll.u32 %v1681, 16
      %v2152 = vrot.slane %v2150, 4
      %v2153 = vor.u32 %v2149, %v2152
      %v2154 = vsel %vm1914, %v2090, %v2153
      %v2155 = vrot.slane %v1493, 3
      %v2156 = vrot.slane %v1496, 4
      %v2157 = vor.u32 %v2155, %v2156
      %v2158 = vsel %vm1914, %v2094, %v2157
      %v2160 = vshrl.u32 %v1242, 16
      %v2162 = vrot.slane %v2160, 3
      %v2163 = vshll.u32 %v1242, 16
      %v2165 = vrot.slane %v2163, 4
      %v2166 = vor.u32 %v2162, %v2165
      %v2167 = vsel %vm1914, %v2103, %v2166
      %v2169 = vshrl.u32 %v1412, 16
      %v2171 = vrot.slane %v2169, 3
      %v2172 = vshll.u32 %v1412, 16
      %v2174 = vrot.slane %v2172, 4
      %v2175 = vor.u32 %v2171, %v2174
      %v2176 = vsel %vm1914, %v2112, %v2175
      %v2177 = vsel %vm1914, %v2122, %v2029
      %v2178 = vsel %vm1914, %v2131, %v2046
      %v2179 = vrot.slane %v1226, 3
      %v2180 = vrot.slane %v1229, 4
      %v2181 = vor.u32 %v2179, %v2180
      %v2182 = vsel %vm1914, %v2135, %v2181
      %v2184 = vshrl.u32 %v1500, 16
      %v2186 = vrot.slane %v2184, 3
      %v2187 = vshll.u32 %v1500, 16
      %v2189 = vrot.slane %v2187, 4
      %v2190 = vor.u32 %v2186, %v2189
      %v2191 = vsel %vm1914, %v2144, %v2190
      %v2193 = vshrl.u32 %v1683, 16
      %v2195 = vrot.slane %v2193, 3
      %v2196 = vshll.u32 %v1683, 16
      %v2198 = vrot.slane %v2196, 4
      %v2199 = vor.u32 %v2195, %v2198
      %v2200 = vsel %vm1914, %v2153, %v2199
      %v2201 = vrot.slane %v1502, 3
      %v2202 = vrot.slane %v1505, 4
      %v2203 = vor.u32 %v2201, %v2202
      %v2204 = vsel %vm1914, %v2157, %v2203
      %v2206 = vshrl.u32 %v1251, 16
      %v2208 = vrot.slane %v2206, 3
      %v2209 = vshll.u32 %v1251, 16
      %v2211 = vrot.slane %v2209, 4
      %v2212 = vor.u32 %v2208, %v2211
      %v2213 = vsel %vm1914, %v2166, %v2212
      %v2215 = vshrl.u32 %v1414, 16
      %v2217 = vrot.slane %v2215, 3
      %v2218 = vshll.u32 %v1414, 16
      %v2220 = vrot.slane %v2218, 4
      %v2221 = vor.u32 %v2217, %v2220
      %v2222 = vsel %vm1914, %v2175, %v2221
      %v2223 = vrot.slane %v1235, 3
      %v2224 = vrot.slane %v1238, 4
      %v2225 = vor.u32 %v2223, %v2224
      %v2226 = vsel %vm1914, %v2181, %v2225
      %v2228 = vshrl.u32 %v1509, 16
      %v2230 = vrot.slane %v2228, 3
      %v2231 = vshll.u32 %v1509, 16
      %v2233 = vrot.slane %v2231, 4
      %v2234 = vor.u32 %v2230, %v2233
      %v2235 = vsel %vm1914, %v2190, %v2234
      %v2237 = vshrl.u32 %v1685, 16
      %v2239 = vrot.slane %v2237, 3
      %v2240 = vshll.u32 %v1685, 16
      %v2242 = vrot.slane %v2240, 4
      %v2243 = vor.u32 %v2239, %v2242
      %v2244 = vsel %vm1914, %v2199, %v2243
      %v2245 = vrot.slane %v1511, 3
      %v2246 = vrot.slane %v1514, 4
      %v2247 = vor.u32 %v2245, %v2246
      %v2248 = vsel %vm1914, %v2203, %v2247
      %v2250 = vshrl.u32 %v1260, 16
      %v2252 = vrot.slane %v2250, 3
      %v2253 = vshll.u32 %v1260, 16
      %v2255 = vrot.slane %v2253, 4
      %v2256 = vor.u32 %v2252, %v2255
      %v2257 = vsel %vm1914, %v2212, %v2256
      %v2259 = vshrl.u32 %v1416, 16
      %v2261 = vrot.slane %v2259, 3
      %v2262 = vshll.u32 %v1416, 16
      %v2264 = vrot.slane %v2262, 4
      %v2265 = vor.u32 %v2261, %v2264
      %v2266 = vsel %vm1914, %v2221, %v2265
      %v2267 = vrot.slane %v1244, 3
      %v2268 = vrot.slane %v1247, 4
      %v2269 = vor.u32 %v2267, %v2268
      %v2270 = vsel %vm1914, %v2225, %v2269
      %v2272 = vshrl.u32 %v1518, 16
      %v2274 = vrot.slane %v2272, 3
      %v2275 = vshll.u32 %v1518, 16
      %v2277 = vrot.slane %v2275, 4
      %v2278 = vor.u32 %v2274, %v2277
      %v2279 = vsel %vm1914, %v2234, %v2278
      %v2281 = vshrl.u32 %v1687, 16
      %v2283 = vrot.slane %v2281, 3
      %v2284 = vshll.u32 %v1687, 16
      %v2286 = vrot.slane %v2284, 4
      %v2287 = vor.u32 %v2283, %v2286
      %v2288 = vsel %vm1914, %v2243, %v2287
      %v2289 = vrot.slane %v1520, 3
      %v2290 = vrot.slane %v1523, 4
      %v2291 = vor.u32 %v2289, %v2290
      %v2292 = vsel %vm1914, %v2247, %v2291
      %v2294 = vshrl.u32 %v1269, 16
      %v2296 = vrot.slane %v2294, 3
      %v2297 = vshll.u32 %v1269, 16
      %v2299 = vrot.slane %v2297, 4
      %v2300 = vor.u32 %v2296, %v2299
      %v2301 = vsel %vm1914, %v2256, %v2300
      %v2303 = vshrl.u32 %v1418, 16
      %v2305 = vrot.slane %v2303, 3
      %v2306 = vshll.u32 %v1418, 16
      %v2308 = vrot.slane %v2306, 4
      %v2309 = vor.u32 %v2305, %v2308
      %v2310 = vsel %vm1914, %v2265, %v2309
      %v2311 = vrot.slane %v1253, 3
      %v2312 = vrot.slane %v1256, 4
      %v2313 = vor.u32 %v2311, %v2312
      %v2314 = vsel %vm1914, %v2269, %v2313
      %v2316 = vshrl.u32 %v1527, 16
      %v2318 = vrot.slane %v2316, 3
      %v2319 = vshll.u32 %v1527, 16
      %v2321 = vrot.slane %v2319, 4
      %v2322 = vor.u32 %v2318, %v2321
      %v2323 = vsel %vm1914, %v2278, %v2322
      %v2325 = vshrl.u32 %v1689, 16
      %v2327 = vrot.slane %v2325, 3
      %v2328 = vshll.u32 %v1689, 16
      %v2330 = vrot.slane %v2328, 4
      %v2331 = vor.u32 %v2327, %v2330
      %v2332 = vsel %vm1914, %v2287, %v2331
      %v2333 = vrot.slane %v1529, 3
      %v2334 = vrot.slane %v1532, 4
      %v2335 = vor.u32 %v2333, %v2334
      %v2336 = vsel %vm1914, %v2291, %v2335
      %v2338 = vshrl.u32 %v1278, 16
      %v2340 = vrot.slane %v2338, 3
      %v2341 = vshll.u32 %v1278, 16
      %v2343 = vrot.slane %v2341, 4
      %v2344 = vor.u32 %v2340, %v2343
      %v2345 = vsel %vm1914, %v2300, %v2344
      %v2347 = vshrl.u32 %v1420, 16
      %v2349 = vrot.slane %v2347, 3
      %v2350 = vshll.u32 %v1420, 16
      %v2352 = vrot.slane %v2350, 4
      %v2353 = vor.u32 %v2349, %v2352
      %v2354 = vsel %vm1914, %v2309, %v2353
      %v2355 = vrot.slane %v1262, 3
      %v2356 = vrot.slane %v1265, 4
      %v2357 = vor.u32 %v2355, %v2356
      %v2358 = vsel %vm1914, %v2313, %v2357
      %v2360 = vshrl.u32 %v1536, 16
      %v2362 = vrot.slane %v2360, 3
      %v2363 = vshll.u32 %v1536, 16
      %v2365 = vrot.slane %v2363, 4
      %v2366 = vor.u32 %v2362, %v2365
      %v2367 = vsel %vm1914, %v2322, %v2366
      %v2369 = vshrl.u32 %v1691, 16
      %v2371 = vrot.slane %v2369, 3
      %v2372 = vshll.u32 %v1691, 16
      %v2374 = vrot.slane %v2372, 4
      %v2375 = vor.u32 %v2371, %v2374
      %v2376 = vsel %vm1914, %v2331, %v2375
      %v2377 = vrot.slane %v1538, 3
      %v2378 = vrot.slane %v1541, 4
      %v2379 = vor.u32 %v2377, %v2378
      %v2380 = vsel %vm1914, %v2335, %v2379
      %v2382 = vshrl.u32 %v1287, 16
      %v2384 = vrot.slane %v2382, 3
      %v2385 = vshll.u32 %v1287, 16
      %v2387 = vrot.slane %v2385, 4
      %v2388 = vor.u32 %v2384, %v2387
      %v2389 = vsel %vm1914, %v2344, %v2388
      %v2391 = vshrl.u32 %v1422, 16
      %v2393 = vrot.slane %v2391, 3
      %v2394 = vshll.u32 %v1422, 16
      %v2396 = vrot.slane %v2394, 4
      %v2397 = vor.u32 %v2393, %v2396
      %v2398 = vsel %vm1914, %v2353, %v2397
      %v2399 = vrot.slane %v1271, 3
      %v2400 = vrot.slane %v1274, 4
      %v2401 = vor.u32 %v2399, %v2400
      %v2402 = vsel %vm1914, %v2357, %v2401
      %v2404 = vshrl.u32 %v1545, 16
      %v2406 = vrot.slane %v2404, 3
      %v2407 = vshll.u32 %v1545, 16
      %v2409 = vrot.slane %v2407, 4
      %v2410 = vor.u32 %v2406, %v2409
      %v2411 = vsel %vm1914, %v2366, %v2410
      %v2413 = vshrl.u32 %v1693, 16
      %v2415 = vrot.slane %v2413, 3
      %v2416 = vshll.u32 %v1693, 16
      %v2418 = vrot.slane %v2416, 4
      %v2419 = vor.u32 %v2415, %v2418
      %v2420 = vsel %vm1914, %v2375, %v2419
      %v2421 = vrot.slane %v1547, 3
      %v2422 = vrot.slane %v1550, 4
      %v2423 = vor.u32 %v2421, %v2422
      %v2424 = vsel %vm1914, %v2379, %v2423
      %v2426 = vshrl.u32 %v1296, 16
      %v2428 = vrot.slane %v2426, 3
      %v2429 = vshll.u32 %v1296, 16
      %v2431 = vrot.slane %v2429, 4
      %v2432 = vor.u32 %v2428, %v2431
      %v2433 = vsel %vm1914, %v2388, %v2432
      %v2435 = vshrl.u32 %v1424, 16
      %v2437 = vrot.slane %v2435, 3
      %v2438 = vshll.u32 %v1424, 16
      %v2440 = vrot.slane %v2438, 4
      %v2441 = vor.u32 %v2437, %v2440
      %v2442 = vsel %vm1914, %v2397, %v2441
      %v2443 = vrot.slane %v1280, 3
      %v2444 = vrot.slane %v1283, 4
      %v2445 = vor.u32 %v2443, %v2444
      %v2446 = vsel %vm1914, %v2401, %v2445
      %v2448 = vshrl.u32 %v1554, 16
      %v2450 = vrot.slane %v2448, 3
      %v2451 = vshll.u32 %v1554, 16
      %v2453 = vrot.slane %v2451, 4
      %v2454 = vor.u32 %v2450, %v2453
      %v2455 = vsel %vm1914, %v2410, %v2454
      %v2457 = vshrl.u32 %v1695, 16
      %v2459 = vrot.slane %v2457, 3
      %v2460 = vshll.u32 %v1695, 16
      %v2462 = vrot.slane %v2460, 4
      %v2463 = vor.u32 %v2459, %v2462
      %v2464 = vsel %vm1914, %v2419, %v2463
      %v2465 = vrot.slane %v1556, 3
      %v2466 = vrot.slane %v1559, 4
      %v2467 = vor.u32 %v2465, %v2466
      %v2468 = vsel %vm1914, %v2423, %v2467
      %v2470 = vshrl.u32 %v1305, 16
      %v2472 = vrot.slane %v2470, 3
      %v2473 = vshll.u32 %v1305, 16
      %v2475 = vrot.slane %v2473, 4
      %v2476 = vor.u32 %v2472, %v2475
      %v2477 = vsel %vm1914, %v2432, %v2476
      %v2479 = vshrl.u32 %v1426, 16
      %v2481 = vrot.slane %v2479, 3
      %v2482 = vshll.u32 %v1426, 16
      %v2484 = vrot.slane %v2482, 4
      %v2485 = vor.u32 %v2481, %v2484
      %v2486 = vsel %vm1914, %v2441, %v2485
      %v2487 = vrot.slane %v1289, 3
      %v2488 = vrot.slane %v1292, 4
      %v2489 = vor.u32 %v2487, %v2488
      %v2490 = vsel %vm1914, %v2445, %v2489
      %v2492 = vshrl.u32 %v1563, 16
      %v2494 = vrot.slane %v2492, 3
      %v2495 = vshll.u32 %v1563, 16
      %v2497 = vrot.slane %v2495, 4
      %v2498 = vor.u32 %v2494, %v2497
      %v2499 = vsel %vm1914, %v2454, %v2498
      %v2501 = vshrl.u32 %v1697, 16
      %v2503 = vrot.slane %v2501, 3
      %v2504 = vshll.u32 %v1697, 16
      %v2506 = vrot.slane %v2504, 4
      %v2507 = vor.u32 %v2503, %v2506
      %v2508 = vsel %vm1914, %v2463, %v2507
      %v2509 = vrot.slane %v1565, 3
      %v2510 = vrot.slane %v1568, 4
      %v2511 = vor.u32 %v2509, %v2510
      %v2512 = vsel %vm1914, %v2467, %v2511
      %v2514 = vshrl.u32 %v1314, 16
      %v2516 = vrot.slane %v2514, 3
      %v2517 = vshll.u32 %v1314, 16
      %v2519 = vrot.slane %v2517, 4
      %v2520 = vor.u32 %v2516, %v2519
      %v2521 = vsel %vm1914, %v2476, %v2520
      %v2523 = vshrl.u32 %v1428, 16
      %v2525 = vrot.slane %v2523, 3
      %v2526 = vshll.u32 %v1428, 16
      %v2528 = vrot.slane %v2526, 4
      %v2529 = vor.u32 %v2525, %v2528
      %v2530 = vsel %vm1914, %v2485, %v2529
      %v2531 = vrot.slane %v1298, 3
      %v2532 = vrot.slane %v1301, 4
      %v2533 = vor.u32 %v2531, %v2532
      %v2534 = vsel %vm1914, %v2489, %v2533
      %v2536 = vshrl.u32 %v1572, 16
      %v2538 = vrot.slane %v2536, 3
      %v2539 = vshll.u32 %v1572, 16
      %v2541 = vrot.slane %v2539, 4
      %v2542 = vor.u32 %v2538, %v2541
      %v2543 = vsel %vm1914, %v2498, %v2542
      %v2545 = vshrl.u32 %v1699, 16
      %v2547 = vrot.slane %v2545, 3
      %v2548 = vshll.u32 %v1699, 16
      %v2550 = vrot.slane %v2548, 4
      %v2551 = vor.u32 %v2547, %v2550
      %v2552 = vsel %vm1914, %v2507, %v2551
      %v2553 = vrot.slane %v1574, 3
      %v2554 = vrot.slane %v1577, 4
      %v2555 = vor.u32 %v2553, %v2554
      %v2556 = vsel %vm1914, %v2511, %v2555
      %v2558 = vshrl.u32 %v1323, 16
      %v2560 = vrot.slane %v2558, 3
      %v2561 = vshll.u32 %v1323, 16
      %v2563 = vrot.slane %v2561, 4
      %v2564 = vor.u32 %v2560, %v2563
      %v2565 = vsel %vm1914, %v2520, %v2564
      %v2567 = vshrl.u32 %v1430, 16
      %v2569 = vrot.slane %v2567, 3
      %v2570 = vshll.u32 %v1430, 16
      %v2572 = vrot.slane %v2570, 4
      %v2573 = vor.u32 %v2569, %v2572
      %v2574 = vsel %vm1914, %v2529, %v2573
      %v2575 = vrot.slane %v1307, 3
      %v2576 = vrot.slane %v1310, 4
      %v2577 = vor.u32 %v2575, %v2576
      %v2578 = vsel %vm1914, %v2533, %v2577
      %v2580 = vshrl.u32 %v1581, 16
      %v2582 = vrot.slane %v2580, 3
      %v2583 = vshll.u32 %v1581, 16
      %v2585 = vrot.slane %v2583, 4
      %v2586 = vor.u32 %v2582, %v2585
      %v2587 = vsel %vm1914, %v2542, %v2586
      %v2589 = vshrl.u32 %v1701, 16
      %v2591 = vrot.slane %v2589, 3
      %v2592 = vshll.u32 %v1701, 16
      %v2594 = vrot.slane %v2592, 4
      %v2595 = vor.u32 %v2591, %v2594
      %v2596 = vsel %vm1914, %v2551, %v2595
      %v2597 = vrot.slane %v1583, 3
      %v2598 = vrot.slane %v1586, 4
      %v2599 = vor.u32 %v2597, %v2598
      %v2600 = vsel %vm1914, %v2555, %v2599
      %v2602 = vshrl.u32 %v1332, 16
      %v2604 = vrot.slane %v2602, 3
      %v2605 = vshll.u32 %v1332, 16
      %v2607 = vrot.slane %v2605, 4
      %v2608 = vor.u32 %v2604, %v2607
      %v2609 = vsel %vm1914, %v2564, %v2608
      %v2611 = vshrl.u32 %v1432, 16
      %v2613 = vrot.slane %v2611, 3
      %v2614 = vshll.u32 %v1432, 16
      %v2616 = vrot.slane %v2614, 4
      %v2617 = vor.u32 %v2613, %v2616
      %v2618 = vsel %vm1914, %v2573, %v2617
      %v2619 = vrot.slane %v1316, 3
      %v2620 = vrot.slane %v1319, 4
      %v2621 = vor.u32 %v2619, %v2620
      %v2622 = vsel %vm1914, %v2577, %v2621
      %v2624 = vshrl.u32 %v1590, 16
      %v2626 = vrot.slane %v2624, 3
      %v2627 = vshll.u32 %v1590, 16
      %v2629 = vrot.slane %v2627, 4
      %v2630 = vor.u32 %v2626, %v2629
      %v2631 = vsel %vm1914, %v2586, %v2630
      %v2633 = vshrl.u32 %v1703, 16
      %v2635 = vrot.slane %v2633, 3
      %v2636 = vshll.u32 %v1703, 16
      %v2638 = vrot.slane %v2636, 4
      %v2639 = vor.u32 %v2635, %v2638
      %v2640 = vsel %vm1914, %v2595, %v2639
      %v2641 = vrot.slane %v1592, 3
      %v2642 = vrot.slane %v1595, 4
      %v2643 = vor.u32 %v2641, %v2642
      %v2644 = vsel %vm1914, %v2599, %v2643
      %v2646 = vshrl.u32 %v1341, 16
      %v2648 = vrot.slane %v2646, 3
      %v2649 = vshll.u32 %v1341, 16
      %v2651 = vrot.slane %v2649, 4
      %v2652 = vor.u32 %v2648, %v2651
      %v2653 = vsel %vm1914, %v2608, %v2652
      %v2655 = vshrl.u32 %v1434, 16
      %v2657 = vrot.slane %v2655, 3
      %v2658 = vshll.u32 %v1434, 16
      %v2660 = vrot.slane %v2658, 4
      %v2661 = vor.u32 %v2657, %v2660
      %v2662 = vsel %vm1914, %v2617, %v2661
      %v2663 = vrot.slane %v1325, 3
      %v2664 = vrot.slane %v1328, 4
      %v2665 = vor.u32 %v2663, %v2664
      %v2666 = vsel %vm1914, %v2621, %v2665
      %v2668 = vshrl.u32 %v1599, 16
      %v2670 = vrot.slane %v2668, 3
      %v2671 = vshll.u32 %v1599, 16
      %v2673 = vrot.slane %v2671, 4
      %v2674 = vor.u32 %v2670, %v2673
      %v2675 = vsel %vm1914, %v2630, %v2674
      %v2677 = vshrl.u32 %v1705, 16
      %v2679 = vrot.slane %v2677, 3
      %v2680 = vshll.u32 %v1705, 16
      %v2682 = vrot.slane %v2680, 4
      %v2683 = vor.u32 %v2679, %v2682
      %v2684 = vsel %vm1914, %v2639, %v2683
      %v2685 = vrot.slane %v1601, 3
      %v2686 = vrot.slane %v1604, 4
      %v2687 = vor.u32 %v2685, %v2686
      %v2688 = vsel %vm1914, %v2643, %v2687
      %v2690 = vshrl.u32 %v1350, 16
      %v2692 = vrot.slane %v2690, 3
      %v2693 = vshll.u32 %v1350, 16
      %v2695 = vrot.slane %v2693, 4
      %v2696 = vor.u32 %v2692, %v2695
      %v2697 = vsel %vm1914, %v2652, %v2696
      %v2699 = vshrl.u32 %v1436, 16
      %v2701 = vrot.slane %v2699, 3
      %v2702 = vshll.u32 %v1436, 16
      %v2704 = vrot.slane %v2702, 4
      %v2705 = vor.u32 %v2701, %v2704
      %v2706 = vsel %vm1914, %v2661, %v2705
      %v2707 = vrot.slane %v1334, 3
      %v2708 = vrot.slane %v1337, 4
      %v2709 = vor.u32 %v2707, %v2708
      %v2710 = vsel %vm1914, %v2665, %v2709
      %v2712 = vshrl.u32 %v1608, 16
      %v2714 = vrot.slane %v2712, 3
      %v2715 = vshll.u32 %v1608, 16
      %v2717 = vrot.slane %v2715, 4
      %v2718 = vor.u32 %v2714, %v2717
      %v2719 = vsel %vm1914, %v2674, %v2718
      %v2721 = vshrl.u32 %v1707, 16
      %v2723 = vrot.slane %v2721, 3
      %v2724 = vshll.u32 %v1707, 16
      %v2726 = vrot.slane %v2724, 4
      %v2727 = vor.u32 %v2723, %v2726
      %v2728 = vsel %vm1914, %v2683, %v2727
      %v2729 = vrot.slane %v1610, 3
      %v2730 = vrot.slane %v1613, 4
      %v2731 = vor.u32 %v2729, %v2730
      %v2732 = vsel %vm1914, %v2687, %v2731
      %v2734 = vshrl.u32 %v1359, 16
      %v2736 = vrot.slane %v2734, 3
      %v2737 = vshll.u32 %v1359, 16
      %v2739 = vrot.slane %v2737, 4
      %v2740 = vor.u32 %v2736, %v2739
      %v2741 = vsel %vm1914, %v2696, %v2740
      %v2743 = vshrl.u32 %v1438, 16
      %v2745 = vrot.slane %v2743, 3
      %v2746 = vshll.u32 %v1438, 16
      %v2748 = vrot.slane %v2746, 4
      %v2749 = vor.u32 %v2745, %v2748
      %v2750 = vsel %vm1914, %v2705, %v2749
      %v2751 = vrot.slane %v1343, 3
      %v2752 = vrot.slane %v1346, 4
      %v2753 = vor.u32 %v2751, %v2752
      %v2754 = vsel %vm1914, %v2709, %v2753
      %v2756 = vshrl.u32 %v1617, 16
      %v2758 = vrot.slane %v2756, 3
      %v2759 = vshll.u32 %v1617, 16
      %v2761 = vrot.slane %v2759, 4
      %v2762 = vor.u32 %v2758, %v2761
      %v2763 = vsel %vm1914, %v2718, %v2762
      %v2765 = vshrl.u32 %v1709, 16
      %v2767 = vrot.slane %v2765, 3
      %v2768 = vshll.u32 %v1709, 16
      %v2770 = vrot.slane %v2768, 4
      %v2771 = vor.u32 %v2767, %v2770
      %v2772 = vsel %vm1914, %v2727, %v2771
      %v2773 = vrot.slane %v1619, 3
      %v2774 = vrot.slane %v1622, 4
      %v2775 = vor.u32 %v2773, %v2774
      %v2776 = vsel %vm1914, %v2731, %v2775
      %v2778 = vshrl.u32 %v1368, 16
      %v2780 = vrot.slane %v2778, 3
      %v2781 = vshll.u32 %v1368, 16
      %v2783 = vrot.slane %v2781, 4
      %v2784 = vor.u32 %v2780, %v2783
      %v2785 = vsel %vm1914, %v2740, %v2784
      %v2787 = vshrl.u32 %v1440, 16
      %v2789 = vrot.slane %v2787, 3
      %v2790 = vshll.u32 %v1440, 16
      %v2792 = vrot.slane %v2790, 4
      %v2793 = vor.u32 %v2789, %v2792
      %v2794 = vsel %vm1914, %v2749, %v2793
      %v2795 = vrot.slane %v1352, 3
      %v2796 = vrot.slane %v1355, 4
      %v2797 = vor.u32 %v2795, %v2796
      %v2798 = vsel %vm1914, %v2753, %v2797
      %v2800 = vshrl.u32 %v1626, 16
      %v2802 = vrot.slane %v2800, 3
      %v2803 = vshll.u32 %v1626, 16
      %v2805 = vrot.slane %v2803, 4
      %v2806 = vor.u32 %v2802, %v2805
      %v2807 = vsel %vm1914, %v2762, %v2806
      %v2809 = vshrl.u32 %v1711, 16
      %v2811 = vrot.slane %v2809, 3
      %v2812 = vshll.u32 %v1711, 16
      %v2814 = vrot.slane %v2812, 4
      %v2815 = vor.u32 %v2811, %v2814
      %v2816 = vsel %vm1914, %v2771, %v2815
      %v2817 = vrot.slane %v1628, 3
      %v2818 = vrot.slane %v1631, 4
      %v2819 = vor.u32 %v2817, %v2818
      %v2820 = vsel %vm1914, %v2775, %v2819
      %v2822 = vshrl.u32 %v1377, 16
      %v2824 = vrot.slane %v2822, 3
      %v2825 = vshll.u32 %v1377, 16
      %v2827 = vrot.slane %v2825, 4
      %v2828 = vor.u32 %v2824, %v2827
      %v2829 = vsel %vm1914, %v2784, %v2828
      %v2831 = vshrl.u32 %v1442, 16
      %v2833 = vrot.slane %v2831, 3
      %v2834 = vshll.u32 %v1442, 16
      %v2836 = vrot.slane %v2834, 4
      %v2837 = vor.u32 %v2833, %v2836
      %v2838 = vsel %vm1914, %v2793, %v2837
      %v2839 = vrot.slane %v1361, 3
      %v2840 = vrot.slane %v1364, 4
      %v2841 = vor.u32 %v2839, %v2840
      %v2842 = vsel %vm1914, %v2797, %v2841
      %v2844 = vshrl.u32 %v1635, 16
      %v2846 = vrot.slane %v2844, 3
      %v2847 = vshll.u32 %v1635, 16
      %v2849 = vrot.slane %v2847, 4
      %v2850 = vor.u32 %v2846, %v2849
      %v2851 = vsel %vm1914, %v2806, %v2850
      %v2853 = vshrl.u32 %v1713, 16
      %v2855 = vrot.slane %v2853, 3
      %v2856 = vshll.u32 %v1713, 16
      %v2858 = vrot.slane %v2856, 4
      %v2859 = vor.u32 %v2855, %v2858
      %v2860 = vsel %vm1914, %v2815, %v2859
      %v2861 = vrot.slane %v1637, 3
      %v2862 = vrot.slane %v1640, 4
      %v2863 = vor.u32 %v2861, %v2862
      %v2864 = vsel %vm1914, %v2819, %v2863
      %v2866 = vshrl.u32 %v1386, 16
      %v2868 = vrot.slane %v2866, 3
      %v2869 = vshll.u32 %v1386, 16
      %v2871 = vrot.slane %v2869, 4
      %v2872 = vor.u32 %v2868, %v2871
      %v2873 = vsel %vm1914, %v2828, %v2872
      %v2875 = vshrl.u32 %v1444, 16
      %v2877 = vrot.slane %v2875, 3
      %v2878 = vshll.u32 %v1444, 16
      %v2880 = vrot.slane %v2878, 4
      %v2881 = vor.u32 %v2877, %v2880
      %v2882 = vsel %vm1914, %v2837, %v2881
      %v2883 = vrot.slane %v1370, 3
      %v2884 = vrot.slane %v1373, 4
      %v2885 = vor.u32 %v2883, %v2884
      %v2886 = vsel %vm1914, %v2841, %v2885
      %v2888 = vshrl.u32 %v1644, 16
      %v2890 = vrot.slane %v2888, 3
      %v2891 = vshll.u32 %v1644, 16
      %v2893 = vrot.slane %v2891, 4
      %v2894 = vor.u32 %v2890, %v2893
      %v2895 = vsel %vm1914, %v2850, %v2894
      %v2897 = vshrl.u32 %v1715, 16
      %v2899 = vrot.slane %v2897, 3
      %v2900 = vshll.u32 %v1715, 16
      %v2902 = vrot.slane %v2900, 4
      %v2903 = vor.u32 %v2899, %v2902
      %v2904 = vsel %vm1914, %v2859, %v2903
      %v2905 = vrot.slane %v1646, 3
      %v2906 = vrot.slane %v1649, 4
      %v2907 = vor.u32 %v2905, %v2906
      %v2908 = vsel %vm1914, %v2863, %v2907
      %v2910 = vshrl.u32 %v1395, 16
      %v2912 = vrot.slane %v2910, 3
      %v2913 = vshll.u32 %v1395, 16
      %v2915 = vrot.slane %v2913, 4
      %v2916 = vor.u32 %v2912, %v2915
      %v2917 = vsel %vm1914, %v2872, %v2916
      %v2919 = vshrl.u32 %v1446, 16
      %v2921 = vrot.slane %v2919, 3
      %v2922 = vshll.u32 %v1446, 16
      %v2924 = vrot.slane %v2922, 4
      %v2925 = vor.u32 %v2921, %v2924
      %v2926 = vsel %vm1914, %v2881, %v2925
      %v2927 = vrot.slane %v1379, 3
      %v2928 = vrot.slane %v1382, 4
      %v2929 = vor.u32 %v2927, %v2928
      %v2930 = vsel %vm1914, %v2885, %v2929
      %v2932 = vshrl.u32 %v1653, 16
      %v2934 = vrot.slane %v2932, 3
      %v2935 = vshll.u32 %v1653, 16
      %v2937 = vrot.slane %v2935, 4
      %v2938 = vor.u32 %v2934, %v2937
      %v2939 = vsel %vm1914, %v2894, %v2938
      %v2941 = vshrl.u32 %v1717, 16
      %v2943 = vrot.slane %v2941, 3
      %v2944 = vshll.u32 %v1717, 16
      %v2946 = vrot.slane %v2944, 4
      %v2947 = vor.u32 %v2943, %v2946
      %v2948 = vsel %vm1914, %v2903, %v2947
      %v2949 = vrot.slane %v1655, 3
      %v2950 = vrot.slane %v1658, 4
      %v2951 = vor.u32 %v2949, %v2950
      %v2952 = vsel %vm1914, %v2907, %v2951
      %v2954 = vshrl.u32 %v1740, 16
      %v2956 = vrot.slane %v2954, 3
      %v2957 = vshll.u32 %v1740, 16
      %v2959 = vrot.slane %v2957, 4
      %v2960 = vor.u32 %v2956, %v2959
      %v2961 = vsel %vm1914, %v2916, %v2960
      %v2963 = vshrl.u32 %v1763, 16
      %v2965 = vrot.slane %v2963, 3
      %v2966 = vshll.u32 %v1763, 16
      %v2968 = vrot.slane %v2966, 4
      %v2969 = vor.u32 %v2965, %v2968
      %v2970 = vsel %vm1914, %v2925, %v2969
      %v2971 = vrot.slane %v1388, 3
      %v2972 = vrot.slane %v1391, 4
      %v2973 = vor.u32 %v2971, %v2972
      %v2974 = vsel %vm1914, %v2929, %v2973
      %v2976 = vshrl.u32 %v1662, 16
      %v2978 = vrot.slane %v2976, 3
      %v2979 = vshll.u32 %v1662, 16
      %v2981 = vrot.slane %v2979, 4
      %v2982 = vor.u32 %v2978, %v2981
      %v2983 = vsel %vm1914, %v2938, %v2982
      %v2985 = vshrl.u32 %v1719, 16
      %v2987 = vrot.slane %v2985, 3
      %v2988 = vshll.u32 %v1719, 16
      %v2990 = vrot.slane %v2988, 4
      %v2991 = vor.u32 %v2987, %v2990
      %v2992 = vsel %vm1914, %v2947, %v2991
      %v2993 = vrot.slane %v1664, 3
      %v2994 = vrot.slane %v1667, 4
      %v2995 = vor.u32 %v2993, %v2994
      %v2996 = vsel %vm1914, %v2951, %v2995
      %v2998 = vshrl.u32 %v1749, 16
      %v3000 = vrot.slane %v2998, 3
      %v3001 = vshll.u32 %v1749, 16
      %v3003 = vrot.slane %v3001, 4
      %v3004 = vor.u32 %v3000, %v3003
      %v3005 = vsel %vm1914, %v2960, %v3004
      %v3007 = vshrl.u32 %v1765, 16
      %v3009 = vrot.slane %v3007, 3
      %v3010 = vshll.u32 %v1765, 16
      %v3012 = vrot.slane %v3010, 4
      %v3013 = vor.u32 %v3009, %v3012
      %v3014 = vsel %vm1914, %v2969, %v3013
      %v3015 = vrot.slane %v1733, 3
      %v3016 = vrot.slane %v1736, 4
      %v3017 = vor.u32 %v3015, %v3016
      %v3018 = vsel %vm1914, %v2973, %v3017
      %v3020 = vshrl.u32 %v1671, 16
      %v3022 = vrot.slane %v3020, 3
      %v3023 = vshll.u32 %v1671, 16
      %v3025 = vrot.slane %v3023, 4
      %v3026 = vor.u32 %v3022, %v3025
      %v3027 = vsel %vm1914, %v2982, %v3026
      %v3029 = vshrl.u32 %v1721, 16
      %v3031 = vrot.slane %v3029, 3
      %v3032 = vshll.u32 %v1721, 16
      %v3034 = vrot.slane %v3032, 4
      %v3035 = vor.u32 %v3031, %v3034
      %v3036 = vsel %vm1914, %v2991, %v3035
      %v3038 = vshrl.u32 %v1728, 16
      %v3040 = vrot.slane %v3038, 3
      %v3041 = vshll.u32 %v1728, 16
      %v3043 = vrot.slane %v3041, 4
      %v3044 = vor.u32 %v3040, %v3043
      %v3045 = vsel %vm1914, %v2995, %v3044
      %v3047 = vshrl.u32 %v1758, 16
      %v3049 = vrot.slane %v3047, 3
      %v3050 = vshll.u32 %v1758, 16
      %v3052 = vrot.slane %v3050, 4
      %v3053 = vor.u32 %v3049, %v3052
      %v3054 = vsel %vm1914, %v3004, %v3053
      %v3056 = vshrl.u32 %v1767, 16
      %v3058 = vrot.slane %v3056, 3
      %v3059 = vshll.u32 %v1767, 16
      %v3061 = vrot.slane %v3059, 4
      %v3062 = vor.u32 %v3058, %v3061
      %v3063 = vsel %vm1914, %v3013, %v3062
      %v3065 = vshrl.u32 %v1155, 16
      %v3067 = vrot.slane %v3065, 3
      %v3068 = vshll.u32 %v1155, 16
      %v3070 = vrot.slane %v3068, 4
      %v3071 = vor.u32 %v3067, %v3070
      %v3072 = vsel %vm1914, %v2907, %v3071
      %v3074 = vshrl.u32 %v1394, 16
      %v3076 = vrot.slane %v3074, 3
      %v3077 = vshll.u32 %v1394, 16
      %v3079 = vrot.slane %v3077, 4
      %v3080 = vor.u32 %v3076, %v3079
      %v3081 = vsel %vm1914, %v2916, %v3080
      %v3083 = vshrl.u32 %v1448, 16
      %v3085 = vrot.slane %v3083, 3
      %v3086 = vshll.u32 %v1448, 16
      %v3088 = vrot.slane %v3086, 4
      %v3089 = vor.u32 %v3085, %v3088
      %v3090 = vsel %vm1914, %v2925, %v3089
      %v3092 = vshrl.u32 %v1454, 16
      %v3094 = vrot.slane %v3092, 3
      %v3095 = vshll.u32 %v1454, 16
      %v3097 = vrot.slane %v3095, 4
      %v3098 = vor.u32 %v3094, %v3097
      %v3099 = vsel %vm1914, %v3017, %v3098
      %v3101 = vshrl.u32 %v1670, 16
      %v3103 = vrot.slane %v3101, 3
      %v3104 = vshll.u32 %v1670, 16
      %v3106 = vrot.slane %v3104, 4
      %v3107 = vor.u32 %v3103, %v3106
      %v3108 = vsel %vm1914, %v3026, %v3107
      %v3110 = vshrl.u32 %v1723, 16
      %v3112 = vrot.slane %v3110, 3
      %v3113 = vshll.u32 %v1723, 16
      %v3115 = vrot.slane %v3113, 4
      %v3116 = vor.u32 %v3112, %v3115
      %v3117 = vsel %vm1914, %v3035, %v3116
      %v3119 = vshrl.u32 %v1729, 16
      %v3121 = vrot.slane %v3119, 3
      %v3122 = vshll.u32 %v1729, 16
      %v3124 = vrot.slane %v3122, 4
      %v3125 = vor.u32 %v3121, %v3124
      %v3126 = vsel %vm1914, %v3044, %v3125
      %v3128 = vshrl.u32 %v1757, 16
      %v3130 = vrot.slane %v3128, 3
      %v3131 = vshll.u32 %v1757, 16
      %v3133 = vrot.slane %v3131, 4
      %v3134 = vor.u32 %v3130, %v3133
      %v3135 = vsel %vm1914, %v3053, %v3134
      %v3137 = vshrl.u32 %v1769, 16
      %v3139 = vrot.slane %v3137, 3
      %v3140 = vshll.u32 %v1769, 16
      %v3142 = vrot.slane %v3140, 4
      %v3143 = vor.u32 %v3139, %v3142
      %v3144 = vsel %vm1914, %v3062, %v3143
      %v3447 = vunpack.c.l.b16 %v1770
      %v3448 = vunpack.c.l.b16 %v1771
      %v3449 = vunpack.c.l.b16 %v1772
      %v3450 = vunpack.c.l.b16 %v1773
      %v3451 = vunpack.c.l.b16 %v1774
      %v3452 = vunpack.c.l.b16 %v1775
      %v3453 = vunpack.c.l.b16 %v1776
      %v3454 = vunpack.c.l.b16 %v1777
      %v3455 = vunpack.c.l.b16 %v1778
      %v3456 = vunpack.c.l.b16 %v1779
      %v3457 = vunpack.c.l.b16 %v1780
      %v3458 = vunpack.c.l.b16 %v1781
      %v3459 = vunpack.c.l.b16 %v1782
      %v3460 = vunpack.c.l.b16 %v1783
      %v3461 = vunpack.c.l.b16 %v1784
      %v3462 = vunpack.c.l.b16 %v1785
      %v3463 = vunpack.c.l.b16 %v1786
      %v3464 = vunpack.c.l.b16 %v1787
      %v3465 = vunpack.c.l.b16 %v1788
      %v3466 = vunpack.c.l.b16 %v1789
      %v3467 = vunpack.c.l.b16 %v1790
      %v3468 = vunpack.c.l.b16 %v1791
      %v3469 = vunpack.c.l.b16 %v1792
      %v3470 = vunpack.c.l.b16 %v1793
      %v3471 = vunpack.c.l.b16 %v1794
      %v3472 = vunpack.c.l.b16 %v1795
      %v3473 = vunpack.c.l.b16 %v1796
      %v3474 = vunpack.c.l.b16 %v1797
      %v3475 = vunpack.c.l.b16 %v1798
      %v3476 = vunpack.c.l.b16 %v1799
      %v3477 = vunpack.c.l.b16 %v1800
      %v3478 = vunpack.c.l.b16 %v1801
      %v3479 = vunpack.c.l.b16 %v1802
      %v3480 = vunpack.c.l.b16 %v1803
      %v3481 = vunpack.c.l.b16 %v1804
      %v3482 = vunpack.c.l.b16 %v1805
      %v3483 = vunpack.c.l.b16 %v1806
      %v3484 = vunpack.c.l.b16 %v1807
      %v3485 = vunpack.c.l.b16 %v1808
      %v3486 = vunpack.c.l.b16 %v1809
      %v3487 = vunpack.c.l.b16 %v1810
      %v3488 = vunpack.c.l.b16 %v1811
      %v3489 = vunpack.c.l.b16 %v1812
      %v3490 = vunpack.c.l.b16 %v1813
      %v3491 = vunpack.c.l.b16 %v1814
      %v3492 = vunpack.c.l.b16 %v1815
      %v3493 = vunpack.c.l.b16 %v1816
      %v3494 = vunpack.c.l.b16 %v1817
      %v3495 = vunpack.c.l.b16 %v1818
      %v3496 = vunpack.c.l.b16 %v1819
      %v3497 = vunpack.c.l.b16 %v1820
      %v3498 = vunpack.c.l.b16 %v1821
      %v3499 = vunpack.c.l.b16 %v1822
      %v3500 = vunpack.c.l.b16 %v1823
      %v3501 = vunpack.c.l.b16 %v1824
      %v3502 = vunpack.c.l.b16 %v1825
      %v3503 = vunpack.c.l.b16 %v1826
      %v3504 = vunpack.c.l.b16 %v1827
      %v3505 = vunpack.c.l.b16 %v1828
      %v3506 = vunpack.c.l.b16 %v1829
      %v3507 = vunpack.c.l.b16 %v1830
      %v3508 = vunpack.c.l.b16 %v1831
      %v3509 = vunpack.c.l.b16 %v1832
      %v3510 = vunpack.c.l.b16 %v1833
      %v3511 = vunpack.c.l.b16 %v1834
      %v3512 = vunpack.c.l.b16 %v1835
      %v3513 = vunpack.c.l.b16 %v1836
      %v3514 = vunpack.c.l.b16 %v1837
      %v3515 = vunpack.c.l.b16 %v1838
      %v3516 = vunpack.c.l.b16 %v1839
      %v3517 = vunpack.c.l.b16 %v1840
      %v3518 = vunpack.c.l.b16 %v1841
      %v3519 = vunpack.c.l.b16 %v1842
      %v3520 = vunpack.c.l.b16 %v1843
      %v3521 = vunpack.c.l.b16 %v1844
      %v3522 = vunpack.c.l.b16 %v1845
      %v3523 = vunpack.c.l.b16 %v1846
      %v3524 = vunpack.c.l.b16 %v1847
      %v3525 = vunpack.c.l.b16 %v1848
      %v3526 = vunpack.c.l.b16 %v1849
      %v3527 = vunpack.c.l.b16 %v1850
      %v3528 = vunpack.c.l.b16 %v1851
      %v3529 = vunpack.c.l.b16 %v1852
      %v3530 = vunpack.c.l.b16 %v1853
      %v3531 = vunpack.c.l.b16 %v1854
      %v3532 = vunpack.c.l.b16 %v1855
      %v3533 = vunpack.c.l.b16 %v1856
      %v3534 = vunpack.c.l.b16 %v1857
      %v3535 = vunpack.c.l.b16 %v1858
      %v3536 = vunpack.c.l.b16 %v1859
      %v3537 = vunpack.c.l.b16 %v1860
      %v3538 = vunpack.c.l.b16 %v1861
      %v3539 = vunpack.c.l.b16 %v1862
      %v3540 = vunpack.c.l.b16 %v1863
      %v3541 = vunpack.c.l.b16 %v1864
      %v3542 = vunpack.c.l.b16 %v1865
      %v3543 = vunpack.c.l.b16 %v1866
      %v3544 = vunpack.c.l.b16 %v1867
      %v3545 = vunpack.c.l.b16 %v1868
      %v3546 = vunpack.c.l.b16 %v1869
      %v3547 = vunpack.c.l.b16 %v1870
      %v3548 = vunpack.c.l.b16 %v1871
      %v3549 = vunpack.c.l.b16 %v1872
      %v3550 = vunpack.c.l.b16 %v1873
      %v3551 = vunpack.c.l.b16 %v1874
      %v3552 = vunpack.c.l.b16 %v1875
      %v3553 = vunpack.c.l.b16 %v1876
      %v3554 = vunpack.c.l.b16 %v1877
      %v3555 = vunpack.c.l.b16 %v1878
      %v3556 = vunpack.c.l.b16 %v1879
      %v3557 = vunpack.c.l.b16 %v1880
      %v3558 = vunpack.c.l.b16 %v1881
      %v3559 = vunpack.c.l.b16 %v1882
      %v3560 = vunpack.c.l.b16 %v1883
      %v3561 = vunpack.c.l.b16 %v1884
      %v3562 = vunpack.c.l.b16 %v1885
      %v3563 = vunpack.c.l.b16 %v1886
      %v3564 = vunpack.c.l.b16 %v1887
      %v3565 = vunpack.c.l.b16 %v1888
      %v3566 = vunpack.c.l.b16 %v1889
      %v3567 = vunpack.c.l.b16 %v1890
      %v3568 = vunpack.c.l.b16 %v1891
      %v3569 = vunpack.c.l.b16 %v1892
      %v3570 = vunpack.c.l.b16 %v1893
      %v3571 = vunpack.c.l.b16 %v1894
      %v3572 = vunpack.c.l.b16 %v1895
      %v3573 = vunpack.c.l.b16 %v1896
      %v3574 = vunpack.c.l.b16 %v1897
      %v3575 = vunpack.c.l.b16 %v1898
      %v3576 = vunpack.c.l.b16 %v1899
      %v3577 = vunpack.c.l.b16 %v1900
      %v3578 = vunpack.c.l.b16 %v1901
      %v3579 = vunpack.c.l.b16 %v1902
      %v3580 = vunpack.c.l.b16 %v1903
      %v3581 = vunpack.c.l.b16 %v1904
      %v3582 = vunpack.c.l.b16 %v1905
      %v3583 = vunpack.c.l.b16 %v1906
      %v3584 = vunpack.c.l.b16 %v1907
      %v3585 = vunpack.c.l.b16 %v1908
      %v3586 = vunpack.c.l.b16 %v1909
      %v3587 = vunpack.c.l.b16 %v1910
      %v3588 = vunpack.c.l.b16 %v1911
      %v3589 = vunpack.c.l.b16 %v1912
      %v3590 = vunpack.c.l.b16 %v1913
      %v3591 = vpack.c.b16 %v3448, %v3447
      %v3592 = vpack.c.b16 %v3450, %v3449
      %v3593 = vpack.c.b16 %v3452, %v3451
      %v3594 = vpack.c.b16 %v3454, %v3453
      %v3595 = vpack.c.b16 %v3456, %v3455
      %v3596 = vpack.c.b16 %v3458, %v3457
      %v3597 = vpack.c.b16 %v3460, %v3459
      %v3598 = vpack.c.b16 %v3462, %v3461
      %v3599 = vpack.c.b16 %v3464, %v3463
      %v3600 = vpack.c.b16 %v3466, %v3465
      %v3601 = vpack.c.b16 %v3468, %v3467
      %v3602 = vpack.c.b16 %v3470, %v3469
      %v3603 = vpack.c.b16 %v3472, %v3471
      %v3604 = vpack.c.b16 %v3474, %v3473
      %v3605 = vpack.c.b16 %v3476, %v3475
      %v3606 = vpack.c.b16 %v3478, %v3477
      %v3607 = vpack.c.b16 %v3480, %v3479
      %v3608 = vpack.c.b16 %v3482, %v3481
      %v3609 = vpack.c.b16 %v3484, %v3483
      %v3610 = vpack.c.b16 %v3486, %v3485
      %v3611 = vpack.c.b16 %v3488, %v3487
      %v3612 = vpack.c.b16 %v3490, %v3489
      %v3613 = vpack.c.b16 %v3492, %v3491
      %v3614 = vpack.c.b16 %v3494, %v3493
      %v3615 = vpack.c.b16 %v3496, %v3495
      %v3616 = vpack.c.b16 %v3498, %v3497
      %v3617 = vpack.c.b16 %v3500, %v3499
      %v3618 = vpack.c.b16 %v3502, %v3501
      %v3619 = vpack.c.b16 %v3504, %v3503
      %v3620 = vpack.c.b16 %v3506, %v3505
      %v3621 = vpack.c.b16 %v3508, %v3507
      %v3622 = vpack.c.b16 %v3510, %v3509
      %v3623 = vpack.c.b16 %v3512, %v3511
      %v3624 = vpack.c.b16 %v3514, %v3513
      %v3625 = vpack.c.b16 %v3516, %v3515
      %v3626 = vpack.c.b16 %v3518, %v3517
      %v3627 = vpack.c.b16 %v3520, %v3519
      %v3628 = vpack.c.b16 %v3522, %v3521
      %v3629 = vpack.c.b16 %v3524, %v3523
      %v3630 = vpack.c.b16 %v3526, %v3525
      %v3631 = vpack.c.b16 %v3528, %v3527
      %v3632 = vpack.c.b16 %v3530, %v3529
      %v3633 = vpack.c.b16 %v3532, %v3531
      %v3634 = vpack.c.b16 %v3534, %v3533
      %v3635 = vpack.c.b16 %v3536, %v3535
      %v3636 = vpack.c.b16 %v3538, %v3537
      %v3637 = vpack.c.b16 %v3540, %v3539
      %v3638 = vpack.c.b16 %v3542, %v3541
      %v3639 = vpack.c.b16 %v3544, %v3543
      %v3640 = vpack.c.b16 %v3546, %v3545
      %v3641 = vpack.c.b16 %v3548, %v3547
      %v3642 = vpack.c.b16 %v3550, %v3549
      %v3643 = vpack.c.b16 %v3552, %v3551
      %v3644 = vpack.c.b16 %v3554, %v3553
      %v3645 = vpack.c.b16 %v3556, %v3555
      %v3646 = vpack.c.b16 %v3558, %v3557
      %v3647 = vpack.c.b16 %v3560, %v3559
      %v3648 = vpack.c.b16 %v3562, %v3561
      %v3649 = vpack.c.b16 %v3564, %v3563
      %v3650 = vpack.c.b16 %v3566, %v3565
      %v3651 = vpack.c.b16 %v3568, %v3567
      %v3652 = vpack.c.b16 %v3570, %v3569
      %v3653 = vpack.c.b16 %v3572, %v3571
      %v3654 = vpack.c.b16 %v3574, %v3573
      %v3655 = vpack.c.b16 %v3576, %v3575
      %v3656 = vpack.c.b16 %v3578, %v3577
      %v3657 = vpack.c.b16 %v3580, %v3579
      %v3658 = vpack.c.b16 %v3582, %v3581
      %v3659 = vpack.c.b16 %v3584, %v3583
      %v3660 = vpack.c.b16 %v3586, %v3585
      %v3661 = vpack.c.b16 %v3588, %v3587
      %v3662 = vpack.c.b16 %v3590, %v3589
      %3735 = vmatpush.bf16.msra.mxu0 %v3598
      %3736 = vmatpush.bf16.msra.mxu0 %v3597
      %3737 = vmatpush.bf16.msra.mxu0 %v3596
      %3738 = vmatpush.bf16.msra.mxu0 %v3595
      %3739 = vmatpush.bf16.msra.mxu0 %v3594
      %3740 = vmatpush.bf16.msra.mxu0 %v3593
      %3741 = vmatpush.bf16.msra.mxu0 %v3592
      %3742 = vmatpush.bf16.msra.mxu0 %v3591
      %3743 = vmatmul.bf16.gmra.mxu0 %v1931
      %v3744 = vpop.f32.mrf.mxu0
      %v3745 = vadd.f32 0.0, %v3744
      %v3746 = vpop.f32.mrf.mxu0
      %v3747 = vadd.f32 0.0, %v3746
      %3748 = vmatmul.bf16.gmra.mxu0 %v2051
      %v3749 = vpop.f32.mrf.mxu0
      %v3750 = vadd.f32 0.0, %v3749
      %v3751 = vpop.f32.mrf.mxu0
      %v3752 = vadd.f32 0.0, %v3751
      %3753 = vmatmul.bf16.gmra.mxu0 %v2114
      %v3754 = vpop.f32.mrf.mxu0
      %v3755 = vadd.f32 0.0, %v3754
      %v3756 = vpop.f32.mrf.mxu0
      %v3757 = vadd.f32 0.0, %v3756
      %3758 = vmatmul.bf16.gmra.mxu0 %v2013
      %v3759 = vpop.f32.mrf.mxu0
      %v3760 = vadd.f32 0.0, %v3759
      %v3761 = vpop.f32.mrf.mxu0
      %v3762 = vadd.f32 0.0, %v3761
      %3763 = vmatmul.bf16.gmra.mxu0 %v2095
      %v3764 = vpop.f32.mrf.mxu0
      %v3765 = vadd.f32 0.0, %v3764
      %v3766 = vpop.f32.mrf.mxu0
      %v3767 = vadd.f32 0.0, %v3766
      %3768 = vmatmul.bf16.gmra.mxu0 %v2158
      %v3769 = vpop.f32.mrf.mxu0
      %v3770 = vadd.f32 0.0, %v3769
      %v3771 = vpop.f32.mrf.mxu0
      %v3772 = vadd.f32 0.0, %v3771
      %3773 = vmatmul.bf16.gmra.mxu0 %v2204
      %v3774 = vpop.f32.mrf.mxu0
      %v3775 = vadd.f32 0.0, %v3774
      %v3776 = vpop.f32.mrf.mxu0
      %v3777 = vadd.f32 0.0, %v3776
      %3778 = vmatmul.bf16.gmra.mxu0 %v2248
      %v3779 = vpop.f32.mrf.mxu0
      %v3780 = vadd.f32 0.0, %v3779
      %v3781 = vpop.f32.mrf.mxu0
      %v3782 = vadd.f32 0.0, %v3781
      %3783 = vmatmul.bf16.gmra.mxu0 %v2292
      %v3784 = vpop.f32.mrf.mxu0
      %v3785 = vadd.f32 0.0, %v3784
      %v3786 = vpop.f32.mrf.mxu0
      %v3787 = vadd.f32 0.0, %v3786
      %3788 = vmatmul.bf16.gmra.mxu0 %v2336
      %v3789 = vpop.f32.mrf.mxu0
      %v3790 = vadd.f32 0.0, %v3789
      %v3791 = vpop.f32.mrf.mxu0
      %v3792 = vadd.f32 0.0, %v3791
      %3793 = vmatmul.bf16.gmra.mxu0 %v2380
      %v3794 = vpop.f32.mrf.mxu0
      %v3795 = vadd.f32 0.0, %v3794
      %v3796 = vpop.f32.mrf.mxu0
      %v3797 = vadd.f32 0.0, %v3796
      %3798 = vmatmul.bf16.gmra.mxu0 %v2424
      %v3799 = vpop.f32.mrf.mxu0
      %v3800 = vadd.f32 0.0, %v3799
      %v3801 = vpop.f32.mrf.mxu0
      %v3802 = vadd.f32 0.0, %v3801
      %3803 = vmatmul.bf16.gmra.mxu0 %v2468
      %v3804 = vpop.f32.mrf.mxu0
      %v3805 = vadd.f32 0.0, %v3804
      %v3806 = vpop.f32.mrf.mxu0
      %v3807 = vadd.f32 0.0, %v3806
      %3808 = vmatmul.bf16.gmra.mxu0 %v2512
      %v3809 = vpop.f32.mrf.mxu0
      %v3810 = vadd.f32 0.0, %v3809
      %v3811 = vpop.f32.mrf.mxu0
      %v3812 = vadd.f32 0.0, %v3811
      %3813 = vmatmul.bf16.gmra.mxu0 %v2556
      %v3814 = vpop.f32.mrf.mxu0
      %v3815 = vadd.f32 0.0, %v3814
      %v3816 = vpop.f32.mrf.mxu0
      %v3817 = vadd.f32 0.0, %v3816
      %3818 = vmatmul.bf16.gmra.mxu0 %v2600
      %v3819 = vpop.f32.mrf.mxu0
      %v3820 = vadd.f32 0.0, %v3819
      %v3821 = vpop.f32.mrf.mxu0
      %v3822 = vadd.f32 0.0, %v3821
      %3823 = vmatmul.bf16.gmra.mxu0 %v2644
      %v3824 = vpop.f32.mrf.mxu0
      %v3825 = vadd.f32 0.0, %v3824
      %v3826 = vpop.f32.mrf.mxu0
      %v3827 = vadd.f32 0.0, %v3826
      %3828 = vmatmul.bf16.gmra.mxu0 %v2688
      %v3829 = vpop.f32.mrf.mxu0
      %v3830 = vadd.f32 0.0, %v3829
      %v3831 = vpop.f32.mrf.mxu0
      %v3832 = vadd.f32 0.0, %v3831
      %3833 = vmatmul.bf16.gmra.mxu0 %v2732
      %v3834 = vpop.f32.mrf.mxu0
      %v3835 = vadd.f32 0.0, %v3834
      %v3836 = vpop.f32.mrf.mxu0
      %v3837 = vadd.f32 0.0, %v3836
      %3838 = vmatmul.bf16.gmra.mxu0 %v2776
      %v3839 = vpop.f32.mrf.mxu0
      %v3840 = vadd.f32 0.0, %v3839
      %v3841 = vpop.f32.mrf.mxu0
      %v3842 = vadd.f32 0.0, %v3841
      %3843 = vmatmul.bf16.gmra.mxu0 %v2820
      %v3844 = vpop.f32.mrf.mxu0
      %v3845 = vadd.f32 0.0, %v3844
      %v3846 = vpop.f32.mrf.mxu0
      %v3847 = vadd.f32 0.0, %v3846
      %3848 = vmatmul.bf16.gmra.mxu0 %v2864
      %v3849 = vpop.f32.mrf.mxu0
      %v3850 = vadd.f32 0.0, %v3849
      %v3851 = vpop.f32.mrf.mxu0
      %v3852 = vadd.f32 0.0, %v3851
      %3853 = vmatmul.bf16.gmra.mxu0 %v2908
      %v3854 = vpop.f32.mrf.mxu0
      %v3855 = vadd.f32 0.0, %v3854
      %v3856 = vpop.f32.mrf.mxu0
      %v3857 = vadd.f32 0.0, %v3856
      %3858 = vmatmul.bf16.gmra.mxu0 %v3072
      %v3859 = vpop.f32.mrf.mxu0
      %v3860 = vadd.f32 0.0, %v3859
      %v3861 = vpop.f32.mrf.mxu0
      %v3862 = vadd.f32 0.0, %v3861
      %3863 = vdwg.mxu0
      %3864 = vmatpush.bf16.msra.mxu0 %v3606
      %3865 = vmatpush.bf16.msra.mxu0 %v3605
      %3866 = vmatpush.bf16.msra.mxu0 %v3604
      %3867 = vmatpush.bf16.msra.mxu0 %v3603
      %3868 = vmatpush.bf16.msra.mxu0 %v3602
      %3869 = vmatpush.bf16.msra.mxu0 %v3601
      %3870 = vmatpush.bf16.msra.mxu0 %v3600
      %3871 = vmatpush.bf16.msra.mxu0 %v3599
      %3872 = vmatmul.bf16.gmra.mxu0 %v1948
      %v3873 = vpop.f32.mrf.mxu0
      %v3874 = vadd.f32 %v3745, %v3873
      %v3875 = vpop.f32.mrf.mxu0
      %v3876 = vadd.f32 %v3747, %v3875
      %3877 = vmatmul.bf16.gmra.mxu0 %v2060
      %v3878 = vpop.f32.mrf.mxu0
      %v3879 = vadd.f32 %v3750, %v3878
      %v3880 = vpop.f32.mrf.mxu0
      %v3881 = vadd.f32 %v3752, %v3880
      %3882 = vmatmul.bf16.gmra.mxu0 %v2123
      %v3883 = vpop.f32.mrf.mxu0
      %v3884 = vadd.f32 %v3755, %v3883
      %v3885 = vpop.f32.mrf.mxu0
      %v3886 = vadd.f32 %v3757, %v3885
      %3887 = vmatmul.bf16.gmra.mxu0 %v2177
      %v3888 = vpop.f32.mrf.mxu0
      %v3889 = vadd.f32 %v3760, %v3888
      %v3890 = vpop.f32.mrf.mxu0
      %v3891 = vadd.f32 %v3762, %v3890
      %3892 = vmatmul.bf16.gmra.mxu0 %v2104
      %v3893 = vpop.f32.mrf.mxu0
      %v3894 = vadd.f32 %v3765, %v3893
      %v3895 = vpop.f32.mrf.mxu0
      %v3896 = vadd.f32 %v3767, %v3895
      %3897 = vmatmul.bf16.gmra.mxu0 %v2167
      %v3898 = vpop.f32.mrf.mxu0
      %v3899 = vadd.f32 %v3770, %v3898
      %v3900 = vpop.f32.mrf.mxu0
      %v3901 = vadd.f32 %v3772, %v3900
      %3902 = vmatmul.bf16.gmra.mxu0 %v2213
      %v3903 = vpop.f32.mrf.mxu0
      %v3904 = vadd.f32 %v3775, %v3903
      %v3905 = vpop.f32.mrf.mxu0
      %v3906 = vadd.f32 %v3777, %v3905
      %3907 = vmatmul.bf16.gmra.mxu0 %v2257
      %v3908 = vpop.f32.mrf.mxu0
      %v3909 = vadd.f32 %v3780, %v3908
      %v3910 = vpop.f32.mrf.mxu0
      %v3911 = vadd.f32 %v3782, %v3910
      %3912 = vmatmul.bf16.gmra.mxu0 %v2301
      %v3913 = vpop.f32.mrf.mxu0
      %v3914 = vadd.f32 %v3785, %v3913
      %v3915 = vpop.f32.mrf.mxu0
      %v3916 = vadd.f32 %v3787, %v3915
      %3917 = vmatmul.bf16.gmra.mxu0 %v2345
      %v3918 = vpop.f32.mrf.mxu0
      %v3919 = vadd.f32 %v3790, %v3918
      %v3920 = vpop.f32.mrf.mxu0
      %v3921 = vadd.f32 %v3792, %v3920
      %3922 = vmatmul.bf16.gmra.mxu0 %v2389
      %v3923 = vpop.f32.mrf.mxu0
      %v3924 = vadd.f32 %v3795, %v3923
      %v3925 = vpop.f32.mrf.mxu0
      %v3926 = vadd.f32 %v3797, %v3925
      %3927 = vmatmul.bf16.gmra.mxu0 %v2433
      %v3928 = vpop.f32.mrf.mxu0
      %v3929 = vadd.f32 %v3800, %v3928
      %v3930 = vpop.f32.mrf.mxu0
      %v3931 = vadd.f32 %v3802, %v3930
      %3932 = vmatmul.bf16.gmra.mxu0 %v2477
      %v3933 = vpop.f32.mrf.mxu0
      %v3934 = vadd.f32 %v3805, %v3933
      %v3935 = vpop.f32.mrf.mxu0
      %v3936 = vadd.f32 %v3807, %v3935
      %3937 = vmatmul.bf16.gmra.mxu0 %v2521
      %v3938 = vpop.f32.mrf.mxu0
      %v3939 = vadd.f32 %v3810, %v3938
      %v3940 = vpop.f32.mrf.mxu0
      %v3941 = vadd.f32 %v3812, %v3940
      %3942 = vmatmul.bf16.gmra.mxu0 %v2565
      %v3943 = vpop.f32.mrf.mxu0
      %v3944 = vadd.f32 %v3815, %v3943
      %v3945 = vpop.f32.mrf.mxu0
      %v3946 = vadd.f32 %v3817, %v3945
      %3947 = vmatmul.bf16.gmra.mxu0 %v2609
      %v3948 = vpop.f32.mrf.mxu0
      %v3949 = vadd.f32 %v3820, %v3948
      %v3950 = vpop.f32.mrf.mxu0
      %v3951 = vadd.f32 %v3822, %v3950
      %3952 = vmatmul.bf16.gmra.mxu0 %v2653
      %v3953 = vpop.f32.mrf.mxu0
      %v3954 = vadd.f32 %v3825, %v3953
      %v3955 = vpop.f32.mrf.mxu0
      %v3956 = vadd.f32 %v3827, %v3955
      %3957 = vmatmul.bf16.gmra.mxu0 %v2697
      %v3958 = vpop.f32.mrf.mxu0
      %v3959 = vadd.f32 %v3830, %v3958
      %v3960 = vpop.f32.mrf.mxu0
      %v3961 = vadd.f32 %v3832, %v3960
      %3962 = vmatmul.bf16.gmra.mxu0 %v2741
      %v3963 = vpop.f32.mrf.mxu0
      %v3964 = vadd.f32 %v3835, %v3963
      %v3965 = vpop.f32.mrf.mxu0
      %v3966 = vadd.f32 %v3837, %v3965
      %3967 = vmatmul.bf16.gmra.mxu0 %v2785
      %v3968 = vpop.f32.mrf.mxu0
      %v3969 = vadd.f32 %v3840, %v3968
      %v3970 = vpop.f32.mrf.mxu0
      %v3971 = vadd.f32 %v3842, %v3970
      %3972 = vmatmul.bf16.gmra.mxu0 %v2829
      %v3973 = vpop.f32.mrf.mxu0
      %v3974 = vadd.f32 %v3845, %v3973
      %v3975 = vpop.f32.mrf.mxu0
      %v3976 = vadd.f32 %v3847, %v3975
      %3977 = vmatmul.bf16.gmra.mxu0 %v2873
      %v3978 = vpop.f32.mrf.mxu0
      %v3979 = vadd.f32 %v3850, %v3978
      %v3980 = vpop.f32.mrf.mxu0
      %v3981 = vadd.f32 %v3852, %v3980
      %3982 = vmatmul.bf16.gmra.mxu0 %v2917
      %v3983 = vpop.f32.mrf.mxu0
      %v3984 = vadd.f32 %v3855, %v3983
      %v3985 = vpop.f32.mrf.mxu0
      %v3986 = vadd.f32 %v3857, %v3985
      %3987 = vmatmul.bf16.gmra.mxu0 %v3081
      %v3988 = vpop.f32.mrf.mxu0
      %v3989 = vadd.f32 %v3860, %v3988
      %v3990 = vpop.f32.mrf.mxu0
      %v3991 = vadd.f32 %v3862, %v3990
      %3992 = vdwg.mxu0
      %3993 = vmatpush.bf16.msra.mxu0 %v3614
      %3994 = vmatpush.bf16.msra.mxu0 %v3613
      %3995 = vmatpush.bf16.msra.mxu0 %v3612
      %3996 = vmatpush.bf16.msra.mxu0 %v3611
      %3997 = vmatpush.bf16.msra.mxu0 %v3610
      %3998 = vmatpush.bf16.msra.mxu0 %v3609
      %3999 = vmatpush.bf16.msra.mxu0 %v3608
      %4000 = vmatpush.bf16.msra.mxu0 %v3607
      %4001 = vmatmul.bf16.gmra.mxu0 %v1965
      %v4002 = vpop.f32.mrf.mxu0
      %v4003 = vadd.f32 %v3874, %v4002
      %v4004 = vpop.f32.mrf.mxu0
      %v4005 = vadd.f32 %v3876, %v4004
      %4006 = vmatmul.bf16.gmra.mxu0 %v2069
      %v4007 = vpop.f32.mrf.mxu0
      %v4008 = vadd.f32 %v3879, %v4007
      %v4009 = vpop.f32.mrf.mxu0
      %v4010 = vadd.f32 %v3881, %v4009
      %4011 = vmatmul.bf16.gmra.mxu0 %v2132
      %v4012 = vpop.f32.mrf.mxu0
      %v4013 = vadd.f32 %v3884, %v4012
      %v4014 = vpop.f32.mrf.mxu0
      %v4015 = vadd.f32 %v3886, %v4014
      %4016 = vmatmul.bf16.gmra.mxu0 %v2178
      %v4017 = vpop.f32.mrf.mxu0
      %v4018 = vadd.f32 %v3889, %v4017
      %v4019 = vpop.f32.mrf.mxu0
      %v4020 = vadd.f32 %v3891, %v4019
      %4021 = vmatmul.bf16.gmra.mxu0 %v2113
      %v4022 = vpop.f32.mrf.mxu0
      %v4023 = vadd.f32 %v3894, %v4022
      %v4024 = vpop.f32.mrf.mxu0
      %v4025 = vadd.f32 %v3896, %v4024
      %4026 = vmatmul.bf16.gmra.mxu0 %v2176
      %v4027 = vpop.f32.mrf.mxu0
      %v4028 = vadd.f32 %v3899, %v4027
      %v4029 = vpop.f32.mrf.mxu0
      %v4030 = vadd.f32 %v3901, %v4029
      %4031 = vmatmul.bf16.gmra.mxu0 %v2222
      %v4032 = vpop.f32.mrf.mxu0
      %v4033 = vadd.f32 %v3904, %v4032
      %v4034 = vpop.f32.mrf.mxu0
      %v4035 = vadd.f32 %v3906, %v4034
      %4036 = vmatmul.bf16.gmra.mxu0 %v2266
      %v4037 = vpop.f32.mrf.mxu0
      %v4038 = vadd.f32 %v3909, %v4037
      %v4039 = vpop.f32.mrf.mxu0
      %v4040 = vadd.f32 %v3911, %v4039
      %4041 = vmatmul.bf16.gmra.mxu0 %v2310
      %v4042 = vpop.f32.mrf.mxu0
      %v4043 = vadd.f32 %v3914, %v4042
      %v4044 = vpop.f32.mrf.mxu0
      %v4045 = vadd.f32 %v3916, %v4044
      %4046 = vmatmul.bf16.gmra.mxu0 %v2354
      %v4047 = vpop.f32.mrf.mxu0
      %v4048 = vadd.f32 %v3919, %v4047
      %v4049 = vpop.f32.mrf.mxu0
      %v4050 = vadd.f32 %v3921, %v4049
      %4051 = vmatmul.bf16.gmra.mxu0 %v2398
      %v4052 = vpop.f32.mrf.mxu0
      %v4053 = vadd.f32 %v3924, %v4052
      %v4054 = vpop.f32.mrf.mxu0
      %v4055 = vadd.f32 %v3926, %v4054
      %4056 = vmatmul.bf16.gmra.mxu0 %v2442
      %v4057 = vpop.f32.mrf.mxu0
      %v4058 = vadd.f32 %v3929, %v4057
      %v4059 = vpop.f32.mrf.mxu0
      %v4060 = vadd.f32 %v3931, %v4059
      %4061 = vmatmul.bf16.gmra.mxu0 %v2486
      %v4062 = vpop.f32.mrf.mxu0
      %v4063 = vadd.f32 %v3934, %v4062
      %v4064 = vpop.f32.mrf.mxu0
      %v4065 = vadd.f32 %v3936, %v4064
      %4066 = vmatmul.bf16.gmra.mxu0 %v2530
      %v4067 = vpop.f32.mrf.mxu0
      %v4068 = vadd.f32 %v3939, %v4067
      %v4069 = vpop.f32.mrf.mxu0
      %v4070 = vadd.f32 %v3941, %v4069
      %4071 = vmatmul.bf16.gmra.mxu0 %v2574
      %v4072 = vpop.f32.mrf.mxu0
      %v4073 = vadd.f32 %v3944, %v4072
      %v4074 = vpop.f32.mrf.mxu0
      %v4075 = vadd.f32 %v3946, %v4074
      %4076 = vmatmul.bf16.gmra.mxu0 %v2618
      %v4077 = vpop.f32.mrf.mxu0
      %v4078 = vadd.f32 %v3949, %v4077
      %v4079 = vpop.f32.mrf.mxu0
      %v4080 = vadd.f32 %v3951, %v4079
      %4081 = vmatmul.bf16.gmra.mxu0 %v2662
      %v4082 = vpop.f32.mrf.mxu0
      %v4083 = vadd.f32 %v3954, %v4082
      %v4084 = vpop.f32.mrf.mxu0
      %v4085 = vadd.f32 %v3956, %v4084
      %4086 = vmatmul.bf16.gmra.mxu0 %v2706
      %v4087 = vpop.f32.mrf.mxu0
      %v4088 = vadd.f32 %v3959, %v4087
      %v4089 = vpop.f32.mrf.mxu0
      %v4090 = vadd.f32 %v3961, %v4089
      %4091 = vmatmul.bf16.gmra.mxu0 %v2750
      %v4092 = vpop.f32.mrf.mxu0
      %v4093 = vadd.f32 %v3964, %v4092
      %v4094 = vpop.f32.mrf.mxu0
      %v4095 = vadd.f32 %v3966, %v4094
      %4096 = vmatmul.bf16.gmra.mxu0 %v2794
      %v4097 = vpop.f32.mrf.mxu0
      %v4098 = vadd.f32 %v3969, %v4097
      %v4099 = vpop.f32.mrf.mxu0
      %v4100 = vadd.f32 %v3971, %v4099
      %4101 = vmatmul.bf16.gmra.mxu0 %v2838
      %v4102 = vpop.f32.mrf.mxu0
      %v4103 = vadd.f32 %v3974, %v4102
      %v4104 = vpop.f32.mrf.mxu0
      %v4105 = vadd.f32 %v3976, %v4104
      %4106 = vmatmul.bf16.gmra.mxu0 %v2882
      %v4107 = vpop.f32.mrf.mxu0
      %v4108 = vadd.f32 %v3979, %v4107
      %v4109 = vpop.f32.mrf.mxu0
      %v4110 = vadd.f32 %v3981, %v4109
      %4111 = vmatmul.bf16.gmra.mxu0 %v2926
      %v4112 = vpop.f32.mrf.mxu0
      %v4113 = vadd.f32 %v3984, %v4112
      %v4114 = vpop.f32.mrf.mxu0
      %v4115 = vadd.f32 %v3986, %v4114
      %4116 = vmatmul.bf16.gmra.mxu0 %v3090
      %v4117 = vpop.f32.mrf.mxu0
      %v4118 = vadd.f32 %v3989, %v4117
      %v4119 = vpop.f32.mrf.mxu0
      %v4120 = vadd.f32 %v3991, %v4119
      %4121 = vdwg.mxu0
      %4122 = vmatpush.bf16.msra.mxu0 %v3622
      %4123 = vmatpush.bf16.msra.mxu0 %v3621
      %4124 = vmatpush.bf16.msra.mxu0 %v3620
      %4125 = vmatpush.bf16.msra.mxu0 %v3619
      %4126 = vmatpush.bf16.msra.mxu0 %v3618
      %4127 = vmatpush.bf16.msra.mxu0 %v3617
      %4128 = vmatpush.bf16.msra.mxu0 %v3616
      %4129 = vmatpush.bf16.msra.mxu0 %v3615
      %4130 = vmatmul.bf16.gmra.mxu0 %v1972
      %v4131 = vpop.f32.mrf.mxu0
      %v4132 = vadd.f32 %v4003, %v4131
      %v4133 = vpop.f32.mrf.mxu0
      %v4134 = vadd.f32 %v4005, %v4133
      %4135 = vmatmul.bf16.gmra.mxu0 %v2073
      %v4136 = vpop.f32.mrf.mxu0
      %v4137 = vadd.f32 %v4008, %v4136
      %v4138 = vpop.f32.mrf.mxu0
      %v4139 = vadd.f32 %v4010, %v4138
      %4140 = vmatmul.bf16.gmra.mxu0 %v2136
      %v4141 = vpop.f32.mrf.mxu0
      %v4142 = vadd.f32 %v4013, %v4141
      %v4143 = vpop.f32.mrf.mxu0
      %v4144 = vadd.f32 %v4015, %v4143
      %4145 = vmatmul.bf16.gmra.mxu0 %v2182
      %v4146 = vpop.f32.mrf.mxu0
      %v4147 = vadd.f32 %v4018, %v4146
      %v4148 = vpop.f32.mrf.mxu0
      %v4149 = vadd.f32 %v4020, %v4148
      %4150 = vmatmul.bf16.gmra.mxu0 %v2226
      %v4151 = vpop.f32.mrf.mxu0
      %v4152 = vadd.f32 %v4023, %v4151
      %v4153 = vpop.f32.mrf.mxu0
      %v4154 = vadd.f32 %v4025, %v4153
      %4155 = vmatmul.bf16.gmra.mxu0 %v2270
      %v4156 = vpop.f32.mrf.mxu0
      %v4157 = vadd.f32 %v4028, %v4156
      %v4158 = vpop.f32.mrf.mxu0
      %v4159 = vadd.f32 %v4030, %v4158
      %4160 = vmatmul.bf16.gmra.mxu0 %v2314
      %v4161 = vpop.f32.mrf.mxu0
      %v4162 = vadd.f32 %v4033, %v4161
      %v4163 = vpop.f32.mrf.mxu0
      %v4164 = vadd.f32 %v4035, %v4163
      %4165 = vmatmul.bf16.gmra.mxu0 %v2358
      %v4166 = vpop.f32.mrf.mxu0
      %v4167 = vadd.f32 %v4038, %v4166
      %v4168 = vpop.f32.mrf.mxu0
      %v4169 = vadd.f32 %v4040, %v4168
      %4170 = vmatmul.bf16.gmra.mxu0 %v2402
      %v4171 = vpop.f32.mrf.mxu0
      %v4172 = vadd.f32 %v4043, %v4171
      %v4173 = vpop.f32.mrf.mxu0
      %v4174 = vadd.f32 %v4045, %v4173
      %4175 = vmatmul.bf16.gmra.mxu0 %v2446
      %v4176 = vpop.f32.mrf.mxu0
      %v4177 = vadd.f32 %v4048, %v4176
      %v4178 = vpop.f32.mrf.mxu0
      %v4179 = vadd.f32 %v4050, %v4178
      %4180 = vmatmul.bf16.gmra.mxu0 %v2490
      %v4181 = vpop.f32.mrf.mxu0
      %v4182 = vadd.f32 %v4053, %v4181
      %v4183 = vpop.f32.mrf.mxu0
      %v4184 = vadd.f32 %v4055, %v4183
      %4185 = vmatmul.bf16.gmra.mxu0 %v2534
      %v4186 = vpop.f32.mrf.mxu0
      %v4187 = vadd.f32 %v4058, %v4186
      %v4188 = vpop.f32.mrf.mxu0
      %v4189 = vadd.f32 %v4060, %v4188
      %4190 = vmatmul.bf16.gmra.mxu0 %v2578
      %v4191 = vpop.f32.mrf.mxu0
      %v4192 = vadd.f32 %v4063, %v4191
      %v4193 = vpop.f32.mrf.mxu0
      %v4194 = vadd.f32 %v4065, %v4193
      %4195 = vmatmul.bf16.gmra.mxu0 %v2622
      %v4196 = vpop.f32.mrf.mxu0
      %v4197 = vadd.f32 %v4068, %v4196
      %v4198 = vpop.f32.mrf.mxu0
      %v4199 = vadd.f32 %v4070, %v4198
      %4200 = vmatmul.bf16.gmra.mxu0 %v2666
      %v4201 = vpop.f32.mrf.mxu0
      %v4202 = vadd.f32 %v4073, %v4201
      %v4203 = vpop.f32.mrf.mxu0
      %v4204 = vadd.f32 %v4075, %v4203
      %4205 = vmatmul.bf16.gmra.mxu0 %v2710
      %v4206 = vpop.f32.mrf.mxu0
      %v4207 = vadd.f32 %v4078, %v4206
      %v4208 = vpop.f32.mrf.mxu0
      %v4209 = vadd.f32 %v4080, %v4208
      %4210 = vmatmul.bf16.gmra.mxu0 %v2754
      %v4211 = vpop.f32.mrf.mxu0
      %v4212 = vadd.f32 %v4083, %v4211
      %v4213 = vpop.f32.mrf.mxu0
      %v4214 = vadd.f32 %v4085, %v4213
      %4215 = vmatmul.bf16.gmra.mxu0 %v2798
      %v4216 = vpop.f32.mrf.mxu0
      %v4217 = vadd.f32 %v4088, %v4216
      %v4218 = vpop.f32.mrf.mxu0
      %v4219 = vadd.f32 %v4090, %v4218
      %4220 = vmatmul.bf16.gmra.mxu0 %v2842
      %v4221 = vpop.f32.mrf.mxu0
      %v4222 = vadd.f32 %v4093, %v4221
      %v4223 = vpop.f32.mrf.mxu0
      %v4224 = vadd.f32 %v4095, %v4223
      %4225 = vmatmul.bf16.gmra.mxu0 %v2886
      %v4226 = vpop.f32.mrf.mxu0
      %v4227 = vadd.f32 %v4098, %v4226
      %v4228 = vpop.f32.mrf.mxu0
      %v4229 = vadd.f32 %v4100, %v4228
      %4230 = vmatmul.bf16.gmra.mxu0 %v2930
      %v4231 = vpop.f32.mrf.mxu0
      %v4232 = vadd.f32 %v4103, %v4231
      %v4233 = vpop.f32.mrf.mxu0
      %v4234 = vadd.f32 %v4105, %v4233
      %4235 = vmatmul.bf16.gmra.mxu0 %v2974
      %v4236 = vpop.f32.mrf.mxu0
      %v4237 = vadd.f32 %v4108, %v4236
      %v4238 = vpop.f32.mrf.mxu0
      %v4239 = vadd.f32 %v4110, %v4238
      %4240 = vmatmul.bf16.gmra.mxu0 %v3018
      %v4241 = vpop.f32.mrf.mxu0
      %v4242 = vadd.f32 %v4113, %v4241
      %v4243 = vpop.f32.mrf.mxu0
      %v4244 = vadd.f32 %v4115, %v4243
      %4245 = vmatmul.bf16.gmra.mxu0 %v3099
      %v4246 = vpop.f32.mrf.mxu0
      %v4247 = vadd.f32 %v4118, %v4246
      %v4248 = vpop.f32.mrf.mxu0
      %v4249 = vadd.f32 %v4120, %v4248
      %4250 = vdwg.mxu0
      %4251 = vmatpush.bf16.msra.mxu0 %v3630
      %4252 = vmatpush.bf16.msra.mxu0 %v3629
      %4253 = vmatpush.bf16.msra.mxu0 %v3628
      %4254 = vmatpush.bf16.msra.mxu0 %v3627
      %4255 = vmatpush.bf16.msra.mxu0 %v3626
      %4256 = vmatpush.bf16.msra.mxu0 %v3625
      %4257 = vmatpush.bf16.msra.mxu0 %v3624
      %4258 = vmatpush.bf16.msra.mxu0 %v3623
      %4259 = vmatmul.bf16.gmra.mxu0 %v1989
      %v4260 = vpop.f32.mrf.mxu0
      %v4261 = vadd.f32 %v4132, %v4260
      %v4262 = vpop.f32.mrf.mxu0
      %v4263 = vadd.f32 %v4134, %v4262
      %4264 = vmatmul.bf16.gmra.mxu0 %v2082
      %v4265 = vpop.f32.mrf.mxu0
      %v4266 = vadd.f32 %v4137, %v4265
      %v4267 = vpop.f32.mrf.mxu0
      %v4268 = vadd.f32 %v4139, %v4267
      %4269 = vmatmul.bf16.gmra.mxu0 %v2145
      %v4270 = vpop.f32.mrf.mxu0
      %v4271 = vadd.f32 %v4142, %v4270
      %v4272 = vpop.f32.mrf.mxu0
      %v4273 = vadd.f32 %v4144, %v4272
      %4274 = vmatmul.bf16.gmra.mxu0 %v2191
      %v4275 = vpop.f32.mrf.mxu0
      %v4276 = vadd.f32 %v4147, %v4275
      %v4277 = vpop.f32.mrf.mxu0
      %v4278 = vadd.f32 %v4149, %v4277
      %4279 = vmatmul.bf16.gmra.mxu0 %v2235
      %v4280 = vpop.f32.mrf.mxu0
      %v4281 = vadd.f32 %v4152, %v4280
      %v4282 = vpop.f32.mrf.mxu0
      %v4283 = vadd.f32 %v4154, %v4282
      %4284 = vmatmul.bf16.gmra.mxu0 %v2279
      %v4285 = vpop.f32.mrf.mxu0
      %v4286 = vadd.f32 %v4157, %v4285
      %v4287 = vpop.f32.mrf.mxu0
      %v4288 = vadd.f32 %v4159, %v4287
      %4289 = vmatmul.bf16.gmra.mxu0 %v2323
      %v4290 = vpop.f32.mrf.mxu0
      %v4291 = vadd.f32 %v4162, %v4290
      %v4292 = vpop.f32.mrf.mxu0
      %v4293 = vadd.f32 %v4164, %v4292
      %4294 = vmatmul.bf16.gmra.mxu0 %v2367
      %v4295 = vpop.f32.mrf.mxu0
      %v4296 = vadd.f32 %v4167, %v4295
      %v4297 = vpop.f32.mrf.mxu0
      %v4298 = vadd.f32 %v4169, %v4297
      %4299 = vmatmul.bf16.gmra.mxu0 %v2411
      %v4300 = vpop.f32.mrf.mxu0
      %v4301 = vadd.f32 %v4172, %v4300
      %v4302 = vpop.f32.mrf.mxu0
      %v4303 = vadd.f32 %v4174, %v4302
      %4304 = vmatmul.bf16.gmra.mxu0 %v2455
      %v4305 = vpop.f32.mrf.mxu0
      %v4306 = vadd.f32 %v4177, %v4305
      %v4307 = vpop.f32.mrf.mxu0
      %v4308 = vadd.f32 %v4179, %v4307
      %4309 = vmatmul.bf16.gmra.mxu0 %v2499
      %v4310 = vpop.f32.mrf.mxu0
      %v4311 = vadd.f32 %v4182, %v4310
      %v4312 = vpop.f32.mrf.mxu0
      %v4313 = vadd.f32 %v4184, %v4312
      %4314 = vmatmul.bf16.gmra.mxu0 %v2543
      %v4315 = vpop.f32.mrf.mxu0
      %v4316 = vadd.f32 %v4187, %v4315
      %v4317 = vpop.f32.mrf.mxu0
      %v4318 = vadd.f32 %v4189, %v4317
      %4319 = vmatmul.bf16.gmra.mxu0 %v2587
      %v4320 = vpop.f32.mrf.mxu0
      %v4321 = vadd.f32 %v4192, %v4320
      %v4322 = vpop.f32.mrf.mxu0
      %v4323 = vadd.f32 %v4194, %v4322
      %4324 = vmatmul.bf16.gmra.mxu0 %v2631
      %v4325 = vpop.f32.mrf.mxu0
      %v4326 = vadd.f32 %v4197, %v4325
      %v4327 = vpop.f32.mrf.mxu0
      %v4328 = vadd.f32 %v4199, %v4327
      %4329 = vmatmul.bf16.gmra.mxu0 %v2675
      %v4330 = vpop.f32.mrf.mxu0
      %v4331 = vadd.f32 %v4202, %v4330
      %v4332 = vpop.f32.mrf.mxu0
      %v4333 = vadd.f32 %v4204, %v4332
      %4334 = vmatmul.bf16.gmra.mxu0 %v2719
      %v4335 = vpop.f32.mrf.mxu0
      %v4336 = vadd.f32 %v4207, %v4335
      %v4337 = vpop.f32.mrf.mxu0
      %v4338 = vadd.f32 %v4209, %v4337
      %4339 = vmatmul.bf16.gmra.mxu0 %v2763
      %v4340 = vpop.f32.mrf.mxu0
      %v4341 = vadd.f32 %v4212, %v4340
      %v4342 = vpop.f32.mrf.mxu0
      %v4343 = vadd.f32 %v4214, %v4342
      %4344 = vmatmul.bf16.gmra.mxu0 %v2807
      %v4345 = vpop.f32.mrf.mxu0
      %v4346 = vadd.f32 %v4217, %v4345
      %v4347 = vpop.f32.mrf.mxu0
      %v4348 = vadd.f32 %v4219, %v4347
      %4349 = vmatmul.bf16.gmra.mxu0 %v2851
      %v4350 = vpop.f32.mrf.mxu0
      %v4351 = vadd.f32 %v4222, %v4350
      %v4352 = vpop.f32.mrf.mxu0
      %v4353 = vadd.f32 %v4224, %v4352
      %4354 = vmatmul.bf16.gmra.mxu0 %v2895
      %v4355 = vpop.f32.mrf.mxu0
      %v4356 = vadd.f32 %v4227, %v4355
      %v4357 = vpop.f32.mrf.mxu0
      %v4358 = vadd.f32 %v4229, %v4357
      %4359 = vmatmul.bf16.gmra.mxu0 %v2939
      %v4360 = vpop.f32.mrf.mxu0
      %v4361 = vadd.f32 %v4232, %v4360
      %v4362 = vpop.f32.mrf.mxu0
      %v4363 = vadd.f32 %v4234, %v4362
      %4364 = vmatmul.bf16.gmra.mxu0 %v2983
      %v4365 = vpop.f32.mrf.mxu0
      %v4366 = vadd.f32 %v4237, %v4365
      %v4367 = vpop.f32.mrf.mxu0
      %v4368 = vadd.f32 %v4239, %v4367
      %4369 = vmatmul.bf16.gmra.mxu0 %v3027
      %v4370 = vpop.f32.mrf.mxu0
      %v4371 = vadd.f32 %v4242, %v4370
      %v4372 = vpop.f32.mrf.mxu0
      %v4373 = vadd.f32 %v4244, %v4372
      %4374 = vmatmul.bf16.gmra.mxu0 %v3108
      %v4375 = vpop.f32.mrf.mxu0
      %v4376 = vadd.f32 %v4247, %v4375
      %v4377 = vpop.f32.mrf.mxu0
      %v4378 = vadd.f32 %v4249, %v4377
      %4379 = vdwg.mxu0
      %4380 = vmatpush.bf16.msra.mxu0 %v3638
      %4381 = vmatpush.bf16.msra.mxu0 %v3637
      %4382 = vmatpush.bf16.msra.mxu0 %v3636
      %4383 = vmatpush.bf16.msra.mxu0 %v3635
      %4384 = vmatpush.bf16.msra.mxu0 %v3634
      %4385 = vmatpush.bf16.msra.mxu0 %v3633
      %4386 = vmatpush.bf16.msra.mxu0 %v3632
      %4387 = vmatpush.bf16.msra.mxu0 %v3631
      %4388 = vmatmul.bf16.gmra.mxu0 %v2006
      %v4389 = vpop.f32.mrf.mxu0
      %v4390 = vadd.f32 %v4261, %v4389
      %v4391 = vpop.f32.mrf.mxu0
      %v4392 = vadd.f32 %v4263, %v4391
      %4393 = vmatmul.bf16.gmra.mxu0 %v2091
      %v4394 = vpop.f32.mrf.mxu0
      %v4395 = vadd.f32 %v4266, %v4394
      %v4396 = vpop.f32.mrf.mxu0
      %v4397 = vadd.f32 %v4268, %v4396
      %4398 = vmatmul.bf16.gmra.mxu0 %v2154
      %v4399 = vpop.f32.mrf.mxu0
      %v4400 = vadd.f32 %v4271, %v4399
      %v4401 = vpop.f32.mrf.mxu0
      %v4402 = vadd.f32 %v4273, %v4401
      %4403 = vmatmul.bf16.gmra.mxu0 %v2200
      %v4404 = vpop.f32.mrf.mxu0
      %v4405 = vadd.f32 %v4276, %v4404
      %v4406 = vpop.f32.mrf.mxu0
      %v4407 = vadd.f32 %v4278, %v4406
      %4408 = vmatmul.bf16.gmra.mxu0 %v2244
      %v4409 = vpop.f32.mrf.mxu0
      %v4410 = vadd.f32 %v4281, %v4409
      %v4411 = vpop.f32.mrf.mxu0
      %v4412 = vadd.f32 %v4283, %v4411
      %4413 = vmatmul.bf16.gmra.mxu0 %v2288
      %v4414 = vpop.f32.mrf.mxu0
      %v4415 = vadd.f32 %v4286, %v4414
      %v4416 = vpop.f32.mrf.mxu0
      %v4417 = vadd.f32 %v4288, %v4416
      %4418 = vmatmul.bf16.gmra.mxu0 %v2332
      %v4419 = vpop.f32.mrf.mxu0
      %v4420 = vadd.f32 %v4291, %v4419
      %v4421 = vpop.f32.mrf.mxu0
      %v4422 = vadd.f32 %v4293, %v4421
      %4423 = vmatmul.bf16.gmra.mxu0 %v2376
      %v4424 = vpop.f32.mrf.mxu0
      %v4425 = vadd.f32 %v4296, %v4424
      %v4426 = vpop.f32.mrf.mxu0
      %v4427 = vadd.f32 %v4298, %v4426
      %4428 = vmatmul.bf16.gmra.mxu0 %v2420
      %v4429 = vpop.f32.mrf.mxu0
      %v4430 = vadd.f32 %v4301, %v4429
      %v4431 = vpop.f32.mrf.mxu0
      %v4432 = vadd.f32 %v4303, %v4431
      %4433 = vmatmul.bf16.gmra.mxu0 %v2464
      %v4434 = vpop.f32.mrf.mxu0
      %v4435 = vadd.f32 %v4306, %v4434
      %v4436 = vpop.f32.mrf.mxu0
      %v4437 = vadd.f32 %v4308, %v4436
      %4438 = vmatmul.bf16.gmra.mxu0 %v2508
      %v4439 = vpop.f32.mrf.mxu0
      %v4440 = vadd.f32 %v4311, %v4439
      %v4441 = vpop.f32.mrf.mxu0
      %v4442 = vadd.f32 %v4313, %v4441
      %4443 = vmatmul.bf16.gmra.mxu0 %v2552
      %v4444 = vpop.f32.mrf.mxu0
      %v4445 = vadd.f32 %v4316, %v4444
      %v4446 = vpop.f32.mrf.mxu0
      %v4447 = vadd.f32 %v4318, %v4446
      %4448 = vmatmul.bf16.gmra.mxu0 %v2596
      %v4449 = vpop.f32.mrf.mxu0
      %v4450 = vadd.f32 %v4321, %v4449
      %v4451 = vpop.f32.mrf.mxu0
      %v4452 = vadd.f32 %v4323, %v4451
      %4453 = vmatmul.bf16.gmra.mxu0 %v2640
      %v4454 = vpop.f32.mrf.mxu0
      %v4455 = vadd.f32 %v4326, %v4454
      %v4456 = vpop.f32.mrf.mxu0
      %v4457 = vadd.f32 %v4328, %v4456
      %4458 = vmatmul.bf16.gmra.mxu0 %v2684
      %v4459 = vpop.f32.mrf.mxu0
      %v4460 = vadd.f32 %v4331, %v4459
      %v4461 = vpop.f32.mrf.mxu0
      %v4462 = vadd.f32 %v4333, %v4461
      %4463 = vmatmul.bf16.gmra.mxu0 %v2728
      %v4464 = vpop.f32.mrf.mxu0
      %v4465 = vadd.f32 %v4336, %v4464
      %v4466 = vpop.f32.mrf.mxu0
      %v4467 = vadd.f32 %v4338, %v4466
      %4468 = vmatmul.bf16.gmra.mxu0 %v2772
      %v4469 = vpop.f32.mrf.mxu0
      %v4470 = vadd.f32 %v4341, %v4469
      %v4471 = vpop.f32.mrf.mxu0
      %v4472 = vadd.f32 %v4343, %v4471
      %4473 = vmatmul.bf16.gmra.mxu0 %v2816
      %v4474 = vpop.f32.mrf.mxu0
      %v4475 = vadd.f32 %v4346, %v4474
      %v4476 = vpop.f32.mrf.mxu0
      %v4477 = vadd.f32 %v4348, %v4476
      %4478 = vmatmul.bf16.gmra.mxu0 %v2860
      %v4479 = vpop.f32.mrf.mxu0
      %v4480 = vadd.f32 %v4351, %v4479
      %v4481 = vpop.f32.mrf.mxu0
      %v4482 = vadd.f32 %v4353, %v4481
      %4483 = vmatmul.bf16.gmra.mxu0 %v2904
      %v4484 = vpop.f32.mrf.mxu0
      %v4485 = vadd.f32 %v4356, %v4484
      %v4486 = vpop.f32.mrf.mxu0
      %v4487 = vadd.f32 %v4358, %v4486
      %4488 = vmatmul.bf16.gmra.mxu0 %v2948
      %v4489 = vpop.f32.mrf.mxu0
      %v4490 = vadd.f32 %v4361, %v4489
      %v4491 = vpop.f32.mrf.mxu0
      %v4492 = vadd.f32 %v4363, %v4491
      %4493 = vmatmul.bf16.gmra.mxu0 %v2992
      %v4494 = vpop.f32.mrf.mxu0
      %v4495 = vadd.f32 %v4366, %v4494
      %v4496 = vpop.f32.mrf.mxu0
      %v4497 = vadd.f32 %v4368, %v4496
      %4498 = vmatmul.bf16.gmra.mxu0 %v3036
      %v4499 = vpop.f32.mrf.mxu0
      %v4500 = vadd.f32 %v4371, %v4499
      %v4501 = vpop.f32.mrf.mxu0
      %v4502 = vadd.f32 %v4373, %v4501
      %4503 = vmatmul.bf16.gmra.mxu0 %v3117
      %v4504 = vpop.f32.mrf.mxu0
      %v4505 = vadd.f32 %v4376, %v4504
      %v4506 = vpop.f32.mrf.mxu0
      %v4507 = vadd.f32 %v4378, %v4506
      %4508 = vdwg.mxu0
      %4509 = vmatpush.bf16.msra.mxu0 %v3646
      %4510 = vmatpush.bf16.msra.mxu0 %v3645
      %4511 = vmatpush.bf16.msra.mxu0 %v3644
      %4512 = vmatpush.bf16.msra.mxu0 %v3643
      %4513 = vmatpush.bf16.msra.mxu0 %v3642
      %4514 = vmatpush.bf16.msra.mxu0 %v3641
      %4515 = vmatpush.bf16.msra.mxu0 %v3640
      %4516 = vmatpush.bf16.msra.mxu0 %v3639
      %4517 = vmatmul.bf16.gmra.mxu0 %v2013
      %v4518 = vpop.f32.mrf.mxu0
      %v4519 = vadd.f32 %v4390, %v4518
      %v4520 = vpop.f32.mrf.mxu0
      %v4521 = vadd.f32 %v4392, %v4520
      %4522 = vmatmul.bf16.gmra.mxu0 %v2095
      %v4523 = vpop.f32.mrf.mxu0
      %v4524 = vadd.f32 %v4395, %v4523
      %v4525 = vpop.f32.mrf.mxu0
      %v4526 = vadd.f32 %v4397, %v4525
      %4527 = vmatmul.bf16.gmra.mxu0 %v2158
      %v4528 = vpop.f32.mrf.mxu0
      %v4529 = vadd.f32 %v4400, %v4528
      %v4530 = vpop.f32.mrf.mxu0
      %v4531 = vadd.f32 %v4402, %v4530
      %4532 = vmatmul.bf16.gmra.mxu0 %v2204
      %v4533 = vpop.f32.mrf.mxu0
      %v4534 = vadd.f32 %v4405, %v4533
      %v4535 = vpop.f32.mrf.mxu0
      %v4536 = vadd.f32 %v4407, %v4535
      %4537 = vmatmul.bf16.gmra.mxu0 %v2248
      %v4538 = vpop.f32.mrf.mxu0
      %v4539 = vadd.f32 %v4410, %v4538
      %v4540 = vpop.f32.mrf.mxu0
      %v4541 = vadd.f32 %v4412, %v4540
      %4542 = vmatmul.bf16.gmra.mxu0 %v2292
      %v4543 = vpop.f32.mrf.mxu0
      %v4544 = vadd.f32 %v4415, %v4543
      %v4545 = vpop.f32.mrf.mxu0
      %v4546 = vadd.f32 %v4417, %v4545
      %4547 = vmatmul.bf16.gmra.mxu0 %v2336
      %v4548 = vpop.f32.mrf.mxu0
      %v4549 = vadd.f32 %v4420, %v4548
      %v4550 = vpop.f32.mrf.mxu0
      %v4551 = vadd.f32 %v4422, %v4550
      %4552 = vmatmul.bf16.gmra.mxu0 %v2380
      %v4553 = vpop.f32.mrf.mxu0
      %v4554 = vadd.f32 %v4425, %v4553
      %v4555 = vpop.f32.mrf.mxu0
      %v4556 = vadd.f32 %v4427, %v4555
      %4557 = vmatmul.bf16.gmra.mxu0 %v2424
      %v4558 = vpop.f32.mrf.mxu0
      %v4559 = vadd.f32 %v4430, %v4558
      %v4560 = vpop.f32.mrf.mxu0
      %v4561 = vadd.f32 %v4432, %v4560
      %4562 = vmatmul.bf16.gmra.mxu0 %v2468
      %v4563 = vpop.f32.mrf.mxu0
      %v4564 = vadd.f32 %v4435, %v4563
      %v4565 = vpop.f32.mrf.mxu0
      %v4566 = vadd.f32 %v4437, %v4565
      %4567 = vmatmul.bf16.gmra.mxu0 %v2512
      %v4568 = vpop.f32.mrf.mxu0
      %v4569 = vadd.f32 %v4440, %v4568
      %v4570 = vpop.f32.mrf.mxu0
      %v4571 = vadd.f32 %v4442, %v4570
      %4572 = vmatmul.bf16.gmra.mxu0 %v2556
      %v4573 = vpop.f32.mrf.mxu0
      %v4574 = vadd.f32 %v4445, %v4573
      %v4575 = vpop.f32.mrf.mxu0
      %v4576 = vadd.f32 %v4447, %v4575
      %4577 = vmatmul.bf16.gmra.mxu0 %v2600
      %v4578 = vpop.f32.mrf.mxu0
      %v4579 = vadd.f32 %v4450, %v4578
      %v4580 = vpop.f32.mrf.mxu0
      %v4581 = vadd.f32 %v4452, %v4580
      %4582 = vmatmul.bf16.gmra.mxu0 %v2644
      %v4583 = vpop.f32.mrf.mxu0
      %v4584 = vadd.f32 %v4455, %v4583
      %v4585 = vpop.f32.mrf.mxu0
      %v4586 = vadd.f32 %v4457, %v4585
      %4587 = vmatmul.bf16.gmra.mxu0 %v2688
      %v4588 = vpop.f32.mrf.mxu0
      %v4589 = vadd.f32 %v4460, %v4588
      %v4590 = vpop.f32.mrf.mxu0
      %v4591 = vadd.f32 %v4462, %v4590
      %4592 = vmatmul.bf16.gmra.mxu0 %v2732
      %v4593 = vpop.f32.mrf.mxu0
      %v4594 = vadd.f32 %v4465, %v4593
      %v4595 = vpop.f32.mrf.mxu0
      %v4596 = vadd.f32 %v4467, %v4595
      %4597 = vmatmul.bf16.gmra.mxu0 %v2776
      %v4598 = vpop.f32.mrf.mxu0
      %v4599 = vadd.f32 %v4470, %v4598
      %v4600 = vpop.f32.mrf.mxu0
      %v4601 = vadd.f32 %v4472, %v4600
      %4602 = vmatmul.bf16.gmra.mxu0 %v2820
      %v4603 = vpop.f32.mrf.mxu0
      %v4604 = vadd.f32 %v4475, %v4603
      %v4605 = vpop.f32.mrf.mxu0
      %v4606 = vadd.f32 %v4477, %v4605
      %4607 = vmatmul.bf16.gmra.mxu0 %v2864
      %v4608 = vpop.f32.mrf.mxu0
      %v4609 = vadd.f32 %v4480, %v4608
      %v4610 = vpop.f32.mrf.mxu0
      %v4611 = vadd.f32 %v4482, %v4610
      %4612 = vmatmul.bf16.gmra.mxu0 %v2908
      %v4613 = vpop.f32.mrf.mxu0
      %v4614 = vadd.f32 %v4485, %v4613
      %v4615 = vpop.f32.mrf.mxu0
      %v4616 = vadd.f32 %v4487, %v4615
      %4617 = vmatmul.bf16.gmra.mxu0 %v2952
      %v4618 = vpop.f32.mrf.mxu0
      %v4619 = vadd.f32 %v4490, %v4618
      %v4620 = vpop.f32.mrf.mxu0
      %v4621 = vadd.f32 %v4492, %v4620
      %4622 = vmatmul.bf16.gmra.mxu0 %v2996
      %v4623 = vpop.f32.mrf.mxu0
      %v4624 = vadd.f32 %v4495, %v4623
      %v4625 = vpop.f32.mrf.mxu0
      %v4626 = vadd.f32 %v4497, %v4625
      %4627 = vmatmul.bf16.gmra.mxu0 %v3045
      %v4628 = vpop.f32.mrf.mxu0
      %v4629 = vadd.f32 %v4500, %v4628
      %v4630 = vpop.f32.mrf.mxu0
      %v4631 = vadd.f32 %v4502, %v4630
      %4632 = vmatmul.bf16.gmra.mxu0 %v3126
      %v4633 = vpop.f32.mrf.mxu0
      %v4634 = vadd.f32 %v4505, %v4633
      %v4635 = vpop.f32.mrf.mxu0
      %v4636 = vadd.f32 %v4507, %v4635
      %4637 = vdwg.mxu0
      %4638 = vmatpush.bf16.msra.mxu0 %v3654
      %4639 = vmatpush.bf16.msra.mxu0 %v3653
      %4640 = vmatpush.bf16.msra.mxu0 %v3652
      %4641 = vmatpush.bf16.msra.mxu0 %v3651
      %4642 = vmatpush.bf16.msra.mxu0 %v3650
      %4643 = vmatpush.bf16.msra.mxu0 %v3649
      %4644 = vmatpush.bf16.msra.mxu0 %v3648
      %4645 = vmatpush.bf16.msra.mxu0 %v3647
      %4646 = vmatmul.bf16.gmra.mxu0 %v2030
      %v4647 = vpop.f32.mrf.mxu0
      %v4648 = vadd.f32 %v4519, %v4647
      %v4649 = vpop.f32.mrf.mxu0
      %v4650 = vadd.f32 %v4521, %v4649
      %4651 = vmatmul.bf16.gmra.mxu0 %v2104
      %v4652 = vpop.f32.mrf.mxu0
      %v4653 = vadd.f32 %v4524, %v4652
      %v4654 = vpop.f32.mrf.mxu0
      %v4655 = vadd.f32 %v4526, %v4654
      %4656 = vmatmul.bf16.gmra.mxu0 %v2167
      %v4657 = vpop.f32.mrf.mxu0
      %v4658 = vadd.f32 %v4529, %v4657
      %v4659 = vpop.f32.mrf.mxu0
      %v4660 = vadd.f32 %v4531, %v4659
      %4661 = vmatmul.bf16.gmra.mxu0 %v2213
      %v4662 = vpop.f32.mrf.mxu0
      %v4663 = vadd.f32 %v4534, %v4662
      %v4664 = vpop.f32.mrf.mxu0
      %v4665 = vadd.f32 %v4536, %v4664
      %4666 = vmatmul.bf16.gmra.mxu0 %v2257
      %v4667 = vpop.f32.mrf.mxu0
      %v4668 = vadd.f32 %v4539, %v4667
      %v4669 = vpop.f32.mrf.mxu0
      %v4670 = vadd.f32 %v4541, %v4669
      %4671 = vmatmul.bf16.gmra.mxu0 %v2301
      %v4672 = vpop.f32.mrf.mxu0
      %v4673 = vadd.f32 %v4544, %v4672
      %v4674 = vpop.f32.mrf.mxu0
      %v4675 = vadd.f32 %v4546, %v4674
      %4676 = vmatmul.bf16.gmra.mxu0 %v2345
      %v4677 = vpop.f32.mrf.mxu0
      %v4678 = vadd.f32 %v4549, %v4677
      %v4679 = vpop.f32.mrf.mxu0
      %v4680 = vadd.f32 %v4551, %v4679
      %4681 = vmatmul.bf16.gmra.mxu0 %v2389
      %v4682 = vpop.f32.mrf.mxu0
      %v4683 = vadd.f32 %v4554, %v4682
      %v4684 = vpop.f32.mrf.mxu0
      %v4685 = vadd.f32 %v4556, %v4684
      %4686 = vmatmul.bf16.gmra.mxu0 %v2433
      %v4687 = vpop.f32.mrf.mxu0
      %v4688 = vadd.f32 %v4559, %v4687
      %v4689 = vpop.f32.mrf.mxu0
      %v4690 = vadd.f32 %v4561, %v4689
      %4691 = vmatmul.bf16.gmra.mxu0 %v2477
      %v4692 = vpop.f32.mrf.mxu0
      %v4693 = vadd.f32 %v4564, %v4692
      %v4694 = vpop.f32.mrf.mxu0
      %v4695 = vadd.f32 %v4566, %v4694
      %4696 = vmatmul.bf16.gmra.mxu0 %v2521
      %v4697 = vpop.f32.mrf.mxu0
      %v4698 = vadd.f32 %v4569, %v4697
      %v4699 = vpop.f32.mrf.mxu0
      %v4700 = vadd.f32 %v4571, %v4699
      %4701 = vmatmul.bf16.gmra.mxu0 %v2565
      %v4702 = vpop.f32.mrf.mxu0
      %v4703 = vadd.f32 %v4574, %v4702
      %v4704 = vpop.f32.mrf.mxu0
      %v4705 = vadd.f32 %v4576, %v4704
      %4706 = vmatmul.bf16.gmra.mxu0 %v2609
      %v4707 = vpop.f32.mrf.mxu0
      %v4708 = vadd.f32 %v4579, %v4707
      %v4709 = vpop.f32.mrf.mxu0
      %v4710 = vadd.f32 %v4581, %v4709
      %4711 = vmatmul.bf16.gmra.mxu0 %v2653
      %v4712 = vpop.f32.mrf.mxu0
      %v4713 = vadd.f32 %v4584, %v4712
      %v4714 = vpop.f32.mrf.mxu0
      %v4715 = vadd.f32 %v4586, %v4714
      %4716 = vmatmul.bf16.gmra.mxu0 %v2697
      %v4717 = vpop.f32.mrf.mxu0
      %v4718 = vadd.f32 %v4589, %v4717
      %v4719 = vpop.f32.mrf.mxu0
      %v4720 = vadd.f32 %v4591, %v4719
      %4721 = vmatmul.bf16.gmra.mxu0 %v2741
      %v4722 = vpop.f32.mrf.mxu0
      %v4723 = vadd.f32 %v4594, %v4722
      %v4724 = vpop.f32.mrf.mxu0
      %v4725 = vadd.f32 %v4596, %v4724
      %4726 = vmatmul.bf16.gmra.mxu0 %v2785
      %v4727 = vpop.f32.mrf.mxu0
      %v4728 = vadd.f32 %v4599, %v4727
      %v4729 = vpop.f32.mrf.mxu0
      %v4730 = vadd.f32 %v4601, %v4729
      %4731 = vmatmul.bf16.gmra.mxu0 %v2829
      %v4732 = vpop.f32.mrf.mxu0
      %v4733 = vadd.f32 %v4604, %v4732
      %v4734 = vpop.f32.mrf.mxu0
      %v4735 = vadd.f32 %v4606, %v4734
      %4736 = vmatmul.bf16.gmra.mxu0 %v2873
      %v4737 = vpop.f32.mrf.mxu0
      %v4738 = vadd.f32 %v4609, %v4737
      %v4739 = vpop.f32.mrf.mxu0
      %v4740 = vadd.f32 %v4611, %v4739
      %4741 = vmatmul.bf16.gmra.mxu0 %v2917
      %v4742 = vpop.f32.mrf.mxu0
      %v4743 = vadd.f32 %v4614, %v4742
      %v4744 = vpop.f32.mrf.mxu0
      %v4745 = vadd.f32 %v4616, %v4744
      %4746 = vmatmul.bf16.gmra.mxu0 %v2961
      %v4747 = vpop.f32.mrf.mxu0
      %v4748 = vadd.f32 %v4619, %v4747
      %v4749 = vpop.f32.mrf.mxu0
      %v4750 = vadd.f32 %v4621, %v4749
      %4751 = vmatmul.bf16.gmra.mxu0 %v3005
      %v4752 = vpop.f32.mrf.mxu0
      %v4753 = vadd.f32 %v4624, %v4752
      %v4754 = vpop.f32.mrf.mxu0
      %v4755 = vadd.f32 %v4626, %v4754
      %4756 = vmatmul.bf16.gmra.mxu0 %v3054
      %v4757 = vpop.f32.mrf.mxu0
      %v4758 = vadd.f32 %v4629, %v4757
      %v4759 = vpop.f32.mrf.mxu0
      %v4760 = vadd.f32 %v4631, %v4759
      %4761 = vmatmul.bf16.gmra.mxu0 %v3135
      %v4762 = vpop.f32.mrf.mxu0
      %v4763 = vadd.f32 %v4634, %v4762
      %v4764 = vpop.f32.mrf.mxu0
      %v4765 = vadd.f32 %v4636, %v4764
      %4766 = vdwg.mxu0
      %4767 = vmatpush.bf16.msra.mxu0 %v3662
      %4768 = vmatpush.bf16.msra.mxu0 %v3661
      %4769 = vmatpush.bf16.msra.mxu0 %v3660
      %4770 = vmatpush.bf16.msra.mxu0 %v3659
      %4771 = vmatpush.bf16.msra.mxu0 %v3658
      %4772 = vmatpush.bf16.msra.mxu0 %v3657
      %4773 = vmatpush.bf16.msra.mxu0 %v3656
      %4774 = vmatpush.bf16.msra.mxu0 %v3655
      %4775 = vmatmul.bf16.gmra.mxu0 %v2047
      %v4776 = vpop.f32.mrf.mxu0
      %v4777 = vadd.f32 %v4648, %v4776
      %v4778 = vpop.f32.mrf.mxu0
      %v4779 = vadd.f32 %v4650, %v4778
      %4780 = vmatmul.bf16.gmra.mxu0 %v2113
      %v4781 = vpop.f32.mrf.mxu0
      %v4782 = vadd.f32 %v4653, %v4781
      %v4783 = vpop.f32.mrf.mxu0
      %v4784 = vadd.f32 %v4655, %v4783
      %4785 = vmatmul.bf16.gmra.mxu0 %v2176
      %v4786 = vpop.f32.mrf.mxu0
      %v4787 = vadd.f32 %v4658, %v4786
      %v4788 = vpop.f32.mrf.mxu0
      %v4789 = vadd.f32 %v4660, %v4788
      %4790 = vmatmul.bf16.gmra.mxu0 %v2222
      %v4791 = vpop.f32.mrf.mxu0
      %v4792 = vadd.f32 %v4663, %v4791
      %v4793 = vpop.f32.mrf.mxu0
      %v4794 = vadd.f32 %v4665, %v4793
      %4795 = vmatmul.bf16.gmra.mxu0 %v2266
      %v4796 = vpop.f32.mrf.mxu0
      %v4797 = vadd.f32 %v4668, %v4796
      %v4798 = vpop.f32.mrf.mxu0
      %v4799 = vadd.f32 %v4670, %v4798
      %4800 = vmatmul.bf16.gmra.mxu0 %v2310
      %v4801 = vpop.f32.mrf.mxu0
      %v4802 = vadd.f32 %v4673, %v4801
      %v4803 = vpop.f32.mrf.mxu0
      %v4804 = vadd.f32 %v4675, %v4803
      %4805 = vmatmul.bf16.gmra.mxu0 %v2354
      %v4806 = vpop.f32.mrf.mxu0
      %v4807 = vadd.f32 %v4678, %v4806
      %v4808 = vpop.f32.mrf.mxu0
      %v4809 = vadd.f32 %v4680, %v4808
      %4810 = vmatmul.bf16.gmra.mxu0 %v2398
      %v4811 = vpop.f32.mrf.mxu0
      %v4812 = vadd.f32 %v4683, %v4811
      %v4813 = vpop.f32.mrf.mxu0
      %v4814 = vadd.f32 %v4685, %v4813
      %4815 = vmatmul.bf16.gmra.mxu0 %v2442
      %v4816 = vpop.f32.mrf.mxu0
      %v4817 = vadd.f32 %v4688, %v4816
      %v4818 = vpop.f32.mrf.mxu0
      %v4819 = vadd.f32 %v4690, %v4818
      %4820 = vmatmul.bf16.gmra.mxu0 %v2486
      %v4821 = vpop.f32.mrf.mxu0
      %v4822 = vadd.f32 %v4693, %v4821
      %v4823 = vpop.f32.mrf.mxu0
      %v4824 = vadd.f32 %v4695, %v4823
      %4825 = vmatmul.bf16.gmra.mxu0 %v2530
      %v4826 = vpop.f32.mrf.mxu0
      %v4827 = vadd.f32 %v4698, %v4826
      %v4828 = vpop.f32.mrf.mxu0
      %v4829 = vadd.f32 %v4700, %v4828
      %4830 = vmatmul.bf16.gmra.mxu0 %v2574
      %v4831 = vpop.f32.mrf.mxu0
      %v4832 = vadd.f32 %v4703, %v4831
      %v4833 = vpop.f32.mrf.mxu0
      %v4834 = vadd.f32 %v4705, %v4833
      %4835 = vmatmul.bf16.gmra.mxu0 %v2618
      %v4836 = vpop.f32.mrf.mxu0
      %v4837 = vadd.f32 %v4708, %v4836
      %v4838 = vpop.f32.mrf.mxu0
      %v4839 = vadd.f32 %v4710, %v4838
      %4840 = vmatmul.bf16.gmra.mxu0 %v2662
      %v4841 = vpop.f32.mrf.mxu0
      %v4842 = vadd.f32 %v4713, %v4841
      %v4843 = vpop.f32.mrf.mxu0
      %v4844 = vadd.f32 %v4715, %v4843
      %4845 = vmatmul.bf16.gmra.mxu0 %v2706
      %v4846 = vpop.f32.mrf.mxu0
      %v4847 = vadd.f32 %v4718, %v4846
      %v4848 = vpop.f32.mrf.mxu0
      %v4849 = vadd.f32 %v4720, %v4848
      %4850 = vmatmul.bf16.gmra.mxu0 %v2750
      %v4851 = vpop.f32.mrf.mxu0
      %v4852 = vadd.f32 %v4723, %v4851
      %v4853 = vpop.f32.mrf.mxu0
      %v4854 = vadd.f32 %v4725, %v4853
      %4855 = vmatmul.bf16.gmra.mxu0 %v2794
      %v4856 = vpop.f32.mrf.mxu0
      %v4857 = vadd.f32 %v4728, %v4856
      %v4858 = vpop.f32.mrf.mxu0
      %v4859 = vadd.f32 %v4730, %v4858
      %4860 = vmatmul.bf16.gmra.mxu0 %v2838
      %v4861 = vpop.f32.mrf.mxu0
      %v4862 = vadd.f32 %v4733, %v4861
      %v4863 = vpop.f32.mrf.mxu0
      %v4864 = vadd.f32 %v4735, %v4863
      %4865 = vmatmul.bf16.gmra.mxu0 %v2882
      %v4866 = vpop.f32.mrf.mxu0
      %v4867 = vadd.f32 %v4738, %v4866
      %v4868 = vpop.f32.mrf.mxu0
      %v4869 = vadd.f32 %v4740, %v4868
      %4870 = vmatmul.bf16.gmra.mxu0 %v2926
      %v4871 = vpop.f32.mrf.mxu0
      %v4872 = vadd.f32 %v4743, %v4871
      %v4873 = vpop.f32.mrf.mxu0
      %v4874 = vadd.f32 %v4745, %v4873
      %4875 = vmatmul.bf16.gmra.mxu0 %v2970
      %v4876 = vpop.f32.mrf.mxu0
      %v4877 = vadd.f32 %v4748, %v4876
      %v4878 = vpop.f32.mrf.mxu0
      %v4879 = vadd.f32 %v4750, %v4878
      %4880 = vmatmul.bf16.gmra.mxu0 %v3014
      %v4881 = vpop.f32.mrf.mxu0
      %v4882 = vadd.f32 %v4753, %v4881
      %v4883 = vpop.f32.mrf.mxu0
      %v4884 = vadd.f32 %v4755, %v4883
      %4885 = vmatmul.bf16.gmra.mxu0 %v3063
      %v4886 = vpop.f32.mrf.mxu0
      %v4887 = vadd.f32 %v4758, %v4886
      %v4888 = vpop.f32.mrf.mxu0
      %v4889 = vadd.f32 %v4760, %v4888
      %4890 = vmatmul.bf16.gmra.mxu0 %v3144
      %v4891 = vpop.f32.mrf.mxu0
      %v4892 = vadd.f32 %v4763, %v4891
      %v4893 = vpop.f32.mrf.mxu0
      %v4894 = vadd.f32 %v4765, %v4893
      %4895 = vdwg.mxu0
      %v4896 = vmul.f32 %v4777, %v664
      %v4897 = vmul.f32 %v4779, %v669
      %v4898 = vmul.f32 %v4782, %v674
      %v4899 = vmul.f32 %v4784, %v679
      %v4900 = vmul.f32 %v4787, %v684
      %v4901 = vmul.f32 %v4789, %v689
      %v4902 = vmul.f32 %v4792, %v694
      %v4903 = vmul.f32 %v4794, %v699
      %v4904 = vmul.f32 %v4797, %v704
      %v4905 = vmul.f32 %v4799, %v709
      %v4906 = vmul.f32 %v4802, %v714
      %v4907 = vmul.f32 %v4804, %v719
      %v4908 = vmul.f32 %v4807, %v724
      %v4909 = vmul.f32 %v4809, %v729
      %v4910 = vmul.f32 %v4812, %v734
      %v4911 = vmul.f32 %v4814, %v739
      %v4912 = vmul.f32 %v4817, %v744
      %v4913 = vmul.f32 %v4819, %v749
      %v4914 = vmul.f32 %v4822, %v754
      %v4915 = vmul.f32 %v4824, %v759
      %v4916 = vmul.f32 %v4827, %v764
      %v4917 = vmul.f32 %v4829, %v769
      %v4918 = vmul.f32 %v4832, %v774
      %v4919 = vmul.f32 %v4834, %v779
      %v4920 = vmul.f32 %v4837, %v784
      %v4921 = vmul.f32 %v4839, %v789
      %v4922 = vmul.f32 %v4842, %v794
      %v4923 = vmul.f32 %v4844, %v799
      %v4924 = vmul.f32 %v4847, %v804
      %v4925 = vmul.f32 %v4849, %v809
      %v4926 = vmul.f32 %v4852, %v814
      %v4927 = vmul.f32 %v4854, %v819
      %v4928 = vmul.f32 %v4857, %v824
      %v4929 = vmul.f32 %v4859, %v829
      %v4930 = vmul.f32 %v4862, %v834
      %v4931 = vmul.f32 %v4864, %v839
      %v4932 = vmul.f32 %v4867, %v844
      %v4933 = vmul.f32 %v4869, %v849
      %v4934 = vmul.f32 %v4872, %v854
      %v4935 = vmul.f32 %v4874, %v859
      %v4936 = vmul.f32 %v4877, %v864
      %v4937 = vmul.f32 %v4879, %v869
      %v4938 = vmul.f32 %v4882, %v874
      %v4939 = vmul.f32 %v4884, %v879
      %v4940 = vmul.f32 %v4887, %v884
      %v4941 = vmul.f32 %v4889, %v889
      %v4942 = vmul.f32 %v4892, %v894
      %v4943 = vmul.f32 %v4894, %v899
      %v4944 = vadd.f32 %v4896, %v4897
      %v4945 = vadd.f32 %v4944, %v4898
      %v4946 = vadd.f32 %v4945, %v4899
      %v4947 = vadd.f32 %v4946, %v4900
      %v4948 = vadd.f32 %v4947, %v4901
      %v4949 = vadd.f32 %v4948, %v4902
      %v4950 = vadd.f32 %v4949, %v4903
      %v4951 = vadd.f32 %v4950, %v4904
      %v4952 = vadd.f32 %v4951, %v4905
      %v4953 = vadd.f32 %v4952, %v4906
      %v4954 = vadd.f32 %v4953, %v4907
      %v4955 = vadd.f32 %v4954, %v4908
      %v4956 = vadd.f32 %v4955, %v4909
      %v4957 = vadd.f32 %v4956, %v4910
      %v4958 = vadd.f32 %v4957, %v4911
      %v4959 = vadd.f32 %v4958, %v4912
      %v4960 = vadd.f32 %v4959, %v4913
      %v4961 = vadd.f32 %v4960, %v4914
      %v4962 = vadd.f32 %v4961, %v4915
      %v4963 = vadd.f32 %v4962, %v4916
      %v4964 = vadd.f32 %v4963, %v4917
      %v4965 = vadd.f32 %v4964, %v4918
      %v4966 = vadd.f32 %v4965, %v4919
      %v4967 = vadd.f32 %v4966, %v4920
      %v4968 = vadd.f32 %v4967, %v4921
      %v4969 = vadd.f32 %v4968, %v4922
      %v4970 = vadd.f32 %v4969, %v4923
      %v4971 = vadd.f32 %v4970, %v4924
      %v4972 = vadd.f32 %v4971, %v4925
      %v4973 = vadd.f32 %v4972, %v4926
      %v4974 = vadd.f32 %v4973, %v4927
      %v4975 = vadd.f32 %v4974, %v4928
      %v4976 = vadd.f32 %v4975, %v4929
      %v4977 = vadd.f32 %v4976, %v4930
      %v4978 = vadd.f32 %v4977, %v4931
      %v4979 = vadd.f32 %v4978, %v4932
      %v4980 = vadd.f32 %v4979, %v4933
      %v4981 = vadd.f32 %v4980, %v4934
      %v4982 = vadd.f32 %v4981, %v4935
      %v4983 = vadd.f32 %v4982, %v4936
      %v4984 = vadd.f32 %v4983, %v4937
      %v4985 = vadd.f32 %v4984, %v4938
      %v4986 = vadd.f32 %v4985, %v4939
      %v4987 = vadd.f32 %v4986, %v4940
      %v4988 = vadd.f32 %v4987, %v4941
      %v4989 = vadd.f32 %v4988, %v4942
      %v4990 = vadd.f32 %v4989, %v4943
      %v4991 = vrot.slane %v4990, 4
      %v4992 = vadd.f32 %v4990, %v4991
      %v4993 = vrot.slane %v4992, 2
      %v4994 = vadd.f32 %v4992, %v4993
      %v4995 = vrot.slane %v4994, 1
      %v4996 = vadd.f32 %v4994, %v4995
      %4997 = vst [vmem:[%s292] sm:$0x1] %v4996
      %v4998 = vmul.f32 %v4896, %v4777
      %v4999 = vmul.f32 %v4897, %v4779
      %v5000 = vmul.f32 %v4898, %v4782
      %v5001 = vmul.f32 %v4899, %v4784
      %v5002 = vmul.f32 %v4900, %v4787
      %v5003 = vmul.f32 %v4901, %v4789
      %v5004 = vmul.f32 %v4902, %v4792
      %v5005 = vmul.f32 %v4903, %v4794
      %v5006 = vmul.f32 %v4904, %v4797
      %v5007 = vmul.f32 %v4905, %v4799
      %v5008 = vmul.f32 %v4906, %v4802
      %v5009 = vmul.f32 %v4907, %v4804
      %v5010 = vmul.f32 %v4908, %v4807
      %v5011 = vmul.f32 %v4909, %v4809
      %v5012 = vmul.f32 %v4910, %v4812
      %v5013 = vmul.f32 %v4911, %v4814
      %v5014 = vmul.f32 %v4912, %v4817
      %v5015 = vmul.f32 %v4913, %v4819
      %v5016 = vmul.f32 %v4914, %v4822
      %v5017 = vmul.f32 %v4915, %v4824
      %v5018 = vmul.f32 %v4916, %v4827
      %v5019 = vmul.f32 %v4917, %v4829
      %v5020 = vmul.f32 %v4918, %v4832
      %v5021 = vmul.f32 %v4919, %v4834
      %v5022 = vmul.f32 %v4920, %v4837
      %v5023 = vmul.f32 %v4921, %v4839
      %v5024 = vmul.f32 %v4922, %v4842
      %v5025 = vmul.f32 %v4923, %v4844
      %v5026 = vmul.f32 %v4924, %v4847
      %v5027 = vmul.f32 %v4925, %v4849
      %v5028 = vmul.f32 %v4926, %v4852
      %v5029 = vmul.f32 %v4927, %v4854
      %v5030 = vmul.f32 %v4928, %v4857
      %v5031 = vmul.f32 %v4929, %v4859
      %v5032 = vmul.f32 %v4930, %v4862
      %v5033 = vmul.f32 %v4931, %v4864
      %v5034 = vmul.f32 %v4932, %v4867
      %v5035 = vmul.f32 %v4933, %v4869
      %v5036 = vmul.f32 %v4934, %v4872
      %v5037 = vmul.f32 %v4935, %v4874
      %v5038 = vmul.f32 %v4936, %v4877
      %v5039 = vmul.f32 %v4937, %v4879
      %v5040 = vmul.f32 %v4938, %v4882
      %v5041 = vmul.f32 %v4939, %v4884
      %v5042 = vmul.f32 %v4940, %v4887
      %v5043 = vmul.f32 %v4941, %v4889
      %v5044 = vmul.f32 %v4942, %v4892
      %v5045 = vmul.f32 %v4943, %v4894
      %v5046 = vadd.f32 %v4998, %v4999
      %v5047 = vadd.f32 %v5046, %v5000
      %v5048 = vadd.f32 %v5047, %v5001
      %v5049 = vadd.f32 %v5048, %v5002
      %v5050 = vadd.f32 %v5049, %v5003
      %v5051 = vadd.f32 %v5050, %v5004
      %v5052 = vadd.f32 %v5051, %v5005
      %v5053 = vadd.f32 %v5052, %v5006
      %v5054 = vadd.f32 %v5053, %v5007
      %v5055 = vadd.f32 %v5054, %v5008
      %v5056 = vadd.f32 %v5055, %v5009
      %v5057 = vadd.f32 %v5056, %v5010
      %v5058 = vadd.f32 %v5057, %v5011
      %v5059 = vadd.f32 %v5058, %v5012
      %v5060 = vadd.f32 %v5059, %v5013
      %v5061 = vadd.f32 %v5060, %v5014
      %v5062 = vadd.f32 %v5061, %v5015
      %v5063 = vadd.f32 %v5062, %v5016
      %v5064 = vadd.f32 %v5063, %v5017
      %v5065 = vadd.f32 %v5064, %v5018
      %v5066 = vadd.f32 %v5065, %v5019
      %v5067 = vadd.f32 %v5066, %v5020
      %v5068 = vadd.f32 %v5067, %v5021
      %v5069 = vadd.f32 %v5068, %v5022
      %v5070 = vadd.f32 %v5069, %v5023
      %v5071 = vadd.f32 %v5070, %v5024
      %v5072 = vadd.f32 %v5071, %v5025
      %v5073 = vadd.f32 %v5072, %v5026
      %v5074 = vadd.f32 %v5073, %v5027
      %v5075 = vadd.f32 %v5074, %v5028
      %v5076 = vadd.f32 %v5075, %v5029
      %v5077 = vadd.f32 %v5076, %v5030
      %v5078 = vadd.f32 %v5077, %v5031
      %v5079 = vadd.f32 %v5078, %v5032
      %v5080 = vadd.f32 %v5079, %v5033
      %v5081 = vadd.f32 %v5080, %v5034
      %v5082 = vadd.f32 %v5081, %v5035
      %v5083 = vadd.f32 %v5082, %v5036
      %v5084 = vadd.f32 %v5083, %v5037
      %v5085 = vadd.f32 %v5084, %v5038
      %v5086 = vadd.f32 %v5085, %v5039
      %v5087 = vadd.f32 %v5086, %v5040
      %v5088 = vadd.f32 %v5087, %v5041
      %v5089 = vadd.f32 %v5088, %v5042
      %v5090 = vadd.f32 %v5089, %v5043
      %v5091 = vadd.f32 %v5090, %v5044
      %v5092 = vadd.f32 %v5091, %v5045
      %v5093 = vrot.slane %v5092, 4
      %v5094 = vadd.f32 %v5092, %v5093
      %v5095 = vrot.slane %v5094, 2
      %v5096 = vadd.f32 %v5094, %v5095
      %v5097 = vrot.slane %v5096, 1
      %v5098 = vadd.f32 %v5096, %v5097
      %5099 = vst [vmem:[%s295] sm:$0x1] %v5098
      %5100 = vst [vmem:[%s289] sm:$0xf] 0
      %5101 = vst [vmem:[%s289 + $0x4] sm:$0xf] 0
      %5102 = vst [vmem:[%s289 + $0x8] sm:$0xf] 0
      %5103 = vst [vmem:[%s289 + $0xc] sm:$0xf] 0
      %5104 = vst [vmem:[%s289 + $0x10] sm:$0xf] 0
      %5105 = vst [vmem:[%s289 + $0x14] sm:$0xf] 0
      %v5106 = vpack.c.bf16 %v4777, %v4777
      %v5107 = vpack.c.bf16 %v4779, %v4779
      %v5108 = vpack.c.bf16 %v4782, %v4782
      %v5109 = vpack.c.bf16 %v4784, %v4784
      %v5110 = vpack.c.bf16 %v4787, %v4787
      %v5111 = vpack.c.bf16 %v4789, %v4789
      %v5112 = vpack.c.bf16 %v4792, %v4792
      %v5113 = vpack.c.bf16 %v4794, %v4794
      %v5114 = vpack.c.bf16 %v4797, %v4797
      %v5115 = vpack.c.bf16 %v4799, %v4799
      %v5116 = vpack.c.bf16 %v4802, %v4802
      %v5117 = vpack.c.bf16 %v4804, %v4804
      %v5118 = vpack.c.bf16 %v4807, %v4807
      %v5119 = vpack.c.bf16 %v4809, %v4809
      %v5120 = vpack.c.bf16 %v4812, %v4812
      %v5121 = vpack.c.bf16 %v4814, %v4814
      %v5122 = vpack.c.bf16 %v4817, %v4817
      %v5123 = vpack.c.bf16 %v4819, %v4819
      %v5124 = vpack.c.bf16 %v4822, %v4822
      %v5125 = vpack.c.bf16 %v4824, %v4824
      %v5126 = vpack.c.bf16 %v4827, %v4827
      %v5127 = vpack.c.bf16 %v4829, %v4829
      %v5128 = vpack.c.bf16 %v4832, %v4832
      %v5129 = vpack.c.bf16 %v4834, %v4834
      %v5130 = vpack.c.bf16 %v4837, %v4837
      %v5131 = vpack.c.bf16 %v4839, %v4839
      %v5132 = vpack.c.bf16 %v4842, %v4842
      %v5133 = vpack.c.bf16 %v4844, %v4844
      %v5134 = vpack.c.bf16 %v4847, %v4847
      %v5135 = vpack.c.bf16 %v4849, %v4849
      %v5136 = vpack.c.bf16 %v4852, %v4852
      %v5137 = vpack.c.bf16 %v4854, %v4854
      %v5138 = vpack.c.bf16 %v4857, %v4857
      %v5139 = vpack.c.bf16 %v4859, %v4859
      %v5140 = vpack.c.bf16 %v4862, %v4862
      %v5141 = vpack.c.bf16 %v4864, %v4864
      %v5142 = vpack.c.bf16 %v4867, %v4867
      %v5143 = vpack.c.bf16 %v4869, %v4869
      %v5144 = vpack.c.bf16 %v4872, %v4872
      %v5145 = vpack.c.bf16 %v4874, %v4874
      %v5146 = vpack.c.bf16 %v4877, %v4877
      %v5147 = vpack.c.bf16 %v4879, %v4879
      %v5148 = vpack.c.bf16 %v4882, %v4882
      %v5149 = vpack.c.bf16 %v4884, %v4884
      %v5150 = vpack.c.bf16 %v4887, %v4887
      %v5151 = vpack.c.bf16 %v4889, %v4889
      %v5152 = vpack.c.bf16 %v4892, %v4892
      %v5153 = vpack.c.bf16 %v4894, %v4894
      %5154 = vst [vmem:[%s289 + $0x18] sm:$0xf] %v5106
      %5155 = vst [vmem:[%s289 + $0x1c] sm:$0xf] %v5107
      %5156 = vst [vmem:[%s289 + $0x20] sm:$0xf] %v5108
      %5157 = vst [vmem:[%s289 + $0x24] sm:$0xf] %v5109
      %5158 = vst [vmem:[%s289 + $0x28] sm:$0xf] %v5110
      %5159 = vst [vmem:[%s289 + $0x2c] sm:$0xf] %v5111
      %5160 = vst [vmem:[%s289 + $0x30] sm:$0xf] %v5112
      %5161 = vst [vmem:[%s289 + $0x34] sm:$0xf] %v5113
      %5162 = vst [vmem:[%s289 + $0x38] sm:$0xf] %v5114
      %5163 = vst [vmem:[%s289 + $0x3c] sm:$0xf] %v5115
      %5164 = vst [vmem:[%s289 + $0x40] sm:$0xf] %v5116
      %5165 = vst [vmem:[%s289 + $0x44] sm:$0xf] %v5117
      %5166 = vst [vmem:[%s289 + $0x48] sm:$0xf] %v5118
      %5167 = vst [vmem:[%s289 + $0x4c] sm:$0xf] %v5119
      %5168 = vst [vmem:[%s289 + $0x50] sm:$0xf] %v5120
      %5169 = vst [vmem:[%s289 + $0x54] sm:$0xf] %v5121
      %5170 = vst [vmem:[%s289 + $0x58] sm:$0xf] %v5122
      %5171 = vst [vmem:[%s289 + $0x5c] sm:$0xf] %v5123
      %5172 = vst [vmem:[%s289 + $0x60] sm:$0xf] %v5124
      %5173 = vst [vmem:[%s289 + $0x64] sm:$0xf] %v5125
      %5174 = vst [vmem:[%s289 + $0x68] sm:$0xf] %v5126
      %5175 = vst [vmem:[%s289 + $0x6c] sm:$0xf] %v5127
      %5176 = vst [vmem:[%s289 + $0x70] sm:$0xf] %v5128
      %5177 = vst [vmem:[%s289 + $0x74] sm:$0xf] %v5129
      %5178 = vst [vmem:[%s289 + $0x78] sm:$0xf] %v5130
      %5179 = vst [vmem:[%s289 + $0x7c] sm:$0xf] %v5131
      %5180 = vst [vmem:[%s289 + $0x80] sm:$0xf] %v5132
      %5181 = vst [vmem:[%s289 + $0x84] sm:$0xf] %v5133
      %5182 = vst [vmem:[%s289 + $0x88] sm:$0xf] %v5134
      %5183 = vst [vmem:[%s289 + $0x8c] sm:$0xf] %v5135
      %5184 = vst [vmem:[%s289 + $0x90] sm:$0xf] %v5136
      %5185 = vst [vmem:[%s289 + $0x94] sm:$0xf] %v5137
      %5186 = vst [vmem:[%s289 + $0x98] sm:$0xf] %v5138
      %5187 = vst [vmem:[%s289 + $0x9c] sm:$0xf] %v5139
      %5188 = vst [vmem:[%s289 + $0xa0] sm:$0xf] %v5140
      %5189 = vst [vmem:[%s289 + $0xa4] sm:$0xf] %v5141
      %5190 = vst [vmem:[%s289 + $0xa8] sm:$0xf] %v5142
      %5191 = vst [vmem:[%s289 + $0xac] sm:$0xf] %v5143
      %5192 = vst [vmem:[%s289 + $0xb0] sm:$0xf] %v5144
      %5193 = vst [vmem:[%s289 + $0xb4] sm:$0xf] %v5145
      %5194 = vst [vmem:[%s289 + $0xb8] sm:$0xf] %v5146
      %5195 = vst [vmem:[%s289 + $0xbc] sm:$0xf] %v5147
      %5196 = vst [vmem:[%s289 + $0xc0] sm:$0xf] %v5148
      %5197 = vst [vmem:[%s289 + $0xc4] sm:$0xf] %v5149
      %5198 = vst [vmem:[%s289 + $0xc8] sm:$0xf] %v5150
      %5199 = vst [vmem:[%s289 + $0xcc] sm:$0xf] %v5151
      %5200 = vst [vmem:[%s289 + $0xd0] sm:$0xf] %v5152
      %5201 = vst [vmem:[%s289 + $0xd4] sm:$0xf] %v5153
      %5202 = vst [vmem:[%s289 + $0xd8] sm:$0xf] 0
      %5203 = vst [vmem:[%s289 + $0xdc] sm:$0xf] 0
      %5204 = vst [vmem:[%s289 + $0xe0] sm:$0xf] 0
      %5205 = vst [vmem:[%s289 + $0xe4] sm:$0xf] 0
      %5206 = vst [vmem:[%s289 + $0xe8] sm:$0xf] 0
      %5207 = vst [vmem:[%s289 + $0xec] sm:$0xf] 0
      %p5208 = scmp.lt.s32.totalorder %s19, 1
      %s5209 = scalar_select %p5208, %s19, 1
      %s5210 = smul.addr %s5209, 60
      %s5211 = smul.addr %s5210, 4
      %s5212 = scalar_lea.vmem %s5, %s5211
      %p5213 = scmp.lt.s32.totalorder %s19, 1
      %s5214 = scalar_select %p5213, %s19, 1
      %s5215 = scalar_lea.vmem %s6, %s5214
      %p5216 = scmp.lt.s32.totalorder %s19, 1
      %s5217 = scalar_select %p5216, %s19, 1
      %s5218 = scalar_lea.vmem %s7, %s5217
      // Predicated region
      $region41: #{residual_forward.4} parent=39 // pred_check
        %p5219 = pneg %p147
      $region42: #{residual_forward.4} parent=39 // pred_check_branch
        %5221 = sbr.rel (%p5219) target = $region44
      $region43: #{residual_forward.4} parent=39 // pred_region
        _
      $region44: #{residual_forward.4} parent=39 // pred_fallthru
        _
      // Predicated region
      $region45: #{residual_forward.4} parent=39 // pred_check
        %p5222 = pneg %p173
      $region46: #{residual_forward.4} parent=39 // pred_check_branch
        %5224 = sbr.rel (%p5222) target = $region48
      $region47: #{residual_forward.4} parent=39 // pred_region
        _
      $region48: #{residual_forward.4} parent=39 // pred_fallthru
        _
      // Predicated region
      $region49: #{residual_forward.4} parent=39 // pred_check
        %p5225 = pneg %p199
      $region50: #{residual_forward.4} parent=39 // pred_check_branch
        %5227 = sbr.rel (%p5225) target = $region52
      $region51: #{residual_forward.4} parent=39 // pred_region
        _
      $region52: #{residual_forward.4} parent=39 // pred_fallthru
        _
    $region40: #{residual_forward.4} parent=5 // pred_fallthru
      _
    %p5228 = scmp.le.s32.totalorder 2, %s14
    // Predicated region
    $region53: #{residual_forward.4} parent=5 // pred_check
      %p5229 = pneg %p5228
    $region54: #{residual_forward.4} parent=5 // pred_check_branch
      %5231 = sbr.rel (%p5229) target = $region56
    $region55: #{residual_forward.4} parent=5 // pred_region
      %s5232 = ssub.s32 %s14, 2
      // Predicated region
      $region57: #{residual_forward.4} parent=55 // pred_check
        %p5233 = pneg %p153
      $region58: #{residual_forward.4} parent=55 // pred_check_branch
        %5235 = sbr.rel (%p5233) target = $region60
      $region59: #{residual_forward.4} parent=55 // pred_region
        %p5236 = scmp.lt.s32.totalorder %s20, 1
        %s5237 = scalar_select %p5236, %s20, 1
        %s5238 = smul.addr %s5237, 60
        %s5239 = smul.addr %s5238, 4
        %s5240 = scalar_lea.vmem %s5, %s5239
      $region60: #{residual_forward.4} parent=55 // pred_fallthru
        _
      // Predicated region
      $region61: #{residual_forward.4} parent=55 // pred_check
        %p5241 = pneg %p179
      $region62: #{residual_forward.4} parent=55 // pred_check_branch
        %5243 = sbr.rel (%p5241) target = $region64
      $region63: #{residual_forward.4} parent=55 // pred_region
        %p5244 = scmp.lt.s32.totalorder %s20, 1
        %s5245 = scalar_select %p5244, %s20, 1
        %s5246 = scalar_lea.vmem %s6, %s5245
      $region64: #{residual_forward.4} parent=55 // pred_fallthru
        _
      // Predicated region
      $region65: #{residual_forward.4} parent=55 // pred_check
        %p5247 = pneg %p205
      $region66: #{residual_forward.4} parent=55 // pred_check_branch
        %5249 = sbr.rel (%p5247) target = $region68
      $region67: #{residual_forward.4} parent=55 // pred_region
        %p5250 = scmp.lt.s32.totalorder %s20, 1
        %s5251 = scalar_select %p5250, %s20, 1
        %s5252 = scalar_lea.vmem %s7, %s5251
      $region68: #{residual_forward.4} parent=55 // pred_fallthru
        _
    $region56: #{residual_forward.4} parent=5 // pred_fallthru
      _
  $region6: #{residual_forward.4} parent=0 // loop_footer
    %s18 = sadd.s32 1, %s14
  $region7: #{residual_forward.4} parent=0 // loop_footer_branch
    %13 = sbr.rel target = $region3
  $region8: #{residual_forward.4} parent=0 // loop_exit
    _

</llo_original>
